<compile_context>
chip_gen: v7x
topology: tpu7x:2x2x1
jax: 0.10.0
libtpu: 0.0.40
codegen_flags: <defaults>
</compile_context>

<pallas_src>
import jax
import jax.numpy as jnp
from jax import lax
from jax.experimental import pallas as pl
from jax.experimental.pallas import tpu as pltpu

PAD_IDX = 0
_VMEM_LIMIT = 32 * 1024 * 1024


def _round_up(x, m):
    return ((x + m - 1) // m) * m


def _pad2(x, shape):
    out = jnp.zeros(shape, x.dtype)
    return out.at[tuple(slice(0, s) for s in x.shape)].set(x)


# ----------------------------------------------------------------------------
# Fused GRU gate math (PyTorch gate order r, z, n); gi/gh are [rows, 3*Hp] f32.
# ----------------------------------------------------------------------------
def _gru_fused(gi, gh, h, Hp):
    r = jax.nn.sigmoid(gi[:, :Hp] + gh[:, :Hp])
    z = jax.nn.sigmoid(gi[:, Hp:2 * Hp] + gh[:, Hp:2 * Hp])
    n = jnp.tanh(gi[:, 2 * Hp:] + r * gh[:, 2 * Hp:])
    return (1.0 - z) * n + z * h


# ----------------------------------------------------------------------------
# Encoder kernel: BOTH GRU directions in one body, recurrences interleaved.
#   x2d_ref  : [T*Bp, Hp]   bf16 embedded inputs, time-major, batch padded to Bp
#   keep_ref : [T, Bp, 1]   f32, 1.0 at non-pad positions (0.0 at pads / pad rows)
#   wih/whh  : [2, Hp, 3Hp] bf16 fused (r|z|n) gate weights (dir 0 = fwd, 1 = bwd)
#   bih/bhh  : [2, 1, 3Hp]  f32
#   out_ref  : [T, Bp, Hp]  f32 masked(fwd) + masked(bwd) per-timestep outputs
#   hid_ref  : [Bp, Hp]     f32 final fwd hidden + final bwd hidden
# NOTE: like the PyTorch reference (no pack_padded_sequence), the recurrence runs
# through padded timesteps; only the per-position outputs are masked.
# ----------------------------------------------------------------------------
def encoder_kernel(x2d_ref, keep_ref, wih_ref, whh_ref, bih_ref, bhh_ref,
                   out_ref, hid_ref, gi_f_ref, gi_b_ref, fwd_ref):
    T, Bp, Hp = out_ref.shape
    bf16 = jnp.bfloat16

    # Hoisted input-side matmuls for all timesteps of both directions (2 big MXU ops).
    x = x2d_ref[...]
    gi_f_ref[...] = (jnp.dot(x, wih_ref[0], preferred_element_type=jnp.float32)
                     + bih_ref[0])
    gi_b_ref[...] = (jnp.dot(x, wih_ref[1], preferred_element_type=jnp.float32)
                     + bih_ref[1])

    h_f = jnp.zeros((Bp, Hp), jnp.float32)
    h_b = jnp.zeros((Bp, Hp), jnp.float32)

    # Statically unrolled recurrence; fwd walks t = i, bwd walks t = T-1-i (all indices
    # compile-time constants -> static slices / stores, no scalar-slot address math).
    for i in range(T):
        tf = i
        tb = T - 1 - i
        gif = gi_f_ref[tf * Bp:(tf + 1) * Bp, :]                         # [Bp, 3Hp]
        gib = gi_b_ref[tb * Bp:(tb + 1) * Bp, :]
        ghf = (jnp.dot(h_f.astype(bf16), whh_ref[0],
                       preferred_element_type=jnp.float32) + bhh_ref[0])
        ghb = (jnp.dot(h_b.astype(bf16), whh_ref[1],
                       preferred_element_type=jnp.float32) + bhh_ref[1])
        h_f = _gru_fused(gif, ghf, h_f, Hp)
        h_b = _gru_fused(gib, ghb, h_b, Hp)
        # pad mask folded into the store (no separate masking pass)
        fwd_ref[tf] = h_f * keep_ref[tf]
        out_ref[tb] = h_b * keep_ref[tb]

    out_ref[...] = out_ref[...] + fwd_ref[...]     # fwd + bwd, all in VMEM
    hid_ref[...] = h_f + h_b


# ----------------------------------------------------------------------------
# Decoder kernel: grid = (max_len,), "arbitrary".  Each step processes ALL B*Jp
# slot rows.  w / hidden carried in VMEM scratch; enc / enc^T / scatter matrix
# built once at k==0 into VMEM scratch; emb / emb^T / weights resident for the
# whole grid (constant index maps).  p_final accumulates into the VMEM-resident
# output block and is written back to HBM once at the end.
# ----------------------------------------------------------------------------
def make_decoder_kernel(batch, v_real):
    def kernel(w0_ref, h0_ref, enc_ref, maskf_ref, ids_ref,
               wih_ref, whh_ref, bih_ref, bhh_ref,
               emb_ref, embT_ref, wgen_ref, wgenb_ref, wgate_ref, wgateb_ref,
               pfinal_ref, gate_ref,
               w_scr, h_scr, enc_scr, encT_scr, scat_scr):
        k = pl.program_id(0)
        BJ, Hp = w_scr.shape
        Jp = BJ // batch
        _, T, Vp = scat_scr.shape
        bf16 = jnp.bfloat16

        @pl.when(k == 0)
        def _init():
            w_scr[...] = w0_ref[...]
            h_scr[...] = h0_ref[...]
            enc_all = enc_ref[...]                                       # [T, Bp, Hp]
            v_iota = lax.broadcasted_iota(jnp.int32, (T, Vp), 1)
            for b in range(batch):
                e_b = enc_all[:, b, :]                                   # [T, Hp]
                enc_scr[b] = e_b
                encT_scr[b] = jnp.transpose(e_b)                         # [Hp, T] (XLU, once)
                # lane-dense scatter matrix: scat[t, v] = (ids[t] == v)
                scat_scr[b] = (v_iota == ids_ref[b]).astype(jnp.float32)

        w = w_scr[...]                                                   # [BJ, Hp] f32
        h = h_scr[...]

        # --- GRU step (fused gates, bf16 MXU operands, f32 accumulate) ---
        gi = (jnp.dot(w.astype(bf16), wih_ref[...],
                      preferred_element_type=jnp.float32) + bih_ref[...])
        gh = (jnp.dot(h.astype(bf16), whh_ref[...],
                      preferred_element_type=jnp.float32) + bhh_ref[...])
        h_new = _gru_fused(gi, gh, h, Hp)
        h_bf = h_new.astype(bf16)

        # --- vocabulary attention over all BJ rows (pre-transposed emb^T: no XLU) ---
        attn_v = jnp.dot(h_bf, embT_ref[...], preferred_element_type=jnp.float32)
        vpad = lax.broadcasted_iota(jnp.int32, (BJ, Vp), 1) >= v_real
        attn_v = jnp.where(vpad, -1e30, attn_v)
        mv = jnp.max(attn_v, axis=-1, keepdims=True)
        ev = jnp.exp(attn_v - mv)
        attn_vocab = ev / jnp.sum(ev, axis=-1, keepdims=True)            # [BJ, Vp]

        # --- per-batch-row history attention / context / copy distribution ---
        ctx_list = []
        pctx_list = []
        for b in range(batch):
            hb = h_new[b * Jp:(b + 1) * Jp, :]                           # [Jp, Hp]
            attn_e = jnp.dot(hb, encT_scr[b],
                             preferred_element_type=jnp.float32)         # [Jp, T]
            attn_e = jnp.where(maskf_ref[b] > 0.5, -10000.0, attn_e)
            m = jnp.max(attn_e, axis=-1, keepdims=True)
            e = jnp.exp(attn_e - m)
            ah = e / jnp.sum(e, axis=-1, keepdims=True)                  # [Jp, T] f32
            ctx_list.append(jnp.dot(ah, enc_scr[b],
                                    preferred_element_type=jnp.float32))  # [Jp, Hp]
            pctx_list.append(jnp.dot(ah, scat_scr[b],
                                     preferred_element_type=jnp.float32))  # [Jp, Vp]
        context = jnp.concatenate(ctx_list, axis=0)                      # [BJ, Hp]
        p_ctx = jnp.concatenate(pctx_list, axis=0)                       # [BJ, Vp]

        # --- p_gen = sigmoid(W_gen [w ; h_new ; context] + b) ---
        pg = (jnp.sum(w * wgen_ref[0], axis=-1, keepdims=True)
              + jnp.sum(h_new * wgen_ref[1], axis=-1, keepdims=True)
              + jnp.sum(context * wgen_ref[2], axis=-1, keepdims=True)
              + wgenb_ref[...])
        p_gen = jax.nn.sigmoid(pg)                                       # [BJ, 1]

        p_final = p_gen * attn_vocab + (1.0 - p_gen) * p_ctx             # [BJ, Vp]
        pfinal_ref[k] = p_final     # VMEM-resident output block; HBM writeback once

        # --- greedy argmax -> next-step input embedding (one-hot gather via MXU) ---
        v_iota2 = lax.broadcasted_iota(jnp.int32, (BJ, Vp), 1)
        maxp = jnp.max(p_final, axis=-1, keepdims=True)
        idx = jnp.min(jnp.where(p_final >= maxp, v_iota2, Vp), axis=-1, keepdims=True)
        onehot = (v_iota2 == idx).astype(bf16)                           # [BJ, Vp]
        w_scr[...] = jnp.dot(onehot, emb_ref[...],
                             preferred_element_type=jnp.float32)
        h_scr[...] = h_new

        @pl.when(k == 0)
        def _gate():
            gate_ref[...] = (jnp.dot(context, wgate_ref[...],
                                     preferred_element_type=jnp.float32)
                             + wgateb_ref[...])

    return kernel


# ----------------------------------------------------------------------------
# Wrappers (plain-JAX glue: embedding lookups, padding)
# ----------------------------------------------------------------------------
def run_encoder(input_ids, params):
    emb = params["emb"]                       # [Vp, Hp] bf16
    Hp = params["Hp"]
    H3 = 3 * Hp
    B, T = input_ids.shape
    Bp = _round_up(B, 8)

    x = emb[input_ids]                        # [B, T, Hp] bf16 (embedding lookup glue)
    x_tb = jnp.transpose(x, (1, 0, 2))        # [T, B, Hp]
    x_tb = jnp.pad(x_tb, ((0, 0), (0, Bp - B), (0, 0)))
    x2d = x_tb.reshape(T * Bp, Hp)

    keep = (input_ids != PAD_IDX).astype(jnp.float32)                 # [B, T]
    keep = jnp.pad(keep, ((0, Bp - B), (0, 0)))                       # pad batch rows -> 0
    keep = jnp.transpose(keep)[:, :, None]                            # [T, Bp, 1]

    out, hid = pl.pallas_call(
        encoder_kernel,
        grid=(1,),
        out_shape=(jax.ShapeDtypeStruct((T, Bp, Hp), jnp.float32),
                   jax.ShapeDtypeStruct((Bp, Hp), jnp.float32)),
        in_specs=[
            pl.BlockSpec((T * Bp, Hp), lambda i: (0, 0)),
            pl.BlockSpec((T, Bp, 1), lambda i: (0, 0, 0)),
            pl.BlockSpec((2, Hp, H3), lambda i: (0, 0, 0)),
            pl.BlockSpec((2, Hp, H3), lambda i: (0, 0, 0)),
            pl.BlockSpec((2, 1, H3), lambda i: (0, 0, 0)),
            pl.BlockSpec((2, 1, H3), lambda i: (0, 0, 0)),
        ],
        out_specs=(
            pl.BlockSpec((T, Bp, Hp), lambda i: (0, 0, 0)),
            pl.BlockSpec((Bp, Hp), lambda i: (0, 0)),
        ),
        scratch_shapes=[pltpu.VMEM((T * Bp, H3), jnp.float32),   # hoisted gi (fwd)
                        pltpu.VMEM((T * Bp, H3), jnp.float32),   # hoisted gi (bwd)
                        pltpu.VMEM((T, Bp, Hp), jnp.float32)],   # fwd masked outputs
        compiler_params=pltpu.CompilerParams(
            dimension_semantics=("arbitrary",),
            vmem_limit_bytes=_VMEM_LIMIT),
    )(x2d, keep, params["enc_wih"], params["enc_whh"],
      params["enc_bih"], params["enc_bhh"])

    # encoder output stays in its native [T, Bp, Hp] layout (no glue transpose pass)
    return out, hid[:B]


def run_decoder(params, slot_arr, input_ids, attention_mask, enc_tbh, pooled, max_len):
    Hp, Vp, Gp = params["Hp"], params["Vp"], params["Gp"]
    V, G = params["V"], params["G"]
    H3 = 3 * Hp
    B, T = input_ids.shape
    Bp = enc_tbh.shape[1]
    J = slot_arr.shape[0]
    Jp = _round_up(J, 8)
    BJ = B * Jp

    # slot embedding: sum of (tied) embeddings over slot tokens  (glue)
    slot_e = jnp.sum(params["emb"][slot_arr].astype(jnp.float32), axis=1)   # [J, Hp]
    slot_e = jnp.pad(slot_e, ((0, Jp - J), (0, 0)))                         # [Jp, Hp]
    w0 = jnp.tile(slot_e, (B, 1))                                           # [BJ, Hp]
    h0 = jnp.repeat(pooled, Jp, axis=0)                                     # [BJ, Hp]

    maskf = (attention_mask != 1).astype(jnp.float32)[:, None, :]           # [B, 1, T]
    ids3 = input_ids.astype(jnp.int32)[:, :, None]                          # [B, T, 1]

    kernel = make_decoder_kernel(B, V)

    pfinal, gate = pl.pallas_call(
        kernel,
        grid=(max_len,),
        out_shape=(jax.ShapeDtypeStruct((max_len, BJ, Vp), jnp.float32),
                   jax.ShapeDtypeStruct((BJ, Gp), jnp.float32)),
        in_specs=[
            pl.BlockSpec((BJ, Hp), lambda k: (0, 0)),          # w0 (tiled slot emb)
            pl.BlockSpec((BJ, Hp), lambda k: (0, 0)),          # h0 (pooled, repeated)
            pl.BlockSpec((T, Bp, Hp), lambda k: (0, 0, 0)),    # encoder output (native)
            pl.BlockSpec((B, 1, T), lambda k: (0, 0, 0)),      # attention mask (!=1)
            pl.BlockSpec((B, T, 1), lambda k: (0, 0, 0)),      # input ids
            pl.BlockSpec((Hp, H3), lambda k: (0, 0)),          # dec W_ih (bf16)
            pl.BlockSpec((Hp, H3), lambda k: (0, 0)),          # dec W_hh (bf16)
            pl.BlockSpec((1, H3), lambda k: (0, 0)),           # dec b_ih
            pl.BlockSpec((1, H3), lambda k: (0, 0)),           # dec b_hh
            pl.BlockSpec((Vp, Hp), lambda k: (0, 0)),          # embedding (bf16)
            pl.BlockSpec((Hp, Vp), lambda k: (0, 0)),          # embedding^T (bf16)
            pl.BlockSpec((3, 1, Hp), lambda k: (0, 0, 0)),     # w_gen weight
            pl.BlockSpec((1, 1), lambda k: (0, 0)),            # w_gen bias
            pl.BlockSpec((Hp, Gp), lambda k: (0, 0)),          # w_gate weight
            pl.BlockSpec((1, Gp), lambda k: (0, 0)),           # w_gate bias
        ],
        out_specs=(
            pl.BlockSpec((max_len, BJ, Vp), lambda k: (0, 0, 0)),
            pl.BlockSpec((BJ, Gp), lambda k: (0, 0)),
        ),
        scratch_shapes=[pltpu.VMEM((BJ, Hp), jnp.float32),     # w carry
                        pltpu.VMEM((BJ, Hp), jnp.float32),     # hidden carry
                        pltpu.VMEM((B, T, Hp), jnp.float32),   # per-b enc
                        pltpu.VMEM((B, Hp, T), jnp.float32),   # per-b enc^T
                        pltpu.VMEM((B, T, Vp), jnp.float32)],  # lane-dense scatter
        compiler_params=pltpu.CompilerParams(
            dimension_semantics=("arbitrary",),
            vmem_limit_bytes=_VMEM_LIMIT),
    )(w0, h0, enc_tbh, maskf, ids3,
      params["dec_wih"], params["dec_whh"], params["dec_bih"], params["dec_bhh"],
      params["emb"], params["embT"], params["wgen_w"], params["wgen_b"],
      params["wgate_w"], params["wgate_b"])

    all_point = jnp.transpose(pfinal.reshape(max_len, B, Jp, Vp),
                              (1, 2, 0, 3))[:, :J, :, :V]          # [B, J, max_len, V]
    gates = gate.reshape(B, Jp, Gp)[:, :J, :G]                     # [B, J, G]
    return all_point, gates


def trade_forward(params, slot_arr, input_ids, token_type_ids, attention_mask, max_len):
    del token_type_ids  # unused by the reference forward
    enc_tbh, pooled = run_encoder(input_ids, params)
    return run_decoder(params, slot_arr, input_ids, attention_mask, enc_tbh, pooled, max_len)


# ----------------------------------------------------------------------------
# Deterministic synthetic parameters (fused-gate layout, zero-padded to tile sizes,
# matmul weights stored in bf16, biases / small projections in f32)
# ----------------------------------------------------------------------------
def init_params(key, vocab_size, hidden_size, n_gate):
    H = hidden_size
    Hp = _round_up(H, 128)
    Vp = _round_up(vocab_size, 128)
    Gp = _round_up(n_gate, 128)
    ks = jax.random.split(key, 16)
    s = 1.0 / (H ** 0.5)
    bf16 = jnp.bfloat16

    def fused_gru_w(k):
        raw = jax.random.uniform(k, (3, H, H), jnp.float32, -s, s)
        return jnp.concatenate([_pad2(raw[g], (Hp, Hp)) for g in range(3)], axis=1)

    def fused_gru_b(k):
        raw = jax.random.uniform(k, (3, 1, H), jnp.float32, -s, s)
        return jnp.concatenate([_pad2(raw[g], (1, Hp)) for g in range(3)], axis=1)

    emb = jax.random.normal(ks[0], (vocab_size, H), jnp.float32) * 0.1
    emb = emb.at[PAD_IDX].set(0.0)   # padding_idx row is zero
    emb_p = _pad2(emb, (Vp, Hp))

    wgen = jax.random.normal(ks[13], (3, 1, H), jnp.float32) * 0.1
    wgate = jax.random.normal(ks[14], (H, n_gate), jnp.float32) * 0.1

    return dict(
        V=vocab_size, H=H, G=n_gate, Hp=Hp, Vp=Vp, Gp=Gp,
        emb=emb_p.astype(bf16),                       # [Vp, Hp] (tied table)
        embT=jnp.transpose(emb_p).astype(bf16),       # [Hp, Vp] pre-transposed
        enc_wih=jnp.stack([fused_gru_w(ks[1]), fused_gru_w(ks[5])]).astype(bf16),
        enc_whh=jnp.stack([fused_gru_w(ks[2]), fused_gru_w(ks[6])]).astype(bf16),
        enc_bih=jnp.stack([fused_gru_b(ks[3]), fused_gru_b(ks[7])]),
        enc_bhh=jnp.stack([fused_gru_b(ks[4]), fused_gru_b(ks[8])]),
        dec_wih=fused_gru_w(ks[9]).astype(bf16),
        dec_whh=fused_gru_w(ks[10]).astype(bf16),
        dec_bih=fused_gru_b(ks[11]), dec_bhh=fused_gru_b(ks[12]),
        wgen_w=jnp.stack([_pad2(wgen[g], (1, Hp)) for g in range(3)]),
        wgen_b=jnp.zeros((1, 1), jnp.float32),
        wgate_w=_pad2(wgate, (Hp, Gp)),
        wgate_b=jnp.zeros((1, Gp), jnp.float32),
    )


if __name__ == "__main__":
    # Small config: vocab=64, hidden=32, proj_dim=None, n_gate=3, 1 encoder layer.
    V, H, G = 64, 32, 3
    B, T = 2, 8
    MAX_LEN = 4

    key = jax.random.PRNGKey(0)
    pkey, ikey = jax.random.split(key)
    params = init_params(pkey, V, H, G)

    # tokenized_slot_meta (padded to max slot-token length with pad_idx=0)
    tokenized_slot_meta = [[3, 4, 5], [6, 7, 0], [8, 0, 0], [9, 10, 11]]
    slot_arr = jnp.array(tokenized_slot_meta, dtype=jnp.int32)   # [J=4, 3]

    # Inputs: random token ids with trailing padding
    ids = jax.random.randint(ikey, (B, T), 1, V, dtype=jnp.int32)
    ids = ids.at[0, 6:].set(PAD_IDX)
    ids = ids.at[1, 5:].set(PAD_IDX)
    attention_mask = (ids != PAD_IDX).astype(jnp.int32)
    token_type_ids = jnp.zeros((B, T), jnp.int32)

    all_point_outputs, all_gate_outputs = trade_forward(
        params, slot_arr, ids, token_type_ids, attention_mask, MAX_LEN)

    jax.block_until_ready(all_point_outputs)
    jax.block_until_ready(all_gate_outputs)

    assert all_point_outputs.shape == (B, slot_arr.shape[0], MAX_LEN, V)
    assert all_gate_outputs.shape == (B, slot_arr.shape[0], G)
    assert bool(jnp.all(jnp.isfinite(all_point_outputs)))
    assert bool(jnp.all(jnp.isfinite(all_gate_outputs)))
    # pointer-generator mixture of two softmaxes must sum to 1 per (b, slot, step)
    sums = jnp.sum(all_point_outputs, axis=-1)
    assert bool(jnp.all(jnp.abs(sums - 1.0) < 1e-3))
    print("KERNEL_OK")
</pallas_src>

<mosaic_0001>
module attributes {stable_mosaic.version = 11 : i64} {
  func.func @encoder_kernel(%arg0: i32, %arg1: memref<64x128xbf16, #tpu.memory_space<vmem>>, %arg2: memref<8x8x1xf32, #tpu.memory_space<vmem>>, %arg3: memref<2x128x384xbf16, #tpu.memory_space<vmem>>, %arg4: memref<2x128x384xbf16, #tpu.memory_space<vmem>>, %arg5: memref<2x1x384xf32, #tpu.memory_space<vmem>>, %arg6: memref<2x1x384xf32, #tpu.memory_space<vmem>>, %arg7: memref<8x8x128xf32, #tpu.memory_space<vmem>>, %arg8: memref<8x128xf32, #tpu.memory_space<vmem>>, %arg9: memref<64x384xf32, #tpu.memory_space<vmem>>, %arg10: memref<64x384xf32, #tpu.memory_space<vmem>>, %arg11: memref<8x8x128xf32, #tpu.memory_space<vmem>>) attributes {dimension_semantics = [#tpu.dimension_semantics<arbitrary>], iteration_bounds = array<i64: 1>, scalar_prefetch = 0 : i64, scratch_operands = 3 : i64, tpu.core_type = #tpu.core_type<tc>, window_params = [{pipeline_mode = #tpu.pipeline_mode<synchronous>, transform_indices = @transform_0, window_bounds = array<i64: 64, 128>}, {pipeline_mode = #tpu.pipeline_mode<synchronous>, transform_indices = @transform_1, window_bounds = array<i64: 8, 8, 1>}, {pipeline_mode = #tpu.pipeline_mode<synchronous>, transform_indices = @transform_2, window_bounds = array<i64: 2, 128, 384>}, {pipeline_mode = #tpu.pipeline_mode<synchronous>, transform_indices = @transform_3, window_bounds = array<i64: 2, 128, 384>}, {pipeline_mode = #tpu.pipeline_mode<synchronous>, transform_indices = @transform_4, window_bounds = array<i64: 2, 1, 384>}, {pipeline_mode = #tpu.pipeline_mode<synchronous>, transform_indices = @transform_5, window_bounds = array<i64: 2, 1, 384>}, {pipeline_mode = #tpu.pipeline_mode<synchronous>, transform_indices = @transform_6, window_bounds = array<i64: 8, 8, 128>}, {pipeline_mode = #tpu.pipeline_mode<synchronous>, transform_indices = @transform_7, window_bounds = array<i64: 8, 128>}]} {
    %c0 = arith.constant 0 : index
    %c0_0 = arith.constant 0 : index
    %0 = vector.load %arg1[%c0, %c0_0] : memref<64x128xbf16, #tpu.memory_space<vmem>>, vector<64x128xbf16>
    %c0_1 = arith.constant 0 : index
    %c0_2 = arith.constant 0 : index
    %c0_3 = arith.constant 0 : index
    %1 = vector.load %arg3[%c0_1, %c0_2, %c0_3] : memref<2x128x384xbf16, #tpu.memory_space<vmem>>, vector<1x128x384xbf16>
    %2 = vector.shape_cast %1 : vector<1x128x384xbf16> to vector<128x384xbf16>
    %cst = arith.constant dense<0.000000e+00> : vector<64x384xf32>
    %3 = tpu.matmul %0, %2, %cst {dimension_numbers = #tpu.dot_dimension_numbers<[1], [0], [0], [1], [0, 0, 1, 1], [], []>} : vector<64x128xbf16>, vector<128x384xbf16>, vector<64x384xf32> -> vector<64x384xf32>
    %c0_4 = arith.constant 0 : index
    %c0_5 = arith.constant 0 : index
    %c0_6 = arith.constant 0 : index
    %4 = vector.load %arg5[%c0_4, %c0_5, %c0_6] : memref<2x1x384xf32, #tpu.memory_space<vmem>>, vector<1x1x384xf32>
    %5 = vector.shape_cast %4 : vector<1x1x384xf32> to vector<1x384xf32>
    %6 = vector.broadcast %5 : vector<1x384xf32> to vector<64x384xf32>
    %7 = arith.addf %3, %6 : vector<64x384xf32>
    %c0_7 = arith.constant 0 : index
    %c0_8 = arith.constant 0 : index
    %8 = vector.load %arg9[%c0_7, %c0_8] : memref<64x384xf32, #tpu.memory_space<vmem>>, vector<64x384xf32>
    tpu.vector_store %arg9[%c0_7, %c0_8], %7 {strides = array<i32>} : memref<64x384xf32, #tpu.memory_space<vmem>>, vector<64x384xf32>,
    %c1 = arith.constant 1 : index
    %c0_9 = arith.constant 0 : index
    %c0_10 = arith.constant 0 : index
    %9 = vector.load %arg3[%c1, %c0_9, %c0_10] : memref<2x128x384xbf16, #tpu.memory_space<vmem>>, vector<1x128x384xbf16>
    %10 = vector.shape_cast %9 : vector<1x128x384xbf16> to vector<128x384xbf16>
    %cst_11 = arith.constant dense<0.000000e+00> : vector<64x384xf32>
    %11 = tpu.matmul %0, %10, %cst_11 {dimension_numbers = #tpu.dot_dimension_numbers<[1], [0], [0], [1], [0, 0, 1, 1], [], []>} : vector<64x128xbf16>, vector<128x384xbf16>, vector<64x384xf32> -> vector<64x384xf32>
    %c1_12 = arith.constant 1 : index
    %c0_13 = arith.constant 0 : index
    %c0_14 = arith.constant 0 : index
    %12 = vector.load %arg5[%c1_12, %c0_13, %c0_14] : memref<2x1x384xf32, #tpu.memory_space<vmem>>, vector<1x1x384xf32>
    %13 = vector.shape_cast %12 : vector<1x1x384xf32> to vector<1x384xf32>
    %14 = vector.broadcast %13 : vector<1x384xf32> to vector<64x384xf32>
    %15 = arith.addf %11, %14 : vector<64x384xf32>
    %c0_15 = arith.constant 0 : index
    %c0_16 = arith.constant 0 : index
    %16 = vector.load %arg10[%c0_15, %c0_16] : memref<64x384xf32, #tpu.memory_space<vmem>>, vector<64x384xf32>
    tpu.vector_store %arg10[%c0_15, %c0_16], %15 {strides = array<i32>} : memref<64x384xf32, #tpu.memory_space<vmem>>, vector<64x384xf32>,
    %cst_17 = arith.constant 0.000000e+00 : f32
    %17 = vector.broadcast %cst_17 : f32 to vector<8x128xf32>
    %cst_18 = arith.constant 0.000000e+00 : f32
    %18 = vector.broadcast %cst_18 : f32 to vector<8x128xf32>
    %c0_19 = arith.constant 0 : index
    %c0_20 = arith.constant 0 : index
    %19 = vector.load %arg9[%c0_19, %c0_20] : memref<64x384xf32, #tpu.memory_space<vmem>>, vector<8x384xf32>
    %c56 = arith.constant 56 : index
    %c0_21 = arith.constant 0 : index
    %20 = vector.load %arg10[%c56, %c0_21] : memref<64x384xf32, #tpu.memory_space<vmem>>, vector<8x384xf32>
    %21 = arith.truncf %17 : vector<8x128xf32> to vector<8x128xbf16>
    %c0_22 = arith.constant 0 : index
    %c0_23 = arith.constant 0 : index
    %c0_24 = arith.constant 0 : index
    %22 = vector.load %arg4[%c0_22, %c0_23, %c0_24] : memref<2x128x384xbf16, #tpu.memory_space<vmem>>, vector<1x128x384xbf16>
    %23 = vector.shape_cast %22 : vector<1x128x384xbf16> to vector<128x384xbf16>
    %cst_25 = arith.constant dense<0.000000e+00> : vector<8x384xf32>
    %24 = tpu.matmul %21, %23, %cst_25 {dimension_numbers = #tpu.dot_dimension_numbers<[1], [0], [0], [1], [0, 0, 1, 1], [], []>} : vector<8x128xbf16>, vector<128x384xbf16>, vector<8x384xf32> -> vector<8x384xf32>
    %c0_26 = arith.constant 0 : index
    %c0_27 = arith.constant 0 : index
    %c0_28 = arith.constant 0 : index
    %25 = vector.load %arg6[%c0_26, %c0_27, %c0_28] : memref<2x1x384xf32, #tpu.memory_space<vmem>>, vector<1x1x384xf32>
    %26 = vector.shape_cast %25 : vector<1x1x384xf32> to vector<1x384xf32>
    %27 = vector.broadcast %26 : vector<1x384xf32> to vector<8x384xf32>
    %28 = arith.addf %24, %27 : vector<8x384xf32>
    %29 = arith.truncf %18 : vector<8x128xf32> to vector<8x128xbf16>
    %c1_29 = arith.constant 1 : index
    %c0_30 = arith.constant 0 : index
    %c0_31 = arith.constant 0 : index
    %30 = vector.load %arg4[%c1_29, %c0_30, %c0_31] : memref<2x128x384xbf16, #tpu.memory_space<vmem>>, vector<1x128x384xbf16>
    %31 = vector.shape_cast %30 : vector<1x128x384xbf16> to vector<128x384xbf16>
    %cst_32 = arith.constant dense<0.000000e+00> : vector<8x384xf32>
    %32 = tpu.matmul %29, %31, %cst_32 {dimension_numbers = #tpu.dot_dimension_numbers<[1], [0], [0], [1], [0, 0, 1, 1], [], []>} : vector<8x128xbf16>, vector<128x384xbf16>, vector<8x384xf32> -> vector<8x384xf32>
    %c1_33 = arith.constant 1 : index
    %c0_34 = arith.constant 0 : index
    %c0_35 = arith.constant 0 : index
    %33 = vector.load %arg6[%c1_33, %c0_34, %c0_35] : memref<2x1x384xf32, #tpu.memory_space<vmem>>, vector<1x1x384xf32>
    %34 = vector.shape_cast %33 : vector<1x1x384xf32> to vector<1x384xf32>
    %35 = vector.broadcast %34 : vector<1x384xf32> to vector<8x384xf32>
    %36 = arith.addf %32, %35 : vector<8x384xf32>
    %37 = vector.extract_strided_slice %19 {offsets = [0, 0], sizes = [8, 128], strides = [1, 1]} : vector<8x384xf32> to vector<8x128xf32>
    %38 = vector.extract_strided_slice %28 {offsets = [0, 0], sizes = [8, 128], strides = [1, 1]} : vector<8x384xf32> to vector<8x128xf32>
    %39 = arith.addf %37, %38 : vector<8x128xf32>
    %40 = arith.negf %39 : vector<8x128xf32>
    %41 = math.exp %40 : vector<8x128xf32>
    %cst_36 = arith.constant 1.000000e+00 : f32
    %42 = vector.broadcast %cst_36 : f32 to vector<8x128xf32>
    %43 = arith.addf %42, %41 : vector<8x128xf32>
    %44 = arith.divf %42, %43 : vector<8x128xf32>
    %45 = vector.extract_strided_slice %19 {offsets = [0, 128], sizes = [8, 128], strides = [1, 1]} : vector<8x384xf32> to vector<8x128xf32>
    %46 = vector.extract_strided_slice %28 {offsets = [0, 128], sizes = [8, 128], strides = [1, 1]} : vector<8x384xf32> to vector<8x128xf32>
    %47 = arith.addf %45, %46 : vector<8x128xf32>
    %48 = arith.negf %47 : vector<8x128xf32>
    %49 = math.exp %48 : vector<8x128xf32>
    %cst_37 = arith.constant 1.000000e+00 : f32
    %50 = vector.broadcast %cst_37 : f32 to vector<8x128xf32>
    %51 = arith.addf %50, %49 : vector<8x128xf32>
    %52 = arith.divf %50, %51 : vector<8x128xf32>
    %53 = vector.extract_strided_slice %19 {offsets = [0, 256], sizes = [8, 128], strides = [1, 1]} : vector<8x384xf32> to vector<8x128xf32>
    %54 = vector.extract_strided_slice %28 {offsets = [0, 256], sizes = [8, 128], strides = [1, 1]} : vector<8x384xf32> to vector<8x128xf32>
    %55 = arith.mulf %44, %54 : vector<8x128xf32>
    %56 = arith.addf %53, %55 : vector<8x128xf32>
    %57 = math.tanh %56 : vector<8x128xf32>
    %cst_38 = arith.constant 1.000000e+00 : f32
    %58 = vector.broadcast %cst_38 : f32 to vector<8x128xf32>
    %59 = arith.subf %58, %52 : vector<8x128xf32>
    %60 = arith.mulf %59, %57 : vector<8x128xf32>
    %61 = arith.mulf %52, %17 : vector<8x128xf32>
    %62 = arith.addf %60, %61 : vector<8x128xf32>
    %63 = vector.extract_strided_slice %20 {offsets = [0, 0], sizes = [8, 128], strides = [1, 1]} : vector<8x384xf32> to vector<8x128xf32>
    %64 = vector.extract_strided_slice %36 {offsets = [0, 0], sizes = [8, 128], strides = [1, 1]} : vector<8x384xf32> to vector<8x128xf32>
    %65 = arith.addf %63, %64 : vector<8x128xf32>
    %66 = arith.negf %65 : vector<8x128xf32>
    %67 = math.exp %66 : vector<8x128xf32>
    %cst_39 = arith.constant 1.000000e+00 : f32
    %68 = vector.broadcast %cst_39 : f32 to vector<8x128xf32>
    %69 = arith.addf %68, %67 : vector<8x128xf32>
    %70 = arith.divf %68, %69 : vector<8x128xf32>
    %71 = vector.extract_strided_slice %20 {offsets = [0, 128], sizes = [8, 128], strides = [1, 1]} : vector<8x384xf32> to vector<8x128xf32>
    %72 = vector.extract_strided_slice %36 {offsets = [0, 128], sizes = [8, 128], strides = [1, 1]} : vector<8x384xf32> to vector<8x128xf32>
    %73 = arith.addf %71, %72 : vector<8x128xf32>
    %74 = arith.negf %73 : vector<8x128xf32>
    %75 = math.exp %74 : vector<8x128xf32>
    %cst_40 = arith.constant 1.000000e+00 : f32
    %76 = vector.broadcast %cst_40 : f32 to vector<8x128xf32>
    %77 = arith.addf %76, %75 : vector<8x128xf32>
    %78 = arith.divf %76, %77 : vector<8x128xf32>
    %79 = vector.extract_strided_slice %20 {offsets = [0, 256], sizes = [8, 128], strides = [1, 1]} : vector<8x384xf32> to vector<8x128xf32>
    %80 = vector.extract_strided_slice %36 {offsets = [0, 256], sizes = [8, 128], strides = [1, 1]} : vector<8x384xf32> to vector<8x128xf32>
    %81 = arith.mulf %70, %80 : vector<8x128xf32>
    %82 = arith.addf %79, %81 : vector<8x128xf32>
    %83 = math.tanh %82 : vector<8x128xf32>
    %cst_41 = arith.constant 1.000000e+00 : f32
    %84 = vector.broadcast %cst_41 : f32 to vector<8x128xf32>
    %85 = arith.subf %84, %78 : vector<8x128xf32>
    %86 = arith.mulf %85, %83 : vector<8x128xf32>
    %87 = arith.mulf %78, %18 : vector<8x128xf32>
    %88 = arith.addf %86, %87 : vector<8x128xf32>
    %c0_42 = arith.constant 0 : index
    %c0_43 = arith.constant 0 : index
    %c0_44 = arith.constant 0 : index
    %89 = vector.load %arg2[%c0_42, %c0_43, %c0_44] : memref<8x8x1xf32, #tpu.memory_space<vmem>>, vector<1x8x1xf32>
    %90 = vector.shape_cast %89 : vector<1x8x1xf32> to vector<8x1xf32>
    %91 = vector.broadcast %90 : vector<8x1xf32> to vector<8x128xf32>
    %92 = arith.mulf %62, %91 : vector<8x128xf32>
    %c0_45 = arith.constant 0 : index
    %c0_46 = arith.constant 0 : index
    %c0_47 = arith.constant 0 : index
    %93 = vector.load %arg11[%c0_45, %c0_46, %c0_47] : memref<8x8x128xf32, #tpu.memory_space<vmem>>, vector<1x8x128xf32>
    %94 = vector.shape_cast %93 : vector<1x8x128xf32> to vector<8x128xf32>
    %95 = vector.shape_cast %92 : vector<8x128xf32> to vector<1x8x128xf32>
    tpu.vector_store %arg11[%c0_45, %c0_46, %c0_47], %95 {strides = array<i32>} : memref<8x8x128xf32, #tpu.memory_space<vmem>>, vector<1x8x128xf32>,
    %c7 = arith.constant 7 : index
    %c0_48 = arith.constant 0 : index
    %c0_49 = arith.constant 0 : index
    %96 = vector.load %arg2[%c7, %c0_48, %c0_49] : memref<8x8x1xf32, #tpu.memory_space<vmem>>, vector<1x8x1xf32>
    %97 = vector.shape_cast %96 : vector<1x8x1xf32> to vector<8x1xf32>
    %98 = vector.broadcast %97 : vector<8x1xf32> to vector<8x128xf32>
    %99 = arith.mulf %88, %98 : vector<8x128xf32>
    %c7_50 = arith.constant 7 : index
    %c0_51 = arith.constant 0 : index
    %c0_52 = arith.constant 0 : index
    %100 = vector.load %arg7[%c7_50, %c0_51, %c0_52] : memref<8x8x128xf32, #tpu.memory_space<vmem>>, vector<1x8x128xf32>
    %101 = vector.shape_cast %100 : vector<1x8x128xf32> to vector<8x128xf32>
    %102 = vector.shape_cast %99 : vector<8x128xf32> to vector<1x8x128xf32>
    tpu.vector_store %arg7[%c7_50, %c0_51, %c0_52], %102 {strides = array<i32>} : memref<8x8x128xf32, #tpu.memory_space<vmem>>, vector<1x8x128xf32>,
    %c8 = arith.constant 8 : index
    %c0_53 = arith.constant 0 : index
    %103 = vector.load %arg9[%c8, %c0_53] : memref<64x384xf32, #tpu.memory_space<vmem>>, vector<8x384xf32>
    %c48 = arith.constant 48 : index
    %c0_54 = arith.constant 0 : index
    %104 = vector.load %arg10[%c48, %c0_54] : memref<64x384xf32, #tpu.memory_space<vmem>>, vector<8x384xf32>
    %105 = arith.truncf %62 : vector<8x128xf32> to vector<8x128xbf16>
    %c0_55 = arith.constant 0 : index
    %c0_56 = arith.constant 0 : index
    %c0_57 = arith.constant 0 : index
    %106 = vector.load %arg4[%c0_55, %c0_56, %c0_57] : memref<2x128x384xbf16, #tpu.memory_space<vmem>>, vector<1x128x384xbf16>
    %107 = vector.shape_cast %106 : vector<1x128x384xbf16> to vector<128x384xbf16>
    %cst_58 = arith.constant dense<0.000000e+00> : vector<8x384xf32>
    %108 = tpu.matmul %105, %107, %cst_58 {dimension_numbers = #tpu.dot_dimension_numbers<[1], [0], [0], [1], [0, 0, 1, 1], [], []>} : vector<8x128xbf16>, vector<128x384xbf16>, vector<8x384xf32> -> vector<8x384xf32>
    %c0_59 = arith.constant 0 : index
    %c0_60 = arith.constant 0 : index
    %c0_61 = arith.constant 0 : index
    %109 = vector.load %arg6[%c0_59, %c0_60, %c0_61] : memref<2x1x384xf32, #tpu.memory_space<vmem>>, vector<1x1x384xf32>
    %110 = vector.shape_cast %109 : vector<1x1x384xf32> to vector<1x384xf32>
    %111 = vector.broadcast %110 : vector<1x384xf32> to vector<8x384xf32>
    %112 = arith.addf %108, %111 : vector<8x384xf32>
    %113 = arith.truncf %88 : vector<8x128xf32> to vector<8x128xbf16>
    %c1_62 = arith.constant 1 : index
    %c0_63 = arith.constant 0 : index
    %c0_64 = arith.constant 0 : index
    %114 = vector.load %arg4[%c1_62, %c0_63, %c0_64] : memref<2x128x384xbf16, #tpu.memory_space<vmem>>, vector<1x128x384xbf16>
    %115 = vector.shape_cast %114 : vector<1x128x384xbf16> to vector<128x384xbf16>
    %cst_65 = arith.constant dense<0.000000e+00> : vector<8x384xf32>
    %116 = tpu.matmul %113, %115, %cst_65 {dimension_numbers = #tpu.dot_dimension_numbers<[1], [0], [0], [1], [0, 0, 1, 1], [], []>} : vector<8x128xbf16>, vector<128x384xbf16>, vector<8x384xf32> -> vector<8x384xf32>
    %c1_66 = arith.constant 1 : index
    %c0_67 = arith.constant 0 : index
    %c0_68 = arith.constant 0 : index
    %117 = vector.load %arg6[%c1_66, %c0_67, %c0_68] : memref<2x1x384xf32, #tpu.memory_space<vmem>>, vector<1x1x384xf32>
    %118 = vector.shape_cast %117 : vector<1x1x384xf32> to vector<1x384xf32>
    %119 = vector.broadcast %118 : vector<1x384xf32> to vector<8x384xf32>
    %120 = arith.addf %116, %119 : vector<8x384xf32>
    %121 = vector.extract_strided_slice %103 {offsets = [0, 0], sizes = [8, 128], strides = [1, 1]} : vector<8x384xf32> to vector<8x128xf32>
    %122 = vector.extract_strided_slice %112 {offsets = [0, 0], sizes = [8, 128], strides = [1, 1]} : vector<8x384xf32> to vector<8x128xf32>
    %123 = arith.addf %121, %122 : vector<8x128xf32>
    %124 = arith.negf %123 : vector<8x128xf32>
    %125 = math.exp %124 : vector<8x128xf32>
    %cst_69 = arith.constant 1.000000e+00 : f32
    %126 = vector.broadcast %cst_69 : f32 to vector<8x128xf32>
    %127 = arith.addf %126, %125 : vector<8x128xf32>
    %128 = arith.divf %126, %127 : vector<8x128xf32>
    %129 = vector.extract_strided_slice %103 {offsets = [0, 128], sizes = [8, 128], strides = [1, 1]} : vector<8x384xf32> to vector<8x128xf32>
    %130 = vector.extract_strided_slice %112 {offsets = [0, 128], sizes = [8, 128], strides = [1, 1]} : vector<8x384xf32> to vector<8x128xf32>
    %131 = arith.addf %129, %130 : vector<8x128xf32>
    %132 = arith.negf %131 : vector<8x128xf32>
    %133 = math.exp %132 : vector<8x128xf32>
    %cst_70 = arith.constant 1.000000e+00 : f32
    %134 = vector.broadcast %cst_70 : f32 to vector<8x128xf32>
    %135 = arith.addf %134, %133 : vector<8x128xf32>
    %136 = arith.divf %134, %135 : vector<8x128xf32>
    %137 = vector.extract_strided_slice %103 {offsets = [0, 256], sizes = [8, 128], strides = [1, 1]} : vector<8x384xf32> to vector<8x128xf32>
    %138 = vector.extract_strided_slice %112 {offsets = [0, 256], sizes = [8, 128], strides = [1, 1]} : vector<8x384xf32> to vector<8x128xf32>
    %139 = arith.mulf %128, %138 : vector<8x128xf32>
    %140 = arith.addf %137, %139 : vector<8x128xf32>
    %141 = math.tanh %140 : vector<8x128xf32>
    %cst_71 = arith.constant 1.000000e+00 : f32
    %142 = vector.broadcast %cst_71 : f32 to vector<8x128xf32>
    %143 = arith.subf %142, %136 : vector<8x128xf32>
    %144 = arith.mulf %143, %141 : vector<8x128xf32>
    %145 = arith.mulf %136, %62 : vector<8x128xf32>
    %146 = arith.addf %144, %145 : vector<8x128xf32>
    %147 = vector.extract_strided_slice %104 {offsets = [0, 0], sizes = [8, 128], strides = [1, 1]} : vector<8x384xf32> to vector<8x128xf32>
    %148 = vector.extract_strided_slice %120 {offsets = [0, 0], sizes = [8, 128], strides = [1, 1]} : vector<8x384xf32> to vector<8x128xf32>
    %149 = arith.addf %147, %148 : vector<8x128xf32>
    %150 = arith.negf %149 : vector<8x128xf32>
    %151 = math.exp %150 : vector<8x128xf32>
    %cst_72 = arith.constant 1.000000e+00 : f32
    %152 = vector.broadcast %cst_72 : f32 to vector<8x128xf32>
    %153 = arith.addf %152, %151 : vector<8x128xf32>
    %154 = arith.divf %152, %153 : vector<8x128xf32>
    %155 = vector.extract_strided_slice %104 {offsets = [0, 128], sizes = [8, 128], strides = [1, 1]} : vector<8x384xf32> to vector<8x128xf32>
    %156 = vector.extract_strided_slice %120 {offsets = [0, 128], sizes = [8, 128], strides = [1, 1]} : vector<8x384xf32> to vector<8x128xf32>
    %157 = arith.addf %155, %156 : vector<8x128xf32>
    %158 = arith.negf %157 : vector<8x128xf32>
    %159 = math.exp %158 : vector<8x128xf32>
    %cst_73 = arith.constant 1.000000e+00 : f32
    %160 = vector.broadcast %cst_73 : f32 to vector<8x128xf32>
    %161 = arith.addf %160, %159 : vector<8x128xf32>
    %162 = arith.divf %160, %161 : vector<8x128xf32>
    %163 = vector.extract_strided_slice %104 {offsets = [0, 256], sizes = [8, 128], strides = [1, 1]} : vector<8x384xf32> to vector<8x128xf32>
    %164 = vector.extract_strided_slice %120 {offsets = [0, 256], sizes = [8, 128], strides = [1, 1]} : vector<8x384xf32> to vector<8x128xf32>
    %165 = arith.mulf %154, %164 : vector<8x128xf32>
    %166 = arith.addf %163, %165 : vector<8x128xf32>
    %167 = math.tanh %166 : vector<8x128xf32>
    %cst_74 = arith.constant 1.000000e+00 : f32
    %168 = vector.broadcast %cst_74 : f32 to vector<8x128xf32>
    %169 = arith.subf %168, %162 : vector<8x128xf32>
    %170 = arith.mulf %169, %167 : vector<8x128xf32>
    %171 = arith.mulf %162, %88 : vector<8x128xf32>
    %172 = arith.addf %170, %171 : vector<8x128xf32>
    %c1_75 = arith.constant 1 : index
    %c0_76 = arith.constant 0 : index
    %c0_77 = arith.constant 0 : index
    %173 = vector.load %arg2[%c1_75, %c0_76, %c0_77] : memref<8x8x1xf32, #tpu.memory_space<vmem>>, vector<1x8x1xf32>
    %174 = vector.shape_cast %173 : vector<1x8x1xf32> to vector<8x1xf32>
    %175 = vector.broadcast %174 : vector<8x1xf32> to vector<8x128xf32>
    %176 = arith.mulf %146, %175 : vector<8x128xf32>
    %c1_78 = arith.constant 1 : index
    %c0_79 = arith.constant 0 : index
    %c0_80 = arith.constant 0 : index
    %177 = vector.load %arg11[%c1_78, %c0_79, %c0_80] : memref<8x8x128xf32, #tpu.memory_space<vmem>>, vector<1x8x128xf32>
    %178 = vector.shape_cast %177 : vector<1x8x128xf32> to vector<8x128xf32>
    %179 = vector.shape_cast %176 : vector<8x128xf32> to vector<1x8x128xf32>
    tpu.vector_store %arg11[%c1_78, %c0_79, %c0_80], %179 {strides = array<i32>} : memref<8x8x128xf32, #tpu.memory_space<vmem>>, vector<1x8x128xf32>,
    %c6 = arith.constant 6 : index
    %c0_81 = arith.constant 0 : index
    %c0_82 = arith.constant 0 : index
    %180 = vector.load %arg2[%c6, %c0_81, %c0_82] : memref<8x8x1xf32, #tpu.memory_space<vmem>>, vector<1x8x1xf32>
    %181 = vector.shape_cast %180 : vector<1x8x1xf32> to vector<8x1xf32>
    %182 = vector.broadcast %181 : vector<8x1xf32> to vector<8x128xf32>
    %183 = arith.mulf %172, %182 : vector<8x128xf32>
    %c6_83 = arith.constant 6 : index
    %c0_84 = arith.constant 0 : index
    %c0_85 = arith.constant 0 : index
    %184 = vector.load %arg7[%c6_83, %c0_84, %c0_85] : memref<8x8x128xf32, #tpu.memory_space<vmem>>, vector<1x8x128xf32>
    %185 = vector.shape_cast %184 : vector<1x8x128xf32> to vector<8x128xf32>
    %186 = vector.shape_cast %183 : vector<8x128xf32> to vector<1x8x128xf32>
    tpu.vector_store %arg7[%c6_83, %c0_84, %c0_85], %186 {strides = array<i32>} : memref<8x8x128xf32, #tpu.memory_space<vmem>>, vector<1x8x128xf32>,
    %c16 = arith.constant 16 : index
    %c0_86 = arith.constant 0 : index
    %187 = vector.load %arg9[%c16, %c0_86] : memref<64x384xf32, #tpu.memory_space<vmem>>, vector<8x384xf32>
    %c40 = arith.constant 40 : index
    %c0_87 = arith.constant 0 : index
    %188 = vector.load %arg10[%c40, %c0_87] : memref<64x384xf32, #tpu.memory_space<vmem>>, vector<8x384xf32>
    %189 = arith.truncf %146 : vector<8x128xf32> to vector<8x128xbf16>
    %c0_88 = arith.constant 0 : index
    %c0_89 = arith.constant 0 : index
    %c0_90 = arith.constant 0 : index
    %190 = vector.load %arg4[%c0_88, %c0_89, %c0_90] : memref<2x128x384xbf16, #tpu.memory_space<vmem>>, vector<1x128x384xbf16>
    %191 = vector.shape_cast %190 : vector<1x128x384xbf16> to vector<128x384xbf16>
    %cst_91 = arith.constant dense<0.000000e+00> : vector<8x384xf32>
    %192 = tpu.matmul %189, %191, %cst_91 {dimension_numbers = #tpu.dot_dimension_numbers<[1], [0], [0], [1], [0, 0, 1, 1], [], []>} : vector<8x128xbf16>, vector<128x384xbf16>, vector<8x384xf32> -> vector<8x384xf32>
    %c0_92 = arith.constant 0 : index
    %c0_93 = arith.constant 0 : index
    %c0_94 = arith.constant 0 : index
    %193 = vector.load %arg6[%c0_92, %c0_93, %c0_94] : memref<2x1x384xf32, #tpu.memory_space<vmem>>, vector<1x1x384xf32>
    %194 = vector.shape_cast %193 : vector<1x1x384xf32> to vector<1x384xf32>
    %195 = vector.broadcast %194 : vector<1x384xf32> to vector<8x384xf32>
    %196 = arith.addf %192, %195 : vector<8x384xf32>
    %197 = arith.truncf %172 : vector<8x128xf32> to vector<8x128xbf16>
    %c1_95 = arith.constant 1 : index
    %c0_96 = arith.constant 0 : index
    %c0_97 = arith.constant 0 : index
    %198 = vector.load %arg4[%c1_95, %c0_96, %c0_97] : memref<2x128x384xbf16, #tpu.memory_space<vmem>>, vector<1x128x384xbf16>
    %199 = vector.shape_cast %198 : vector<1x128x384xbf16> to vector<128x384xbf16>
    %cst_98 = arith.constant dense<0.000000e+00> : vector<8x384xf32>
    %200 = tpu.matmul %197, %199, %cst_98 {dimension_numbers = #tpu.dot_dimension_numbers<[1], [0], [0], [1], [0, 0, 1, 1], [], []>} : vector<8x128xbf16>, vector<128x384xbf16>, vector<8x384xf32> -> vector<8x384xf32>
    %c1_99 = arith.constant 1 : index
    %c0_100 = arith.constant 0 : index
    %c0_101 = arith.constant 0 : index
    %201 = vector.load %arg6[%c1_99, %c0_100, %c0_101] : memref<2x1x384xf32, #tpu.memory_space<vmem>>, vector<1x1x384xf32>
    %202 = vector.shape_cast %201 : vector<1x1x384xf32> to vector<1x384xf32>
    %203 = vector.broadcast %202 : vector<1x384xf32> to vector<8x384xf32>
    %204 = arith.addf %200, %203 : vector<8x384xf32>
    %205 = vector.extract_strided_slice %187 {offsets = [0, 0], sizes = [8, 128], strides = [1, 1]} : vector<8x384xf32> to vector<8x128xf32>
    %206 = vector.extract_strided_slice %196 {offsets = [0, 0], sizes = [8, 128], strides = [1, 1]} : vector<8x384xf32> to vector<8x128xf32>
    %207 = arith.addf %205, %206 : vector<8x128xf32>
    %208 = arith.negf %207 : vector<8x128xf32>
    %209 = math.exp %208 : vector<8x128xf32>
    %cst_102 = arith.constant 1.000000e+00 : f32
    %210 = vector.broadcast %cst_102 : f32 to vector<8x128xf32>
    %211 = arith.addf %210, %209 : vector<8x128xf32>
    %212 = arith.divf %210, %211 : vector<8x128xf32>
    %213 = vector.extract_strided_slice %187 {offsets = [0, 128], sizes = [8, 128], strides = [1, 1]} : vector<8x384xf32> to vector<8x128xf32>
    %214 = vector.extract_strided_slice %196 {offsets = [0, 128], sizes = [8, 128], strides = [1, 1]} : vector<8x384xf32> to vector<8x128xf32>
    %215 = arith.addf %213, %214 : vector<8x128xf32>
    %216 = arith.negf %215 : vector<8x128xf32>
    %217 = math.exp %216 : vector<8x128xf32>
    %cst_103 = arith.constant 1.000000e+00 : f32
    %218 = vector.broadcast %cst_103 : f32 to vector<8x128xf32>
    %219 = arith.addf %218, %217 : vector<8x128xf32>
    %220 = arith.divf %218, %219 : vector<8x128xf32>
    %221 = vector.extract_strided_slice %187 {offsets = [0, 256], sizes = [8, 128], strides = [1, 1]} : vector<8x384xf32> to vector<8x128xf32>
    %222 = vector.extract_strided_slice %196 {offsets = [0, 256], sizes = [8, 128], strides = [1, 1]} : vector<8x384xf32> to vector<8x128xf32>
    %223 = arith.mulf %212, %222 : vector<8x128xf32>
    %224 = arith.addf %221, %223 : vector<8x128xf32>
    %225 = math.tanh %224 : vector<8x128xf32>
    %cst_104 = arith.constant 1.000000e+00 : f32
    %226 = vector.broadcast %cst_104 : f32 to vector<8x128xf32>
    %227 = arith.subf %226, %220 : vector<8x128xf32>
    %228 = arith.mulf %227, %225 : vector<8x128xf32>
    %229 = arith.mulf %220, %146 : vector<8x128xf32>
    %230 = arith.addf %228, %229 : vector<8x128xf32>
    %231 = vector.extract_strided_slice %188 {offsets = [0, 0], sizes = [8, 128], strides = [1, 1]} : vector<8x384xf32> to vector<8x128xf32>
    %232 = vector.extract_strided_slice %204 {offsets = [0, 0], sizes = [8, 128], strides = [1, 1]} : vector<8x384xf32> to vector<8x128xf32>
    %233 = arith.addf %231, %232 : vector<8x128xf32>
    %234 = arith.negf %233 : vector<8x128xf32>
    %235 = math.exp %234 : vector<8x128xf32>
    %cst_105 = arith.constant 1.000000e+00 : f32
    %236 = vector.broadcast %cst_105 : f32 to vector<8x128xf32>
    %237 = arith.addf %236, %235 : vector<8x128xf32>
    %238 = arith.divf %236, %237 : vector<8x128xf32>
    %239 = vector.extract_strided_slice %188 {offsets = [0, 128], sizes = [8, 128], strides = [1, 1]} : vector<8x384xf32> to vector<8x128xf32>
    %240 = vector.extract_strided_slice %204 {offsets = [0, 128], sizes = [8, 128], strides = [1, 1]} : vector<8x384xf32> to vector<8x128xf32>
    %241 = arith.addf %239, %240 : vector<8x128xf32>
    %242 = arith.negf %241 : vector<8x128xf32>
    %243 = math.exp %242 : vector<8x128xf32>
    %cst_106 = arith.constant 1.000000e+00 : f32
    %244 = vector.broadcast %cst_106 : f32 to vector<8x128xf32>
    %245 = arith.addf %244, %243 : vector<8x128xf32>
    %246 = arith.divf %244, %245 : vector<8x128xf32>
    %247 = vector.extract_strided_slice %188 {offsets = [0, 256], sizes = [8, 128], strides = [1, 1]} : vector<8x384xf32> to vector<8x128xf32>
    %248 = vector.extract_strided_slice %204 {offsets = [0, 256], sizes = [8, 128], strides = [1, 1]} : vector<8x384xf32> to vector<8x128xf32>
    %249 = arith.mulf %238, %248 : vector<8x128xf32>
    %250 = arith.addf %247, %249 : vector<8x128xf32>
    %251 = math.tanh %250 : vector<8x128xf32>
    %cst_107 = arith.constant 1.000000e+00 : f32
    %252 = vector.broadcast %cst_107 : f32 to vector<8x128xf32>
    %253 = arith.subf %252, %246 : vector<8x128xf32>
    %254 = arith.mulf %253, %251 : vector<8x128xf32>
    %255 = arith.mulf %246, %172 : vector<8x128xf32>
    %256 = arith.addf %254, %255 : vector<8x128xf32>
    %c2 = arith.constant 2 : index
    %c0_108 = arith.constant 0 : index
    %c0_109 = arith.constant 0 : index
    %257 = vector.load %arg2[%c2, %c0_108, %c0_109] : memref<8x8x1xf32, #tpu.memory_space<vmem>>, vector<1x8x1xf32>
    %258 = vector.shape_cast %257 : vector<1x8x1xf32> to vector<8x1xf32>
    %259 = vector.broadcast %258 : vector<8x1xf32> to vector<8x128xf32>
    %260 = arith.mulf %230, %259 : vector<8x128xf32>
    %c2_110 = arith.constant 2 : index
    %c0_111 = arith.constant 0 : index
    %c0_112 = arith.constant 0 : index
    %261 = vector.load %arg11[%c2_110, %c0_111, %c0_112] : memref<8x8x128xf32, #tpu.memory_space<vmem>>, vector<1x8x128xf32>
    %262 = vector.shape_cast %261 : vector<1x8x128xf32> to vector<8x128xf32>
    %263 = vector.shape_cast %260 : vector<8x128xf32> to vector<1x8x128xf32>
    tpu.vector_store %arg11[%c2_110, %c0_111, %c0_112], %263 {strides = array<i32>} : memref<8x8x128xf32, #tpu.memory_space<vmem>>, vector<1x8x128xf32>,
    %c5 = arith.constant 5 : index
    %c0_113 = arith.constant 0 : index
    %c0_114 = arith.constant 0 : index
    %264 = vector.load %arg2[%c5, %c0_113, %c0_114] : memref<8x8x1xf32, #tpu.memory_space<vmem>>, vector<1x8x1xf32>
    %265 = vector.shape_cast %264 : vector<1x8x1xf32> to vector<8x1xf32>
    %266 = vector.broadcast %265 : vector<8x1xf32> to vector<8x128xf32>
    %267 = arith.mulf %256, %266 : vector<8x128xf32>
    %c5_115 = arith.constant 5 : index
    %c0_116 = arith.constant 0 : index
    %c0_117 = arith.constant 0 : index
    %268 = vector.load %arg7[%c5_115, %c0_116, %c0_117] : memref<8x8x128xf32, #tpu.memory_space<vmem>>, vector<1x8x128xf32>
    %269 = vector.shape_cast %268 : vector<1x8x128xf32> to vector<8x128xf32>
    %270 = vector.shape_cast %267 : vector<8x128xf32> to vector<1x8x128xf32>
    tpu.vector_store %arg7[%c5_115, %c0_116, %c0_117], %270 {strides = array<i32>} : memref<8x8x128xf32, #tpu.memory_space<vmem>>, vector<1x8x128xf32>,
    %c24 = arith.constant 24 : index
    %c0_118 = arith.constant 0 : index
    %271 = vector.load %arg9[%c24, %c0_118] : memref<64x384xf32, #tpu.memory_space<vmem>>, vector<8x384xf32>
    %c32 = arith.constant 32 : index
    %c0_119 = arith.constant 0 : index
    %272 = vector.load %arg10[%c32, %c0_119] : memref<64x384xf32, #tpu.memory_space<vmem>>, vector<8x384xf32>
    %273 = arith.truncf %230 : vector<8x128xf32> to vector<8x128xbf16>
    %c0_120 = arith.constant 0 : index
    %c0_121 = arith.constant 0 : index
    %c0_122 = arith.constant 0 : index
    %274 = vector.load %arg4[%c0_120, %c0_121, %c0_122] : memref<2x128x384xbf16, #tpu.memory_space<vmem>>, vector<1x128x384xbf16>
    %275 = vector.shape_cast %274 : vector<1x128x384xbf16> to vector<128x384xbf16>
    %cst_123 = arith.constant dense<0.000000e+00> : vector<8x384xf32>
    %276 = tpu.matmul %273, %275, %cst_123 {dimension_numbers = #tpu.dot_dimension_numbers<[1], [0], [0], [1], [0, 0, 1, 1], [], []>} : vector<8x128xbf16>, vector<128x384xbf16>, vector<8x384xf32> -> vector<8x384xf32>
    %c0_124 = arith.constant 0 : index
    %c0_125 = arith.constant 0 : index
    %c0_126 = arith.constant 0 : index
    %277 = vector.load %arg6[%c0_124, %c0_125, %c0_126] : memref<2x1x384xf32, #tpu.memory_space<vmem>>, vector<1x1x384xf32>
    %278 = vector.shape_cast %277 : vector<1x1x384xf32> to vector<1x384xf32>
    %279 = vector.broadcast %278 : vector<1x384xf32> to vector<8x384xf32>
    %280 = arith.addf %276, %279 : vector<8x384xf32>
    %281 = arith.truncf %256 : vector<8x128xf32> to vector<8x128xbf16>
    %c1_127 = arith.constant 1 : index
    %c0_128 = arith.constant 0 : index
    %c0_129 = arith.constant 0 : index
    %282 = vector.load %arg4[%c1_127, %c0_128, %c0_129] : memref<2x128x384xbf16, #tpu.memory_space<vmem>>, vector<1x128x384xbf16>
    %283 = vector.shape_cast %282 : vector<1x128x384xbf16> to vector<128x384xbf16>
    %cst_130 = arith.constant dense<0.000000e+00> : vector<8x384xf32>
    %284 = tpu.matmul %281, %283, %cst_130 {dimension_numbers = #tpu.dot_dimension_numbers<[1], [0], [0], [1], [0, 0, 1, 1], [], []>} : vector<8x128xbf16>, vector<128x384xbf16>, vector<8x384xf32> -> vector<8x384xf32>
    %c1_131 = arith.constant 1 : index
    %c0_132 = arith.constant 0 : index
    %c0_133 = arith.constant 0 : index
    %285 = vector.load %arg6[%c1_131, %c0_132, %c0_133] : memref<2x1x384xf32, #tpu.memory_space<vmem>>, vector<1x1x384xf32>
    %286 = vector.shape_cast %285 : vector<1x1x384xf32> to vector<1x384xf32>
    %287 = vector.broadcast %286 : vector<1x384xf32> to vector<8x384xf32>
    %288 = arith.addf %284, %287 : vector<8x384xf32>
    %289 = vector.extract_strided_slice %271 {offsets = [0, 0], sizes = [8, 128], strides = [1, 1]} : vector<8x384xf32> to vector<8x128xf32>
    %290 = vector.extract_strided_slice %280 {offsets = [0, 0], sizes = [8, 128], strides = [1, 1]} : vector<8x384xf32> to vector<8x128xf32>
    %291 = arith.addf %289, %290 : vector<8x128xf32>
    %292 = arith.negf %291 : vector<8x128xf32>
    %293 = math.exp %292 : vector<8x128xf32>
    %cst_134 = arith.constant 1.000000e+00 : f32
    %294 = vector.broadcast %cst_134 : f32 to vector<8x128xf32>
    %295 = arith.addf %294, %293 : vector<8x128xf32>
    %296 = arith.divf %294, %295 : vector<8x128xf32>
    %297 = vector.extract_strided_slice %271 {offsets = [0, 128], sizes = [8, 128], strides = [1, 1]} : vector<8x384xf32> to vector<8x128xf32>
    %298 = vector.extract_strided_slice %280 {offsets = [0, 128], sizes = [8, 128], strides = [1, 1]} : vector<8x384xf32> to vector<8x128xf32>
    %299 = arith.addf %297, %298 : vector<8x128xf32>
    %300 = arith.negf %299 : vector<8x128xf32>
    %301 = math.exp %300 : vector<8x128xf32>
    %cst_135 = arith.constant 1.000000e+00 : f32
    %302 = vector.broadcast %cst_135 : f32 to vector<8x128xf32>
    %303 = arith.addf %302, %301 : vector<8x128xf32>
    %304 = arith.divf %302, %303 : vector<8x128xf32>
    %305 = vector.extract_strided_slice %271 {offsets = [0, 256], sizes = [8, 128], strides = [1, 1]} : vector<8x384xf32> to vector<8x128xf32>
    %306 = vector.extract_strided_slice %280 {offsets = [0, 256], sizes = [8, 128], strides = [1, 1]} : vector<8x384xf32> to vector<8x128xf32>
    %307 = arith.mulf %296, %306 : vector<8x128xf32>
    %308 = arith.addf %305, %307 : vector<8x128xf32>
    %309 = math.tanh %308 : vector<8x128xf32>
    %cst_136 = arith.constant 1.000000e+00 : f32
    %310 = vector.broadcast %cst_136 : f32 to vector<8x128xf32>
    %311 = arith.subf %310, %304 : vector<8x128xf32>
    %312 = arith.mulf %311, %309 : vector<8x128xf32>
    %313 = arith.mulf %304, %230 : vector<8x128xf32>
    %314 = arith.addf %312, %313 : vector<8x128xf32>
    %315 = vector.extract_strided_slice %272 {offsets = [0, 0], sizes = [8, 128], strides = [1, 1]} : vector<8x384xf32> to vector<8x128xf32>
    %316 = vector.extract_strided_slice %288 {offsets = [0, 0], sizes = [8, 128], strides = [1, 1]} : vector<8x384xf32> to vector<8x128xf32>
    %317 = arith.addf %315, %316 : vector<8x128xf32>
    %318 = arith.negf %317 : vector<8x128xf32>
    %319 = math.exp %318 : vector<8x128xf32>
    %cst_137 = arith.constant 1.000000e+00 : f32
    %320 = vector.broadcast %cst_137 : f32 to vector<8x128xf32>
    %321 = arith.addf %320, %319 : vector<8x128xf32>
    %322 = arith.divf %320, %321 : vector<8x128xf32>
    %323 = vector.extract_strided_slice %272 {offsets = [0, 128], sizes = [8, 128], strides = [1, 1]} : vector<8x384xf32> to vector<8x128xf32>
    %324 = vector.extract_strided_slice %288 {offsets = [0, 128], sizes = [8, 128], strides = [1, 1]} : vector<8x384xf32> to vector<8x128xf32>
    %325 = arith.addf %323, %324 : vector<8x128xf32>
    %326 = arith.negf %325 : vector<8x128xf32>
    %327 = math.exp %326 : vector<8x128xf32>
    %cst_138 = arith.constant 1.000000e+00 : f32
    %328 = vector.broadcast %cst_138 : f32 to vector<8x128xf32>
    %329 = arith.addf %328, %327 : vector<8x128xf32>
    %330 = arith.divf %328, %329 : vector<8x128xf32>
    %331 = vector.extract_strided_slice %272 {offsets = [0, 256], sizes = [8, 128], strides = [1, 1]} : vector<8x384xf32> to vector<8x128xf32>
    %332 = vector.extract_strided_slice %288 {offsets = [0, 256], sizes = [8, 128], strides = [1, 1]} : vector<8x384xf32> to vector<8x128xf32>
    %333 = arith.mulf %322, %332 : vector<8x128xf32>
    %334 = arith.addf %331, %333 : vector<8x128xf32>
    %335 = math.tanh %334 : vector<8x128xf32>
    %cst_139 = arith.constant 1.000000e+00 : f32
    %336 = vector.broadcast %cst_139 : f32 to vector<8x128xf32>
    %337 = arith.subf %336, %330 : vector<8x128xf32>
    %338 = arith.mulf %337, %335 : vector<8x128xf32>
    %339 = arith.mulf %330, %256 : vector<8x128xf32>
    %340 = arith.addf %338, %339 : vector<8x128xf32>
    %c3 = arith.constant 3 : index
    %c0_140 = arith.constant 0 : index
    %c0_141 = arith.constant 0 : index
    %341 = vector.load %arg2[%c3, %c0_140, %c0_141] : memref<8x8x1xf32, #tpu.memory_space<vmem>>, vector<1x8x1xf32>
    %342 = vector.shape_cast %341 : vector<1x8x1xf32> to vector<8x1xf32>
    %343 = vector.broadcast %342 : vector<8x1xf32> to vector<8x128xf32>
    %344 = arith.mulf %314, %343 : vector<8x128xf32>
    %c3_142 = arith.constant 3 : index
    %c0_143 = arith.constant 0 : index
    %c0_144 = arith.constant 0 : index
    %345 = vector.load %arg11[%c3_142, %c0_143, %c0_144] : memref<8x8x128xf32, #tpu.memory_space<vmem>>, vector<1x8x128xf32>
    %346 = vector.shape_cast %345 : vector<1x8x128xf32> to vector<8x128xf32>
    %347 = vector.shape_cast %344 : vector<8x128xf32> to vector<1x8x128xf32>
    tpu.vector_store %arg11[%c3_142, %c0_143, %c0_144], %347 {strides = array<i32>} : memref<8x8x128xf32, #tpu.memory_space<vmem>>, vector<1x8x128xf32>,
    %c4 = arith.constant 4 : index
    %c0_145 = arith.constant 0 : index
    %c0_146 = arith.constant 0 : index
    %348 = vector.load %arg2[%c4, %c0_145, %c0_146] : memref<8x8x1xf32, #tpu.memory_space<vmem>>, vector<1x8x1xf32>
    %349 = vector.shape_cast %348 : vector<1x8x1xf32> to vector<8x1xf32>
    %350 = vector.broadcast %349 : vector<8x1xf32> to vector<8x128xf32>
    %351 = arith.mulf %340, %350 : vector<8x128xf32>
    %c4_147 = arith.constant 4 : index
    %c0_148 = arith.constant 0 : index
    %c0_149 = arith.constant 0 : index
    %352 = vector.load %arg7[%c4_147, %c0_148, %c0_149] : memref<8x8x128xf32, #tpu.memory_space<vmem>>, vector<1x8x128xf32>
    %353 = vector.shape_cast %352 : vector<1x8x128xf32> to vector<8x128xf32>
    %354 = vector.shape_cast %351 : vector<8x128xf32> to vector<1x8x128xf32>
    tpu.vector_store %arg7[%c4_147, %c0_148, %c0_149], %354 {strides = array<i32>} : memref<8x8x128xf32, #tpu.memory_space<vmem>>, vector<1x8x128xf32>,
    %c32_150 = arith.constant 32 : index
    %c0_151 = arith.constant 0 : index
    %355 = vector.load %arg9[%c32_150, %c0_151] : memref<64x384xf32, #tpu.memory_space<vmem>>, vector<8x384xf32>
    %c24_152 = arith.constant 24 : index
    %c0_153 = arith.constant 0 : index
    %356 = vector.load %arg10[%c24_152, %c0_153] : memref<64x384xf32, #tpu.memory_space<vmem>>, vector<8x384xf32>
    %357 = arith.truncf %314 : vector<8x128xf32> to vector<8x128xbf16>
    %c0_154 = arith.constant 0 : index
    %c0_155 = arith.constant 0 : index
    %c0_156 = arith.constant 0 : index
    %358 = vector.load %arg4[%c0_154, %c0_155, %c0_156] : memref<2x128x384xbf16, #tpu.memory_space<vmem>>, vector<1x128x384xbf16>
    %359 = vector.shape_cast %358 : vector<1x128x384xbf16> to vector<128x384xbf16>
    %cst_157 = arith.constant dense<0.000000e+00> : vector<8x384xf32>
    %360 = tpu.matmul %357, %359, %cst_157 {dimension_numbers = #tpu.dot_dimension_numbers<[1], [0], [0], [1], [0, 0, 1, 1], [], []>} : vector<8x128xbf16>, vector<128x384xbf16>, vector<8x384xf32> -> vector<8x384xf32>
    %c0_158 = arith.constant 0 : index
    %c0_159 = arith.constant 0 : index
    %c0_160 = arith.constant 0 : index
    %361 = vector.load %arg6[%c0_158, %c0_159, %c0_160] : memref<2x1x384xf32, #tpu.memory_space<vmem>>, vector<1x1x384xf32>
    %362 = vector.shape_cast %361 : vector<1x1x384xf32> to vector<1x384xf32>
    %363 = vector.broadcast %362 : vector<1x384xf32> to vector<8x384xf32>
    %364 = arith.addf %360, %363 : vector<8x384xf32>
    %365 = arith.truncf %340 : vector<8x128xf32> to vector<8x128xbf16>
    %c1_161 = arith.constant 1 : index
    %c0_162 = arith.constant 0 : index
    %c0_163 = arith.constant 0 : index
    %366 = vector.load %arg4[%c1_161, %c0_162, %c0_163] : memref<2x128x384xbf16, #tpu.memory_space<vmem>>, vector<1x128x384xbf16>
    %367 = vector.shape_cast %366 : vector<1x128x384xbf16> to vector<128x384xbf16>
    %cst_164 = arith.constant dense<0.000000e+00> : vector<8x384xf32>
    %368 = tpu.matmul %365, %367, %cst_164 {dimension_numbers = #tpu.dot_dimension_numbers<[1], [0], [0], [1], [0, 0, 1, 1], [], []>} : vector<8x128xbf16>, vector<128x384xbf16>, vector<8x384xf32> -> vector<8x384xf32>
    %c1_165 = arith.constant 1 : index
    %c0_166 = arith.constant 0 : index
    %c0_167 = arith.constant 0 : index
    %369 = vector.load %arg6[%c1_165, %c0_166, %c0_167] : memref<2x1x384xf32, #tpu.memory_space<vmem>>, vector<1x1x384xf32>
    %370 = vector.shape_cast %369 : vector<1x1x384xf32> to vector<1x384xf32>
    %371 = vector.broadcast %370 : vector<1x384xf32> to vector<8x384xf32>
    %372 = arith.addf %368, %371 : vector<8x384xf32>
    %373 = vector.extract_strided_slice %355 {offsets = [0, 0], sizes = [8, 128], strides = [1, 1]} : vector<8x384xf32> to vector<8x128xf32>
    %374 = vector.extract_strided_slice %364 {offsets = [0, 0], sizes = [8, 128], strides = [1, 1]} : vector<8x384xf32> to vector<8x128xf32>
    %375 = arith.addf %373, %374 : vector<8x128xf32>
    %376 = arith.negf %375 : vector<8x128xf32>
    %377 = math.exp %376 : vector<8x128xf32>
    %cst_168 = arith.constant 1.000000e+00 : f32
    %378 = vector.broadcast %cst_168 : f32 to vector<8x128xf32>
    %379 = arith.addf %378, %377 : vector<8x128xf32>
    %380 = arith.divf %378, %379 : vector<8x128xf32>
    %381 = vector.extract_strided_slice %355 {offsets = [0, 128], sizes = [8, 128], strides = [1, 1]} : vector<8x384xf32> to vector<8x128xf32>
    %382 = vector.extract_strided_slice %364 {offsets = [0, 128], sizes = [8, 128], strides = [1, 1]} : vector<8x384xf32> to vector<8x128xf32>
    %383 = arith.addf %381, %382 : vector<8x128xf32>
    %384 = arith.negf %383 : vector<8x128xf32>
    %385 = math.exp %384 : vector<8x128xf32>
    %cst_169 = arith.constant 1.000000e+00 : f32
    %386 = vector.broadcast %cst_169 : f32 to vector<8x128xf32>
    %387 = arith.addf %386, %385 : vector<8x128xf32>
    %388 = arith.divf %386, %387 : vector<8x128xf32>
    %389 = vector.extract_strided_slice %355 {offsets = [0, 256], sizes = [8, 128], strides = [1, 1]} : vector<8x384xf32> to vector<8x128xf32>
    %390 = vector.extract_strided_slice %364 {offsets = [0, 256], sizes = [8, 128], strides = [1, 1]} : vector<8x384xf32> to vector<8x128xf32>
    %391 = arith.mulf %380, %390 : vector<8x128xf32>
    %392 = arith.addf %389, %391 : vector<8x128xf32>
    %393 = math.tanh %392 : vector<8x128xf32>
    %cst_170 = arith.constant 1.000000e+00 : f32
    %394 = vector.broadcast %cst_170 : f32 to vector<8x128xf32>
    %395 = arith.subf %394, %388 : vector<8x128xf32>
    %396 = arith.mulf %395, %393 : vector<8x128xf32>
    %397 = arith.mulf %388, %314 : vector<8x128xf32>
    %398 = arith.addf %396, %397 : vector<8x128xf32>
    %399 = vector.extract_strided_slice %356 {offsets = [0, 0], sizes = [8, 128], strides = [1, 1]} : vector<8x384xf32> to vector<8x128xf32>
    %400 = vector.extract_strided_slice %372 {offsets = [0, 0], sizes = [8, 128], strides = [1, 1]} : vector<8x384xf32> to vector<8x128xf32>
    %401 = arith.addf %399, %400 : vector<8x128xf32>
    %402 = arith.negf %401 : vector<8x128xf32>
    %403 = math.exp %402 : vector<8x128xf32>
    %cst_171 = arith.constant 1.000000e+00 : f32
    %404 = vector.broadcast %cst_171 : f32 to vector<8x128xf32>
    %405 = arith.addf %404, %403 : vector<8x128xf32>
    %406 = arith.divf %404, %405 : vector<8x128xf32>
    %407 = vector.extract_strided_slice %356 {offsets = [0, 128], sizes = [8, 128], strides = [1, 1]} : vector<8x384xf32> to vector<8x128xf32>
    %408 = vector.extract_strided_slice %372 {offsets = [0, 128], sizes = [8, 128], strides = [1, 1]} : vector<8x384xf32> to vector<8x128xf32>
    %409 = arith.addf %407, %408 : vector<8x128xf32>
    %410 = arith.negf %409 : vector<8x128xf32>
    %411 = math.exp %410 : vector<8x128xf32>
    %cst_172 = arith.constant 1.000000e+00 : f32
    %412 = vector.broadcast %cst_172 : f32 to vector<8x128xf32>
    %413 = arith.addf %412, %411 : vector<8x128xf32>
    %414 = arith.divf %412, %413 : vector<8x128xf32>
    %415 = vector.extract_strided_slice %356 {offsets = [0, 256], sizes = [8, 128], strides = [1, 1]} : vector<8x384xf32> to vector<8x128xf32>
    %416 = vector.extract_strided_slice %372 {offsets = [0, 256], sizes = [8, 128], strides = [1, 1]} : vector<8x384xf32> to vector<8x128xf32>
    %417 = arith.mulf %406, %416 : vector<8x128xf32>
    %418 = arith.addf %415, %417 : vector<8x128xf32>
    %419 = math.tanh %418 : vector<8x128xf32>
    %cst_173 = arith.constant 1.000000e+00 : f32
    %420 = vector.broadcast %cst_173 : f32 to vector<8x128xf32>
    %421 = arith.subf %420, %414 : vector<8x128xf32>
    %422 = arith.mulf %421, %419 : vector<8x128xf32>
    %423 = arith.mulf %414, %340 : vector<8x128xf32>
    %424 = arith.addf %422, %423 : vector<8x128xf32>
    %c4_174 = arith.constant 4 : index
    %c0_175 = arith.constant 0 : index
    %c0_176 = arith.constant 0 : index
    %425 = vector.load %arg2[%c4_174, %c0_175, %c0_176] : memref<8x8x1xf32, #tpu.memory_space<vmem>>, vector<1x8x1xf32>
    %426 = vector.shape_cast %425 : vector<1x8x1xf32> to vector<8x1xf32>
    %427 = vector.broadcast %426 : vector<8x1xf32> to vector<8x128xf32>
    %428 = arith.mulf %398, %427 : vector<8x128xf32>
    %c4_177 = arith.constant 4 : index
    %c0_178 = arith.constant 0 : index
    %c0_179 = arith.constant 0 : index
    %429 = vector.load %arg11[%c4_177, %c0_178, %c0_179] : memref<8x8x128xf32, #tpu.memory_space<vmem>>, vector<1x8x128xf32>
    %430 = vector.shape_cast %429 : vector<1x8x128xf32> to vector<8x128xf32>
    %431 = vector.shape_cast %428 : vector<8x128xf32> to vector<1x8x128xf32>
    tpu.vector_store %arg11[%c4_177, %c0_178, %c0_179], %431 {strides = array<i32>} : memref<8x8x128xf32, #tpu.memory_space<vmem>>, vector<1x8x128xf32>,
    %c3_180 = arith.constant 3 : index
    %c0_181 = arith.constant 0 : index
    %c0_182 = arith.constant 0 : index
    %432 = vector.load %arg2[%c3_180, %c0_181, %c0_182] : memref<8x8x1xf32, #tpu.memory_space<vmem>>, vector<1x8x1xf32>
    %433 = vector.shape_cast %432 : vector<1x8x1xf32> to vector<8x1xf32>
    %434 = vector.broadcast %433 : vector<8x1xf32> to vector<8x128xf32>
    %435 = arith.mulf %424, %434 : vector<8x128xf32>
    %c3_183 = arith.constant 3 : index
    %c0_184 = arith.constant 0 : index
    %c0_185 = arith.constant 0 : index
    %436 = vector.load %arg7[%c3_183, %c0_184, %c0_185] : memref<8x8x128xf32, #tpu.memory_space<vmem>>, vector<1x8x128xf32>
    %437 = vector.shape_cast %436 : vector<1x8x128xf32> to vector<8x128xf32>
    %438 = vector.shape_cast %435 : vector<8x128xf32> to vector<1x8x128xf32>
    tpu.vector_store %arg7[%c3_183, %c0_184, %c0_185], %438 {strides = array<i32>} : memref<8x8x128xf32, #tpu.memory_space<vmem>>, vector<1x8x128xf32>,
    %c40_186 = arith.constant 40 : index
    %c0_187 = arith.constant 0 : index
    %439 = vector.load %arg9[%c40_186, %c0_187] : memref<64x384xf32, #tpu.memory_space<vmem>>, vector<8x384xf32>
    %c16_188 = arith.constant 16 : index
    %c0_189 = arith.constant 0 : index
    %440 = vector.load %arg10[%c16_188, %c0_189] : memref<64x384xf32, #tpu.memory_space<vmem>>, vector<8x384xf32>
    %441 = arith.truncf %398 : vector<8x128xf32> to vector<8x128xbf16>
    %c0_190 = arith.constant 0 : index
    %c0_191 = arith.constant 0 : index
    %c0_192 = arith.constant 0 : index
    %442 = vector.load %arg4[%c0_190, %c0_191, %c0_192] : memref<2x128x384xbf16, #tpu.memory_space<vmem>>, vector<1x128x384xbf16>
    %443 = vector.shape_cast %442 : vector<1x128x384xbf16> to vector<128x384xbf16>
    %cst_193 = arith.constant dense<0.000000e+00> : vector<8x384xf32>
    %444 = tpu.matmul %441, %443, %cst_193 {dimension_numbers = #tpu.dot_dimension_numbers<[1], [0], [0], [1], [0, 0, 1, 1], [], []>} : vector<8x128xbf16>, vector<128x384xbf16>, vector<8x384xf32> -> vector<8x384xf32>
    %c0_194 = arith.constant 0 : index
    %c0_195 = arith.constant 0 : index
    %c0_196 = arith.constant 0 : index
    %445 = vector.load %arg6[%c0_194, %c0_195, %c0_196] : memref<2x1x384xf32, #tpu.memory_space<vmem>>, vector<1x1x384xf32>
    %446 = vector.shape_cast %445 : vector<1x1x384xf32> to vector<1x384xf32>
    %447 = vector.broadcast %446 : vector<1x384xf32> to vector<8x384xf32>
    %448 = arith.addf %444, %447 : vector<8x384xf32>
    %449 = arith.truncf %424 : vector<8x128xf32> to vector<8x128xbf16>
    %c1_197 = arith.constant 1 : index
    %c0_198 = arith.constant 0 : index
    %c0_199 = arith.constant 0 : index
    %450 = vector.load %arg4[%c1_197, %c0_198, %c0_199] : memref<2x128x384xbf16, #tpu.memory_space<vmem>>, vector<1x128x384xbf16>
    %451 = vector.shape_cast %450 : vector<1x128x384xbf16> to vector<128x384xbf16>
    %cst_200 = arith.constant dense<0.000000e+00> : vector<8x384xf32>
    %452 = tpu.matmul %449, %451, %cst_200 {dimension_numbers = #tpu.dot_dimension_numbers<[1], [0], [0], [1], [0, 0, 1, 1], [], []>} : vector<8x128xbf16>, vector<128x384xbf16>, vector<8x384xf32> -> vector<8x384xf32>
    %c1_201 = arith.constant 1 : index
    %c0_202 = arith.constant 0 : index
    %c0_203 = arith.constant 0 : index
    %453 = vector.load %arg6[%c1_201, %c0_202, %c0_203] : memref<2x1x384xf32, #tpu.memory_space<vmem>>, vector<1x1x384xf32>
    %454 = vector.shape_cast %453 : vector<1x1x384xf32> to vector<1x384xf32>
    %455 = vector.broadcast %454 : vector<1x384xf32> to vector<8x384xf32>
    %456 = arith.addf %452, %455 : vector<8x384xf32>
    %457 = vector.extract_strided_slice %439 {offsets = [0, 0], sizes = [8, 128], strides = [1, 1]} : vector<8x384xf32> to vector<8x128xf32>
    %458 = vector.extract_strided_slice %448 {offsets = [0, 0], sizes = [8, 128], strides = [1, 1]} : vector<8x384xf32> to vector<8x128xf32>
    %459 = arith.addf %457, %458 : vector<8x128xf32>
    %460 = arith.negf %459 : vector<8x128xf32>
    %461 = math.exp %460 : vector<8x128xf32>
    %cst_204 = arith.constant 1.000000e+00 : f32
    %462 = vector.broadcast %cst_204 : f32 to vector<8x128xf32>
    %463 = arith.addf %462, %461 : vector<8x128xf32>
    %464 = arith.divf %462, %463 : vector<8x128xf32>
    %465 = vector.extract_strided_slice %439 {offsets = [0, 128], sizes = [8, 128], strides = [1, 1]} : vector<8x384xf32> to vector<8x128xf32>
    %466 = vector.extract_strided_slice %448 {offsets = [0, 128], sizes = [8, 128], strides = [1, 1]} : vector<8x384xf32> to vector<8x128xf32>
    %467 = arith.addf %465, %466 : vector<8x128xf32>
    %468 = arith.negf %467 : vector<8x128xf32>
    %469 = math.exp %468 : vector<8x128xf32>
    %cst_205 = arith.constant 1.000000e+00 : f32
    %470 = vector.broadcast %cst_205 : f32 to vector<8x128xf32>
    %471 = arith.addf %470, %469 : vector<8x128xf32>
    %472 = arith.divf %470, %471 : vector<8x128xf32>
    %473 = vector.extract_strided_slice %439 {offsets = [0, 256], sizes = [8, 128], strides = [1, 1]} : vector<8x384xf32> to vector<8x128xf32>
    %474 = vector.extract_strided_slice %448 {offsets = [0, 256], sizes = [8, 128], strides = [1, 1]} : vector<8x384xf32> to vector<8x128xf32>
    %475 = arith.mulf %464, %474 : vector<8x128xf32>
    %476 = arith.addf %473, %475 : vector<8x128xf32>
    %477 = math.tanh %476 : vector<8x128xf32>
    %cst_206 = arith.constant 1.000000e+00 : f32
    %478 = vector.broadcast %cst_206 : f32 to vector<8x128xf32>
    %479 = arith.subf %478, %472 : vector<8x128xf32>
    %480 = arith.mulf %479, %477 : vector<8x128xf32>
    %481 = arith.mulf %472, %398 : vector<8x128xf32>
    %482 = arith.addf %480, %481 : vector<8x128xf32>
    %483 = vector.extract_strided_slice %440 {offsets = [0, 0], sizes = [8, 128], strides = [1, 1]} : vector<8x384xf32> to vector<8x128xf32>
    %484 = vector.extract_strided_slice %456 {offsets = [0, 0], sizes = [8, 128], strides = [1, 1]} : vector<8x384xf32> to vector<8x128xf32>
    %485 = arith.addf %483, %484 : vector<8x128xf32>
    %486 = arith.negf %485 : vector<8x128xf32>
    %487 = math.exp %486 : vector<8x128xf32>
    %cst_207 = arith.constant 1.000000e+00 : f32
    %488 = vector.broadcast %cst_207 : f32 to vector<8x128xf32>
    %489 = arith.addf %488, %487 : vector<8x128xf32>
    %490 = arith.divf %488, %489 : vector<8x128xf32>
    %491 = vector.extract_strided_slice %440 {offsets = [0, 128], sizes = [8, 128], strides = [1, 1]} : vector<8x384xf32> to vector<8x128xf32>
    %492 = vector.extract_strided_slice %456 {offsets = [0, 128], sizes = [8, 128], strides = [1, 1]} : vector<8x384xf32> to vector<8x128xf32>
    %493 = arith.addf %491, %492 : vector<8x128xf32>
    %494 = arith.negf %493 : vector<8x128xf32>
    %495 = math.exp %494 : vector<8x128xf32>
    %cst_208 = arith.constant 1.000000e+00 : f32
    %496 = vector.broadcast %cst_208 : f32 to vector<8x128xf32>
    %497 = arith.addf %496, %495 : vector<8x128xf32>
    %498 = arith.divf %496, %497 : vector<8x128xf32>
    %499 = vector.extract_strided_slice %440 {offsets = [0, 256], sizes = [8, 128], strides = [1, 1]} : vector<8x384xf32> to vector<8x128xf32>
    %500 = vector.extract_strided_slice %456 {offsets = [0, 256], sizes = [8, 128], strides = [1, 1]} : vector<8x384xf32> to vector<8x128xf32>
    %501 = arith.mulf %490, %500 : vector<8x128xf32>
    %502 = arith.addf %499, %501 : vector<8x128xf32>
    %503 = math.tanh %502 : vector<8x128xf32>
    %cst_209 = arith.constant 1.000000e+00 : f32
    %504 = vector.broadcast %cst_209 : f32 to vector<8x128xf32>
    %505 = arith.subf %504, %498 : vector<8x128xf32>
    %506 = arith.mulf %505, %503 : vector<8x128xf32>
    %507 = arith.mulf %498, %424 : vector<8x128xf32>
    %508 = arith.addf %506, %507 : vector<8x128xf32>
    %c5_210 = arith.constant 5 : index
    %c0_211 = arith.constant 0 : index
    %c0_212 = arith.constant 0 : index
    %509 = vector.load %arg2[%c5_210, %c0_211, %c0_212] : memref<8x8x1xf32, #tpu.memory_space<vmem>>, vector<1x8x1xf32>
    %510 = vector.shape_cast %509 : vector<1x8x1xf32> to vector<8x1xf32>
    %511 = vector.broadcast %510 : vector<8x1xf32> to vector<8x128xf32>
    %512 = arith.mulf %482, %511 : vector<8x128xf32>
    %c5_213 = arith.constant 5 : index
    %c0_214 = arith.constant 0 : index
    %c0_215 = arith.constant 0 : index
    %513 = vector.load %arg11[%c5_213, %c0_214, %c0_215] : memref<8x8x128xf32, #tpu.memory_space<vmem>>, vector<1x8x128xf32>
    %514 = vector.shape_cast %513 : vector<1x8x128xf32> to vector<8x128xf32>
    %515 = vector.shape_cast %512 : vector<8x128xf32> to vector<1x8x128xf32>
    tpu.vector_store %arg11[%c5_213, %c0_214, %c0_215], %515 {strides = array<i32>} : memref<8x8x128xf32, #tpu.memory_space<vmem>>, vector<1x8x128xf32>,
    %c2_216 = arith.constant 2 : index
    %c0_217 = arith.constant 0 : index
    %c0_218 = arith.constant 0 : index
    %516 = vector.load %arg2[%c2_216, %c0_217, %c0_218] : memref<8x8x1xf32, #tpu.memory_space<vmem>>, vector<1x8x1xf32>
    %517 = vector.shape_cast %516 : vector<1x8x1xf32> to vector<8x1xf32>
    %518 = vector.broadcast %517 : vector<8x1xf32> to vector<8x128xf32>
    %519 = arith.mulf %508, %518 : vector<8x128xf32>
    %c2_219 = arith.constant 2 : index
    %c0_220 = arith.constant 0 : index
    %c0_221 = arith.constant 0 : index
    %520 = vector.load %arg7[%c2_219, %c0_220, %c0_221] : memref<8x8x128xf32, #tpu.memory_space<vmem>>, vector<1x8x128xf32>
    %521 = vector.shape_cast %520 : vector<1x8x128xf32> to vector<8x128xf32>
    %522 = vector.shape_cast %519 : vector<8x128xf32> to vector<1x8x128xf32>
    tpu.vector_store %arg7[%c2_219, %c0_220, %c0_221], %522 {strides = array<i32>} : memref<8x8x128xf32, #tpu.memory_space<vmem>>, vector<1x8x128xf32>,
    %c48_222 = arith.constant 48 : index
    %c0_223 = arith.constant 0 : index
    %523 = vector.load %arg9[%c48_222, %c0_223] : memref<64x384xf32, #tpu.memory_space<vmem>>, vector<8x384xf32>
    %c8_224 = arith.constant 8 : index
    %c0_225 = arith.constant 0 : index
    %524 = vector.load %arg10[%c8_224, %c0_225] : memref<64x384xf32, #tpu.memory_space<vmem>>, vector<8x384xf32>
    %525 = arith.truncf %482 : vector<8x128xf32> to vector<8x128xbf16>
    %c0_226 = arith.constant 0 : index
    %c0_227 = arith.constant 0 : index
    %c0_228 = arith.constant 0 : index
    %526 = vector.load %arg4[%c0_226, %c0_227, %c0_228] : memref<2x128x384xbf16, #tpu.memory_space<vmem>>, vector<1x128x384xbf16>
    %527 = vector.shape_cast %526 : vector<1x128x384xbf16> to vector<128x384xbf16>
    %cst_229 = arith.constant dense<0.000000e+00> : vector<8x384xf32>
    %528 = tpu.matmul %525, %527, %cst_229 {dimension_numbers = #tpu.dot_dimension_numbers<[1], [0], [0], [1], [0, 0, 1, 1], [], []>} : vector<8x128xbf16>, vector<128x384xbf16>, vector<8x384xf32> -> vector<8x384xf32>
    %c0_230 = arith.constant 0 : index
    %c0_231 = arith.constant 0 : index
    %c0_232 = arith.constant 0 : index
    %529 = vector.load %arg6[%c0_230, %c0_231, %c0_232] : memref<2x1x384xf32, #tpu.memory_space<vmem>>, vector<1x1x384xf32>
    %530 = vector.shape_cast %529 : vector<1x1x384xf32> to vector<1x384xf32>
    %531 = vector.broadcast %530 : vector<1x384xf32> to vector<8x384xf32>
    %532 = arith.addf %528, %531 : vector<8x384xf32>
    %533 = arith.truncf %508 : vector<8x128xf32> to vector<8x128xbf16>
    %c1_233 = arith.constant 1 : index
    %c0_234 = arith.constant 0 : index
    %c0_235 = arith.constant 0 : index
    %534 = vector.load %arg4[%c1_233, %c0_234, %c0_235] : memref<2x128x384xbf16, #tpu.memory_space<vmem>>, vector<1x128x384xbf16>
    %535 = vector.shape_cast %534 : vector<1x128x384xbf16> to vector<128x384xbf16>
    %cst_236 = arith.constant dense<0.000000e+00> : vector<8x384xf32>
    %536 = tpu.matmul %533, %535, %cst_236 {dimension_numbers = #tpu.dot_dimension_numbers<[1], [0], [0], [1], [0, 0, 1, 1], [], []>} : vector<8x128xbf16>, vector<128x384xbf16>, vector<8x384xf32> -> vector<8x384xf32>
    %c1_237 = arith.constant 1 : index
    %c0_238 = arith.constant 0 : index
    %c0_239 = arith.constant 0 : index
    %537 = vector.load %arg6[%c1_237, %c0_238, %c0_239] : memref<2x1x384xf32, #tpu.memory_space<vmem>>, vector<1x1x384xf32>
    %538 = vector.shape_cast %537 : vector<1x1x384xf32> to vector<1x384xf32>
    %539 = vector.broadcast %538 : vector<1x384xf32> to vector<8x384xf32>
    %540 = arith.addf %536, %539 : vector<8x384xf32>
    %541 = vector.extract_strided_slice %523 {offsets = [0, 0], sizes = [8, 128], strides = [1, 1]} : vector<8x384xf32> to vector<8x128xf32>
    %542 = vector.extract_strided_slice %532 {offsets = [0, 0], sizes = [8, 128], strides = [1, 1]} : vector<8x384xf32> to vector<8x128xf32>
    %543 = arith.addf %541, %542 : vector<8x128xf32>
    %544 = arith.negf %543 : vector<8x128xf32>
    %545 = math.exp %544 : vector<8x128xf32>
    %cst_240 = arith.constant 1.000000e+00 : f32
    %546 = vector.broadcast %cst_240 : f32 to vector<8x128xf32>
    %547 = arith.addf %546, %545 : vector<8x128xf32>
    %548 = arith.divf %546, %547 : vector<8x128xf32>
    %549 = vector.extract_strided_slice %523 {offsets = [0, 128], sizes = [8, 128], strides = [1, 1]} : vector<8x384xf32> to vector<8x128xf32>
    %550 = vector.extract_strided_slice %532 {offsets = [0, 128], sizes = [8, 128], strides = [1, 1]} : vector<8x384xf32> to vector<8x128xf32>
    %551 = arith.addf %549, %550 : vector<8x128xf32>
    %552 = arith.negf %551 : vector<8x128xf32>
    %553 = math.exp %552 : vector<8x128xf32>
    %cst_241 = arith.constant 1.000000e+00 : f32
    %554 = vector.broadcast %cst_241 : f32 to vector<8x128xf32>
    %555 = arith.addf %554, %553 : vector<8x128xf32>
    %556 = arith.divf %554, %555 : vector<8x128xf32>
    %557 = vector.extract_strided_slice %523 {offsets = [0, 256], sizes = [8, 128], strides = [1, 1]} : vector<8x384xf32> to vector<8x128xf32>
    %558 = vector.extract_strided_slice %532 {offsets = [0, 256], sizes = [8, 128], strides = [1, 1]} : vector<8x384xf32> to vector<8x128xf32>
    %559 = arith.mulf %548, %558 : vector<8x128xf32>
    %560 = arith.addf %557, %559 : vector<8x128xf32>
    %561 = math.tanh %560 : vector<8x128xf32>
    %cst_242 = arith.constant 1.000000e+00 : f32
    %562 = vector.broadcast %cst_242 : f32 to vector<8x128xf32>
    %563 = arith.subf %562, %556 : vector<8x128xf32>
    %564 = arith.mulf %563, %561 : vector<8x128xf32>
    %565 = arith.mulf %556, %482 : vector<8x128xf32>
    %566 = arith.addf %564, %565 : vector<8x128xf32>
    %567 = vector.extract_strided_slice %524 {offsets = [0, 0], sizes = [8, 128], strides = [1, 1]} : vector<8x384xf32> to vector<8x128xf32>
    %568 = vector.extract_strided_slice %540 {offsets = [0, 0], sizes = [8, 128], strides = [1, 1]} : vector<8x384xf32> to vector<8x128xf32>
    %569 = arith.addf %567, %568 : vector<8x128xf32>
    %570 = arith.negf %569 : vector<8x128xf32>
    %571 = math.exp %570 : vector<8x128xf32>
    %cst_243 = arith.constant 1.000000e+00 : f32
    %572 = vector.broadcast %cst_243 : f32 to vector<8x128xf32>
    %573 = arith.addf %572, %571 : vector<8x128xf32>
    %574 = arith.divf %572, %573 : vector<8x128xf32>
    %575 = vector.extract_strided_slice %524 {offsets = [0, 128], sizes = [8, 128], strides = [1, 1]} : vector<8x384xf32> to vector<8x128xf32>
    %576 = vector.extract_strided_slice %540 {offsets = [0, 128], sizes = [8, 128], strides = [1, 1]} : vector<8x384xf32> to vector<8x128xf32>
    %577 = arith.addf %575, %576 : vector<8x128xf32>
    %578 = arith.negf %577 : vector<8x128xf32>
    %579 = math.exp %578 : vector<8x128xf32>
    %cst_244 = arith.constant 1.000000e+00 : f32
    %580 = vector.broadcast %cst_244 : f32 to vector<8x128xf32>
    %581 = arith.addf %580, %579 : vector<8x128xf32>
    %582 = arith.divf %580, %581 : vector<8x128xf32>
    %583 = vector.extract_strided_slice %524 {offsets = [0, 256], sizes = [8, 128], strides = [1, 1]} : vector<8x384xf32> to vector<8x128xf32>
    %584 = vector.extract_strided_slice %540 {offsets = [0, 256], sizes = [8, 128], strides = [1, 1]} : vector<8x384xf32> to vector<8x128xf32>
    %585 = arith.mulf %574, %584 : vector<8x128xf32>
    %586 = arith.addf %583, %585 : vector<8x128xf32>
    %587 = math.tanh %586 : vector<8x128xf32>
    %cst_245 = arith.constant 1.000000e+00 : f32
    %588 = vector.broadcast %cst_245 : f32 to vector<8x128xf32>
    %589 = arith.subf %588, %582 : vector<8x128xf32>
    %590 = arith.mulf %589, %587 : vector<8x128xf32>
    %591 = arith.mulf %582, %508 : vector<8x128xf32>
    %592 = arith.addf %590, %591 : vector<8x128xf32>
    %c6_246 = arith.constant 6 : index
    %c0_247 = arith.constant 0 : index
    %c0_248 = arith.constant 0 : index
    %593 = vector.load %arg2[%c6_246, %c0_247, %c0_248] : memref<8x8x1xf32, #tpu.memory_space<vmem>>, vector<1x8x1xf32>
    %594 = vector.shape_cast %593 : vector<1x8x1xf32> to vector<8x1xf32>
    %595 = vector.broadcast %594 : vector<8x1xf32> to vector<8x128xf32>
    %596 = arith.mulf %566, %595 : vector<8x128xf32>
    %c6_249 = arith.constant 6 : index
    %c0_250 = arith.constant 0 : index
    %c0_251 = arith.constant 0 : index
    %597 = vector.load %arg11[%c6_249, %c0_250, %c0_251] : memref<8x8x128xf32, #tpu.memory_space<vmem>>, vector<1x8x128xf32>
    %598 = vector.shape_cast %597 : vector<1x8x128xf32> to vector<8x128xf32>
    %599 = vector.shape_cast %596 : vector<8x128xf32> to vector<1x8x128xf32>
    tpu.vector_store %arg11[%c6_249, %c0_250, %c0_251], %599 {strides = array<i32>} : memref<8x8x128xf32, #tpu.memory_space<vmem>>, vector<1x8x128xf32>,
    %c1_252 = arith.constant 1 : index
    %c0_253 = arith.constant 0 : index
    %c0_254 = arith.constant 0 : index
    %600 = vector.load %arg2[%c1_252, %c0_253, %c0_254] : memref<8x8x1xf32, #tpu.memory_space<vmem>>, vector<1x8x1xf32>
    %601 = vector.shape_cast %600 : vector<1x8x1xf32> to vector<8x1xf32>
    %602 = vector.broadcast %601 : vector<8x1xf32> to vector<8x128xf32>
    %603 = arith.mulf %592, %602 : vector<8x128xf32>
    %c1_255 = arith.constant 1 : index
    %c0_256 = arith.constant 0 : index
    %c0_257 = arith.constant 0 : index
    %604 = vector.load %arg7[%c1_255, %c0_256, %c0_257] : memref<8x8x128xf32, #tpu.memory_space<vmem>>, vector<1x8x128xf32>
    %605 = vector.shape_cast %604 : vector<1x8x128xf32> to vector<8x128xf32>
    %606 = vector.shape_cast %603 : vector<8x128xf32> to vector<1x8x128xf32>
    tpu.vector_store %arg7[%c1_255, %c0_256, %c0_257], %606 {strides = array<i32>} : memref<8x8x128xf32, #tpu.memory_space<vmem>>, vector<1x8x128xf32>,
    %c56_258 = arith.constant 56 : index
    %c0_259 = arith.constant 0 : index
    %607 = vector.load %arg9[%c56_258, %c0_259] : memref<64x384xf32, #tpu.memory_space<vmem>>, vector<8x384xf32>
    %c0_260 = arith.constant 0 : index
    %c0_261 = arith.constant 0 : index
    %608 = vector.load %arg10[%c0_260, %c0_261] : memref<64x384xf32, #tpu.memory_space<vmem>>, vector<8x384xf32>
    %609 = arith.truncf %566 : vector<8x128xf32> to vector<8x128xbf16>
    %c0_262 = arith.constant 0 : index
    %c0_263 = arith.constant 0 : index
    %c0_264 = arith.constant 0 : index
    %610 = vector.load %arg4[%c0_262, %c0_263, %c0_264] : memref<2x128x384xbf16, #tpu.memory_space<vmem>>, vector<1x128x384xbf16>
    %611 = vector.shape_cast %610 : vector<1x128x384xbf16> to vector<128x384xbf16>
    %cst_265 = arith.constant dense<0.000000e+00> : vector<8x384xf32>
    %612 = tpu.matmul %609, %611, %cst_265 {dimension_numbers = #tpu.dot_dimension_numbers<[1], [0], [0], [1], [0, 0, 1, 1], [], []>} : vector<8x128xbf16>, vector<128x384xbf16>, vector<8x384xf32> -> vector<8x384xf32>
    %c0_266 = arith.constant 0 : index
    %c0_267 = arith.constant 0 : index
    %c0_268 = arith.constant 0 : index
    %613 = vector.load %arg6[%c0_266, %c0_267, %c0_268] : memref<2x1x384xf32, #tpu.memory_space<vmem>>, vector<1x1x384xf32>
    %614 = vector.shape_cast %613 : vector<1x1x384xf32> to vector<1x384xf32>
    %615 = vector.broadcast %614 : vector<1x384xf32> to vector<8x384xf32>
    %616 = arith.addf %612, %615 : vector<8x384xf32>
    %617 = arith.truncf %592 : vector<8x128xf32> to vector<8x128xbf16>
    %c1_269 = arith.constant 1 : index
    %c0_270 = arith.constant 0 : index
    %c0_271 = arith.constant 0 : index
    %618 = vector.load %arg4[%c1_269, %c0_270, %c0_271] : memref<2x128x384xbf16, #tpu.memory_space<vmem>>, vector<1x128x384xbf16>
    %619 = vector.shape_cast %618 : vector<1x128x384xbf16> to vector<128x384xbf16>
    %cst_272 = arith.constant dense<0.000000e+00> : vector<8x384xf32>
    %620 = tpu.matmul %617, %619, %cst_272 {dimension_numbers = #tpu.dot_dimension_numbers<[1], [0], [0], [1], [0, 0, 1, 1], [], []>} : vector<8x128xbf16>, vector<128x384xbf16>, vector<8x384xf32> -> vector<8x384xf32>
    %c1_273 = arith.constant 1 : index
    %c0_274 = arith.constant 0 : index
    %c0_275 = arith.constant 0 : index
    %621 = vector.load %arg6[%c1_273, %c0_274, %c0_275] : memref<2x1x384xf32, #tpu.memory_space<vmem>>, vector<1x1x384xf32>
    %622 = vector.shape_cast %621 : vector<1x1x384xf32> to vector<1x384xf32>
    %623 = vector.broadcast %622 : vector<1x384xf32> to vector<8x384xf32>
    %624 = arith.addf %620, %623 : vector<8x384xf32>
    %625 = vector.extract_strided_slice %607 {offsets = [0, 0], sizes = [8, 128], strides = [1, 1]} : vector<8x384xf32> to vector<8x128xf32>
    %626 = vector.extract_strided_slice %616 {offsets = [0, 0], sizes = [8, 128], strides = [1, 1]} : vector<8x384xf32> to vector<8x128xf32>
    %627 = arith.addf %625, %626 : vector<8x128xf32>
    %628 = arith.negf %627 : vector<8x128xf32>
    %629 = math.exp %628 : vector<8x128xf32>
    %cst_276 = arith.constant 1.000000e+00 : f32
    %630 = vector.broadcast %cst_276 : f32 to vector<8x128xf32>
    %631 = arith.addf %630, %629 : vector<8x128xf32>
    %632 = arith.divf %630, %631 : vector<8x128xf32>
    %633 = vector.extract_strided_slice %607 {offsets = [0, 128], sizes = [8, 128], strides = [1, 1]} : vector<8x384xf32> to vector<8x128xf32>
    %634 = vector.extract_strided_slice %616 {offsets = [0, 128], sizes = [8, 128], strides = [1, 1]} : vector<8x384xf32> to vector<8x128xf32>
    %635 = arith.addf %633, %634 : vector<8x128xf32>
    %636 = arith.negf %635 : vector<8x128xf32>
    %637 = math.exp %636 : vector<8x128xf32>
    %cst_277 = arith.constant 1.000000e+00 : f32
    %638 = vector.broadcast %cst_277 : f32 to vector<8x128xf32>
    %639 = arith.addf %638, %637 : vector<8x128xf32>
    %640 = arith.divf %638, %639 : vector<8x128xf32>
    %641 = vector.extract_strided_slice %607 {offsets = [0, 256], sizes = [8, 128], strides = [1, 1]} : vector<8x384xf32> to vector<8x128xf32>
    %642 = vector.extract_strided_slice %616 {offsets = [0, 256], sizes = [8, 128], strides = [1, 1]} : vector<8x384xf32> to vector<8x128xf32>
    %643 = arith.mulf %632, %642 : vector<8x128xf32>
    %644 = arith.addf %641, %643 : vector<8x128xf32>
    %645 = math.tanh %644 : vector<8x128xf32>
    %cst_278 = arith.constant 1.000000e+00 : f32
    %646 = vector.broadcast %cst_278 : f32 to vector<8x128xf32>
    %647 = arith.subf %646, %640 : vector<8x128xf32>
    %648 = arith.mulf %647, %645 : vector<8x128xf32>
    %649 = arith.mulf %640, %566 : vector<8x128xf32>
    %650 = arith.addf %648, %649 : vector<8x128xf32>
    %651 = vector.extract_strided_slice %608 {offsets = [0, 0], sizes = [8, 128], strides = [1, 1]} : vector<8x384xf32> to vector<8x128xf32>
    %652 = vector.extract_strided_slice %624 {offsets = [0, 0], sizes = [8, 128], strides = [1, 1]} : vector<8x384xf32> to vector<8x128xf32>
    %653 = arith.addf %651, %652 : vector<8x128xf32>
    %654 = arith.negf %653 : vector<8x128xf32>
    %655 = math.exp %654 : vector<8x128xf32>
    %cst_279 = arith.constant 1.000000e+00 : f32
    %656 = vector.broadcast %cst_279 : f32 to vector<8x128xf32>
    %657 = arith.addf %656, %655 : vector<8x128xf32>
    %658 = arith.divf %656, %657 : vector<8x128xf32>
    %659 = vector.extract_strided_slice %608 {offsets = [0, 128], sizes = [8, 128], strides = [1, 1]} : vector<8x384xf32> to vector<8x128xf32>
    %660 = vector.extract_strided_slice %624 {offsets = [0, 128], sizes = [8, 128], strides = [1, 1]} : vector<8x384xf32> to vector<8x128xf32>
    %661 = arith.addf %659, %660 : vector<8x128xf32>
    %662 = arith.negf %661 : vector<8x128xf32>
    %663 = math.exp %662 : vector<8x128xf32>
    %cst_280 = arith.constant 1.000000e+00 : f32
    %664 = vector.broadcast %cst_280 : f32 to vector<8x128xf32>
    %665 = arith.addf %664, %663 : vector<8x128xf32>
    %666 = arith.divf %664, %665 : vector<8x128xf32>
    %667 = vector.extract_strided_slice %608 {offsets = [0, 256], sizes = [8, 128], strides = [1, 1]} : vector<8x384xf32> to vector<8x128xf32>
    %668 = vector.extract_strided_slice %624 {offsets = [0, 256], sizes = [8, 128], strides = [1, 1]} : vector<8x384xf32> to vector<8x128xf32>
    %669 = arith.mulf %658, %668 : vector<8x128xf32>
    %670 = arith.addf %667, %669 : vector<8x128xf32>
    %671 = math.tanh %670 : vector<8x128xf32>
    %cst_281 = arith.constant 1.000000e+00 : f32
    %672 = vector.broadcast %cst_281 : f32 to vector<8x128xf32>
    %673 = arith.subf %672, %666 : vector<8x128xf32>
    %674 = arith.mulf %673, %671 : vector<8x128xf32>
    %675 = arith.mulf %666, %592 : vector<8x128xf32>
    %676 = arith.addf %674, %675 : vector<8x128xf32>
    %c7_282 = arith.constant 7 : index
    %c0_283 = arith.constant 0 : index
    %c0_284 = arith.constant 0 : index
    %677 = vector.load %arg2[%c7_282, %c0_283, %c0_284] : memref<8x8x1xf32, #tpu.memory_space<vmem>>, vector<1x8x1xf32>
    %678 = vector.shape_cast %677 : vector<1x8x1xf32> to vector<8x1xf32>
    %679 = vector.broadcast %678 : vector<8x1xf32> to vector<8x128xf32>
    %680 = arith.mulf %650, %679 : vector<8x128xf32>
    %c7_285 = arith.constant 7 : index
    %c0_286 = arith.constant 0 : index
    %c0_287 = arith.constant 0 : index
    %681 = vector.load %arg11[%c7_285, %c0_286, %c0_287] : memref<8x8x128xf32, #tpu.memory_space<vmem>>, vector<1x8x128xf32>
    %682 = vector.shape_cast %681 : vector<1x8x128xf32> to vector<8x128xf32>
    %683 = vector.shape_cast %680 : vector<8x128xf32> to vector<1x8x128xf32>
    tpu.vector_store %arg11[%c7_285, %c0_286, %c0_287], %683 {strides = array<i32>} : memref<8x8x128xf32, #tpu.memory_space<vmem>>, vector<1x8x128xf32>,
    %c0_288 = arith.constant 0 : index
    %c0_289 = arith.constant 0 : index
    %c0_290 = arith.constant 0 : index
    %684 = vector.load %arg2[%c0_288, %c0_289, %c0_290] : memref<8x8x1xf32, #tpu.memory_space<vmem>>, vector<1x8x1xf32>
    %685 = vector.shape_cast %684 : vector<1x8x1xf32> to vector<8x1xf32>
    %686 = vector.broadcast %685 : vector<8x1xf32> to vector<8x128xf32>
    %687 = arith.mulf %676, %686 : vector<8x128xf32>
    %c0_291 = arith.constant 0 : index
    %c0_292 = arith.constant 0 : index
    %c0_293 = arith.constant 0 : index
    %688 = vector.load %arg7[%c0_291, %c0_292, %c0_293] : memref<8x8x128xf32, #tpu.memory_space<vmem>>, vector<1x8x128xf32>
    %689 = vector.shape_cast %688 : vector<1x8x128xf32> to vector<8x128xf32>
    %690 = vector.shape_cast %687 : vector<8x128xf32> to vector<1x8x128xf32>
    tpu.vector_store %arg7[%c0_291, %c0_292, %c0_293], %690 {strides = array<i32>} : memref<8x8x128xf32, #tpu.memory_space<vmem>>, vector<1x8x128xf32>,
    %c0_294 = arith.constant 0 : index
    %c0_295 = arith.constant 0 : index
    %c0_296 = arith.constant 0 : index
    %691 = vector.load %arg7[%c0_294, %c0_295, %c0_296] : memref<8x8x128xf32, #tpu.memory_space<vmem>>, vector<8x8x128xf32>
    %c0_297 = arith.constant 0 : index
    %c0_298 = arith.constant 0 : index
    %c0_299 = arith.constant 0 : index
    %692 = vector.load %arg11[%c0_297, %c0_298, %c0_299] : memref<8x8x128xf32, #tpu.memory_space<vmem>>, vector<8x8x128xf32>
    %693 = arith.addf %691, %692 : vector<8x8x128xf32>
    %c0_300 = arith.constant 0 : index
    %c0_301 = arith.constant 0 : index
    %c0_302 = arith.constant 0 : index
    %694 = vector.load %arg7[%c0_300, %c0_301, %c0_302] : memref<8x8x128xf32, #tpu.memory_space<vmem>>, vector<8x8x128xf32>
    tpu.vector_store %arg7[%c0_300, %c0_301, %c0_302], %693 {strides = array<i32>} : memref<8x8x128xf32, #tpu.memory_space<vmem>>, vector<8x8x128xf32>,
    %695 = arith.addf %650, %676 : vector<8x128xf32>
    %c0_303 = arith.constant 0 : index
    %c0_304 = arith.constant 0 : index
    %696 = vector.load %arg8[%c0_303, %c0_304] : memref<8x128xf32, #tpu.memory_space<vmem>>, vector<8x128xf32>
    tpu.vector_store %arg8[%c0_303, %c0_304], %695 {strides = array<i32>} : memref<8x128xf32, #tpu.memory_space<vmem>>, vector<8x128xf32>,
    return
  }
  func.func @transform_0(%arg0: i32) -> (i32, i32) {
    %c0_i32 = arith.constant 0 : i32
    %c0_i32_0 = arith.constant 0 : i32
    %c0_i32_1 = arith.constant 0 : i32
    return %c0_i32, %c0_i32_0 : i32, i32
  }
  func.func @transform_1(%arg0: i32) -> (i32, i32, i32) {
    %c0_i32 = arith.constant 0 : i32
    %c0_i32_0 = arith.constant 0 : i32
    %c0_i32_1 = arith.constant 0 : i32
    %c0_i32_2 = arith.constant 0 : i32
    return %c0_i32, %c0_i32_0, %c0_i32_1 : i32, i32, i32
  }
  func.func @transform_2(%arg0: i32) -> (i32, i32, i32) {
    %c0_i32 = arith.constant 0 : i32
    %c0_i32_0 = arith.constant 0 : i32
    %c0_i32_1 = arith.constant 0 : i32
    %c0_i32_2 = arith.constant 0 : i32
    return %c0_i32, %c0_i32_0, %c0_i32_1 : i32, i32, i32
  }
  func.func @transform_3(%arg0: i32) -> (i32, i32, i32) {
    %c0_i32 = arith.constant 0 : i32
    %c0_i32_0 = arith.constant 0 : i32
    %c0_i32_1 = arith.constant 0 : i32
    %c0_i32_2 = arith.constant 0 : i32
    return %c0_i32, %c0_i32_0, %c0_i32_1 : i32, i32, i32
  }
  func.func @transform_4(%arg0: i32) -> (i32, i32, i32) {
    %c0_i32 = arith.constant 0 : i32
    %c0_i32_0 = arith.constant 0 : i32
    %c0_i32_1 = arith.constant 0 : i32
    %c0_i32_2 = arith.constant 0 : i32
    return %c0_i32, %c0_i32_0, %c0_i32_1 : i32, i32, i32
  }
  func.func @transform_5(%arg0: i32) -> (i32, i32, i32) {
    %c0_i32 = arith.constant 0 : i32
    %c0_i32_0 = arith.constant 0 : i32
    %c0_i32_1 = arith.constant 0 : i32
    %c0_i32_2 = arith.constant 0 : i32
    return %c0_i32, %c0_i32_0, %c0_i32_1 : i32, i32, i32
  }
  func.func @transform_6(%arg0: i32) -> (i32, i32, i32) {
    %c0_i32 = arith.constant 0 : i32
    %c0_i32_0 = arith.constant 0 : i32
    %c0_i32_1 = arith.constant 0 : i32
    %c0_i32_2 = arith.constant 0 : i32
    return %c0_i32, %c0_i32_0, %c0_i32_1 : i32, i32, i32
  }
  func.func @transform_7(%arg0: i32) -> (i32, i32) {
    %c0_i32 = arith.constant 0 : i32
    %c0_i32_0 = arith.constant 0 : i32
    %c0_i32_1 = arith.constant 0 : i32
    return %c0_i32, %c0_i32_0 : i32, i32
  }
}

</mosaic_0001>

<llo_original>
// kernel: tpu_custom_call.1
$region0: #{tpu_custom_call.1}
  #allocation0 [shape = 'u32[]', space=smem, size = 0x4, offset = 0x4, fixed_abs, tag = 'smem constant byte address 0x4 - core index']
  #allocation1 [shape = 'u32[144,128]{1,0:T(1,128)}', space=vmem, size = 0x12000, scoped, tag = 'internal scratch']
  #allocation2 [shape = 'f32[64,384]{1,0:T(8,128)}', space=vmem, size = 0x18000, scoped, tag = 'scratch operand']
  #allocation3 [shape = 'f32[64,384]{1,0:T(8,128)}', space=vmem, size = 0x18000, scoped, tag = 'scratch operand']
  #allocation4 [shape = 'f32[8,8,128]{2,1,0:T(8,128)}', space=vmem, size = 0x8000, scoped, tag = 'scratch operand']
  %s0 = inlined_call_operand.vmem [shape: bf16[64,128], index: 0, kind: input, shape index: {}]
  %s1 = inlined_call_operand.vmem [shape: f32[8,8,1], index: 1, kind: input, shape index: {}]
  %s2 = inlined_call_operand.hbm [shape: bf16[2,128,384], index: 2, kind: input, shape index: {}]
  %s3 = inlined_call_operand.hbm [shape: bf16[2,128,384], index: 3, kind: input, shape index: {}]
  %s4 = inlined_call_operand.vmem [shape: f32[2,1,384], index: 4, kind: input, shape index: {}]
  %s5 = inlined_call_operand.vmem [shape: f32[2,1,384], index: 5, kind: input, shape index: {}]
  %s6 = inlined_call_operand.hbm [shape: f32[8,8,128], index: 6, kind: output, shape index: {0}]
  %s7 = inlined_call_operand.hbm [shape: f32[8,128], index: 7, kind: output, shape index: {1}]
  %8 = xla_tuple %s6, %s7
  %s9 = sld [smem:[#allocation0]]
  $region50: #{tpu_custom_call.1} parent=0
    _
  %s11 = ssub.s32 1, %s9
  %s12 = scalar_select 0, %s11, %s9
  $region1: #{tpu_custom_call.1} parent=0
    #allocation5 [shape = 'u8[196608]{0}', space=vmem, size = 0x30000, scoped, tag = 'input window, operand 2, single buffered']
    #allocation6 [shape = 's32[1]{0}', space=sflag, size = 0x4, scoped, tag = 'scoped memory for tpu_custom_call.1']
    #allocation7 [shape = 's32[1]{0}', space=sflag, size = 0x4, scoped, tag = 'scoped memory for tpu_custom_call.1']
    #allocation8 [shape = 'u8[196608]{0}', space=vmem, size = 0x30000, scoped, tag = 'input window, operand 3, single buffered']
    #allocation9 [shape = 's32[1]{0}', space=sflag, size = 0x4, scoped, tag = 'scoped memory for tpu_custom_call.1']
    #allocation10 [shape = 'u8[32768]{0}', space=vmem, size = 0x8000, scoped, tag = 'output window, operand 0, single buffered']
    #allocation11 [shape = 'u8[4096]{0}', space=vmem, size = 0x1000, scoped, tag = 'output window, operand 1, single buffered']
    #allocation12 [shape = 's32[1]{0}', space=sflag, size = 0x4, scoped, tag = 'scoped memory for tpu_custom_call.1']
    %13 = vsyncpa [#allocation6], 0
    %14 = vsyncpa [#allocation9], 0
    %15 = vsyncpa [#allocation7], 0
    %16 = vsyncpa [#allocation12], 0
    // Predicated region
    $region2: #{tpu_custom_call.1} parent=1 // pred_check
      _
    $region3: #{tpu_custom_call.1} parent=1 // pred_check_branch
      %18 = sbr.rel (0) target = $region5
    $region4: #{tpu_custom_call.1} parent=1 // pred_region
      _
    $region5: #{tpu_custom_call.1} parent=1 // pred_fallthru
      _
    // Predicated region
    $region6: #{tpu_custom_call.1} parent=1 // pred_check
      _
    $region7: #{tpu_custom_call.1} parent=1 // pred_check_branch
      %20 = sbr.rel (0) target = $region9
    $region8: #{tpu_custom_call.1} parent=1 // pred_region
      _
    $region9: #{tpu_custom_call.1} parent=1 // pred_fallthru
      _
    // Predicated region
    $region10: #{tpu_custom_call.1} parent=1 // pred_check
      _
    $region11: #{tpu_custom_call.1} parent=1 // pred_check_branch
      %22 = sbr.rel (0) target = $region13
    $region12: #{tpu_custom_call.1} parent=1 // pred_region
      %s24 = ssub.s32 6144, 6144
      %25 = vsyncadd [#allocation6], %s24
      %s26 = sshll.u32 [#allocation5], 4
      %s27 = int_to_ptr.vmem [resolvable:$true] %s26
      %32 = dma.hbm_to_vmem [thread:$0]  %s2, 6144, %s27, [#allocation6], 192, 192, 12
    $region13: #{tpu_custom_call.1} parent=1 // pred_fallthru
      _
    // Predicated region
    $region14: #{tpu_custom_call.1} parent=1 // pred_check
      _
    $region15: #{tpu_custom_call.1} parent=1 // pred_check_branch
      %34 = sbr.rel (0) target = $region17
    $region16: #{tpu_custom_call.1} parent=1 // pred_region
      %s36 = ssub.s32 6144, 6144
      %37 = vsyncadd [#allocation9], %s36
      %s38 = sshll.u32 [#allocation8], 4
      %s39 = int_to_ptr.vmem [resolvable:$true] %s38
      %44 = dma.hbm_to_vmem [thread:$0]  %s3, 6144, %s39, [#allocation9], 192, 192, 12
    $region17: #{tpu_custom_call.1} parent=1 // pred_fallthru
      _
    // Predicated region
    $region18: #{tpu_custom_call.1} parent=1 // pred_check
      _
    $region19: #{tpu_custom_call.1} parent=1 // pred_check_branch
      %46 = sbr.rel (0) target = $region21
    $region20: #{tpu_custom_call.1} parent=1 // pred_region
      _
    $region21: #{tpu_custom_call.1} parent=1 // pred_fallthru
      _
    // Predicated region
    $region22: #{tpu_custom_call.1} parent=1 // pred_check
      _
    $region23: #{tpu_custom_call.1} parent=1 // pred_check_branch
      %48 = sbr.rel (0) target = $region25
    $region24: #{tpu_custom_call.1} parent=1 // pred_region
      _
    $region25: #{tpu_custom_call.1} parent=1 // pred_fallthru
      _
    // Predicated region
    $region26: #{tpu_custom_call.1} parent=1 // pred_check
      _
    $region27: #{tpu_custom_call.1} parent=1 // pred_check_branch
      %50 = sbr.rel (0) target = $region29
    $region28: #{tpu_custom_call.1} parent=1 // pred_region
      %51 = dma.done [#allocation6], 6144
    $region29: #{tpu_custom_call.1} parent=1 // pred_fallthru
      _
    // Predicated region
    $region30: #{tpu_custom_call.1} parent=1 // pred_check
      _
    $region31: #{tpu_custom_call.1} parent=1 // pred_check_branch
      %53 = sbr.rel (0) target = $region33
    $region32: #{tpu_custom_call.1} parent=1 // pred_region
      %54 = dma.done [#allocation9], 6144
    $region33: #{tpu_custom_call.1} parent=1 // pred_fallthru
      _
    %v56 = vld [vmem:[%s0] sm:$0xf]
    %v57 = vld [vmem:[%s0 + $0x4] sm:$0xf]
    %v58 = vld [vmem:[%s0 + $0x8] sm:$0xf]
    %v59 = vld [vmem:[%s0 + $0xc] sm:$0xf]
    %v60 = vld [vmem:[%s0 + $0x10] sm:$0xf]
    %v61 = vld [vmem:[%s0 + $0x14] sm:$0xf]
    %v62 = vld [vmem:[%s0 + $0x18] sm:$0xf]
    %v63 = vld [vmem:[%s0 + $0x1c] sm:$0xf]
    %v64 = vld [vmem:[#allocation5] sm:$0xff]
    %v65 = vld [vmem:[#allocation5 + $0x8] sm:$0xf]
    %v66 = vld [vmem:[#allocation5 + $0xc] sm:$0xff]
    %v67 = vld [vmem:[#allocation5 + $0x14] sm:$0xf]
    %v68 = vld [vmem:[#allocation5 + $0x18] sm:$0xff]
    %v69 = vld [vmem:[#allocation5 + $0x20] sm:$0xf]
    %v70 = vld [vmem:[#allocation5 + $0x24] sm:$0xff]
    %v71 = vld [vmem:[#allocation5 + $0x2c] sm:$0xf]
    %v72 = vld [vmem:[#allocation5 + $0x30] sm:$0xff]
    %v73 = vld [vmem:[#allocation5 + $0x38] sm:$0xf]
    %v74 = vld [vmem:[#allocation5 + $0x3c] sm:$0xff]
    %v75 = vld [vmem:[#allocation5 + $0x44] sm:$0xf]
    %v76 = vld [vmem:[#allocation5 + $0x48] sm:$0xff]
    %v77 = vld [vmem:[#allocation5 + $0x50] sm:$0xf]
    %v78 = vld [vmem:[#allocation5 + $0x54] sm:$0xff]
    %v79 = vld [vmem:[#allocation5 + $0x5c] sm:$0xf]
    %v80 = vld [vmem:[#allocation5 + $0x60] sm:$0xff]
    %v81 = vld [vmem:[#allocation5 + $0x68] sm:$0xf]
    %v82 = vld [vmem:[#allocation5 + $0x6c] sm:$0xff]
    %v83 = vld [vmem:[#allocation5 + $0x74] sm:$0xf]
    %v84 = vld [vmem:[#allocation5 + $0x78] sm:$0xff]
    %v85 = vld [vmem:[#allocation5 + $0x80] sm:$0xf]
    %v86 = vld [vmem:[#allocation5 + $0x84] sm:$0xff]
    %v87 = vld [vmem:[#allocation5 + $0x8c] sm:$0xf]
    %v88 = vld [vmem:[#allocation5 + $0x90] sm:$0xff]
    %v89 = vld [vmem:[#allocation5 + $0x98] sm:$0xf]
    %v90 = vld [vmem:[#allocation5 + $0x9c] sm:$0xff]
    %v91 = vld [vmem:[#allocation5 + $0xa4] sm:$0xf]
    %v92 = vld [vmem:[#allocation5 + $0xa8] sm:$0xff]
    %v93 = vld [vmem:[#allocation5 + $0xb0] sm:$0xf]
    %v94 = vld [vmem:[#allocation5 + $0xb4] sm:$0xff]
    %v95 = vld [vmem:[#allocation5 + $0xbc] sm:$0xf]
    %v96 = vld [vmem:[%s4] sm:$0x7]
    %v98 = vlaneseq
    %v99 = vshrl.u32 %v98, 7
    %v100 = vsub.s32 0, %v99
    %v101 = vrot.slane %v96, %v100
    %v102 = vlaneseq
    %v103 = vshrl.u32 %v102, 7
    %v104 = vsub.s32 1, %v103
    %v105 = vrot.slane %v96, %v104
    %v106 = vlaneseq
    %v107 = vshrl.u32 %v106, 7
    %v108 = vsub.s32 2, %v107
    %v109 = vrot.slane %v96, %v108
    %v121 = vunpack.c.l.b16 %v56
    %v122 = vunpack.c.l.b16 %v57
    %v123 = vunpack.c.l.b16 %v58
    %v124 = vunpack.c.l.b16 %v59
    %v125 = vunpack.c.l.b16 %v60
    %v126 = vunpack.c.l.b16 %v61
    %v127 = vunpack.c.l.b16 %v62
    %v128 = vunpack.c.l.b16 %v63
    %v129 = vpack.c.b16 %v122, %v121
    %v130 = vpack.c.b16 %v124, %v123
    %v131 = vpack.c.b16 %v126, %v125
    %v132 = vpack.c.b16 %v128, %v127
    %v169 = vunpack.c.l.b16 %v64
    %v170 = vunpack.c.h.b16 %v64
    %v171 = vunpack.c.l.b16 %v65
    %v172 = vunpack.c.l.b16 %v66
    %v173 = vunpack.c.h.b16 %v66
    %v174 = vunpack.c.l.b16 %v67
    %v175 = vunpack.c.l.b16 %v68
    %v176 = vunpack.c.h.b16 %v68
    %v177 = vunpack.c.l.b16 %v69
    %v178 = vunpack.c.l.b16 %v70
    %v179 = vunpack.c.h.b16 %v70
    %v180 = vunpack.c.l.b16 %v71
    %v181 = vunpack.c.l.b16 %v72
    %v182 = vunpack.c.h.b16 %v72
    %v183 = vunpack.c.l.b16 %v73
    %v184 = vunpack.c.l.b16 %v74
    %v185 = vunpack.c.h.b16 %v74
    %v186 = vunpack.c.l.b16 %v75
    %v187 = vunpack.c.l.b16 %v76
    %v188 = vunpack.c.h.b16 %v76
    %v189 = vunpack.c.l.b16 %v77
    %v190 = vunpack.c.l.b16 %v78
    %v191 = vunpack.c.h.b16 %v78
    %v192 = vunpack.c.l.b16 %v79
    %v193 = vunpack.c.l.b16 %v80
    %v194 = vunpack.c.h.b16 %v80
    %v195 = vunpack.c.l.b16 %v81
    %v196 = vunpack.c.l.b16 %v82
    %v197 = vunpack.c.h.b16 %v82
    %v198 = vunpack.c.l.b16 %v83
    %v199 = vunpack.c.l.b16 %v84
    %v200 = vunpack.c.h.b16 %v84
    %v201 = vunpack.c.l.b16 %v85
    %v202 = vunpack.c.l.b16 %v86
    %v203 = vunpack.c.h.b16 %v86
    %v204 = vunpack.c.l.b16 %v87
    %v205 = vunpack.c.l.b16 %v88
    %v206 = vunpack.c.h.b16 %v88
    %v207 = vunpack.c.l.b16 %v89
    %v208 = vunpack.c.l.b16 %v90
    %v209 = vunpack.c.h.b16 %v90
    %v210 = vunpack.c.l.b16 %v91
    %v211 = vunpack.c.l.b16 %v92
    %v212 = vunpack.c.h.b16 %v92
    %v213 = vunpack.c.l.b16 %v93
    %v214 = vunpack.c.l.b16 %v94
    %v215 = vunpack.c.h.b16 %v94
    %v216 = vunpack.c.l.b16 %v95
    %v217 = vpack.c.b16 %v172, %v169
    %v218 = vpack.c.b16 %v173, %v170
    %v219 = vpack.c.b16 %v174, %v171
    %v220 = vpack.c.b16 %v178, %v175
    %v221 = vpack.c.b16 %v179, %v176
    %v222 = vpack.c.b16 %v180, %v177
    %v223 = vpack.c.b16 %v184, %v181
    %v224 = vpack.c.b16 %v185, %v182
    %v225 = vpack.c.b16 %v186, %v183
    %v226 = vpack.c.b16 %v190, %v187
    %v227 = vpack.c.b16 %v191, %v188
    %v228 = vpack.c.b16 %v192, %v189
    %v229 = vpack.c.b16 %v196, %v193
    %v230 = vpack.c.b16 %v197, %v194
    %v231 = vpack.c.b16 %v198, %v195
    %v232 = vpack.c.b16 %v202, %v199
    %v233 = vpack.c.b16 %v203, %v200
    %v234 = vpack.c.b16 %v204, %v201
    %v235 = vpack.c.b16 %v208, %v205
    %v236 = vpack.c.b16 %v209, %v206
    %v237 = vpack.c.b16 %v210, %v207
    %v238 = vpack.c.b16 %v214, %v211
    %v239 = vpack.c.b16 %v215, %v212
    %v240 = vpack.c.b16 %v216, %v213
    %265 = vmatprep.subr.bf16.mxu0 %v218
    %266 = vmatpush1.bf16.msra.mxu0 %v217
    %267 = vmatprep.subr.bf16.mxu0 %v221
    %268 = vmatpush1.bf16.msra.mxu0 %v220
    %269 = vmatprep.subr.bf16.mxu0 %v224
    %270 = vmatpush1.bf16.msra.mxu0 %v223
    %271 = vmatprep.subr.bf16.mxu0 %v227
    %272 = vmatpush1.bf16.msra.mxu0 %v226
    %273 = vmatprep.subr.bf16.mxu0 %v230
    %274 = vmatpush1.bf16.msra.mxu0 %v229
    %275 = vmatprep.subr.bf16.mxu0 %v233
    %276 = vmatpush1.bf16.msra.mxu0 %v232
    %277 = vmatprep.subr.bf16.mxu0 %v236
    %278 = vmatpush1.bf16.msra.mxu0 %v235
    %279 = vmatprep.subr.bf16.mxu0 %v239
    %280 = vmatpush1.bf16.msra.mxu0 %v238
    %281 = vmatprep.subr.bf16.mxu0 0
    %282 = vmatpush1.bf16.msra.mxu0 0
    %283 = vmatprep.subr.bf16.mxu0 0
    %284 = vmatpush1.bf16.msra.mxu0 0
    %285 = vmatprep.subr.bf16.mxu0 0
    %286 = vmatpush1.bf16.msra.mxu0 0
    %287 = vmatprep.subr.bf16.mxu0 0
    %288 = vmatpush1.bf16.msra.mxu0 0
    %289 = vmatprep.subr.bf16.mxu0 0
    %290 = vmatpush1.bf16.msra.mxu0 0
    %291 = vmatprep.subr.bf16.mxu0 0
    %292 = vmatpush1.bf16.msra.mxu0 0
    %293 = vmatprep.subr.bf16.mxu0 0
    %294 = vmatpush1.bf16.msra.mxu0 0
    %295 = vmatprep.subr.bf16.mxu0 0
    %296 = vmatpush1.bf16.msra.mxu0 0
    %297 = vmatprep.mubr.bf16.mxu0 0
    %298 = vmatmul.mubr.bf16.gmra.mrb[0].mxu0 %v129
    %v299 = vpop.f32.mrb[0].mxu0
    %v300 = vadd.f32 %v101, %v299
    %v301 = vpop.f32.mrb[0].mxu0
    %v302 = vadd.f32 %v105, %v301
    %v303 = vpop.f32.mrb[0].mxu0
    %v304 = vadd.f32 %v101, %v303
    %v305 = vpop.f32.mrb[0].mxu0
    %v306 = vadd.f32 %v105, %v305
    %307 = vmatprep.mubr.bf16.mxu0 0
    %308 = vmatmul.mubr.bf16.gmra.mrb[0].mxu0 %v130
    %v309 = vpop.f32.mrb[0].mxu0
    %v310 = vadd.f32 %v101, %v309
    %v311 = vpop.f32.mrb[0].mxu0
    %v312 = vadd.f32 %v105, %v311
    %v313 = vpop.f32.mrb[0].mxu0
    %v314 = vadd.f32 %v101, %v313
    %v315 = vpop.f32.mrb[0].mxu0
    %v316 = vadd.f32 %v105, %v315
    %317 = vmatprep.mubr.bf16.mxu0 0
    %318 = vmatmul.mubr.bf16.gmra.mrb[0].mxu0 %v131
    %v319 = vpop.f32.mrb[0].mxu0
    %v320 = vadd.f32 %v101, %v319
    %v321 = vpop.f32.mrb[0].mxu0
    %v322 = vadd.f32 %v105, %v321
    %v323 = vpop.f32.mrb[0].mxu0
    %v324 = vadd.f32 %v101, %v323
    %v325 = vpop.f32.mrb[0].mxu0
    %v326 = vadd.f32 %v105, %v325
    %327 = vmatprep.mubr.bf16.mxu0 0
    %328 = vmatmul.mubr.bf16.gmra.mrb[0].mxu0 %v132
    %v329 = vpop.f32.mrb[0].mxu0
    %v330 = vadd.f32 %v101, %v329
    %v331 = vpop.f32.mrb[0].mxu0
    %v332 = vadd.f32 %v105, %v331
    %v333 = vpop.f32.mrb[0].mxu0
    %v334 = vadd.f32 %v101, %v333
    %v335 = vpop.f32.mrb[0].mxu0
    %v336 = vadd.f32 %v105, %v335
    %337 = vdwg.mxu0
    %338 = vmatprep.subr.bf16.mxu0 0
    %339 = vmatpush1.bf16.msra.mxu0 %v219
    %340 = vmatprep.subr.bf16.mxu0 0
    %341 = vmatpush1.bf16.msra.mxu0 %v222
    %342 = vmatprep.subr.bf16.mxu0 0
    %343 = vmatpush1.bf16.msra.mxu0 %v225
    %344 = vmatprep.subr.bf16.mxu0 0
    %345 = vmatpush1.bf16.msra.mxu0 %v228
    %346 = vmatprep.subr.bf16.mxu0 0
    %347 = vmatpush1.bf16.msra.mxu0 %v231
    %348 = vmatprep.subr.bf16.mxu0 0
    %349 = vmatpush1.bf16.msra.mxu0 %v234
    %350 = vmatprep.subr.bf16.mxu0 0
    %351 = vmatpush1.bf16.msra.mxu0 %v237
    %352 = vmatprep.subr.bf16.mxu0 0
    %353 = vmatpush1.bf16.msra.mxu0 %v240
    %354 = vmatprep.subr.bf16.mxu0 0
    %355 = vmatpush1.bf16.msra.mxu0 0
    %356 = vmatprep.subr.bf16.mxu0 0
    %357 = vmatpush1.bf16.msra.mxu0 0
    %358 = vmatprep.subr.bf16.mxu0 0
    %359 = vmatpush1.bf16.msra.mxu0 0
    %360 = vmatprep.subr.bf16.mxu0 0
    %361 = vmatpush1.bf16.msra.mxu0 0
    %362 = vmatprep.subr.bf16.mxu0 0
    %363 = vmatpush1.bf16.msra.mxu0 0
    %364 = vmatprep.subr.bf16.mxu0 0
    %365 = vmatpush1.bf16.msra.mxu0 0
    %366 = vmatprep.subr.bf16.mxu0 0
    %367 = vmatpush1.bf16.msra.mxu0 0
    %368 = vmatprep.subr.bf16.mxu0 0
    %369 = vmatpush1.bf16.msra.mxu0 0
    %370 = vmatprep.mubr.bf16.mxu0 0
    %371 = vmatmul.mubr.bf16.gmra.mrb[0].mxu0 %v129
    %v372 = vpop.f32.mrb[0].mxu0
    %v373 = vadd.f32 %v109, %v372
    %v374 = vpop.f32.mrb[0].mxu0
    %v375 = vpop.f32.mrb[0].mxu0
    %v376 = vadd.f32 %v109, %v375
    %v377 = vpop.f32.mrb[0].mxu0
    %378 = vmatprep.mubr.bf16.mxu0 0
    %379 = vmatmul.mubr.bf16.gmra.mrb[0].mxu0 %v130
    %v380 = vpop.f32.mrb[0].mxu0
    %v381 = vadd.f32 %v109, %v380
    %v382 = vpop.f32.mrb[0].mxu0
    %v383 = vpop.f32.mrb[0].mxu0
    %v384 = vadd.f32 %v109, %v383
    %v385 = vpop.f32.mrb[0].mxu0
    %386 = vmatprep.mubr.bf16.mxu0 0
    %387 = vmatmul.mubr.bf16.gmra.mrb[0].mxu0 %v131
    %v388 = vpop.f32.mrb[0].mxu0
    %v389 = vadd.f32 %v109, %v388
    %v390 = vpop.f32.mrb[0].mxu0
    %v391 = vpop.f32.mrb[0].mxu0
    %v392 = vadd.f32 %v109, %v391
    %v393 = vpop.f32.mrb[0].mxu0
    %394 = vmatprep.mubr.bf16.mxu0 0
    %395 = vmatmul.mubr.bf16.gmra.mrb[0].mxu0 %v132
    %v396 = vpop.f32.mrb[0].mxu0
    %v397 = vadd.f32 %v109, %v396
    %v398 = vpop.f32.mrb[0].mxu0
    %v399 = vpop.f32.mrb[0].mxu0
    %v400 = vadd.f32 %v109, %v399
    %v401 = vpop.f32.mrb[0].mxu0
    %402 = vdwg.mxu0
    %403 = vst [vmem:[#allocation2] sm:$0xff] %v300
    %404 = vst [vmem:[#allocation2 + $0x8] sm:$0xff] %v302
    %405 = vst [vmem:[#allocation2 + $0x10] sm:$0xff] %v373
    %406 = vst [vmem:[#allocation2 + $0x18] sm:$0xff] %v304
    %407 = vst [vmem:[#allocation2 + $0x20] sm:$0xff] %v306
    %408 = vst [vmem:[#allocation2 + $0x28] sm:$0xff] %v376
    %409 = vst [vmem:[#allocation2 + $0x30] sm:$0xff] %v310
    %410 = vst [vmem:[#allocation2 + $0x38] sm:$0xff] %v312
    %411 = vst [vmem:[#allocation2 + $0x40] sm:$0xff] %v381
    %412 = vst [vmem:[#allocation2 + $0x48] sm:$0xff] %v314
    %413 = vst [vmem:[#allocation2 + $0x50] sm:$0xff] %v316
    %414 = vst [vmem:[#allocation2 + $0x58] sm:$0xff] %v384
    %415 = vst [vmem:[#allocation2 + $0x60] sm:$0xff] %v320
    %416 = vst [vmem:[#allocation2 + $0x68] sm:$0xff] %v322
    %417 = vst [vmem:[#allocation2 + $0x70] sm:$0xff] %v389
    %418 = vst [vmem:[#allocation2 + $0x78] sm:$0xff] %v324
    %419 = vst [vmem:[#allocation2 + $0x80] sm:$0xff] %v326
    %420 = vst [vmem:[#allocation2 + $0x88] sm:$0xff] %v392
    %421 = vst [vmem:[#allocation2 + $0x90] sm:$0xff] %v330
    %422 = vst [vmem:[#allocation2 + $0x98] sm:$0xff] %v332
    %423 = vst [vmem:[#allocation2 + $0xa0] sm:$0xff] %v397
    %424 = vst [vmem:[#allocation2 + $0xa8] sm:$0xff] %v334
    %425 = vst [vmem:[#allocation2 + $0xb0] sm:$0xff] %v336
    %426 = vst [vmem:[#allocation2 + $0xb8] sm:$0xff] %v400
    %s427 = scalar_lea.vmem [#allocation5], 192
    %v428 = vld [vmem:[%s427] sm:$0xff]
    %v429 = vld [vmem:[%s427 + $0x8] sm:$0xf]
    %v430 = vld [vmem:[%s427 + $0xc] sm:$0xff]
    %v431 = vld [vmem:[%s427 + $0x14] sm:$0xf]
    %v432 = vld [vmem:[%s427 + $0x18] sm:$0xff]
    %v433 = vld [vmem:[%s427 + $0x20] sm:$0xf]
    %v434 = vld [vmem:[%s427 + $0x24] sm:$0xff]
    %v435 = vld [vmem:[%s427 + $0x2c] sm:$0xf]
    %v436 = vld [vmem:[%s427 + $0x30] sm:$0xff]
    %v437 = vld [vmem:[%s427 + $0x38] sm:$0xf]
    %v438 = vld [vmem:[%s427 + $0x3c] sm:$0xff]
    %v439 = vld [vmem:[%s427 + $0x44] sm:$0xf]
    %v440 = vld [vmem:[%s427 + $0x48] sm:$0xff]
    %v441 = vld [vmem:[%s427 + $0x50] sm:$0xf]
    %v442 = vld [vmem:[%s427 + $0x54] sm:$0xff]
    %v443 = vld [vmem:[%s427 + $0x5c] sm:$0xf]
    %v444 = vld [vmem:[%s427 + $0x60] sm:$0xff]
    %v445 = vld [vmem:[%s427 + $0x68] sm:$0xf]
    %v446 = vld [vmem:[%s427 + $0x6c] sm:$0xff]
    %v447 = vld [vmem:[%s427 + $0x74] sm:$0xf]
    %v448 = vld [vmem:[%s427 + $0x78] sm:$0xff]
    %v449 = vld [vmem:[%s427 + $0x80] sm:$0xf]
    %v450 = vld [vmem:[%s427 + $0x84] sm:$0xff]
    %v451 = vld [vmem:[%s427 + $0x8c] sm:$0xf]
    %v452 = vld [vmem:[%s427 + $0x90] sm:$0xff]
    %v453 = vld [vmem:[%s427 + $0x98] sm:$0xf]
    %v454 = vld [vmem:[%s427 + $0x9c] sm:$0xff]
    %v455 = vld [vmem:[%s427 + $0xa4] sm:$0xf]
    %v456 = vld [vmem:[%s427 + $0xa8] sm:$0xff]
    %v457 = vld [vmem:[%s427 + $0xb0] sm:$0xf]
    %v458 = vld [vmem:[%s427 + $0xb4] sm:$0xff]
    %v459 = vld [vmem:[%s427 + $0xbc] sm:$0xf]
    %s460 = scalar_lea.vmem %s4, 3
    %v461 = vld [vmem:[%s460] sm:$0x7]
    %v463 = vlaneseq
    %v464 = vshrl.u32 %v463, 7
    %v465 = vsub.s32 0, %v464
    %v466 = vrot.slane %v461, %v465
    %v467 = vlaneseq
    %v468 = vshrl.u32 %v467, 7
    %v469 = vsub.s32 1, %v468
    %v470 = vrot.slane %v461, %v469
    %v471 = vlaneseq
    %v472 = vshrl.u32 %v471, 7
    %v473 = vsub.s32 2, %v472
    %v474 = vrot.slane %v461, %v473
    %v510 = vunpack.c.l.b16 %v428
    %v511 = vunpack.c.h.b16 %v428
    %v512 = vunpack.c.l.b16 %v429
    %v513 = vunpack.c.l.b16 %v430
    %v514 = vunpack.c.h.b16 %v430
    %v515 = vunpack.c.l.b16 %v431
    %v516 = vunpack.c.l.b16 %v432
    %v517 = vunpack.c.h.b16 %v432
    %v518 = vunpack.c.l.b16 %v433
    %v519 = vunpack.c.l.b16 %v434
    %v520 = vunpack.c.h.b16 %v434
    %v521 = vunpack.c.l.b16 %v435
    %v522 = vunpack.c.l.b16 %v436
    %v523 = vunpack.c.h.b16 %v436
    %v524 = vunpack.c.l.b16 %v437
    %v525 = vunpack.c.l.b16 %v438
    %v526 = vunpack.c.h.b16 %v438
    %v527 = vunpack.c.l.b16 %v439
    %v528 = vunpack.c.l.b16 %v440
    %v529 = vunpack.c.h.b16 %v440
    %v530 = vunpack.c.l.b16 %v441
    %v531 = vunpack.c.l.b16 %v442
    %v532 = vunpack.c.h.b16 %v442
    %v533 = vunpack.c.l.b16 %v443
    %v534 = vunpack.c.l.b16 %v444
    %v535 = vunpack.c.h.b16 %v444
    %v536 = vunpack.c.l.b16 %v445
    %v537 = vunpack.c.l.b16 %v446
    %v538 = vunpack.c.h.b16 %v446
    %v539 = vunpack.c.l.b16 %v447
    %v540 = vunpack.c.l.b16 %v448
    %v541 = vunpack.c.h.b16 %v448
    %v542 = vunpack.c.l.b16 %v449
    %v543 = vunpack.c.l.b16 %v450
    %v544 = vunpack.c.h.b16 %v450
    %v545 = vunpack.c.l.b16 %v451
    %v546 = vunpack.c.l.b16 %v452
    %v547 = vunpack.c.h.b16 %v452
    %v548 = vunpack.c.l.b16 %v453
    %v549 = vunpack.c.l.b16 %v454
    %v550 = vunpack.c.h.b16 %v454
    %v551 = vunpack.c.l.b16 %v455
    %v552 = vunpack.c.l.b16 %v456
    %v553 = vunpack.c.h.b16 %v456
    %v554 = vunpack.c.l.b16 %v457
    %v555 = vunpack.c.l.b16 %v458
    %v556 = vunpack.c.h.b16 %v458
    %v557 = vunpack.c.l.b16 %v459
    %v558 = vpack.c.b16 %v513, %v510
    %v559 = vpack.c.b16 %v514, %v511
    %v560 = vpack.c.b16 %v515, %v512
    %v561 = vpack.c.b16 %v519, %v516
    %v562 = vpack.c.b16 %v520, %v517
    %v563 = vpack.c.b16 %v521, %v518
    %v564 = vpack.c.b16 %v525, %v522
    %v565 = vpack.c.b16 %v526, %v523
    %v566 = vpack.c.b16 %v527, %v524
    %v567 = vpack.c.b16 %v531, %v528
    %v568 = vpack.c.b16 %v532, %v529
    %v569 = vpack.c.b16 %v533, %v530
    %v570 = vpack.c.b16 %v537, %v534
    %v571 = vpack.c.b16 %v538, %v535
    %v572 = vpack.c.b16 %v539, %v536
    %v573 = vpack.c.b16 %v543, %v540
    %v574 = vpack.c.b16 %v544, %v541
    %v575 = vpack.c.b16 %v545, %v542
    %v576 = vpack.c.b16 %v549, %v546
    %v577 = vpack.c.b16 %v550, %v547
    %v578 = vpack.c.b16 %v551, %v548
    %v579 = vpack.c.b16 %v555, %v552
    %v580 = vpack.c.b16 %v556, %v553
    %v581 = vpack.c.b16 %v557, %v554
    %606 = vmatprep.subr.bf16.mxu0 %v559
    %607 = vmatpush1.bf16.msra.mxu0 %v558
    %608 = vmatprep.subr.bf16.mxu0 %v562
    %609 = vmatpush1.bf16.msra.mxu0 %v561
    %610 = vmatprep.subr.bf16.mxu0 %v565
    %611 = vmatpush1.bf16.msra.mxu0 %v564
    %612 = vmatprep.subr.bf16.mxu0 %v568
    %613 = vmatpush1.bf16.msra.mxu0 %v567
    %614 = vmatprep.subr.bf16.mxu0 %v571
    %615 = vmatpush1.bf16.msra.mxu0 %v570
    %616 = vmatprep.subr.bf16.mxu0 %v574
    %617 = vmatpush1.bf16.msra.mxu0 %v573
    %618 = vmatprep.subr.bf16.mxu0 %v577
    %619 = vmatpush1.bf16.msra.mxu0 %v576
    %620 = vmatprep.subr.bf16.mxu0 %v580
    %621 = vmatpush1.bf16.msra.mxu0 %v579
    %622 = vmatprep.subr.bf16.mxu0 0
    %623 = vmatpush1.bf16.msra.mxu0 0
    %624 = vmatprep.subr.bf16.mxu0 0
    %625 = vmatpush1.bf16.msra.mxu0 0
    %626 = vmatprep.subr.bf16.mxu0 0
    %627 = vmatpush1.bf16.msra.mxu0 0
    %628 = vmatprep.subr.bf16.mxu0 0
    %629 = vmatpush1.bf16.msra.mxu0 0
    %630 = vmatprep.subr.bf16.mxu0 0
    %631 = vmatpush1.bf16.msra.mxu0 0
    %632 = vmatprep.subr.bf16.mxu0 0
    %633 = vmatpush1.bf16.msra.mxu0 0
    %634 = vmatprep.subr.bf16.mxu0 0
    %635 = vmatpush1.bf16.msra.mxu0 0
    %636 = vmatprep.subr.bf16.mxu0 0
    %637 = vmatpush1.bf16.msra.mxu0 0
    %638 = vmatprep.mubr.bf16.mxu0 0
    %639 = vmatmul.mubr.bf16.gmra.mrb[0].mxu0 %v129
    %v640 = vpop.f32.mrb[0].mxu0
    %v641 = vadd.f32 %v466, %v640
    %v642 = vpop.f32.mrb[0].mxu0
    %v643 = vadd.f32 %v470, %v642
    %v644 = vpop.f32.mrb[0].mxu0
    %v645 = vadd.f32 %v466, %v644
    %v646 = vpop.f32.mrb[0].mxu0
    %v647 = vadd.f32 %v470, %v646
    %648 = vmatprep.mubr.bf16.mxu0 0
    %649 = vmatmul.mubr.bf16.gmra.mrb[0].mxu0 %v130
    %v650 = vpop.f32.mrb[0].mxu0
    %v651 = vadd.f32 %v466, %v650
    %v652 = vpop.f32.mrb[0].mxu0
    %v653 = vadd.f32 %v470, %v652
    %v654 = vpop.f32.mrb[0].mxu0
    %v655 = vadd.f32 %v466, %v654
    %v656 = vpop.f32.mrb[0].mxu0
    %v657 = vadd.f32 %v470, %v656
    %658 = vmatprep.mubr.bf16.mxu0 0
    %659 = vmatmul.mubr.bf16.gmra.mrb[0].mxu0 %v131
    %v660 = vpop.f32.mrb[0].mxu0
    %v661 = vadd.f32 %v466, %v660
    %v662 = vpop.f32.mrb[0].mxu0
    %v663 = vadd.f32 %v470, %v662
    %v664 = vpop.f32.mrb[0].mxu0
    %v665 = vadd.f32 %v466, %v664
    %v666 = vpop.f32.mrb[0].mxu0
    %v667 = vadd.f32 %v470, %v666
    %668 = vmatprep.mubr.bf16.mxu0 0
    %669 = vmatmul.mubr.bf16.gmra.mrb[0].mxu0 %v132
    %v670 = vpop.f32.mrb[0].mxu0
    %v671 = vadd.f32 %v466, %v670
    %v672 = vpop.f32.mrb[0].mxu0
    %v673 = vadd.f32 %v470, %v672
    %v674 = vpop.f32.mrb[0].mxu0
    %v675 = vadd.f32 %v466, %v674
    %v676 = vpop.f32.mrb[0].mxu0
    %v677 = vadd.f32 %v470, %v676
    %678 = vdwg.mxu0
    %679 = vmatprep.subr.bf16.mxu0 0
    %680 = vmatpush1.bf16.msra.mxu0 %v560
    %681 = vmatprep.subr.bf16.mxu0 0
    %682 = vmatpush1.bf16.msra.mxu0 %v563
    %683 = vmatprep.subr.bf16.mxu0 0
    %684 = vmatpush1.bf16.msra.mxu0 %v566
    %685 = vmatprep.subr.bf16.mxu0 0
    %686 = vmatpush1.bf16.msra.mxu0 %v569
    %687 = vmatprep.subr.bf16.mxu0 0
    %688 = vmatpush1.bf16.msra.mxu0 %v572
    %689 = vmatprep.subr.bf16.mxu0 0
    %690 = vmatpush1.bf16.msra.mxu0 %v575
    %691 = vmatprep.subr.bf16.mxu0 0
    %692 = vmatpush1.bf16.msra.mxu0 %v578
    %693 = vmatprep.subr.bf16.mxu0 0
    %694 = vmatpush1.bf16.msra.mxu0 %v581
    %695 = vmatprep.subr.bf16.mxu0 0
    %696 = vmatpush1.bf16.msra.mxu0 0
    %697 = vmatprep.subr.bf16.mxu0 0
    %698 = vmatpush1.bf16.msra.mxu0 0
    %699 = vmatprep.subr.bf16.mxu0 0
    %700 = vmatpush1.bf16.msra.mxu0 0
    %701 = vmatprep.subr.bf16.mxu0 0
    %702 = vmatpush1.bf16.msra.mxu0 0
    %703 = vmatprep.subr.bf16.mxu0 0
    %704 = vmatpush1.bf16.msra.mxu0 0
    %705 = vmatprep.subr.bf16.mxu0 0
    %706 = vmatpush1.bf16.msra.mxu0 0
    %707 = vmatprep.subr.bf16.mxu0 0
    %708 = vmatpush1.bf16.msra.mxu0 0
    %709 = vmatprep.subr.bf16.mxu0 0
    %710 = vmatpush1.bf16.msra.mxu0 0
    %711 = vmatprep.mubr.bf16.mxu0 0
    %712 = vmatmul.mubr.bf16.gmra.mrb[0].mxu0 %v129
    %v713 = vpop.f32.mrb[0].mxu0
    %v714 = vadd.f32 %v474, %v713
    %v715 = vpop.f32.mrb[0].mxu0
    %v716 = vpop.f32.mrb[0].mxu0
    %v717 = vadd.f32 %v474, %v716
    %v718 = vpop.f32.mrb[0].mxu0
    %719 = vmatprep.mubr.bf16.mxu0 0
    %720 = vmatmul.mubr.bf16.gmra.mrb[0].mxu0 %v130
    %v721 = vpop.f32.mrb[0].mxu0
    %v722 = vadd.f32 %v474, %v721
    %v723 = vpop.f32.mrb[0].mxu0
    %v724 = vpop.f32.mrb[0].mxu0
    %v725 = vadd.f32 %v474, %v724
    %v726 = vpop.f32.mrb[0].mxu0
    %727 = vmatprep.mubr.bf16.mxu0 0
    %728 = vmatmul.mubr.bf16.gmra.mrb[0].mxu0 %v131
    %v729 = vpop.f32.mrb[0].mxu0
    %v730 = vadd.f32 %v474, %v729
    %v731 = vpop.f32.mrb[0].mxu0
    %v732 = vpop.f32.mrb[0].mxu0
    %v733 = vadd.f32 %v474, %v732
    %v734 = vpop.f32.mrb[0].mxu0
    %735 = vmatprep.mubr.bf16.mxu0 0
    %736 = vmatmul.mubr.bf16.gmra.mrb[0].mxu0 %v132
    %v737 = vpop.f32.mrb[0].mxu0
    %v738 = vadd.f32 %v474, %v737
    %v739 = vpop.f32.mrb[0].mxu0
    %v740 = vpop.f32.mrb[0].mxu0
    %v741 = vadd.f32 %v474, %v740
    %v742 = vpop.f32.mrb[0].mxu0
    %743 = vdwg.mxu0
    %744 = vst [vmem:[#allocation3] sm:$0xff] %v641
    %745 = vst [vmem:[#allocation3 + $0x8] sm:$0xff] %v643
    %746 = vst [vmem:[#allocation3 + $0x10] sm:$0xff] %v714
    %747 = vst [vmem:[#allocation3 + $0x18] sm:$0xff] %v645
    %748 = vst [vmem:[#allocation3 + $0x20] sm:$0xff] %v647
    %749 = vst [vmem:[#allocation3 + $0x28] sm:$0xff] %v717
    %750 = vst [vmem:[#allocation3 + $0x30] sm:$0xff] %v651
    %751 = vst [vmem:[#allocation3 + $0x38] sm:$0xff] %v653
    %752 = vst [vmem:[#allocation3 + $0x40] sm:$0xff] %v722
    %753 = vst [vmem:[#allocation3 + $0x48] sm:$0xff] %v655
    %754 = vst [vmem:[#allocation3 + $0x50] sm:$0xff] %v657
    %755 = vst [vmem:[#allocation3 + $0x58] sm:$0xff] %v725
    %756 = vst [vmem:[#allocation3 + $0x60] sm:$0xff] %v661
    %757 = vst [vmem:[#allocation3 + $0x68] sm:$0xff] %v663
    %758 = vst [vmem:[#allocation3 + $0x70] sm:$0xff] %v730
    %759 = vst [vmem:[#allocation3 + $0x78] sm:$0xff] %v665
    %760 = vst [vmem:[#allocation3 + $0x80] sm:$0xff] %v667
    %761 = vst [vmem:[#allocation3 + $0x88] sm:$0xff] %v733
    %762 = vst [vmem:[#allocation3 + $0x90] sm:$0xff] %v671
    %763 = vst [vmem:[#allocation3 + $0x98] sm:$0xff] %v673
    %764 = vst [vmem:[#allocation3 + $0xa0] sm:$0xff] %v738
    %765 = vst [vmem:[#allocation3 + $0xa8] sm:$0xff] %v675
    %766 = vst [vmem:[#allocation3 + $0xb0] sm:$0xff] %v677
    %767 = vst [vmem:[#allocation3 + $0xb8] sm:$0xff] %v741
    %v768 = vld [vmem:[#allocation2] sm:$0xff]
    %v769 = vld [vmem:[#allocation2 + $0x8] sm:$0xff]
    %v770 = vld [vmem:[#allocation2 + $0x10] sm:$0xff]
    %v771 = vld [vmem:[#allocation3 + $0xa8] sm:$0xff]
    %v772 = vld [vmem:[#allocation3 + $0xb0] sm:$0xff]
    %v773 = vld [vmem:[#allocation3 + $0xb8] sm:$0xff]
    %v774 = vld [vmem:[#allocation8] sm:$0xff]
    %v775 = vld [vmem:[#allocation8 + $0x8] sm:$0xf]
    %v776 = vld [vmem:[#allocation8 + $0xc] sm:$0xff]
    %v777 = vld [vmem:[#allocation8 + $0x14] sm:$0xf]
    %v778 = vld [vmem:[#allocation8 + $0x18] sm:$0xff]
    %v779 = vld [vmem:[#allocation8 + $0x20] sm:$0xf]
    %v780 = vld [vmem:[#allocation8 + $0x24] sm:$0xff]
    %v781 = vld [vmem:[#allocation8 + $0x2c] sm:$0xf]
    %v782 = vld [vmem:[#allocation8 + $0x30] sm:$0xff]
    %v783 = vld [vmem:[#allocation8 + $0x38] sm:$0xf]
    %v784 = vld [vmem:[#allocation8 + $0x3c] sm:$0xff]
    %v785 = vld [vmem:[#allocation8 + $0x44] sm:$0xf]
    %v786 = vld [vmem:[#allocation8 + $0x48] sm:$0xff]
    %v787 = vld [vmem:[#allocation8 + $0x50] sm:$0xf]
    %v788 = vld [vmem:[#allocation8 + $0x54] sm:$0xff]
    %v789 = vld [vmem:[#allocation8 + $0x5c] sm:$0xf]
    %v790 = vld [vmem:[#allocation8 + $0x60] sm:$0xff]
    %v791 = vld [vmem:[#allocation8 + $0x68] sm:$0xf]
    %v792 = vld [vmem:[#allocation8 + $0x6c] sm:$0xff]
    %v793 = vld [vmem:[#allocation8 + $0x74] sm:$0xf]
    %v794 = vld [vmem:[#allocation8 + $0x78] sm:$0xff]
    %v795 = vld [vmem:[#allocation8 + $0x80] sm:$0xf]
    %v796 = vld [vmem:[#allocation8 + $0x84] sm:$0xff]
    %v797 = vld [vmem:[#allocation8 + $0x8c] sm:$0xf]
    %v798 = vld [vmem:[#allocation8 + $0x90] sm:$0xff]
    %v799 = vld [vmem:[#allocation8 + $0x98] sm:$0xf]
    %v800 = vld [vmem:[#allocation8 + $0x9c] sm:$0xff]
    %v801 = vld [vmem:[#allocation8 + $0xa4] sm:$0xf]
    %v802 = vld [vmem:[#allocation8 + $0xa8] sm:$0xff]
    %v803 = vld [vmem:[#allocation8 + $0xb0] sm:$0xf]
    %v804 = vld [vmem:[#allocation8 + $0xb4] sm:$0xff]
    %v805 = vld [vmem:[#allocation8 + $0xbc] sm:$0xf]
    %v806 = vld [vmem:[%s5] sm:$0x7]
    %v808 = vlaneseq
    %v809 = vshrl.u32 %v808, 7
    %v810 = vsub.s32 0, %v809
    %v811 = vrot.slane %v806, %v810
    %v812 = vlaneseq
    %v813 = vshrl.u32 %v812, 7
    %v814 = vsub.s32 1, %v813
    %v815 = vrot.slane %v806, %v814
    %v816 = vlaneseq
    %v817 = vshrl.u32 %v816, 7
    %v818 = vsub.s32 2, %v817
    %v819 = vrot.slane %v806, %v818
    %v855 = vunpack.c.l.b16 %v774
    %v856 = vunpack.c.h.b16 %v774
    %v857 = vunpack.c.l.b16 %v775
    %v858 = vunpack.c.l.b16 %v776
    %v859 = vunpack.c.h.b16 %v776
    %v860 = vunpack.c.l.b16 %v777
    %v861 = vunpack.c.l.b16 %v778
    %v862 = vunpack.c.h.b16 %v778
    %v863 = vunpack.c.l.b16 %v779
    %v864 = vunpack.c.l.b16 %v780
    %v865 = vunpack.c.h.b16 %v780
    %v866 = vunpack.c.l.b16 %v781
    %v867 = vunpack.c.l.b16 %v782
    %v868 = vunpack.c.h.b16 %v782
    %v869 = vunpack.c.l.b16 %v783
    %v870 = vunpack.c.l.b16 %v784
    %v871 = vunpack.c.h.b16 %v784
    %v872 = vunpack.c.l.b16 %v785
    %v873 = vunpack.c.l.b16 %v786
    %v874 = vunpack.c.h.b16 %v786
    %v875 = vunpack.c.l.b16 %v787
    %v876 = vunpack.c.l.b16 %v788
    %v877 = vunpack.c.h.b16 %v788
    %v878 = vunpack.c.l.b16 %v789
    %v879 = vunpack.c.l.b16 %v790
    %v880 = vunpack.c.h.b16 %v790
    %v881 = vunpack.c.l.b16 %v791
    %v882 = vunpack.c.l.b16 %v792
    %v883 = vunpack.c.h.b16 %v792
    %v884 = vunpack.c.l.b16 %v793
    %v885 = vunpack.c.l.b16 %v794
    %v886 = vunpack.c.h.b16 %v794
    %v887 = vunpack.c.l.b16 %v795
    %v888 = vunpack.c.l.b16 %v796
    %v889 = vunpack.c.h.b16 %v796
    %v890 = vunpack.c.l.b16 %v797
    %v891 = vunpack.c.l.b16 %v798
    %v892 = vunpack.c.h.b16 %v798
    %v893 = vunpack.c.l.b16 %v799
    %v894 = vunpack.c.l.b16 %v800
    %v895 = vunpack.c.h.b16 %v800
    %v896 = vunpack.c.l.b16 %v801
    %v897 = vunpack.c.l.b16 %v802
    %v898 = vunpack.c.h.b16 %v802
    %v899 = vunpack.c.l.b16 %v803
    %v900 = vunpack.c.l.b16 %v804
    %v901 = vunpack.c.h.b16 %v804
    %v902 = vunpack.c.l.b16 %v805
    %v903 = vpack.c.b16 %v858, %v855
    %v904 = vpack.c.b16 %v859, %v856
    %v905 = vpack.c.b16 %v860, %v857
    %v906 = vpack.c.b16 %v864, %v861
    %v907 = vpack.c.b16 %v865, %v862
    %v908 = vpack.c.b16 %v866, %v863
    %v909 = vpack.c.b16 %v870, %v867
    %v910 = vpack.c.b16 %v871, %v868
    %v911 = vpack.c.b16 %v872, %v869
    %v912 = vpack.c.b16 %v876, %v873
    %v913 = vpack.c.b16 %v877, %v874
    %v914 = vpack.c.b16 %v878, %v875
    %v915 = vpack.c.b16 %v882, %v879
    %v916 = vpack.c.b16 %v883, %v880
    %v917 = vpack.c.b16 %v884, %v881
    %v918 = vpack.c.b16 %v888, %v885
    %v919 = vpack.c.b16 %v889, %v886
    %v920 = vpack.c.b16 %v890, %v887
    %v921 = vpack.c.b16 %v894, %v891
    %v922 = vpack.c.b16 %v895, %v892
    %v923 = vpack.c.b16 %v896, %v893
    %v924 = vpack.c.b16 %v900, %v897
    %v925 = vpack.c.b16 %v901, %v898
    %v926 = vpack.c.b16 %v902, %v899
    %951 = vmatprep.subr.bf16.mxu0 %v904
    %952 = vmatpush1.bf16.msra.mxu0 %v903
    %953 = vmatprep.subr.bf16.mxu0 %v907
    %954 = vmatpush1.bf16.msra.mxu0 %v906
    %955 = vmatprep.subr.bf16.mxu0 %v910
    %956 = vmatpush1.bf16.msra.mxu0 %v909
    %957 = vmatprep.subr.bf16.mxu0 %v913
    %958 = vmatpush1.bf16.msra.mxu0 %v912
    %959 = vmatprep.subr.bf16.mxu0 %v916
    %960 = vmatpush1.bf16.msra.mxu0 %v915
    %961 = vmatprep.subr.bf16.mxu0 %v919
    %962 = vmatpush1.bf16.msra.mxu0 %v918
    %963 = vmatprep.subr.bf16.mxu0 %v922
    %964 = vmatpush1.bf16.msra.mxu0 %v921
    %965 = vmatprep.subr.bf16.mxu0 %v925
    %966 = vmatpush1.bf16.msra.mxu0 %v924
    %967 = vmatprep.subr.bf16.mxu0 0
    %968 = vmatpush1.bf16.msra.mxu0 0
    %969 = vmatprep.subr.bf16.mxu0 0
    %970 = vmatpush1.bf16.msra.mxu0 0
    %971 = vmatprep.subr.bf16.mxu0 0
    %972 = vmatpush1.bf16.msra.mxu0 0
    %973 = vmatprep.subr.bf16.mxu0 0
    %974 = vmatpush1.bf16.msra.mxu0 0
    %975 = vmatprep.subr.bf16.mxu0 0
    %976 = vmatpush1.bf16.msra.mxu0 0
    %977 = vmatprep.subr.bf16.mxu0 0
    %978 = vmatpush1.bf16.msra.mxu0 0
    %979 = vmatprep.subr.bf16.mxu0 0
    %980 = vmatpush1.bf16.msra.mxu0 0
    %981 = vmatprep.subr.bf16.mxu0 0
    %982 = vmatpush1.bf16.msra.mxu0 0
    %983 = vmatprep.mubr.bf16.mxu0 0
    %984 = vmatmul.mubr.bf16.gmra.mrb[0].mxu0 0
    %v985 = vpop.f32.mrb[0].mxu0
    %v986 = vadd.f32 %v811, %v985
    %v987 = vpop.f32.mrb[0].mxu0
    %v988 = vadd.f32 %v815, %v987
    %v989 = vpop.f32.mrb[0].mxu0
    %v990 = vpop.f32.mrb[0].mxu0
    %991 = vdwg.mxu0
    %992 = vmatprep.subr.bf16.mxu0 0
    %993 = vmatpush1.bf16.msra.mxu0 %v905
    %994 = vmatprep.subr.bf16.mxu0 0
    %995 = vmatpush1.bf16.msra.mxu0 %v908
    %996 = vmatprep.subr.bf16.mxu0 0
    %997 = vmatpush1.bf16.msra.mxu0 %v911
    %998 = vmatprep.subr.bf16.mxu0 0
    %999 = vmatpush1.bf16.msra.mxu0 %v914
    %1000 = vmatprep.subr.bf16.mxu0 0
    %1001 = vmatpush1.bf16.msra.mxu0 %v917
    %1002 = vmatprep.subr.bf16.mxu0 0
    %1003 = vmatpush1.bf16.msra.mxu0 %v920
    %1004 = vmatprep.subr.bf16.mxu0 0
    %1005 = vmatpush1.bf16.msra.mxu0 %v923
    %1006 = vmatprep.subr.bf16.mxu0 0
    %1007 = vmatpush1.bf16.msra.mxu0 %v926
    %1008 = vmatprep.subr.bf16.mxu0 0
    %1009 = vmatpush1.bf16.msra.mxu0 0
    %1010 = vmatprep.subr.bf16.mxu0 0
    %1011 = vmatpush1.bf16.msra.mxu0 0
    %1012 = vmatprep.subr.bf16.mxu0 0
    %1013 = vmatpush1.bf16.msra.mxu0 0
    %1014 = vmatprep.subr.bf16.mxu0 0
    %1015 = vmatpush1.bf16.msra.mxu0 0
    %1016 = vmatprep.subr.bf16.mxu0 0
    %1017 = vmatpush1.bf16.msra.mxu0 0
    %1018 = vmatprep.subr.bf16.mxu0 0
    %1019 = vmatpush1.bf16.msra.mxu0 0
    %1020 = vmatprep.subr.bf16.mxu0 0
    %1021 = vmatpush1.bf16.msra.mxu0 0
    %1022 = vmatprep.subr.bf16.mxu0 0
    %1023 = vmatpush1.bf16.msra.mxu0 0
    %1024 = vmatprep.mubr.bf16.mxu0 0
    %1025 = vmatmul.mubr.bf16.gmra.mrb[0].mxu0 0
    %v1026 = vpop.f32.mrb[0].mxu0
    %v1027 = vadd.f32 %v819, %v1026
    %v1028 = vpop.f32.mrb[0].mxu0
    %v1029 = vpop.f32.mrb[0].mxu0
    %v1030 = vpop.f32.mrb[0].mxu0
    %1031 = vdwg.mxu0
    %s1032 = scalar_lea.vmem [#allocation8], 192
    %v1033 = vld [vmem:[%s1032] sm:$0xff]
    %v1034 = vld [vmem:[%s1032 + $0x8] sm:$0xf]
    %v1035 = vld [vmem:[%s1032 + $0xc] sm:$0xff]
    %v1036 = vld [vmem:[%s1032 + $0x14] sm:$0xf]
    %v1037 = vld [vmem:[%s1032 + $0x18] sm:$0xff]
    %v1038 = vld [vmem:[%s1032 + $0x20] sm:$0xf]
    %v1039 = vld [vmem:[%s1032 + $0x24] sm:$0xff]
    %v1040 = vld [vmem:[%s1032 + $0x2c] sm:$0xf]
    %v1041 = vld [vmem:[%s1032 + $0x30] sm:$0xff]
    %v1042 = vld [vmem:[%s1032 + $0x38] sm:$0xf]
    %v1043 = vld [vmem:[%s1032 + $0x3c] sm:$0xff]
    %v1044 = vld [vmem:[%s1032 + $0x44] sm:$0xf]
    %v1045 = vld [vmem:[%s1032 + $0x48] sm:$0xff]
    %v1046 = vld [vmem:[%s1032 + $0x50] sm:$0xf]
    %v1047 = vld [vmem:[%s1032 + $0x54] sm:$0xff]
    %v1048 = vld [vmem:[%s1032 + $0x5c] sm:$0xf]
    %v1049 = vld [vmem:[%s1032 + $0x60] sm:$0xff]
    %v1050 = vld [vmem:[%s1032 + $0x68] sm:$0xf]
    %v1051 = vld [vmem:[%s1032 + $0x6c] sm:$0xff]
    %v1052 = vld [vmem:[%s1032 + $0x74] sm:$0xf]
    %v1053 = vld [vmem:[%s1032 + $0x78] sm:$0xff]
    %v1054 = vld [vmem:[%s1032 + $0x80] sm:$0xf]
    %v1055 = vld [vmem:[%s1032 + $0x84] sm:$0xff]
    %v1056 = vld [vmem:[%s1032 + $0x8c] sm:$0xf]
    %v1057 = vld [vmem:[%s1032 + $0x90] sm:$0xff]
    %v1058 = vld [vmem:[%s1032 + $0x98] sm:$0xf]
    %v1059 = vld [vmem:[%s1032 + $0x9c] sm:$0xff]
    %v1060 = vld [vmem:[%s1032 + $0xa4] sm:$0xf]
    %v1061 = vld [vmem:[%s1032 + $0xa8] sm:$0xff]
    %v1062 = vld [vmem:[%s1032 + $0xb0] sm:$0xf]
    %v1063 = vld [vmem:[%s1032 + $0xb4] sm:$0xff]
    %v1064 = vld [vmem:[%s1032 + $0xbc] sm:$0xf]
    %s1065 = scalar_lea.vmem %s5, 3
    %v1066 = vld [vmem:[%s1065] sm:$0x7]
    %v1068 = vlaneseq
    %v1069 = vshrl.u32 %v1068, 7
    %v1070 = vsub.s32 0, %v1069
    %v1071 = vrot.slane %v1066, %v1070
    %v1072 = vlaneseq
    %v1073 = vshrl.u32 %v1072, 7
    %v1074 = vsub.s32 1, %v1073
    %v1075 = vrot.slane %v1066, %v1074
    %v1076 = vlaneseq
    %v1077 = vshrl.u32 %v1076, 7
    %v1078 = vsub.s32 2, %v1077
    %v1079 = vrot.slane %v1066, %v1078
    %v1115 = vunpack.c.l.b16 %v1033
    %v1116 = vunpack.c.h.b16 %v1033
    %v1117 = vunpack.c.l.b16 %v1034
    %v1118 = vunpack.c.l.b16 %v1035
    %v1119 = vunpack.c.h.b16 %v1035
    %v1120 = vunpack.c.l.b16 %v1036
    %v1121 = vunpack.c.l.b16 %v1037
    %v1122 = vunpack.c.h.b16 %v1037
    %v1123 = vunpack.c.l.b16 %v1038
    %v1124 = vunpack.c.l.b16 %v1039
    %v1125 = vunpack.c.h.b16 %v1039
    %v1126 = vunpack.c.l.b16 %v1040
    %v1127 = vunpack.c.l.b16 %v1041
    %v1128 = vunpack.c.h.b16 %v1041
    %v1129 = vunpack.c.l.b16 %v1042
    %v1130 = vunpack.c.l.b16 %v1043
    %v1131 = vunpack.c.h.b16 %v1043
    %v1132 = vunpack.c.l.b16 %v1044
    %v1133 = vunpack.c.l.b16 %v1045
    %v1134 = vunpack.c.h.b16 %v1045
    %v1135 = vunpack.c.l.b16 %v1046
    %v1136 = vunpack.c.l.b16 %v1047
    %v1137 = vunpack.c.h.b16 %v1047
    %v1138 = vunpack.c.l.b16 %v1048
    %v1139 = vunpack.c.l.b16 %v1049
    %v1140 = vunpack.c.h.b16 %v1049
    %v1141 = vunpack.c.l.b16 %v1050
    %v1142 = vunpack.c.l.b16 %v1051
    %v1143 = vunpack.c.h.b16 %v1051
    %v1144 = vunpack.c.l.b16 %v1052
    %v1145 = vunpack.c.l.b16 %v1053
    %v1146 = vunpack.c.h.b16 %v1053
    %v1147 = vunpack.c.l.b16 %v1054
    %v1148 = vunpack.c.l.b16 %v1055
    %v1149 = vunpack.c.h.b16 %v1055
    %v1150 = vunpack.c.l.b16 %v1056
    %v1151 = vunpack.c.l.b16 %v1057
    %v1152 = vunpack.c.h.b16 %v1057
    %v1153 = vunpack.c.l.b16 %v1058
    %v1154 = vunpack.c.l.b16 %v1059
    %v1155 = vunpack.c.h.b16 %v1059
    %v1156 = vunpack.c.l.b16 %v1060
    %v1157 = vunpack.c.l.b16 %v1061
    %v1158 = vunpack.c.h.b16 %v1061
    %v1159 = vunpack.c.l.b16 %v1062
    %v1160 = vunpack.c.l.b16 %v1063
    %v1161 = vunpack.c.h.b16 %v1063
    %v1162 = vunpack.c.l.b16 %v1064
    %v1163 = vpack.c.b16 %v1118, %v1115
    %v1164 = vpack.c.b16 %v1119, %v1116
    %v1165 = vpack.c.b16 %v1120, %v1117
    %v1166 = vpack.c.b16 %v1124, %v1121
    %v1167 = vpack.c.b16 %v1125, %v1122
    %v1168 = vpack.c.b16 %v1126, %v1123
    %v1169 = vpack.c.b16 %v1130, %v1127
    %v1170 = vpack.c.b16 %v1131, %v1128
    %v1171 = vpack.c.b16 %v1132, %v1129
    %v1172 = vpack.c.b16 %v1136, %v1133
    %v1173 = vpack.c.b16 %v1137, %v1134
    %v1174 = vpack.c.b16 %v1138, %v1135
    %v1175 = vpack.c.b16 %v1142, %v1139
    %v1176 = vpack.c.b16 %v1143, %v1140
    %v1177 = vpack.c.b16 %v1144, %v1141
    %v1178 = vpack.c.b16 %v1148, %v1145
    %v1179 = vpack.c.b16 %v1149, %v1146
    %v1180 = vpack.c.b16 %v1150, %v1147
    %v1181 = vpack.c.b16 %v1154, %v1151
    %v1182 = vpack.c.b16 %v1155, %v1152
    %v1183 = vpack.c.b16 %v1156, %v1153
    %v1184 = vpack.c.b16 %v1160, %v1157
    %v1185 = vpack.c.b16 %v1161, %v1158
    %v1186 = vpack.c.b16 %v1162, %v1159
    %1211 = vmatprep.subr.bf16.mxu0 %v1164
    %1212 = vmatpush1.bf16.msra.mxu0 %v1163
    %1213 = vmatprep.subr.bf16.mxu0 %v1167
    %1214 = vmatpush1.bf16.msra.mxu0 %v1166
    %1215 = vmatprep.subr.bf16.mxu0 %v1170
    %1216 = vmatpush1.bf16.msra.mxu0 %v1169
    %1217 = vmatprep.subr.bf16.mxu0 %v1173
    %1218 = vmatpush1.bf16.msra.mxu0 %v1172
    %1219 = vmatprep.subr.bf16.mxu0 %v1176
    %1220 = vmatpush1.bf16.msra.mxu0 %v1175
    %1221 = vmatprep.subr.bf16.mxu0 %v1179
    %1222 = vmatpush1.bf16.msra.mxu0 %v1178
    %1223 = vmatprep.subr.bf16.mxu0 %v1182
    %1224 = vmatpush1.bf16.msra.mxu0 %v1181
    %1225 = vmatprep.subr.bf16.mxu0 %v1185
    %1226 = vmatpush1.bf16.msra.mxu0 %v1184
    %1227 = vmatprep.subr.bf16.mxu0 0
    %1228 = vmatpush1.bf16.msra.mxu0 0
    %1229 = vmatprep.subr.bf16.mxu0 0
    %1230 = vmatpush1.bf16.msra.mxu0 0
    %1231 = vmatprep.subr.bf16.mxu0 0
    %1232 = vmatpush1.bf16.msra.mxu0 0
    %1233 = vmatprep.subr.bf16.mxu0 0
    %1234 = vmatpush1.bf16.msra.mxu0 0
    %1235 = vmatprep.subr.bf16.mxu0 0
    %1236 = vmatpush1.bf16.msra.mxu0 0
    %1237 = vmatprep.subr.bf16.mxu0 0
    %1238 = vmatpush1.bf16.msra.mxu0 0
    %1239 = vmatprep.subr.bf16.mxu0 0
    %1240 = vmatpush1.bf16.msra.mxu0 0
    %1241 = vmatprep.subr.bf16.mxu0 0
    %1242 = vmatpush1.bf16.msra.mxu0 0
    %1243 = vmatprep.mubr.bf16.mxu0 0
    %1244 = vmatmul.mubr.bf16.gmra.mrb[0].mxu0 0
    %v1245 = vpop.f32.mrb[0].mxu0
    %v1246 = vadd.f32 %v1071, %v1245
    %v1247 = vpop.f32.mrb[0].mxu0
    %v1248 = vadd.f32 %v1075, %v1247
    %v1249 = vpop.f32.mrb[0].mxu0
    %v1250 = vpop.f32.mrb[0].mxu0
    %1251 = vdwg.mxu0
    %1252 = vmatprep.subr.bf16.mxu0 0
    %1253 = vmatpush1.bf16.msra.mxu0 %v1165
    %1254 = vmatprep.subr.bf16.mxu0 0
    %1255 = vmatpush1.bf16.msra.mxu0 %v1168
    %1256 = vmatprep.subr.bf16.mxu0 0
    %1257 = vmatpush1.bf16.msra.mxu0 %v1171
    %1258 = vmatprep.subr.bf16.mxu0 0
    %1259 = vmatpush1.bf16.msra.mxu0 %v1174
    %1260 = vmatprep.subr.bf16.mxu0 0
    %1261 = vmatpush1.bf16.msra.mxu0 %v1177
    %1262 = vmatprep.subr.bf16.mxu0 0
    %1263 = vmatpush1.bf16.msra.mxu0 %v1180
    %1264 = vmatprep.subr.bf16.mxu0 0
    %1265 = vmatpush1.bf16.msra.mxu0 %v1183
    %1266 = vmatprep.subr.bf16.mxu0 0
    %1267 = vmatpush1.bf16.msra.mxu0 %v1186
    %1268 = vmatprep.subr.bf16.mxu0 0
    %1269 = vmatpush1.bf16.msra.mxu0 0
    %1270 = vmatprep.subr.bf16.mxu0 0
    %1271 = vmatpush1.bf16.msra.mxu0 0
    %1272 = vmatprep.subr.bf16.mxu0 0
    %1273 = vmatpush1.bf16.msra.mxu0 0
    %1274 = vmatprep.subr.bf16.mxu0 0
    %1275 = vmatpush1.bf16.msra.mxu0 0
    %1276 = vmatprep.subr.bf16.mxu0 0
    %1277 = vmatpush1.bf16.msra.mxu0 0
    %1278 = vmatprep.subr.bf16.mxu0 0
    %1279 = vmatpush1.bf16.msra.mxu0 0
    %1280 = vmatprep.subr.bf16.mxu0 0
    %1281 = vmatpush1.bf16.msra.mxu0 0
    %1282 = vmatprep.subr.bf16.mxu0 0
    %1283 = vmatpush1.bf16.msra.mxu0 0
    %1284 = vmatprep.mubr.bf16.mxu0 0
    %1285 = vmatmul.mubr.bf16.gmra.mrb[0].mxu0 0
    %v1286 = vpop.f32.mrb[0].mxu0
    %v1287 = vadd.f32 %v1079, %v1286
    %v1288 = vpop.f32.mrb[0].mxu0
    %v1289 = vpop.f32.mrb[0].mxu0
    %v1290 = vpop.f32.mrb[0].mxu0
    %1291 = vdwg.mxu0
    %v1292 = vadd.f32 %v768, %v986
    %v1293 = vxor.u32 %v1292, 2147483648
    %v1294 = vmul.f32 %v1293, 1.442695
    %v1295 = vpow.pop %v1294
    %v1296 = vadd.f32 %v1295, 1.0
    %v1297 = vrcp.pop %v1296
    %v1298 = vmul.f32 1.0, %v1297
    %v1299 = vadd.f32 %v769, %v988
    %v1300 = vxor.u32 %v1299, 2147483648
    %v1301 = vmul.f32 %v1300, 1.442695
    %v1302 = vpow.pop %v1301
    %v1303 = vadd.f32 %v1302, 1.0
    %v1304 = vrcp.pop %v1303
    %v1305 = vmul.f32 1.0, %v1304
    %v1306 = vmul.f32 %v1298, %v1027
    %v1307 = vadd.f32 %v770, %v1306
    %v1308 = vtanh.pop %v1307
    %v1309 = vsub.f32 1.0, %v1305
    %v1310 = vmul.f32 %v1309, %v1308
    %v1311 = vmul.f32 %v1305, 0.0
    %v1312 = vadd.f32 %v1310, %v1311
    %v1313 = vadd.f32 %v771, %v1246
    %v1314 = vxor.u32 %v1313, 2147483648
    %v1315 = vmul.f32 %v1314, 1.442695
    %v1316 = vpow.pop %v1315
    %v1317 = vadd.f32 %v1316, 1.0
    %v1318 = vrcp.pop %v1317
    %v1319 = vmul.f32 1.0, %v1318
    %v1320 = vadd.f32 %v772, %v1248
    %v1321 = vxor.u32 %v1320, 2147483648
    %v1322 = vmul.f32 %v1321, 1.442695
    %v1323 = vpow.pop %v1322
    %v1324 = vadd.f32 %v1323, 1.0
    %v1325 = vrcp.pop %v1324
    %v1326 = vmul.f32 1.0, %v1325
    %v1327 = vmul.f32 %v1319, %v1287
    %v1328 = vadd.f32 %v773, %v1327
    %v1329 = vtanh.pop %v1328
    %v1330 = vsub.f32 1.0, %v1326
    %v1331 = vmul.f32 %v1330, %v1329
    %v1332 = vmul.f32 %v1326, 0.0
    %v1333 = vadd.f32 %v1331, %v1332
    %v1334 = vld [vmem:[%s1] sm:$0xff]
    %1336 = vset.pattern.permute.xlu0 0
    %1337 = vperm.xlu0 %1336, %v1334
    %v1338 = vpop.permute.xlu0 %1337
    %v1340 = vmul.f32 %v1312, %v1338
    %1341 = vst [vmem:[#allocation4] sm:$0xff] %v1340
    %s1342 = scalar_lea.vmem %s1, 56
    %v1343 = vld [vmem:[%s1342] sm:$0xff]
    %1345 = vset.pattern.permute.xlu0 0
    %1346 = vperm.xlu0 %1345, %v1343
    %v1347 = vpop.permute.xlu0 %1346
    %v1349 = vmul.f32 %v1333, %v1347
    %s1350 = scalar_lea.vmem [#allocation10], 56
    %1351 = vst [vmem:[%s1350] sm:$0xff] %v1349
    %v1352 = vld [vmem:[#allocation2 + $0x18] sm:$0xff]
    %v1353 = vld [vmem:[#allocation2 + $0x20] sm:$0xff]
    %v1354 = vld [vmem:[#allocation2 + $0x28] sm:$0xff]
    %v1355 = vld [vmem:[#allocation3 + $0x90] sm:$0xff]
    %v1356 = vld [vmem:[#allocation3 + $0x98] sm:$0xff]
    %v1357 = vld [vmem:[#allocation3 + $0xa0] sm:$0xff]
    %v1358 = vpack.c.bf16 %v1312, %v1312
    %v1359 = vld [vmem:[#allocation8] sm:$0xff]
    %v1360 = vld [vmem:[#allocation8 + $0x8] sm:$0xf]
    %v1361 = vld [vmem:[#allocation8 + $0xc] sm:$0xff]
    %v1362 = vld [vmem:[#allocation8 + $0x14] sm:$0xf]
    %v1363 = vld [vmem:[#allocation8 + $0x18] sm:$0xff]
    %v1364 = vld [vmem:[#allocation8 + $0x20] sm:$0xf]
    %v1365 = vld [vmem:[#allocation8 + $0x24] sm:$0xff]
    %v1366 = vld [vmem:[#allocation8 + $0x2c] sm:$0xf]
    %v1367 = vld [vmem:[#allocation8 + $0x30] sm:$0xff]
    %v1368 = vld [vmem:[#allocation8 + $0x38] sm:$0xf]
    %v1369 = vld [vmem:[#allocation8 + $0x3c] sm:$0xff]
    %v1370 = vld [vmem:[#allocation8 + $0x44] sm:$0xf]
    %v1371 = vld [vmem:[#allocation8 + $0x48] sm:$0xff]
    %v1372 = vld [vmem:[#allocation8 + $0x50] sm:$0xf]
    %v1373 = vld [vmem:[#allocation8 + $0x54] sm:$0xff]
    %v1374 = vld [vmem:[#allocation8 + $0x5c] sm:$0xf]
    %v1375 = vld [vmem:[#allocation8 + $0x60] sm:$0xff]
    %v1376 = vld [vmem:[#allocation8 + $0x68] sm:$0xf]
    %v1377 = vld [vmem:[#allocation8 + $0x6c] sm:$0xff]
    %v1378 = vld [vmem:[#allocation8 + $0x74] sm:$0xf]
    %v1379 = vld [vmem:[#allocation8 + $0x78] sm:$0xff]
    %v1380 = vld [vmem:[#allocation8 + $0x80] sm:$0xf]
    %v1381 = vld [vmem:[#allocation8 + $0x84] sm:$0xff]
    %v1382 = vld [vmem:[#allocation8 + $0x8c] sm:$0xf]
    %v1383 = vld [vmem:[#allocation8 + $0x90] sm:$0xff]
    %v1384 = vld [vmem:[#allocation8 + $0x98] sm:$0xf]
    %v1385 = vld [vmem:[#allocation8 + $0x9c] sm:$0xff]
    %v1386 = vld [vmem:[#allocation8 + $0xa4] sm:$0xf]
    %v1387 = vld [vmem:[#allocation8 + $0xa8] sm:$0xff]
    %v1388 = vld [vmem:[#allocation8 + $0xb0] sm:$0xf]
    %v1389 = vld [vmem:[#allocation8 + $0xb4] sm:$0xff]
    %v1390 = vld [vmem:[#allocation8 + $0xbc] sm:$0xf]
    %v1391 = vld [vmem:[%s5] sm:$0x7]
    %v1393 = vlaneseq
    %v1394 = vshrl.u32 %v1393, 7
    %v1395 = vsub.s32 0, %v1394
    %v1396 = vrot.slane %v1391, %v1395
    %v1397 = vlaneseq
    %v1398 = vshrl.u32 %v1397, 7
    %v1399 = vsub.s32 1, %v1398
    %v1400 = vrot.slane %v1391, %v1399
    %v1401 = vlaneseq
    %v1402 = vshrl.u32 %v1401, 7
    %v1403 = vsub.s32 2, %v1402
    %v1404 = vrot.slane %v1391, %v1403
    %v1440 = vunpack.c.l.b16 %v1359
    %v1441 = vunpack.c.h.b16 %v1359
    %v1442 = vunpack.c.l.b16 %v1360
    %v1443 = vunpack.c.l.b16 %v1361
    %v1444 = vunpack.c.h.b16 %v1361
    %v1445 = vunpack.c.l.b16 %v1362
    %v1446 = vunpack.c.l.b16 %v1363
    %v1447 = vunpack.c.h.b16 %v1363
    %v1448 = vunpack.c.l.b16 %v1364
    %v1449 = vunpack.c.l.b16 %v1365
    %v1450 = vunpack.c.h.b16 %v1365
    %v1451 = vunpack.c.l.b16 %v1366
    %v1452 = vunpack.c.l.b16 %v1367
    %v1453 = vunpack.c.h.b16 %v1367
    %v1454 = vunpack.c.l.b16 %v1368
    %v1455 = vunpack.c.l.b16 %v1369
    %v1456 = vunpack.c.h.b16 %v1369
    %v1457 = vunpack.c.l.b16 %v1370
    %v1458 = vunpack.c.l.b16 %v1371
    %v1459 = vunpack.c.h.b16 %v1371
    %v1460 = vunpack.c.l.b16 %v1372
    %v1461 = vunpack.c.l.b16 %v1373
    %v1462 = vunpack.c.h.b16 %v1373
    %v1463 = vunpack.c.l.b16 %v1374
    %v1464 = vunpack.c.l.b16 %v1375
    %v1465 = vunpack.c.h.b16 %v1375
    %v1466 = vunpack.c.l.b16 %v1376
    %v1467 = vunpack.c.l.b16 %v1377
    %v1468 = vunpack.c.h.b16 %v1377
    %v1469 = vunpack.c.l.b16 %v1378
    %v1470 = vunpack.c.l.b16 %v1379
    %v1471 = vunpack.c.h.b16 %v1379
    %v1472 = vunpack.c.l.b16 %v1380
    %v1473 = vunpack.c.l.b16 %v1381
    %v1474 = vunpack.c.h.b16 %v1381
    %v1475 = vunpack.c.l.b16 %v1382
    %v1476 = vunpack.c.l.b16 %v1383
    %v1477 = vunpack.c.h.b16 %v1383
    %v1478 = vunpack.c.l.b16 %v1384
    %v1479 = vunpack.c.l.b16 %v1385
    %v1480 = vunpack.c.h.b16 %v1385
    %v1481 = vunpack.c.l.b16 %v1386
    %v1482 = vunpack.c.l.b16 %v1387
    %v1483 = vunpack.c.h.b16 %v1387
    %v1484 = vunpack.c.l.b16 %v1388
    %v1485 = vunpack.c.l.b16 %v1389
    %v1486 = vunpack.c.h.b16 %v1389
    %v1487 = vunpack.c.l.b16 %v1390
    %v1488 = vpack.c.b16 %v1443, %v1440
    %v1489 = vpack.c.b16 %v1444, %v1441
    %v1490 = vpack.c.b16 %v1445, %v1442
    %v1491 = vpack.c.b16 %v1449, %v1446
    %v1492 = vpack.c.b16 %v1450, %v1447
    %v1493 = vpack.c.b16 %v1451, %v1448
    %v1494 = vpack.c.b16 %v1455, %v1452
    %v1495 = vpack.c.b16 %v1456, %v1453
    %v1496 = vpack.c.b16 %v1457, %v1454
    %v1497 = vpack.c.b16 %v1461, %v1458
    %v1498 = vpack.c.b16 %v1462, %v1459
    %v1499 = vpack.c.b16 %v1463, %v1460
    %v1500 = vpack.c.b16 %v1467, %v1464
    %v1501 = vpack.c.b16 %v1468, %v1465
    %v1502 = vpack.c.b16 %v1469, %v1466
    %v1503 = vpack.c.b16 %v1473, %v1470
    %v1504 = vpack.c.b16 %v1474, %v1471
    %v1505 = vpack.c.b16 %v1475, %v1472
    %v1506 = vpack.c.b16 %v1479, %v1476
    %v1507 = vpack.c.b16 %v1480, %v1477
    %v1508 = vpack.c.b16 %v1481, %v1478
    %v1509 = vpack.c.b16 %v1485, %v1482
    %v1510 = vpack.c.b16 %v1486, %v1483
    %v1511 = vpack.c.b16 %v1487, %v1484
    %1536 = vmatprep.subr.bf16.mxu0 %v1489
    %1537 = vmatpush1.bf16.msra.mxu0 %v1488
    %1538 = vmatprep.subr.bf16.mxu0 %v1492
    %1539 = vmatpush1.bf16.msra.mxu0 %v1491
    %1540 = vmatprep.subr.bf16.mxu0 %v1495
    %1541 = vmatpush1.bf16.msra.mxu0 %v1494
    %1542 = vmatprep.subr.bf16.mxu0 %v1498
    %1543 = vmatpush1.bf16.msra.mxu0 %v1497
    %1544 = vmatprep.subr.bf16.mxu0 %v1501
    %1545 = vmatpush1.bf16.msra.mxu0 %v1500
    %1546 = vmatprep.subr.bf16.mxu0 %v1504
    %1547 = vmatpush1.bf16.msra.mxu0 %v1503
    %1548 = vmatprep.subr.bf16.mxu0 %v1507
    %1549 = vmatpush1.bf16.msra.mxu0 %v1506
    %1550 = vmatprep.subr.bf16.mxu0 %v1510
    %1551 = vmatpush1.bf16.msra.mxu0 %v1509
    %1552 = vmatprep.subr.bf16.mxu0 0
    %1553 = vmatpush1.bf16.msra.mxu0 0
    %1554 = vmatprep.subr.bf16.mxu0 0
    %1555 = vmatpush1.bf16.msra.mxu0 0
    %1556 = vmatprep.subr.bf16.mxu0 0
    %1557 = vmatpush1.bf16.msra.mxu0 0
    %1558 = vmatprep.subr.bf16.mxu0 0
    %1559 = vmatpush1.bf16.msra.mxu0 0
    %1560 = vmatprep.subr.bf16.mxu0 0
    %1561 = vmatpush1.bf16.msra.mxu0 0
    %1562 = vmatprep.subr.bf16.mxu0 0
    %1563 = vmatpush1.bf16.msra.mxu0 0
    %1564 = vmatprep.subr.bf16.mxu0 0
    %1565 = vmatpush1.bf16.msra.mxu0 0
    %1566 = vmatprep.subr.bf16.mxu0 0
    %1567 = vmatpush1.bf16.msra.mxu0 0
    %1568 = vmatprep.mubr.bf16.mxu0 0
    %1569 = vmatmul.mubr.bf16.gmra.mrb[0].mxu0 %v1358
    %v1570 = vpop.f32.mrb[0].mxu0
    %v1571 = vadd.f32 %v1396, %v1570
    %v1572 = vpop.f32.mrb[0].mxu0
    %v1573 = vadd.f32 %v1400, %v1572
    %v1574 = vpop.f32.mrb[0].mxu0
    %v1575 = vpop.f32.mrb[0].mxu0
    %1576 = vdwg.mxu0
    %1577 = vmatprep.subr.bf16.mxu0 0
    %1578 = vmatpush1.bf16.msra.mxu0 %v1490
    %1579 = vmatprep.subr.bf16.mxu0 0
    %1580 = vmatpush1.bf16.msra.mxu0 %v1493
    %1581 = vmatprep.subr.bf16.mxu0 0
    %1582 = vmatpush1.bf16.msra.mxu0 %v1496
    %1583 = vmatprep.subr.bf16.mxu0 0
    %1584 = vmatpush1.bf16.msra.mxu0 %v1499
    %1585 = vmatprep.subr.bf16.mxu0 0
    %1586 = vmatpush1.bf16.msra.mxu0 %v1502
    %1587 = vmatprep.subr.bf16.mxu0 0
    %1588 = vmatpush1.bf16.msra.mxu0 %v1505
    %1589 = vmatprep.subr.bf16.mxu0 0
    %1590 = vmatpush1.bf16.msra.mxu0 %v1508
    %1591 = vmatprep.subr.bf16.mxu0 0
    %1592 = vmatpush1.bf16.msra.mxu0 %v1511
    %1593 = vmatprep.subr.bf16.mxu0 0
    %1594 = vmatpush1.bf16.msra.mxu0 0
    %1595 = vmatprep.subr.bf16.mxu0 0
    %1596 = vmatpush1.bf16.msra.mxu0 0
    %1597 = vmatprep.subr.bf16.mxu0 0
    %1598 = vmatpush1.bf16.msra.mxu0 0
    %1599 = vmatprep.subr.bf16.mxu0 0
    %1600 = vmatpush1.bf16.msra.mxu0 0
    %1601 = vmatprep.subr.bf16.mxu0 0
    %1602 = vmatpush1.bf16.msra.mxu0 0
    %1603 = vmatprep.subr.bf16.mxu0 0
    %1604 = vmatpush1.bf16.msra.mxu0 0
    %1605 = vmatprep.subr.bf16.mxu0 0
    %1606 = vmatpush1.bf16.msra.mxu0 0
    %1607 = vmatprep.subr.bf16.mxu0 0
    %1608 = vmatpush1.bf16.msra.mxu0 0
    %1609 = vmatprep.mubr.bf16.mxu0 0
    %1610 = vmatmul.mubr.bf16.gmra.mrb[0].mxu0 %v1358
    %v1611 = vpop.f32.mrb[0].mxu0
    %v1612 = vadd.f32 %v1404, %v1611
    %v1613 = vpop.f32.mrb[0].mxu0
    %v1614 = vpop.f32.mrb[0].mxu0
    %v1615 = vpop.f32.mrb[0].mxu0
    %1616 = vdwg.mxu0
    %v1617 = vpack.c.bf16 %v1333, %v1333
    %v1618 = vld [vmem:[%s1032] sm:$0xff]
    %v1619 = vld [vmem:[%s1032 + $0x8] sm:$0xf]
    %v1620 = vld [vmem:[%s1032 + $0xc] sm:$0xff]
    %v1621 = vld [vmem:[%s1032 + $0x14] sm:$0xf]
    %v1622 = vld [vmem:[%s1032 + $0x18] sm:$0xff]
    %v1623 = vld [vmem:[%s1032 + $0x20] sm:$0xf]
    %v1624 = vld [vmem:[%s1032 + $0x24] sm:$0xff]
    %v1625 = vld [vmem:[%s1032 + $0x2c] sm:$0xf]
    %v1626 = vld [vmem:[%s1032 + $0x30] sm:$0xff]
    %v1627 = vld [vmem:[%s1032 + $0x38] sm:$0xf]
    %v1628 = vld [vmem:[%s1032 + $0x3c] sm:$0xff]
    %v1629 = vld [vmem:[%s1032 + $0x44] sm:$0xf]
    %v1630 = vld [vmem:[%s1032 + $0x48] sm:$0xff]
    %v1631 = vld [vmem:[%s1032 + $0x50] sm:$0xf]
    %v1632 = vld [vmem:[%s1032 + $0x54] sm:$0xff]
    %v1633 = vld [vmem:[%s1032 + $0x5c] sm:$0xf]
    %v1634 = vld [vmem:[%s1032 + $0x60] sm:$0xff]
    %v1635 = vld [vmem:[%s1032 + $0x68] sm:$0xf]
    %v1636 = vld [vmem:[%s1032 + $0x6c] sm:$0xff]
    %v1637 = vld [vmem:[%s1032 + $0x74] sm:$0xf]
    %v1638 = vld [vmem:[%s1032 + $0x78] sm:$0xff]
    %v1639 = vld [vmem:[%s1032 + $0x80] sm:$0xf]
    %v1640 = vld [vmem:[%s1032 + $0x84] sm:$0xff]
    %v1641 = vld [vmem:[%s1032 + $0x8c] sm:$0xf]
    %v1642 = vld [vmem:[%s1032 + $0x90] sm:$0xff]
    %v1643 = vld [vmem:[%s1032 + $0x98] sm:$0xf]
    %v1644 = vld [vmem:[%s1032 + $0x9c] sm:$0xff]
    %v1645 = vld [vmem:[%s1032 + $0xa4] sm:$0xf]
    %v1646 = vld [vmem:[%s1032 + $0xa8] sm:$0xff]
    %v1647 = vld [vmem:[%s1032 + $0xb0] sm:$0xf]
    %v1648 = vld [vmem:[%s1032 + $0xb4] sm:$0xff]
    %v1649 = vld [vmem:[%s1032 + $0xbc] sm:$0xf]
    %v1650 = vld [vmem:[%s1065] sm:$0x7]
    %v1652 = vlaneseq
    %v1653 = vshrl.u32 %v1652, 7
    %v1654 = vsub.s32 0, %v1653
    %v1655 = vrot.slane %v1650, %v1654
    %v1656 = vlaneseq
    %v1657 = vshrl.u32 %v1656, 7
    %v1658 = vsub.s32 1, %v1657
    %v1659 = vrot.slane %v1650, %v1658
    %v1660 = vlaneseq
    %v1661 = vshrl.u32 %v1660, 7
    %v1662 = vsub.s32 2, %v1661
    %v1663 = vrot.slane %v1650, %v1662
    %v1699 = vunpack.c.l.b16 %v1618
    %v1700 = vunpack.c.h.b16 %v1618
    %v1701 = vunpack.c.l.b16 %v1619
    %v1702 = vunpack.c.l.b16 %v1620
    %v1703 = vunpack.c.h.b16 %v1620
    %v1704 = vunpack.c.l.b16 %v1621
    %v1705 = vunpack.c.l.b16 %v1622
    %v1706 = vunpack.c.h.b16 %v1622
    %v1707 = vunpack.c.l.b16 %v1623
    %v1708 = vunpack.c.l.b16 %v1624
    %v1709 = vunpack.c.h.b16 %v1624
    %v1710 = vunpack.c.l.b16 %v1625
    %v1711 = vunpack.c.l.b16 %v1626
    %v1712 = vunpack.c.h.b16 %v1626
    %v1713 = vunpack.c.l.b16 %v1627
    %v1714 = vunpack.c.l.b16 %v1628
    %v1715 = vunpack.c.h.b16 %v1628
    %v1716 = vunpack.c.l.b16 %v1629
    %v1717 = vunpack.c.l.b16 %v1630
    %v1718 = vunpack.c.h.b16 %v1630
    %v1719 = vunpack.c.l.b16 %v1631
    %v1720 = vunpack.c.l.b16 %v1632
    %v1721 = vunpack.c.h.b16 %v1632
    %v1722 = vunpack.c.l.b16 %v1633
    %v1723 = vunpack.c.l.b16 %v1634
    %v1724 = vunpack.c.h.b16 %v1634
    %v1725 = vunpack.c.l.b16 %v1635
    %v1726 = vunpack.c.l.b16 %v1636
    %v1727 = vunpack.c.h.b16 %v1636
    %v1728 = vunpack.c.l.b16 %v1637
    %v1729 = vunpack.c.l.b16 %v1638
    %v1730 = vunpack.c.h.b16 %v1638
    %v1731 = vunpack.c.l.b16 %v1639
    %v1732 = vunpack.c.l.b16 %v1640
    %v1733 = vunpack.c.h.b16 %v1640
    %v1734 = vunpack.c.l.b16 %v1641
    %v1735 = vunpack.c.l.b16 %v1642
    %v1736 = vunpack.c.h.b16 %v1642
    %v1737 = vunpack.c.l.b16 %v1643
    %v1738 = vunpack.c.l.b16 %v1644
    %v1739 = vunpack.c.h.b16 %v1644
    %v1740 = vunpack.c.l.b16 %v1645
    %v1741 = vunpack.c.l.b16 %v1646
    %v1742 = vunpack.c.h.b16 %v1646
    %v1743 = vunpack.c.l.b16 %v1647
    %v1744 = vunpack.c.l.b16 %v1648
    %v1745 = vunpack.c.h.b16 %v1648
    %v1746 = vunpack.c.l.b16 %v1649
    %v1747 = vpack.c.b16 %v1702, %v1699
    %v1748 = vpack.c.b16 %v1703, %v1700
    %v1749 = vpack.c.b16 %v1704, %v1701
    %v1750 = vpack.c.b16 %v1708, %v1705
    %v1751 = vpack.c.b16 %v1709, %v1706
    %v1752 = vpack.c.b16 %v1710, %v1707
    %v1753 = vpack.c.b16 %v1714, %v1711
    %v1754 = vpack.c.b16 %v1715, %v1712
    %v1755 = vpack.c.b16 %v1716, %v1713
    %v1756 = vpack.c.b16 %v1720, %v1717
    %v1757 = vpack.c.b16 %v1721, %v1718
    %v1758 = vpack.c.b16 %v1722, %v1719
    %v1759 = vpack.c.b16 %v1726, %v1723
    %v1760 = vpack.c.b16 %v1727, %v1724
    %v1761 = vpack.c.b16 %v1728, %v1725
    %v1762 = vpack.c.b16 %v1732, %v1729
    %v1763 = vpack.c.b16 %v1733, %v1730
    %v1764 = vpack.c.b16 %v1734, %v1731
    %v1765 = vpack.c.b16 %v1738, %v1735
    %v1766 = vpack.c.b16 %v1739, %v1736
    %v1767 = vpack.c.b16 %v1740, %v1737
    %v1768 = vpack.c.b16 %v1744, %v1741
    %v1769 = vpack.c.b16 %v1745, %v1742
    %v1770 = vpack.c.b16 %v1746, %v1743
    %1795 = vmatprep.subr.bf16.mxu0 %v1748
    %1796 = vmatpush1.bf16.msra.mxu0 %v1747
    %1797 = vmatprep.subr.bf16.mxu0 %v1751
    %1798 = vmatpush1.bf16.msra.mxu0 %v1750
    %1799 = vmatprep.subr.bf16.mxu0 %v1754
    %1800 = vmatpush1.bf16.msra.mxu0 %v1753
    %1801 = vmatprep.subr.bf16.mxu0 %v1757
    %1802 = vmatpush1.bf16.msra.mxu0 %v1756
    %1803 = vmatprep.subr.bf16.mxu0 %v1760
    %1804 = vmatpush1.bf16.msra.mxu0 %v1759
    %1805 = vmatprep.subr.bf16.mxu0 %v1763
    %1806 = vmatpush1.bf16.msra.mxu0 %v1762
    %1807 = vmatprep.subr.bf16.mxu0 %v1766
    %1808 = vmatpush1.bf16.msra.mxu0 %v1765
    %1809 = vmatprep.subr.bf16.mxu0 %v1769
    %1810 = vmatpush1.bf16.msra.mxu0 %v1768
    %1811 = vmatprep.subr.bf16.mxu0 0
    %1812 = vmatpush1.bf16.msra.mxu0 0
    %1813 = vmatprep.subr.bf16.mxu0 0
    %1814 = vmatpush1.bf16.msra.mxu0 0
    %1815 = vmatprep.subr.bf16.mxu0 0
    %1816 = vmatpush1.bf16.msra.mxu0 0
    %1817 = vmatprep.subr.bf16.mxu0 0
    %1818 = vmatpush1.bf16.msra.mxu0 0
    %1819 = vmatprep.subr.bf16.mxu0 0
    %1820 = vmatpush1.bf16.msra.mxu0 0
    %1821 = vmatprep.subr.bf16.mxu0 0
    %1822 = vmatpush1.bf16.msra.mxu0 0
    %1823 = vmatprep.subr.bf16.mxu0 0
    %1824 = vmatpush1.bf16.msra.mxu0 0
    %1825 = vmatprep.subr.bf16.mxu0 0
    %1826 = vmatpush1.bf16.msra.mxu0 0
    %1827 = vmatprep.mubr.bf16.mxu0 0
    %1828 = vmatmul.mubr.bf16.gmra.mrb[0].mxu0 %v1617
    %v1829 = vpop.f32.mrb[0].mxu0
    %v1830 = vadd.f32 %v1655, %v1829
    %v1831 = vpop.f32.mrb[0].mxu0
    %v1832 = vadd.f32 %v1659, %v1831
    %v1833 = vpop.f32.mrb[0].mxu0
    %v1834 = vpop.f32.mrb[0].mxu0
    %1835 = vdwg.mxu0
    %1836 = vmatprep.subr.bf16.mxu0 0
    %1837 = vmatpush1.bf16.msra.mxu0 %v1749
    %1838 = vmatprep.subr.bf16.mxu0 0
    %1839 = vmatpush1.bf16.msra.mxu0 %v1752
    %1840 = vmatprep.subr.bf16.mxu0 0
    %1841 = vmatpush1.bf16.msra.mxu0 %v1755
    %1842 = vmatprep.subr.bf16.mxu0 0
    %1843 = vmatpush1.bf16.msra.mxu0 %v1758
    %1844 = vmatprep.subr.bf16.mxu0 0
    %1845 = vmatpush1.bf16.msra.mxu0 %v1761
    %1846 = vmatprep.subr.bf16.mxu0 0
    %1847 = vmatpush1.bf16.msra.mxu0 %v1764
    %1848 = vmatprep.subr.bf16.mxu0 0
    %1849 = vmatpush1.bf16.msra.mxu0 %v1767
    %1850 = vmatprep.subr.bf16.mxu0 0
    %1851 = vmatpush1.bf16.msra.mxu0 %v1770
    %1852 = vmatprep.subr.bf16.mxu0 0
    %1853 = vmatpush1.bf16.msra.mxu0 0
    %1854 = vmatprep.subr.bf16.mxu0 0
    %1855 = vmatpush1.bf16.msra.mxu0 0
    %1856 = vmatprep.subr.bf16.mxu0 0
    %1857 = vmatpush1.bf16.msra.mxu0 0
    %1858 = vmatprep.subr.bf16.mxu0 0
    %1859 = vmatpush1.bf16.msra.mxu0 0
    %1860 = vmatprep.subr.bf16.mxu0 0
    %1861 = vmatpush1.bf16.msra.mxu0 0
    %1862 = vmatprep.subr.bf16.mxu0 0
    %1863 = vmatpush1.bf16.msra.mxu0 0
    %1864 = vmatprep.subr.bf16.mxu0 0
    %1865 = vmatpush1.bf16.msra.mxu0 0
    %1866 = vmatprep.subr.bf16.mxu0 0
    %1867 = vmatpush1.bf16.msra.mxu0 0
    %1868 = vmatprep.mubr.bf16.mxu0 0
    %1869 = vmatmul.mubr.bf16.gmra.mrb[0].mxu0 %v1617
    %v1870 = vpop.f32.mrb[0].mxu0
    %v1871 = vadd.f32 %v1663, %v1870
    %v1872 = vpop.f32.mrb[0].mxu0
    %v1873 = vpop.f32.mrb[0].mxu0
    %v1874 = vpop.f32.mrb[0].mxu0
    %1875 = vdwg.mxu0
    %v1876 = vadd.f32 %v1352, %v1571
    %v1877 = vxor.u32 %v1876, 2147483648
    %v1878 = vmul.f32 %v1877, 1.442695
    %v1879 = vpow.pop %v1878
    %v1880 = vadd.f32 %v1879, 1.0
    %v1881 = vrcp.pop %v1880
    %v1882 = vmul.f32 1.0, %v1881
    %v1883 = vadd.f32 %v1353, %v1573
    %v1884 = vxor.u32 %v1883, 2147483648
    %v1885 = vmul.f32 %v1884, 1.442695
    %v1886 = vpow.pop %v1885
    %v1887 = vadd.f32 %v1886, 1.0
    %v1888 = vrcp.pop %v1887
    %v1889 = vmul.f32 1.0, %v1888
    %v1890 = vmul.f32 %v1882, %v1612
    %v1891 = vadd.f32 %v1354, %v1890
    %v1892 = vtanh.pop %v1891
    %v1893 = vsub.f32 1.0, %v1889
    %v1894 = vmul.f32 %v1893, %v1892
    %v1895 = vmul.f32 %v1889, %v1312
    %v1896 = vadd.f32 %v1894, %v1895
    %v1897 = vadd.f32 %v1355, %v1830
    %v1898 = vxor.u32 %v1897, 2147483648
    %v1899 = vmul.f32 %v1898, 1.442695
    %v1900 = vpow.pop %v1899
    %v1901 = vadd.f32 %v1900, 1.0
    %v1902 = vrcp.pop %v1901
    %v1903 = vmul.f32 1.0, %v1902
    %v1904 = vadd.f32 %v1356, %v1832
    %v1905 = vxor.u32 %v1904, 2147483648
    %v1906 = vmul.f32 %v1905, 1.442695
    %v1907 = vpow.pop %v1906
    %v1908 = vadd.f32 %v1907, 1.0
    %v1909 = vrcp.pop %v1908
    %v1910 = vmul.f32 1.0, %v1909
    %v1911 = vmul.f32 %v1903, %v1871
    %v1912 = vadd.f32 %v1357, %v1911
    %v1913 = vtanh.pop %v1912
    %v1914 = vsub.f32 1.0, %v1910
    %v1915 = vmul.f32 %v1914, %v1913
    %v1916 = vmul.f32 %v1910, %v1333
    %v1917 = vadd.f32 %v1915, %v1916
    %s1918 = scalar_lea.vmem %s1, 8
    %v1919 = vld [vmem:[%s1918] sm:$0xff]
    %1921 = vset.pattern.permute.xlu0 0
    %1922 = vperm.xlu0 %1921, %v1919
    %v1923 = vpop.permute.xlu0 %1922
    %v1925 = vmul.f32 %v1896, %v1923
    %s1926 = scalar_lea.vmem [#allocation4], 8
    %1927 = vst [vmem:[%s1926] sm:$0xff] %v1925
    %s1928 = scalar_lea.vmem %s1, 48
    %v1929 = vld [vmem:[%s1928] sm:$0xff]
    %1931 = vset.pattern.permute.xlu0 0
    %1932 = vperm.xlu0 %1931, %v1929
    %v1933 = vpop.permute.xlu0 %1932
    %v1935 = vmul.f32 %v1917, %v1933
    %s1936 = scalar_lea.vmem [#allocation10], 48
    %1937 = vst [vmem:[%s1936] sm:$0xff] %v1935
    %v1938 = vld [vmem:[#allocation2 + $0x30] sm:$0xff]
    %v1939 = vld [vmem:[#allocation2 + $0x38] sm:$0xff]
    %v1940 = vld [vmem:[#allocation2 + $0x40] sm:$0xff]
    %v1941 = vld [vmem:[#allocation3 + $0x78] sm:$0xff]
    %v1942 = vld [vmem:[#allocation3 + $0x80] sm:$0xff]
    %v1943 = vld [vmem:[#allocation3 + $0x88] sm:$0xff]
    %v1944 = vpack.c.bf16 %v1896, %v1896
    %v1945 = vld [vmem:[#allocation8] sm:$0xff]
    %v1946 = vld [vmem:[#allocation8 + $0x8] sm:$0xf]
    %v1947 = vld [vmem:[#allocation8 + $0xc] sm:$0xff]
    %v1948 = vld [vmem:[#allocation8 + $0x14] sm:$0xf]
    %v1949 = vld [vmem:[#allocation8 + $0x18] sm:$0xff]
    %v1950 = vld [vmem:[#allocation8 + $0x20] sm:$0xf]
    %v1951 = vld [vmem:[#allocation8 + $0x24] sm:$0xff]
    %v1952 = vld [vmem:[#allocation8 + $0x2c] sm:$0xf]
    %v1953 = vld [vmem:[#allocation8 + $0x30] sm:$0xff]
    %v1954 = vld [vmem:[#allocation8 + $0x38] sm:$0xf]
    %v1955 = vld [vmem:[#allocation8 + $0x3c] sm:$0xff]
    %v1956 = vld [vmem:[#allocation8 + $0x44] sm:$0xf]
    %v1957 = vld [vmem:[#allocation8 + $0x48] sm:$0xff]
    %v1958 = vld [vmem:[#allocation8 + $0x50] sm:$0xf]
    %v1959 = vld [vmem:[#allocation8 + $0x54] sm:$0xff]
    %v1960 = vld [vmem:[#allocation8 + $0x5c] sm:$0xf]
    %v1961 = vld [vmem:[#allocation8 + $0x60] sm:$0xff]
    %v1962 = vld [vmem:[#allocation8 + $0x68] sm:$0xf]
    %v1963 = vld [vmem:[#allocation8 + $0x6c] sm:$0xff]
    %v1964 = vld [vmem:[#allocation8 + $0x74] sm:$0xf]
    %v1965 = vld [vmem:[#allocation8 + $0x78] sm:$0xff]
    %v1966 = vld [vmem:[#allocation8 + $0x80] sm:$0xf]
    %v1967 = vld [vmem:[#allocation8 + $0x84] sm:$0xff]
    %v1968 = vld [vmem:[#allocation8 + $0x8c] sm:$0xf]
    %v1969 = vld [vmem:[#allocation8 + $0x90] sm:$0xff]
    %v1970 = vld [vmem:[#allocation8 + $0x98] sm:$0xf]
    %v1971 = vld [vmem:[#allocation8 + $0x9c] sm:$0xff]
    %v1972 = vld [vmem:[#allocation8 + $0xa4] sm:$0xf]
    %v1973 = vld [vmem:[#allocation8 + $0xa8] sm:$0xff]
    %v1974 = vld [vmem:[#allocation8 + $0xb0] sm:$0xf]
    %v1975 = vld [vmem:[#allocation8 + $0xb4] sm:$0xff]
    %v1976 = vld [vmem:[#allocation8 + $0xbc] sm:$0xf]
    %v1977 = vld [vmem:[%s5] sm:$0x7]
    %v1979 = vlaneseq
    %v1980 = vshrl.u32 %v1979, 7
    %v1981 = vsub.s32 0, %v1980
    %v1982 = vrot.slane %v1977, %v1981
    %v1983 = vlaneseq
    %v1984 = vshrl.u32 %v1983, 7
    %v1985 = vsub.s32 1, %v1984
    %v1986 = vrot.slane %v1977, %v1985
    %v1987 = vlaneseq
    %v1988 = vshrl.u32 %v1987, 7
    %v1989 = vsub.s32 2, %v1988
    %v1990 = vrot.slane %v1977, %v1989
    %v2026 = vunpack.c.l.b16 %v1945
    %v2027 = vunpack.c.h.b16 %v1945
    %v2028 = vunpack.c.l.b16 %v1946
    %v2029 = vunpack.c.l.b16 %v1947
    %v2030 = vunpack.c.h.b16 %v1947
    %v2031 = vunpack.c.l.b16 %v1948
    %v2032 = vunpack.c.l.b16 %v1949
    %v2033 = vunpack.c.h.b16 %v1949
    %v2034 = vunpack.c.l.b16 %v1950
    %v2035 = vunpack.c.l.b16 %v1951
    %v2036 = vunpack.c.h.b16 %v1951
    %v2037 = vunpack.c.l.b16 %v1952
    %v2038 = vunpack.c.l.b16 %v1953
    %v2039 = vunpack.c.h.b16 %v1953
    %v2040 = vunpack.c.l.b16 %v1954
    %v2041 = vunpack.c.l.b16 %v1955
    %v2042 = vunpack.c.h.b16 %v1955
    %v2043 = vunpack.c.l.b16 %v1956
    %v2044 = vunpack.c.l.b16 %v1957
    %v2045 = vunpack.c.h.b16 %v1957
    %v2046 = vunpack.c.l.b16 %v1958
    %v2047 = vunpack.c.l.b16 %v1959
    %v2048 = vunpack.c.h.b16 %v1959
    %v2049 = vunpack.c.l.b16 %v1960
    %v2050 = vunpack.c.l.b16 %v1961
    %v2051 = vunpack.c.h.b16 %v1961
    %v2052 = vunpack.c.l.b16 %v1962
    %v2053 = vunpack.c.l.b16 %v1963
    %v2054 = vunpack.c.h.b16 %v1963
    %v2055 = vunpack.c.l.b16 %v1964
    %v2056 = vunpack.c.l.b16 %v1965
    %v2057 = vunpack.c.h.b16 %v1965
    %v2058 = vunpack.c.l.b16 %v1966
    %v2059 = vunpack.c.l.b16 %v1967
    %v2060 = vunpack.c.h.b16 %v1967
    %v2061 = vunpack.c.l.b16 %v1968
    %v2062 = vunpack.c.l.b16 %v1969
    %v2063 = vunpack.c.h.b16 %v1969
    %v2064 = vunpack.c.l.b16 %v1970
    %v2065 = vunpack.c.l.b16 %v1971
    %v2066 = vunpack.c.h.b16 %v1971
    %v2067 = vunpack.c.l.b16 %v1972
    %v2068 = vunpack.c.l.b16 %v1973
    %v2069 = vunpack.c.h.b16 %v1973
    %v2070 = vunpack.c.l.b16 %v1974
    %v2071 = vunpack.c.l.b16 %v1975
    %v2072 = vunpack.c.h.b16 %v1975
    %v2073 = vunpack.c.l.b16 %v1976
    %v2074 = vpack.c.b16 %v2029, %v2026
    %v2075 = vpack.c.b16 %v2030, %v2027
    %v2076 = vpack.c.b16 %v2031, %v2028
    %v2077 = vpack.c.b16 %v2035, %v2032
    %v2078 = vpack.c.b16 %v2036, %v2033
    %v2079 = vpack.c.b16 %v2037, %v2034
    %v2080 = vpack.c.b16 %v2041, %v2038
    %v2081 = vpack.c.b16 %v2042, %v2039
    %v2082 = vpack.c.b16 %v2043, %v2040
    %v2083 = vpack.c.b16 %v2047, %v2044
    %v2084 = vpack.c.b16 %v2048, %v2045
    %v2085 = vpack.c.b16 %v2049, %v2046
    %v2086 = vpack.c.b16 %v2053, %v2050
    %v2087 = vpack.c.b16 %v2054, %v2051
    %v2088 = vpack.c.b16 %v2055, %v2052
    %v2089 = vpack.c.b16 %v2059, %v2056
    %v2090 = vpack.c.b16 %v2060, %v2057
    %v2091 = vpack.c.b16 %v2061, %v2058
    %v2092 = vpack.c.b16 %v2065, %v2062
    %v2093 = vpack.c.b16 %v2066, %v2063
    %v2094 = vpack.c.b16 %v2067, %v2064
    %v2095 = vpack.c.b16 %v2071, %v2068
    %v2096 = vpack.c.b16 %v2072, %v2069
    %v2097 = vpack.c.b16 %v2073, %v2070
    %2122 = vmatprep.subr.bf16.mxu0 %v2075
    %2123 = vmatpush1.bf16.msra.mxu0 %v2074
    %2124 = vmatprep.subr.bf16.mxu0 %v2078
    %2125 = vmatpush1.bf16.msra.mxu0 %v2077
    %2126 = vmatprep.subr.bf16.mxu0 %v2081
    %2127 = vmatpush1.bf16.msra.mxu0 %v2080
    %2128 = vmatprep.subr.bf16.mxu0 %v2084
    %2129 = vmatpush1.bf16.msra.mxu0 %v2083
    %2130 = vmatprep.subr.bf16.mxu0 %v2087
    %2131 = vmatpush1.bf16.msra.mxu0 %v2086
    %2132 = vmatprep.subr.bf16.mxu0 %v2090
    %2133 = vmatpush1.bf16.msra.mxu0 %v2089
    %2134 = vmatprep.subr.bf16.mxu0 %v2093
    %2135 = vmatpush1.bf16.msra.mxu0 %v2092
    %2136 = vmatprep.subr.bf16.mxu0 %v2096
    %2137 = vmatpush1.bf16.msra.mxu0 %v2095
    %2138 = vmatprep.subr.bf16.mxu0 0
    %2139 = vmatpush1.bf16.msra.mxu0 0
    %2140 = vmatprep.subr.bf16.mxu0 0
    %2141 = vmatpush1.bf16.msra.mxu0 0
    %2142 = vmatprep.subr.bf16.mxu0 0
    %2143 = vmatpush1.bf16.msra.mxu0 0
    %2144 = vmatprep.subr.bf16.mxu0 0
    %2145 = vmatpush1.bf16.msra.mxu0 0
    %2146 = vmatprep.subr.bf16.mxu0 0
    %2147 = vmatpush1.bf16.msra.mxu0 0
    %2148 = vmatprep.subr.bf16.mxu0 0
    %2149 = vmatpush1.bf16.msra.mxu0 0
    %2150 = vmatprep.subr.bf16.mxu0 0
    %2151 = vmatpush1.bf16.msra.mxu0 0
    %2152 = vmatprep.subr.bf16.mxu0 0
    %2153 = vmatpush1.bf16.msra.mxu0 0
    %2154 = vmatprep.mubr.bf16.mxu0 0
    %2155 = vmatmul.mubr.bf16.gmra.mrb[0].mxu0 %v1944
    %v2156 = vpop.f32.mrb[0].mxu0
    %v2157 = vadd.f32 %v1982, %v2156
    %v2158 = vpop.f32.mrb[0].mxu0
    %v2159 = vadd.f32 %v1986, %v2158
    %v2160 = vpop.f32.mrb[0].mxu0
    %v2161 = vpop.f32.mrb[0].mxu0
    %2162 = vdwg.mxu0
    %2163 = vmatprep.subr.bf16.mxu0 0
    %2164 = vmatpush1.bf16.msra.mxu0 %v2076
    %2165 = vmatprep.subr.bf16.mxu0 0
    %2166 = vmatpush1.bf16.msra.mxu0 %v2079
    %2167 = vmatprep.subr.bf16.mxu0 0
    %2168 = vmatpush1.bf16.msra.mxu0 %v2082
    %2169 = vmatprep.subr.bf16.mxu0 0
    %2170 = vmatpush1.bf16.msra.mxu0 %v2085
    %2171 = vmatprep.subr.bf16.mxu0 0
    %2172 = vmatpush1.bf16.msra.mxu0 %v2088
    %2173 = vmatprep.subr.bf16.mxu0 0
    %2174 = vmatpush1.bf16.msra.mxu0 %v2091
    %2175 = vmatprep.subr.bf16.mxu0 0
    %2176 = vmatpush1.bf16.msra.mxu0 %v2094
    %2177 = vmatprep.subr.bf16.mxu0 0
    %2178 = vmatpush1.bf16.msra.mxu0 %v2097
    %2179 = vmatprep.subr.bf16.mxu0 0
    %2180 = vmatpush1.bf16.msra.mxu0 0
    %2181 = vmatprep.subr.bf16.mxu0 0
    %2182 = vmatpush1.bf16.msra.mxu0 0
    %2183 = vmatprep.subr.bf16.mxu0 0
    %2184 = vmatpush1.bf16.msra.mxu0 0
    %2185 = vmatprep.subr.bf16.mxu0 0
    %2186 = vmatpush1.bf16.msra.mxu0 0
    %2187 = vmatprep.subr.bf16.mxu0 0
    %2188 = vmatpush1.bf16.msra.mxu0 0
    %2189 = vmatprep.subr.bf16.mxu0 0
    %2190 = vmatpush1.bf16.msra.mxu0 0
    %2191 = vmatprep.subr.bf16.mxu0 0
    %2192 = vmatpush1.bf16.msra.mxu0 0
    %2193 = vmatprep.subr.bf16.mxu0 0
    %2194 = vmatpush1.bf16.msra.mxu0 0
    %2195 = vmatprep.mubr.bf16.mxu0 0
    %2196 = vmatmul.mubr.bf16.gmra.mrb[0].mxu0 %v1944
    %v2197 = vpop.f32.mrb[0].mxu0
    %v2198 = vadd.f32 %v1990, %v2197
    %v2199 = vpop.f32.mrb[0].mxu0
    %v2200 = vpop.f32.mrb[0].mxu0
    %v2201 = vpop.f32.mrb[0].mxu0
    %2202 = vdwg.mxu0
    %v2203 = vpack.c.bf16 %v1917, %v1917
    %v2204 = vld [vmem:[%s1032] sm:$0xff]
    %v2205 = vld [vmem:[%s1032 + $0x8] sm:$0xf]
    %v2206 = vld [vmem:[%s1032 + $0xc] sm:$0xff]
    %v2207 = vld [vmem:[%s1032 + $0x14] sm:$0xf]
    %v2208 = vld [vmem:[%s1032 + $0x18] sm:$0xff]
    %v2209 = vld [vmem:[%s1032 + $0x20] sm:$0xf]
    %v2210 = vld [vmem:[%s1032 + $0x24] sm:$0xff]
    %v2211 = vld [vmem:[%s1032 + $0x2c] sm:$0xf]
    %v2212 = vld [vmem:[%s1032 + $0x30] sm:$0xff]
    %v2213 = vld [vmem:[%s1032 + $0x38] sm:$0xf]
    %v2214 = vld [vmem:[%s1032 + $0x3c] sm:$0xff]
    %v2215 = vld [vmem:[%s1032 + $0x44] sm:$0xf]
    %v2216 = vld [vmem:[%s1032 + $0x48] sm:$0xff]
    %v2217 = vld [vmem:[%s1032 + $0x50] sm:$0xf]
    %v2218 = vld [vmem:[%s1032 + $0x54] sm:$0xff]
    %v2219 = vld [vmem:[%s1032 + $0x5c] sm:$0xf]
    %v2220 = vld [vmem:[%s1032 + $0x60] sm:$0xff]
    %v2221 = vld [vmem:[%s1032 + $0x68] sm:$0xf]
    %v2222 = vld [vmem:[%s1032 + $0x6c] sm:$0xff]
    %v2223 = vld [vmem:[%s1032 + $0x74] sm:$0xf]
    %v2224 = vld [vmem:[%s1032 + $0x78] sm:$0xff]
    %v2225 = vld [vmem:[%s1032 + $0x80] sm:$0xf]
    %v2226 = vld [vmem:[%s1032 + $0x84] sm:$0xff]
    %v2227 = vld [vmem:[%s1032 + $0x8c] sm:$0xf]
    %v2228 = vld [vmem:[%s1032 + $0x90] sm:$0xff]
    %v2229 = vld [vmem:[%s1032 + $0x98] sm:$0xf]
    %v2230 = vld [vmem:[%s1032 + $0x9c] sm:$0xff]
    %v2231 = vld [vmem:[%s1032 + $0xa4] sm:$0xf]
    %v2232 = vld [vmem:[%s1032 + $0xa8] sm:$0xff]
    %v2233 = vld [vmem:[%s1032 + $0xb0] sm:$0xf]
    %v2234 = vld [vmem:[%s1032 + $0xb4] sm:$0xff]
    %v2235 = vld [vmem:[%s1032 + $0xbc] sm:$0xf]
    %v2236 = vld [vmem:[%s1065] sm:$0x7]
    %v2238 = vlaneseq
    %v2239 = vshrl.u32 %v2238, 7
    %v2240 = vsub.s32 0, %v2239
    %v2241 = vrot.slane %v2236, %v2240
    %v2242 = vlaneseq
    %v2243 = vshrl.u32 %v2242, 7
    %v2244 = vsub.s32 1, %v2243
    %v2245 = vrot.slane %v2236, %v2244
    %v2246 = vlaneseq
    %v2247 = vshrl.u32 %v2246, 7
    %v2248 = vsub.s32 2, %v2247
    %v2249 = vrot.slane %v2236, %v2248
    %v2285 = vunpack.c.l.b16 %v2204
    %v2286 = vunpack.c.h.b16 %v2204
    %v2287 = vunpack.c.l.b16 %v2205
    %v2288 = vunpack.c.l.b16 %v2206
    %v2289 = vunpack.c.h.b16 %v2206
    %v2290 = vunpack.c.l.b16 %v2207
    %v2291 = vunpack.c.l.b16 %v2208
    %v2292 = vunpack.c.h.b16 %v2208
    %v2293 = vunpack.c.l.b16 %v2209
    %v2294 = vunpack.c.l.b16 %v2210
    %v2295 = vunpack.c.h.b16 %v2210
    %v2296 = vunpack.c.l.b16 %v2211
    %v2297 = vunpack.c.l.b16 %v2212
    %v2298 = vunpack.c.h.b16 %v2212
    %v2299 = vunpack.c.l.b16 %v2213
    %v2300 = vunpack.c.l.b16 %v2214
    %v2301 = vunpack.c.h.b16 %v2214
    %v2302 = vunpack.c.l.b16 %v2215
    %v2303 = vunpack.c.l.b16 %v2216
    %v2304 = vunpack.c.h.b16 %v2216
    %v2305 = vunpack.c.l.b16 %v2217
    %v2306 = vunpack.c.l.b16 %v2218
    %v2307 = vunpack.c.h.b16 %v2218
    %v2308 = vunpack.c.l.b16 %v2219
    %v2309 = vunpack.c.l.b16 %v2220
    %v2310 = vunpack.c.h.b16 %v2220
    %v2311 = vunpack.c.l.b16 %v2221
    %v2312 = vunpack.c.l.b16 %v2222
    %v2313 = vunpack.c.h.b16 %v2222
    %v2314 = vunpack.c.l.b16 %v2223
    %v2315 = vunpack.c.l.b16 %v2224
    %v2316 = vunpack.c.h.b16 %v2224
    %v2317 = vunpack.c.l.b16 %v2225
    %v2318 = vunpack.c.l.b16 %v2226
    %v2319 = vunpack.c.h.b16 %v2226
    %v2320 = vunpack.c.l.b16 %v2227
    %v2321 = vunpack.c.l.b16 %v2228
    %v2322 = vunpack.c.h.b16 %v2228
    %v2323 = vunpack.c.l.b16 %v2229
    %v2324 = vunpack.c.l.b16 %v2230
    %v2325 = vunpack.c.h.b16 %v2230
    %v2326 = vunpack.c.l.b16 %v2231
    %v2327 = vunpack.c.l.b16 %v2232
    %v2328 = vunpack.c.h.b16 %v2232
    %v2329 = vunpack.c.l.b16 %v2233
    %v2330 = vunpack.c.l.b16 %v2234
    %v2331 = vunpack.c.h.b16 %v2234
    %v2332 = vunpack.c.l.b16 %v2235
    %v2333 = vpack.c.b16 %v2288, %v2285
    %v2334 = vpack.c.b16 %v2289, %v2286
    %v2335 = vpack.c.b16 %v2290, %v2287
    %v2336 = vpack.c.b16 %v2294, %v2291
    %v2337 = vpack.c.b16 %v2295, %v2292
    %v2338 = vpack.c.b16 %v2296, %v2293
    %v2339 = vpack.c.b16 %v2300, %v2297
    %v2340 = vpack.c.b16 %v2301, %v2298
    %v2341 = vpack.c.b16 %v2302, %v2299
    %v2342 = vpack.c.b16 %v2306, %v2303
    %v2343 = vpack.c.b16 %v2307, %v2304
    %v2344 = vpack.c.b16 %v2308, %v2305
    %v2345 = vpack.c.b16 %v2312, %v2309
    %v2346 = vpack.c.b16 %v2313, %v2310
    %v2347 = vpack.c.b16 %v2314, %v2311
    %v2348 = vpack.c.b16 %v2318, %v2315
    %v2349 = vpack.c.b16 %v2319, %v2316
    %v2350 = vpack.c.b16 %v2320, %v2317
    %v2351 = vpack.c.b16 %v2324, %v2321
    %v2352 = vpack.c.b16 %v2325, %v2322
    %v2353 = vpack.c.b16 %v2326, %v2323
    %v2354 = vpack.c.b16 %v2330, %v2327
    %v2355 = vpack.c.b16 %v2331, %v2328
    %v2356 = vpack.c.b16 %v2332, %v2329
    %2381 = vmatprep.subr.bf16.mxu0 %v2334
    %2382 = vmatpush1.bf16.msra.mxu0 %v2333
    %2383 = vmatprep.subr.bf16.mxu0 %v2337
    %2384 = vmatpush1.bf16.msra.mxu0 %v2336
    %2385 = vmatprep.subr.bf16.mxu0 %v2340
    %2386 = vmatpush1.bf16.msra.mxu0 %v2339
    %2387 = vmatprep.subr.bf16.mxu0 %v2343
    %2388 = vmatpush1.bf16.msra.mxu0 %v2342
    %2389 = vmatprep.subr.bf16.mxu0 %v2346
    %2390 = vmatpush1.bf16.msra.mxu0 %v2345
    %2391 = vmatprep.subr.bf16.mxu0 %v2349
    %2392 = vmatpush1.bf16.msra.mxu0 %v2348
    %2393 = vmatprep.subr.bf16.mxu0 %v2352
    %2394 = vmatpush1.bf16.msra.mxu0 %v2351
    %2395 = vmatprep.subr.bf16.mxu0 %v2355
    %2396 = vmatpush1.bf16.msra.mxu0 %v2354
    %2397 = vmatprep.subr.bf16.mxu0 0
    %2398 = vmatpush1.bf16.msra.mxu0 0
    %2399 = vmatprep.subr.bf16.mxu0 0
    %2400 = vmatpush1.bf16.msra.mxu0 0
    %2401 = vmatprep.subr.bf16.mxu0 0
    %2402 = vmatpush1.bf16.msra.mxu0 0
    %2403 = vmatprep.subr.bf16.mxu0 0
    %2404 = vmatpush1.bf16.msra.mxu0 0
    %2405 = vmatprep.subr.bf16.mxu0 0
    %2406 = vmatpush1.bf16.msra.mxu0 0
    %2407 = vmatprep.subr.bf16.mxu0 0
    %2408 = vmatpush1.bf16.msra.mxu0 0
    %2409 = vmatprep.subr.bf16.mxu0 0
    %2410 = vmatpush1.bf16.msra.mxu0 0
    %2411 = vmatprep.subr.bf16.mxu0 0
    %2412 = vmatpush1.bf16.msra.mxu0 0
    %2413 = vmatprep.mubr.bf16.mxu0 0
    %2414 = vmatmul.mubr.bf16.gmra.mrb[0].mxu0 %v2203
    %v2415 = vpop.f32.mrb[0].mxu0
    %v2416 = vadd.f32 %v2241, %v2415
    %v2417 = vpop.f32.mrb[0].mxu0
    %v2418 = vadd.f32 %v2245, %v2417
    %v2419 = vpop.f32.mrb[0].mxu0
    %v2420 = vpop.f32.mrb[0].mxu0
    %2421 = vdwg.mxu0
    %2422 = vmatprep.subr.bf16.mxu0 0
    %2423 = vmatpush1.bf16.msra.mxu0 %v2335
    %2424 = vmatprep.subr.bf16.mxu0 0
    %2425 = vmatpush1.bf16.msra.mxu0 %v2338
    %2426 = vmatprep.subr.bf16.mxu0 0
    %2427 = vmatpush1.bf16.msra.mxu0 %v2341
    %2428 = vmatprep.subr.bf16.mxu0 0
    %2429 = vmatpush1.bf16.msra.mxu0 %v2344
    %2430 = vmatprep.subr.bf16.mxu0 0
    %2431 = vmatpush1.bf16.msra.mxu0 %v2347
    %2432 = vmatprep.subr.bf16.mxu0 0
    %2433 = vmatpush1.bf16.msra.mxu0 %v2350
    %2434 = vmatprep.subr.bf16.mxu0 0
    %2435 = vmatpush1.bf16.msra.mxu0 %v2353
    %2436 = vmatprep.subr.bf16.mxu0 0
    %2437 = vmatpush1.bf16.msra.mxu0 %v2356
    %2438 = vmatprep.subr.bf16.mxu0 0
    %2439 = vmatpush1.bf16.msra.mxu0 0
    %2440 = vmatprep.subr.bf16.mxu0 0
    %2441 = vmatpush1.bf16.msra.mxu0 0
    %2442 = vmatprep.subr.bf16.mxu0 0
    %2443 = vmatpush1.bf16.msra.mxu0 0
    %2444 = vmatprep.subr.bf16.mxu0 0
    %2445 = vmatpush1.bf16.msra.mxu0 0
    %2446 = vmatprep.subr.bf16.mxu0 0
    %2447 = vmatpush1.bf16.msra.mxu0 0
    %2448 = vmatprep.subr.bf16.mxu0 0
    %2449 = vmatpush1.bf16.msra.mxu0 0
    %2450 = vmatprep.subr.bf16.mxu0 0
    %2451 = vmatpush1.bf16.msra.mxu0 0
    %2452 = vmatprep.subr.bf16.mxu0 0
    %2453 = vmatpush1.bf16.msra.mxu0 0
    %2454 = vmatprep.mubr.bf16.mxu0 0
    %2455 = vmatmul.mubr.bf16.gmra.mrb[0].mxu0 %v2203
    %v2456 = vpop.f32.mrb[0].mxu0
    %v2457 = vadd.f32 %v2249, %v2456
    %v2458 = vpop.f32.mrb[0].mxu0
    %v2459 = vpop.f32.mrb[0].mxu0
    %v2460 = vpop.f32.mrb[0].mxu0
    %2461 = vdwg.mxu0
    %v2462 = vadd.f32 %v1938, %v2157
    %v2463 = vxor.u32 %v2462, 2147483648
    %v2464 = vmul.f32 %v2463, 1.442695
    %v2465 = vpow.pop %v2464
    %v2466 = vadd.f32 %v2465, 1.0
    %v2467 = vrcp.pop %v2466
    %v2468 = vmul.f32 1.0, %v2467
    %v2469 = vadd.f32 %v1939, %v2159
    %v2470 = vxor.u32 %v2469, 2147483648
    %v2471 = vmul.f32 %v2470, 1.442695
    %v2472 = vpow.pop %v2471
    %v2473 = vadd.f32 %v2472, 1.0
    %v2474 = vrcp.pop %v2473
    %v2475 = vmul.f32 1.0, %v2474
    %v2476 = vmul.f32 %v2468, %v2198
    %v2477 = vadd.f32 %v1940, %v2476
    %v2478 = vtanh.pop %v2477
    %v2479 = vsub.f32 1.0, %v2475
    %v2480 = vmul.f32 %v2479, %v2478
    %v2481 = vmul.f32 %v2475, %v1896
    %v2482 = vadd.f32 %v2480, %v2481
    %v2483 = vadd.f32 %v1941, %v2416
    %v2484 = vxor.u32 %v2483, 2147483648
    %v2485 = vmul.f32 %v2484, 1.442695
    %v2486 = vpow.pop %v2485
    %v2487 = vadd.f32 %v2486, 1.0
    %v2488 = vrcp.pop %v2487
    %v2489 = vmul.f32 1.0, %v2488
    %v2490 = vadd.f32 %v1942, %v2418
    %v2491 = vxor.u32 %v2490, 2147483648
    %v2492 = vmul.f32 %v2491, 1.442695
    %v2493 = vpow.pop %v2492
    %v2494 = vadd.f32 %v2493, 1.0
    %v2495 = vrcp.pop %v2494
    %v2496 = vmul.f32 1.0, %v2495
    %v2497 = vmul.f32 %v2489, %v2457
    %v2498 = vadd.f32 %v1943, %v2497
    %v2499 = vtanh.pop %v2498
    %v2500 = vsub.f32 1.0, %v2496
    %v2501 = vmul.f32 %v2500, %v2499
    %v2502 = vmul.f32 %v2496, %v1917
    %v2503 = vadd.f32 %v2501, %v2502
    %s2504 = scalar_lea.vmem %s1, 16
    %v2505 = vld [vmem:[%s2504] sm:$0xff]
    %2507 = vset.pattern.permute.xlu0 0
    %2508 = vperm.xlu0 %2507, %v2505
    %v2509 = vpop.permute.xlu0 %2508
    %v2511 = vmul.f32 %v2482, %v2509
    %s2512 = scalar_lea.vmem [#allocation4], 16
    %2513 = vst [vmem:[%s2512] sm:$0xff] %v2511
    %s2514 = scalar_lea.vmem %s1, 40
    %v2515 = vld [vmem:[%s2514] sm:$0xff]
    %2517 = vset.pattern.permute.xlu0 0
    %2518 = vperm.xlu0 %2517, %v2515
    %v2519 = vpop.permute.xlu0 %2518
    %v2521 = vmul.f32 %v2503, %v2519
    %s2522 = scalar_lea.vmem [#allocation10], 40
    %2523 = vst [vmem:[%s2522] sm:$0xff] %v2521
    %v2524 = vld [vmem:[#allocation2 + $0x48] sm:$0xff]
    %v2525 = vld [vmem:[#allocation2 + $0x50] sm:$0xff]
    %v2526 = vld [vmem:[#allocation2 + $0x58] sm:$0xff]
    %v2527 = vld [vmem:[#allocation3 + $0x60] sm:$0xff]
    %v2528 = vld [vmem:[#allocation3 + $0x68] sm:$0xff]
    %v2529 = vld [vmem:[#allocation3 + $0x70] sm:$0xff]
    %v2530 = vpack.c.bf16 %v2482, %v2482
    %v2531 = vld [vmem:[#allocation8] sm:$0xff]
    %v2532 = vld [vmem:[#allocation8 + $0x8] sm:$0xf]
    %v2533 = vld [vmem:[#allocation8 + $0xc] sm:$0xff]
    %v2534 = vld [vmem:[#allocation8 + $0x14] sm:$0xf]
    %v2535 = vld [vmem:[#allocation8 + $0x18] sm:$0xff]
    %v2536 = vld [vmem:[#allocation8 + $0x20] sm:$0xf]
    %v2537 = vld [vmem:[#allocation8 + $0x24] sm:$0xff]
    %v2538 = vld [vmem:[#allocation8 + $0x2c] sm:$0xf]
    %v2539 = vld [vmem:[#allocation8 + $0x30] sm:$0xff]
    %v2540 = vld [vmem:[#allocation8 + $0x38] sm:$0xf]
    %v2541 = vld [vmem:[#allocation8 + $0x3c] sm:$0xff]
    %v2542 = vld [vmem:[#allocation8 + $0x44] sm:$0xf]
    %v2543 = vld [vmem:[#allocation8 + $0x48] sm:$0xff]
    %v2544 = vld [vmem:[#allocation8 + $0x50] sm:$0xf]
    %v2545 = vld [vmem:[#allocation8 + $0x54] sm:$0xff]
    %v2546 = vld [vmem:[#allocation8 + $0x5c] sm:$0xf]
    %v2547 = vld [vmem:[#allocation8 + $0x60] sm:$0xff]
    %v2548 = vld [vmem:[#allocation8 + $0x68] sm:$0xf]
    %v2549 = vld [vmem:[#allocation8 + $0x6c] sm:$0xff]
    %v2550 = vld [vmem:[#allocation8 + $0x74] sm:$0xf]
    %v2551 = vld [vmem:[#allocation8 + $0x78] sm:$0xff]
    %v2552 = vld [vmem:[#allocation8 + $0x80] sm:$0xf]
    %v2553 = vld [vmem:[#allocation8 + $0x84] sm:$0xff]
    %v2554 = vld [vmem:[#allocation8 + $0x8c] sm:$0xf]
    %v2555 = vld [vmem:[#allocation8 + $0x90] sm:$0xff]
    %v2556 = vld [vmem:[#allocation8 + $0x98] sm:$0xf]
    %v2557 = vld [vmem:[#allocation8 + $0x9c] sm:$0xff]
    %v2558 = vld [vmem:[#allocation8 + $0xa4] sm:$0xf]
    %v2559 = vld [vmem:[#allocation8 + $0xa8] sm:$0xff]
    %v2560 = vld [vmem:[#allocation8 + $0xb0] sm:$0xf]
    %v2561 = vld [vmem:[#allocation8 + $0xb4] sm:$0xff]
    %v2562 = vld [vmem:[#allocation8 + $0xbc] sm:$0xf]
    %v2563 = vld [vmem:[%s5] sm:$0x7]
    %v2565 = vlaneseq
    %v2566 = vshrl.u32 %v2565, 7
    %v2567 = vsub.s32 0, %v2566
    %v2568 = vrot.slane %v2563, %v2567
    %v2569 = vlaneseq
    %v2570 = vshrl.u32 %v2569, 7
    %v2571 = vsub.s32 1, %v2570
    %v2572 = vrot.slane %v2563, %v2571
    %v2573 = vlaneseq
    %v2574 = vshrl.u32 %v2573, 7
    %v2575 = vsub.s32 2, %v2574
    %v2576 = vrot.slane %v2563, %v2575
    %v2612 = vunpack.c.l.b16 %v2531
    %v2613 = vunpack.c.h.b16 %v2531
    %v2614 = vunpack.c.l.b16 %v2532
    %v2615 = vunpack.c.l.b16 %v2533
    %v2616 = vunpack.c.h.b16 %v2533
    %v2617 = vunpack.c.l.b16 %v2534
    %v2618 = vunpack.c.l.b16 %v2535
    %v2619 = vunpack.c.h.b16 %v2535
    %v2620 = vunpack.c.l.b16 %v2536
    %v2621 = vunpack.c.l.b16 %v2537
    %v2622 = vunpack.c.h.b16 %v2537
    %v2623 = vunpack.c.l.b16 %v2538
    %v2624 = vunpack.c.l.b16 %v2539
    %v2625 = vunpack.c.h.b16 %v2539
    %v2626 = vunpack.c.l.b16 %v2540
    %v2627 = vunpack.c.l.b16 %v2541
    %v2628 = vunpack.c.h.b16 %v2541
    %v2629 = vunpack.c.l.b16 %v2542
    %v2630 = vunpack.c.l.b16 %v2543
    %v2631 = vunpack.c.h.b16 %v2543
    %v2632 = vunpack.c.l.b16 %v2544
    %v2633 = vunpack.c.l.b16 %v2545
    %v2634 = vunpack.c.h.b16 %v2545
    %v2635 = vunpack.c.l.b16 %v2546
    %v2636 = vunpack.c.l.b16 %v2547
    %v2637 = vunpack.c.h.b16 %v2547
    %v2638 = vunpack.c.l.b16 %v2548
    %v2639 = vunpack.c.l.b16 %v2549
    %v2640 = vunpack.c.h.b16 %v2549
    %v2641 = vunpack.c.l.b16 %v2550
    %v2642 = vunpack.c.l.b16 %v2551
    %v2643 = vunpack.c.h.b16 %v2551
    %v2644 = vunpack.c.l.b16 %v2552
    %v2645 = vunpack.c.l.b16 %v2553
    %v2646 = vunpack.c.h.b16 %v2553
    %v2647 = vunpack.c.l.b16 %v2554
    %v2648 = vunpack.c.l.b16 %v2555
    %v2649 = vunpack.c.h.b16 %v2555
    %v2650 = vunpack.c.l.b16 %v2556
    %v2651 = vunpack.c.l.b16 %v2557
    %v2652 = vunpack.c.h.b16 %v2557
    %v2653 = vunpack.c.l.b16 %v2558
    %v2654 = vunpack.c.l.b16 %v2559
    %v2655 = vunpack.c.h.b16 %v2559
    %v2656 = vunpack.c.l.b16 %v2560
    %v2657 = vunpack.c.l.b16 %v2561
    %v2658 = vunpack.c.h.b16 %v2561
    %v2659 = vunpack.c.l.b16 %v2562
    %v2660 = vpack.c.b16 %v2615, %v2612
    %v2661 = vpack.c.b16 %v2616, %v2613
    %v2662 = vpack.c.b16 %v2617, %v2614
    %v2663 = vpack.c.b16 %v2621, %v2618
    %v2664 = vpack.c.b16 %v2622, %v2619
    %v2665 = vpack.c.b16 %v2623, %v2620
    %v2666 = vpack.c.b16 %v2627, %v2624
    %v2667 = vpack.c.b16 %v2628, %v2625
    %v2668 = vpack.c.b16 %v2629, %v2626
    %v2669 = vpack.c.b16 %v2633, %v2630
    %v2670 = vpack.c.b16 %v2634, %v2631
    %v2671 = vpack.c.b16 %v2635, %v2632
    %v2672 = vpack.c.b16 %v2639, %v2636
    %v2673 = vpack.c.b16 %v2640, %v2637
    %v2674 = vpack.c.b16 %v2641, %v2638
    %v2675 = vpack.c.b16 %v2645, %v2642
    %v2676 = vpack.c.b16 %v2646, %v2643
    %v2677 = vpack.c.b16 %v2647, %v2644
    %v2678 = vpack.c.b16 %v2651, %v2648
    %v2679 = vpack.c.b16 %v2652, %v2649
    %v2680 = vpack.c.b16 %v2653, %v2650
    %v2681 = vpack.c.b16 %v2657, %v2654
    %v2682 = vpack.c.b16 %v2658, %v2655
    %v2683 = vpack.c.b16 %v2659, %v2656
    %2708 = vmatprep.subr.bf16.mxu0 %v2661
    %2709 = vmatpush1.bf16.msra.mxu0 %v2660
    %2710 = vmatprep.subr.bf16.mxu0 %v2664
    %2711 = vmatpush1.bf16.msra.mxu0 %v2663
    %2712 = vmatprep.subr.bf16.mxu0 %v2667
    %2713 = vmatpush1.bf16.msra.mxu0 %v2666
    %2714 = vmatprep.subr.bf16.mxu0 %v2670
    %2715 = vmatpush1.bf16.msra.mxu0 %v2669
    %2716 = vmatprep.subr.bf16.mxu0 %v2673
    %2717 = vmatpush1.bf16.msra.mxu0 %v2672
    %2718 = vmatprep.subr.bf16.mxu0 %v2676
    %2719 = vmatpush1.bf16.msra.mxu0 %v2675
    %2720 = vmatprep.subr.bf16.mxu0 %v2679
    %2721 = vmatpush1.bf16.msra.mxu0 %v2678
    %2722 = vmatprep.subr.bf16.mxu0 %v2682
    %2723 = vmatpush1.bf16.msra.mxu0 %v2681
    %2724 = vmatprep.subr.bf16.mxu0 0
    %2725 = vmatpush1.bf16.msra.mxu0 0
    %2726 = vmatprep.subr.bf16.mxu0 0
    %2727 = vmatpush1.bf16.msra.mxu0 0
    %2728 = vmatprep.subr.bf16.mxu0 0
    %2729 = vmatpush1.bf16.msra.mxu0 0
    %2730 = vmatprep.subr.bf16.mxu0 0
    %2731 = vmatpush1.bf16.msra.mxu0 0
    %2732 = vmatprep.subr.bf16.mxu0 0
    %2733 = vmatpush1.bf16.msra.mxu0 0
    %2734 = vmatprep.subr.bf16.mxu0 0
    %2735 = vmatpush1.bf16.msra.mxu0 0
    %2736 = vmatprep.subr.bf16.mxu0 0
    %2737 = vmatpush1.bf16.msra.mxu0 0
    %2738 = vmatprep.subr.bf16.mxu0 0
    %2739 = vmatpush1.bf16.msra.mxu0 0
    %2740 = vmatprep.mubr.bf16.mxu0 0
    %2741 = vmatmul.mubr.bf16.gmra.mrb[0].mxu0 %v2530
    %v2742 = vpop.f32.mrb[0].mxu0
    %v2743 = vadd.f32 %v2568, %v2742
    %v2744 = vpop.f32.mrb[0].mxu0
    %v2745 = vadd.f32 %v2572, %v2744
    %v2746 = vpop.f32.mrb[0].mxu0
    %v2747 = vpop.f32.mrb[0].mxu0
    %2748 = vdwg.mxu0
    %2749 = vmatprep.subr.bf16.mxu0 0
    %2750 = vmatpush1.bf16.msra.mxu0 %v2662
    %2751 = vmatprep.subr.bf16.mxu0 0
    %2752 = vmatpush1.bf16.msra.mxu0 %v2665
    %2753 = vmatprep.subr.bf16.mxu0 0
    %2754 = vmatpush1.bf16.msra.mxu0 %v2668
    %2755 = vmatprep.subr.bf16.mxu0 0
    %2756 = vmatpush1.bf16.msra.mxu0 %v2671
    %2757 = vmatprep.subr.bf16.mxu0 0
    %2758 = vmatpush1.bf16.msra.mxu0 %v2674
    %2759 = vmatprep.subr.bf16.mxu0 0
    %2760 = vmatpush1.bf16.msra.mxu0 %v2677
    %2761 = vmatprep.subr.bf16.mxu0 0
    %2762 = vmatpush1.bf16.msra.mxu0 %v2680
    %2763 = vmatprep.subr.bf16.mxu0 0
    %2764 = vmatpush1.bf16.msra.mxu0 %v2683
    %2765 = vmatprep.subr.bf16.mxu0 0
    %2766 = vmatpush1.bf16.msra.mxu0 0
    %2767 = vmatprep.subr.bf16.mxu0 0
    %2768 = vmatpush1.bf16.msra.mxu0 0
    %2769 = vmatprep.subr.bf16.mxu0 0
    %2770 = vmatpush1.bf16.msra.mxu0 0
    %2771 = vmatprep.subr.bf16.mxu0 0
    %2772 = vmatpush1.bf16.msra.mxu0 0
    %2773 = vmatprep.subr.bf16.mxu0 0
    %2774 = vmatpush1.bf16.msra.mxu0 0
    %2775 = vmatprep.subr.bf16.mxu0 0
    %2776 = vmatpush1.bf16.msra.mxu0 0
    %2777 = vmatprep.subr.bf16.mxu0 0
    %2778 = vmatpush1.bf16.msra.mxu0 0
    %2779 = vmatprep.subr.bf16.mxu0 0
    %2780 = vmatpush1.bf16.msra.mxu0 0
    %2781 = vmatprep.mubr.bf16.mxu0 0
    %2782 = vmatmul.mubr.bf16.gmra.mrb[0].mxu0 %v2530
    %v2783 = vpop.f32.mrb[0].mxu0
    %v2784 = vadd.f32 %v2576, %v2783
    %v2785 = vpop.f32.mrb[0].mxu0
    %v2786 = vpop.f32.mrb[0].mxu0
    %v2787 = vpop.f32.mrb[0].mxu0
    %2788 = vdwg.mxu0
    %v2789 = vpack.c.bf16 %v2503, %v2503
    %v2790 = vld [vmem:[%s1032] sm:$0xff]
    %v2791 = vld [vmem:[%s1032 + $0x8] sm:$0xf]
    %v2792 = vld [vmem:[%s1032 + $0xc] sm:$0xff]
    %v2793 = vld [vmem:[%s1032 + $0x14] sm:$0xf]
    %v2794 = vld [vmem:[%s1032 + $0x18] sm:$0xff]
    %v2795 = vld [vmem:[%s1032 + $0x20] sm:$0xf]
    %v2796 = vld [vmem:[%s1032 + $0x24] sm:$0xff]
    %v2797 = vld [vmem:[%s1032 + $0x2c] sm:$0xf]
    %v2798 = vld [vmem:[%s1032 + $0x30] sm:$0xff]
    %v2799 = vld [vmem:[%s1032 + $0x38] sm:$0xf]
    %v2800 = vld [vmem:[%s1032 + $0x3c] sm:$0xff]
    %v2801 = vld [vmem:[%s1032 + $0x44] sm:$0xf]
    %v2802 = vld [vmem:[%s1032 + $0x48] sm:$0xff]
    %v2803 = vld [vmem:[%s1032 + $0x50] sm:$0xf]
    %v2804 = vld [vmem:[%s1032 + $0x54] sm:$0xff]
    %v2805 = vld [vmem:[%s1032 + $0x5c] sm:$0xf]
    %v2806 = vld [vmem:[%s1032 + $0x60] sm:$0xff]
    %v2807 = vld [vmem:[%s1032 + $0x68] sm:$0xf]
    %v2808 = vld [vmem:[%s1032 + $0x6c] sm:$0xff]
    %v2809 = vld [vmem:[%s1032 + $0x74] sm:$0xf]
    %v2810 = vld [vmem:[%s1032 + $0x78] sm:$0xff]
    %v2811 = vld [vmem:[%s1032 + $0x80] sm:$0xf]
    %v2812 = vld [vmem:[%s1032 + $0x84] sm:$0xff]
    %v2813 = vld [vmem:[%s1032 + $0x8c] sm:$0xf]
    %v2814 = vld [vmem:[%s1032 + $0x90] sm:$0xff]
    %v2815 = vld [vmem:[%s1032 + $0x98] sm:$0xf]
    %v2816 = vld [vmem:[%s1032 + $0x9c] sm:$0xff]
    %v2817 = vld [vmem:[%s1032 + $0xa4] sm:$0xf]
    %v2818 = vld [vmem:[%s1032 + $0xa8] sm:$0xff]
    %v2819 = vld [vmem:[%s1032 + $0xb0] sm:$0xf]
    %v2820 = vld [vmem:[%s1032 + $0xb4] sm:$0xff]
    %v2821 = vld [vmem:[%s1032 + $0xbc] sm:$0xf]
    %v2822 = vld [vmem:[%s1065] sm:$0x7]
    %v2824 = vlaneseq
    %v2825 = vshrl.u32 %v2824, 7
    %v2826 = vsub.s32 0, %v2825
    %v2827 = vrot.slane %v2822, %v2826
    %v2828 = vlaneseq
    %v2829 = vshrl.u32 %v2828, 7
    %v2830 = vsub.s32 1, %v2829
    %v2831 = vrot.slane %v2822, %v2830
    %v2832 = vlaneseq
    %v2833 = vshrl.u32 %v2832, 7
    %v2834 = vsub.s32 2, %v2833
    %v2835 = vrot.slane %v2822, %v2834
    %v2871 = vunpack.c.l.b16 %v2790
    %v2872 = vunpack.c.h.b16 %v2790
    %v2873 = vunpack.c.l.b16 %v2791
    %v2874 = vunpack.c.l.b16 %v2792
    %v2875 = vunpack.c.h.b16 %v2792
    %v2876 = vunpack.c.l.b16 %v2793
    %v2877 = vunpack.c.l.b16 %v2794
    %v2878 = vunpack.c.h.b16 %v2794
    %v2879 = vunpack.c.l.b16 %v2795
    %v2880 = vunpack.c.l.b16 %v2796
    %v2881 = vunpack.c.h.b16 %v2796
    %v2882 = vunpack.c.l.b16 %v2797
    %v2883 = vunpack.c.l.b16 %v2798
    %v2884 = vunpack.c.h.b16 %v2798
    %v2885 = vunpack.c.l.b16 %v2799
    %v2886 = vunpack.c.l.b16 %v2800
    %v2887 = vunpack.c.h.b16 %v2800
    %v2888 = vunpack.c.l.b16 %v2801
    %v2889 = vunpack.c.l.b16 %v2802
    %v2890 = vunpack.c.h.b16 %v2802
    %v2891 = vunpack.c.l.b16 %v2803
    %v2892 = vunpack.c.l.b16 %v2804
    %v2893 = vunpack.c.h.b16 %v2804
    %v2894 = vunpack.c.l.b16 %v2805
    %v2895 = vunpack.c.l.b16 %v2806
    %v2896 = vunpack.c.h.b16 %v2806
    %v2897 = vunpack.c.l.b16 %v2807
    %v2898 = vunpack.c.l.b16 %v2808
    %v2899 = vunpack.c.h.b16 %v2808
    %v2900 = vunpack.c.l.b16 %v2809
    %v2901 = vunpack.c.l.b16 %v2810
    %v2902 = vunpack.c.h.b16 %v2810
    %v2903 = vunpack.c.l.b16 %v2811
    %v2904 = vunpack.c.l.b16 %v2812
    %v2905 = vunpack.c.h.b16 %v2812
    %v2906 = vunpack.c.l.b16 %v2813
    %v2907 = vunpack.c.l.b16 %v2814
    %v2908 = vunpack.c.h.b16 %v2814
    %v2909 = vunpack.c.l.b16 %v2815
    %v2910 = vunpack.c.l.b16 %v2816
    %v2911 = vunpack.c.h.b16 %v2816
    %v2912 = vunpack.c.l.b16 %v2817
    %v2913 = vunpack.c.l.b16 %v2818
    %v2914 = vunpack.c.h.b16 %v2818
    %v2915 = vunpack.c.l.b16 %v2819
    %v2916 = vunpack.c.l.b16 %v2820
    %v2917 = vunpack.c.h.b16 %v2820
    %v2918 = vunpack.c.l.b16 %v2821
    %v2919 = vpack.c.b16 %v2874, %v2871
    %v2920 = vpack.c.b16 %v2875, %v2872
    %v2921 = vpack.c.b16 %v2876, %v2873
    %v2922 = vpack.c.b16 %v2880, %v2877
    %v2923 = vpack.c.b16 %v2881, %v2878
    %v2924 = vpack.c.b16 %v2882, %v2879
    %v2925 = vpack.c.b16 %v2886, %v2883
    %v2926 = vpack.c.b16 %v2887, %v2884
    %v2927 = vpack.c.b16 %v2888, %v2885
    %v2928 = vpack.c.b16 %v2892, %v2889
    %v2929 = vpack.c.b16 %v2893, %v2890
    %v2930 = vpack.c.b16 %v2894, %v2891
    %v2931 = vpack.c.b16 %v2898, %v2895
    %v2932 = vpack.c.b16 %v2899, %v2896
    %v2933 = vpack.c.b16 %v2900, %v2897
    %v2934 = vpack.c.b16 %v2904, %v2901
    %v2935 = vpack.c.b16 %v2905, %v2902
    %v2936 = vpack.c.b16 %v2906, %v2903
    %v2937 = vpack.c.b16 %v2910, %v2907
    %v2938 = vpack.c.b16 %v2911, %v2908
    %v2939 = vpack.c.b16 %v2912, %v2909
    %v2940 = vpack.c.b16 %v2916, %v2913
    %v2941 = vpack.c.b16 %v2917, %v2914
    %v2942 = vpack.c.b16 %v2918, %v2915
    %2967 = vmatprep.subr.bf16.mxu0 %v2920
    %2968 = vmatpush1.bf16.msra.mxu0 %v2919
    %2969 = vmatprep.subr.bf16.mxu0 %v2923
    %2970 = vmatpush1.bf16.msra.mxu0 %v2922
    %2971 = vmatprep.subr.bf16.mxu0 %v2926
    %2972 = vmatpush1.bf16.msra.mxu0 %v2925
    %2973 = vmatprep.subr.bf16.mxu0 %v2929
    %2974 = vmatpush1.bf16.msra.mxu0 %v2928
    %2975 = vmatprep.subr.bf16.mxu0 %v2932
    %2976 = vmatpush1.bf16.msra.mxu0 %v2931
    %2977 = vmatprep.subr.bf16.mxu0 %v2935
    %2978 = vmatpush1.bf16.msra.mxu0 %v2934
    %2979 = vmatprep.subr.bf16.mxu0 %v2938
    %2980 = vmatpush1.bf16.msra.mxu0 %v2937
    %2981 = vmatprep.subr.bf16.mxu0 %v2941
    %2982 = vmatpush1.bf16.msra.mxu0 %v2940
    %2983 = vmatprep.subr.bf16.mxu0 0
    %2984 = vmatpush1.bf16.msra.mxu0 0
    %2985 = vmatprep.subr.bf16.mxu0 0
    %2986 = vmatpush1.bf16.msra.mxu0 0
    %2987 = vmatprep.subr.bf16.mxu0 0
    %2988 = vmatpush1.bf16.msra.mxu0 0
    %2989 = vmatprep.subr.bf16.mxu0 0
    %2990 = vmatpush1.bf16.msra.mxu0 0
    %2991 = vmatprep.subr.bf16.mxu0 0
    %2992 = vmatpush1.bf16.msra.mxu0 0
    %2993 = vmatprep.subr.bf16.mxu0 0
    %2994 = vmatpush1.bf16.msra.mxu0 0
    %2995 = vmatprep.subr.bf16.mxu0 0
    %2996 = vmatpush1.bf16.msra.mxu0 0
    %2997 = vmatprep.subr.bf16.mxu0 0
    %2998 = vmatpush1.bf16.msra.mxu0 0
    %2999 = vmatprep.mubr.bf16.mxu0 0
    %3000 = vmatmul.mubr.bf16.gmra.mrb[0].mxu0 %v2789
    %v3001 = vpop.f32.mrb[0].mxu0
    %v3002 = vadd.f32 %v2827, %v3001
    %v3003 = vpop.f32.mrb[0].mxu0
    %v3004 = vadd.f32 %v2831, %v3003
    %v3005 = vpop.f32.mrb[0].mxu0
    %v3006 = vpop.f32.mrb[0].mxu0
    %3007 = vdwg.mxu0
    %3008 = vmatprep.subr.bf16.mxu0 0
    %3009 = vmatpush1.bf16.msra.mxu0 %v2921
    %3010 = vmatprep.subr.bf16.mxu0 0
    %3011 = vmatpush1.bf16.msra.mxu0 %v2924
    %3012 = vmatprep.subr.bf16.mxu0 0
    %3013 = vmatpush1.bf16.msra.mxu0 %v2927
    %3014 = vmatprep.subr.bf16.mxu0 0
    %3015 = vmatpush1.bf16.msra.mxu0 %v2930
    %3016 = vmatprep.subr.bf16.mxu0 0
    %3017 = vmatpush1.bf16.msra.mxu0 %v2933
    %3018 = vmatprep.subr.bf16.mxu0 0
    %3019 = vmatpush1.bf16.msra.mxu0 %v2936
    %3020 = vmatprep.subr.bf16.mxu0 0
    %3021 = vmatpush1.bf16.msra.mxu0 %v2939
    %3022 = vmatprep.subr.bf16.mxu0 0
    %3023 = vmatpush1.bf16.msra.mxu0 %v2942
    %3024 = vmatprep.subr.bf16.mxu0 0
    %3025 = vmatpush1.bf16.msra.mxu0 0
    %3026 = vmatprep.subr.bf16.mxu0 0
    %3027 = vmatpush1.bf16.msra.mxu0 0
    %3028 = vmatprep.subr.bf16.mxu0 0
    %3029 = vmatpush1.bf16.msra.mxu0 0
    %3030 = vmatprep.subr.bf16.mxu0 0
    %3031 = vmatpush1.bf16.msra.mxu0 0
    %3032 = vmatprep.subr.bf16.mxu0 0
    %3033 = vmatpush1.bf16.msra.mxu0 0
    %3034 = vmatprep.subr.bf16.mxu0 0
    %3035 = vmatpush1.bf16.msra.mxu0 0
    %3036 = vmatprep.subr.bf16.mxu0 0
    %3037 = vmatpush1.bf16.msra.mxu0 0
    %3038 = vmatprep.subr.bf16.mxu0 0
    %3039 = vmatpush1.bf16.msra.mxu0 0
    %3040 = vmatprep.mubr.bf16.mxu0 0
    %3041 = vmatmul.mubr.bf16.gmra.mrb[0].mxu0 %v2789
    %v3042 = vpop.f32.mrb[0].mxu0
    %v3043 = vadd.f32 %v2835, %v3042
    %v3044 = vpop.f32.mrb[0].mxu0
    %v3045 = vpop.f32.mrb[0].mxu0
    %v3046 = vpop.f32.mrb[0].mxu0
    %3047 = vdwg.mxu0
    %v3048 = vadd.f32 %v2524, %v2743
    %v3049 = vxor.u32 %v3048, 2147483648
    %v3050 = vmul.f32 %v3049, 1.442695
    %v3051 = vpow.pop %v3050
    %v3052 = vadd.f32 %v3051, 1.0
    %v3053 = vrcp.pop %v3052
    %v3054 = vmul.f32 1.0, %v3053
    %v3055 = vadd.f32 %v2525, %v2745
    %v3056 = vxor.u32 %v3055, 2147483648
    %v3057 = vmul.f32 %v3056, 1.442695
    %v3058 = vpow.pop %v3057
    %v3059 = vadd.f32 %v3058, 1.0
    %v3060 = vrcp.pop %v3059
    %v3061 = vmul.f32 1.0, %v3060
    %v3062 = vmul.f32 %v3054, %v2784
    %v3063 = vadd.f32 %v2526, %v3062
    %v3064 = vtanh.pop %v3063
    %v3065 = vsub.f32 1.0, %v3061
    %v3066 = vmul.f32 %v3065, %v3064
    %v3067 = vmul.f32 %v3061, %v2482
    %v3068 = vadd.f32 %v3066, %v3067
    %v3069 = vadd.f32 %v2527, %v3002
    %v3070 = vxor.u32 %v3069, 2147483648
    %v3071 = vmul.f32 %v3070, 1.442695
    %v3072 = vpow.pop %v3071
    %v3073 = vadd.f32 %v3072, 1.0
    %v3074 = vrcp.pop %v3073
    %v3075 = vmul.f32 1.0, %v3074
    %v3076 = vadd.f32 %v2528, %v3004
    %v3077 = vxor.u32 %v3076, 2147483648
    %v3078 = vmul.f32 %v3077, 1.442695
    %v3079 = vpow.pop %v3078
    %v3080 = vadd.f32 %v3079, 1.0
    %v3081 = vrcp.pop %v3080
    %v3082 = vmul.f32 1.0, %v3081
    %v3083 = vmul.f32 %v3075, %v3043
    %v3084 = vadd.f32 %v2529, %v3083
    %v3085 = vtanh.pop %v3084
    %v3086 = vsub.f32 1.0, %v3082
    %v3087 = vmul.f32 %v3086, %v3085
    %v3088 = vmul.f32 %v3082, %v2503
    %v3089 = vadd.f32 %v3087, %v3088
    %s3090 = scalar_lea.vmem %s1, 24
    %v3091 = vld [vmem:[%s3090] sm:$0xff]
    %3093 = vset.pattern.permute.xlu0 0
    %3094 = vperm.xlu0 %3093, %v3091
    %v3095 = vpop.permute.xlu0 %3094
    %v3097 = vmul.f32 %v3068, %v3095
    %s3098 = scalar_lea.vmem [#allocation4], 24
    %3099 = vst [vmem:[%s3098] sm:$0xff] %v3097
    %s3100 = scalar_lea.vmem %s1, 32
    %v3101 = vld [vmem:[%s3100] sm:$0xff]
    %3103 = vset.pattern.permute.xlu0 0
    %3104 = vperm.xlu0 %3103, %v3101
    %v3105 = vpop.permute.xlu0 %3104
    %v3107 = vmul.f32 %v3089, %v3105
    %s3108 = scalar_lea.vmem [#allocation10], 32
    %3109 = vst [vmem:[%s3108] sm:$0xff] %v3107
    %v3110 = vld [vmem:[#allocation2 + $0x60] sm:$0xff]
    %v3111 = vld [vmem:[#allocation2 + $0x68] sm:$0xff]
    %v3112 = vld [vmem:[#allocation2 + $0x70] sm:$0xff]
    %v3113 = vld [vmem:[#allocation3 + $0x48] sm:$0xff]
    %v3114 = vld [vmem:[#allocation3 + $0x50] sm:$0xff]
    %v3115 = vld [vmem:[#allocation3 + $0x58] sm:$0xff]
    %v3116 = vpack.c.bf16 %v3068, %v3068
    %v3117 = vld [vmem:[#allocation8] sm:$0xff]
    %v3118 = vld [vmem:[#allocation8 + $0x8] sm:$0xf]
    %v3119 = vld [vmem:[#allocation8 + $0xc] sm:$0xff]
    %v3120 = vld [vmem:[#allocation8 + $0x14] sm:$0xf]
    %v3121 = vld [vmem:[#allocation8 + $0x18] sm:$0xff]
    %v3122 = vld [vmem:[#allocation8 + $0x20] sm:$0xf]
    %v3123 = vld [vmem:[#allocation8 + $0x24] sm:$0xff]
    %v3124 = vld [vmem:[#allocation8 + $0x2c] sm:$0xf]
    %v3125 = vld [vmem:[#allocation8 + $0x30] sm:$0xff]
    %v3126 = vld [vmem:[#allocation8 + $0x38] sm:$0xf]
    %v3127 = vld [vmem:[#allocation8 + $0x3c] sm:$0xff]
    %v3128 = vld [vmem:[#allocation8 + $0x44] sm:$0xf]
    %v3129 = vld [vmem:[#allocation8 + $0x48] sm:$0xff]
    %v3130 = vld [vmem:[#allocation8 + $0x50] sm:$0xf]
    %v3131 = vld [vmem:[#allocation8 + $0x54] sm:$0xff]
    %v3132 = vld [vmem:[#allocation8 + $0x5c] sm:$0xf]
    %v3133 = vld [vmem:[#allocation8 + $0x60] sm:$0xff]
    %v3134 = vld [vmem:[#allocation8 + $0x68] sm:$0xf]
    %v3135 = vld [vmem:[#allocation8 + $0x6c] sm:$0xff]
    %v3136 = vld [vmem:[#allocation8 + $0x74] sm:$0xf]
    %v3137 = vld [vmem:[#allocation8 + $0x78] sm:$0xff]
    %v3138 = vld [vmem:[#allocation8 + $0x80] sm:$0xf]
    %v3139 = vld [vmem:[#allocation8 + $0x84] sm:$0xff]
    %v3140 = vld [vmem:[#allocation8 + $0x8c] sm:$0xf]
    %v3141 = vld [vmem:[#allocation8 + $0x90] sm:$0xff]
    %v3142 = vld [vmem:[#allocation8 + $0x98] sm:$0xf]
    %v3143 = vld [vmem:[#allocation8 + $0x9c] sm:$0xff]
    %v3144 = vld [vmem:[#allocation8 + $0xa4] sm:$0xf]
    %v3145 = vld [vmem:[#allocation8 + $0xa8] sm:$0xff]
    %v3146 = vld [vmem:[#allocation8 + $0xb0] sm:$0xf]
    %v3147 = vld [vmem:[#allocation8 + $0xb4] sm:$0xff]
    %v3148 = vld [vmem:[#allocation8 + $0xbc] sm:$0xf]
    %v3149 = vld [vmem:[%s5] sm:$0x7]
    %v3151 = vlaneseq
    %v3152 = vshrl.u32 %v3151, 7
    %v3153 = vsub.s32 0, %v3152
    %v3154 = vrot.slane %v3149, %v3153
    %v3155 = vlaneseq
    %v3156 = vshrl.u32 %v3155, 7
    %v3157 = vsub.s32 1, %v3156
    %v3158 = vrot.slane %v3149, %v3157
    %v3159 = vlaneseq
    %v3160 = vshrl.u32 %v3159, 7
    %v3161 = vsub.s32 2, %v3160
    %v3162 = vrot.slane %v3149, %v3161
    %v3198 = vunpack.c.l.b16 %v3117
    %v3199 = vunpack.c.h.b16 %v3117
    %v3200 = vunpack.c.l.b16 %v3118
    %v3201 = vunpack.c.l.b16 %v3119
    %v3202 = vunpack.c.h.b16 %v3119
    %v3203 = vunpack.c.l.b16 %v3120
    %v3204 = vunpack.c.l.b16 %v3121
    %v3205 = vunpack.c.h.b16 %v3121
    %v3206 = vunpack.c.l.b16 %v3122
    %v3207 = vunpack.c.l.b16 %v3123
    %v3208 = vunpack.c.h.b16 %v3123
    %v3209 = vunpack.c.l.b16 %v3124
    %v3210 = vunpack.c.l.b16 %v3125
    %v3211 = vunpack.c.h.b16 %v3125
    %v3212 = vunpack.c.l.b16 %v3126
    %v3213 = vunpack.c.l.b16 %v3127
    %v3214 = vunpack.c.h.b16 %v3127
    %v3215 = vunpack.c.l.b16 %v3128
    %v3216 = vunpack.c.l.b16 %v3129
    %v3217 = vunpack.c.h.b16 %v3129
    %v3218 = vunpack.c.l.b16 %v3130
    %v3219 = vunpack.c.l.b16 %v3131
    %v3220 = vunpack.c.h.b16 %v3131
    %v3221 = vunpack.c.l.b16 %v3132
    %v3222 = vunpack.c.l.b16 %v3133
    %v3223 = vunpack.c.h.b16 %v3133
    %v3224 = vunpack.c.l.b16 %v3134
    %v3225 = vunpack.c.l.b16 %v3135
    %v3226 = vunpack.c.h.b16 %v3135
    %v3227 = vunpack.c.l.b16 %v3136
    %v3228 = vunpack.c.l.b16 %v3137
    %v3229 = vunpack.c.h.b16 %v3137
    %v3230 = vunpack.c.l.b16 %v3138
    %v3231 = vunpack.c.l.b16 %v3139
    %v3232 = vunpack.c.h.b16 %v3139
    %v3233 = vunpack.c.l.b16 %v3140
    %v3234 = vunpack.c.l.b16 %v3141
    %v3235 = vunpack.c.h.b16 %v3141
    %v3236 = vunpack.c.l.b16 %v3142
    %v3237 = vunpack.c.l.b16 %v3143
    %v3238 = vunpack.c.h.b16 %v3143
    %v3239 = vunpack.c.l.b16 %v3144
    %v3240 = vunpack.c.l.b16 %v3145
    %v3241 = vunpack.c.h.b16 %v3145
    %v3242 = vunpack.c.l.b16 %v3146
    %v3243 = vunpack.c.l.b16 %v3147
    %v3244 = vunpack.c.h.b16 %v3147
    %v3245 = vunpack.c.l.b16 %v3148
    %v3246 = vpack.c.b16 %v3201, %v3198
    %v3247 = vpack.c.b16 %v3202, %v3199
    %v3248 = vpack.c.b16 %v3203, %v3200
    %v3249 = vpack.c.b16 %v3207, %v3204
    %v3250 = vpack.c.b16 %v3208, %v3205
    %v3251 = vpack.c.b16 %v3209, %v3206
    %v3252 = vpack.c.b16 %v3213, %v3210
    %v3253 = vpack.c.b16 %v3214, %v3211
    %v3254 = vpack.c.b16 %v3215, %v3212
    %v3255 = vpack.c.b16 %v3219, %v3216
    %v3256 = vpack.c.b16 %v3220, %v3217
    %v3257 = vpack.c.b16 %v3221, %v3218
    %v3258 = vpack.c.b16 %v3225, %v3222
    %v3259 = vpack.c.b16 %v3226, %v3223
    %v3260 = vpack.c.b16 %v3227, %v3224
    %v3261 = vpack.c.b16 %v3231, %v3228
    %v3262 = vpack.c.b16 %v3232, %v3229
    %v3263 = vpack.c.b16 %v3233, %v3230
    %v3264 = vpack.c.b16 %v3237, %v3234
    %v3265 = vpack.c.b16 %v3238, %v3235
    %v3266 = vpack.c.b16 %v3239, %v3236
    %v3267 = vpack.c.b16 %v3243, %v3240
    %v3268 = vpack.c.b16 %v3244, %v3241
    %v3269 = vpack.c.b16 %v3245, %v3242
    %3294 = vmatprep.subr.bf16.mxu0 %v3247
    %3295 = vmatpush1.bf16.msra.mxu0 %v3246
    %3296 = vmatprep.subr.bf16.mxu0 %v3250
    %3297 = vmatpush1.bf16.msra.mxu0 %v3249
    %3298 = vmatprep.subr.bf16.mxu0 %v3253
    %3299 = vmatpush1.bf16.msra.mxu0 %v3252
    %3300 = vmatprep.subr.bf16.mxu0 %v3256
    %3301 = vmatpush1.bf16.msra.mxu0 %v3255
    %3302 = vmatprep.subr.bf16.mxu0 %v3259
    %3303 = vmatpush1.bf16.msra.mxu0 %v3258
    %3304 = vmatprep.subr.bf16.mxu0 %v3262
    %3305 = vmatpush1.bf16.msra.mxu0 %v3261
    %3306 = vmatprep.subr.bf16.mxu0 %v3265
    %3307 = vmatpush1.bf16.msra.mxu0 %v3264
    %3308 = vmatprep.subr.bf16.mxu0 %v3268
    %3309 = vmatpush1.bf16.msra.mxu0 %v3267
    %3310 = vmatprep.subr.bf16.mxu0 0
    %3311 = vmatpush1.bf16.msra.mxu0 0
    %3312 = vmatprep.subr.bf16.mxu0 0
    %3313 = vmatpush1.bf16.msra.mxu0 0
    %3314 = vmatprep.subr.bf16.mxu0 0
    %3315 = vmatpush1.bf16.msra.mxu0 0
    %3316 = vmatprep.subr.bf16.mxu0 0
    %3317 = vmatpush1.bf16.msra.mxu0 0
    %3318 = vmatprep.subr.bf16.mxu0 0
    %3319 = vmatpush1.bf16.msra.mxu0 0
    %3320 = vmatprep.subr.bf16.mxu0 0
    %3321 = vmatpush1.bf16.msra.mxu0 0
    %3322 = vmatprep.subr.bf16.mxu0 0
    %3323 = vmatpush1.bf16.msra.mxu0 0
    %3324 = vmatprep.subr.bf16.mxu0 0
    %3325 = vmatpush1.bf16.msra.mxu0 0
    %3326 = vmatprep.mubr.bf16.mxu0 0
    %3327 = vmatmul.mubr.bf16.gmra.mrb[0].mxu0 %v3116
    %v3328 = vpop.f32.mrb[0].mxu0
    %v3329 = vadd.f32 %v3154, %v3328
    %v3330 = vpop.f32.mrb[0].mxu0
    %v3331 = vadd.f32 %v3158, %v3330
    %v3332 = vpop.f32.mrb[0].mxu0
    %v3333 = vpop.f32.mrb[0].mxu0
    %3334 = vdwg.mxu0
    %3335 = vmatprep.subr.bf16.mxu0 0
    %3336 = vmatpush1.bf16.msra.mxu0 %v3248
    %3337 = vmatprep.subr.bf16.mxu0 0
    %3338 = vmatpush1.bf16.msra.mxu0 %v3251
    %3339 = vmatprep.subr.bf16.mxu0 0
    %3340 = vmatpush1.bf16.msra.mxu0 %v3254
    %3341 = vmatprep.subr.bf16.mxu0 0
    %3342 = vmatpush1.bf16.msra.mxu0 %v3257
    %3343 = vmatprep.subr.bf16.mxu0 0
    %3344 = vmatpush1.bf16.msra.mxu0 %v3260
    %3345 = vmatprep.subr.bf16.mxu0 0
    %3346 = vmatpush1.bf16.msra.mxu0 %v3263
    %3347 = vmatprep.subr.bf16.mxu0 0
    %3348 = vmatpush1.bf16.msra.mxu0 %v3266
    %3349 = vmatprep.subr.bf16.mxu0 0
    %3350 = vmatpush1.bf16.msra.mxu0 %v3269
    %3351 = vmatprep.subr.bf16.mxu0 0
    %3352 = vmatpush1.bf16.msra.mxu0 0
    %3353 = vmatprep.subr.bf16.mxu0 0
    %3354 = vmatpush1.bf16.msra.mxu0 0
    %3355 = vmatprep.subr.bf16.mxu0 0
    %3356 = vmatpush1.bf16.msra.mxu0 0
    %3357 = vmatprep.subr.bf16.mxu0 0
    %3358 = vmatpush1.bf16.msra.mxu0 0
    %3359 = vmatprep.subr.bf16.mxu0 0
    %3360 = vmatpush1.bf16.msra.mxu0 0
    %3361 = vmatprep.subr.bf16.mxu0 0
    %3362 = vmatpush1.bf16.msra.mxu0 0
    %3363 = vmatprep.subr.bf16.mxu0 0
    %3364 = vmatpush1.bf16.msra.mxu0 0
    %3365 = vmatprep.subr.bf16.mxu0 0
    %3366 = vmatpush1.bf16.msra.mxu0 0
    %3367 = vmatprep.mubr.bf16.mxu0 0
    %3368 = vmatmul.mubr.bf16.gmra.mrb[0].mxu0 %v3116
    %v3369 = vpop.f32.mrb[0].mxu0
    %v3370 = vadd.f32 %v3162, %v3369
    %v3371 = vpop.f32.mrb[0].mxu0
    %v3372 = vpop.f32.mrb[0].mxu0
    %v3373 = vpop.f32.mrb[0].mxu0
    %3374 = vdwg.mxu0
    %v3375 = vpack.c.bf16 %v3089, %v3089
    %v3376 = vld [vmem:[%s1032] sm:$0xff]
    %v3377 = vld [vmem:[%s1032 + $0x8] sm:$0xf]
    %v3378 = vld [vmem:[%s1032 + $0xc] sm:$0xff]
    %v3379 = vld [vmem:[%s1032 + $0x14] sm:$0xf]
    %v3380 = vld [vmem:[%s1032 + $0x18] sm:$0xff]
    %v3381 = vld [vmem:[%s1032 + $0x20] sm:$0xf]
    %v3382 = vld [vmem:[%s1032 + $0x24] sm:$0xff]
    %v3383 = vld [vmem:[%s1032 + $0x2c] sm:$0xf]
    %v3384 = vld [vmem:[%s1032 + $0x30] sm:$0xff]
    %v3385 = vld [vmem:[%s1032 + $0x38] sm:$0xf]
    %v3386 = vld [vmem:[%s1032 + $0x3c] sm:$0xff]
    %v3387 = vld [vmem:[%s1032 + $0x44] sm:$0xf]
    %v3388 = vld [vmem:[%s1032 + $0x48] sm:$0xff]
    %v3389 = vld [vmem:[%s1032 + $0x50] sm:$0xf]
    %v3390 = vld [vmem:[%s1032 + $0x54] sm:$0xff]
    %v3391 = vld [vmem:[%s1032 + $0x5c] sm:$0xf]
    %v3392 = vld [vmem:[%s1032 + $0x60] sm:$0xff]
    %v3393 = vld [vmem:[%s1032 + $0x68] sm:$0xf]
    %v3394 = vld [vmem:[%s1032 + $0x6c] sm:$0xff]
    %v3395 = vld [vmem:[%s1032 + $0x74] sm:$0xf]
    %v3396 = vld [vmem:[%s1032 + $0x78] sm:$0xff]
    %v3397 = vld [vmem:[%s1032 + $0x80] sm:$0xf]
    %v3398 = vld [vmem:[%s1032 + $0x84] sm:$0xff]
    %v3399 = vld [vmem:[%s1032 + $0x8c] sm:$0xf]
    %v3400 = vld [vmem:[%s1032 + $0x90] sm:$0xff]
    %v3401 = vld [vmem:[%s1032 + $0x98] sm:$0xf]
    %v3402 = vld [vmem:[%s1032 + $0x9c] sm:$0xff]
    %v3403 = vld [vmem:[%s1032 + $0xa4] sm:$0xf]
    %v3404 = vld [vmem:[%s1032 + $0xa8] sm:$0xff]
    %v3405 = vld [vmem:[%s1032 + $0xb0] sm:$0xf]
    %v3406 = vld [vmem:[%s1032 + $0xb4] sm:$0xff]
    %v3407 = vld [vmem:[%s1032 + $0xbc] sm:$0xf]
    %v3408 = vld [vmem:[%s1065] sm:$0x7]
    %v3410 = vlaneseq
    %v3411 = vshrl.u32 %v3410, 7
    %v3412 = vsub.s32 0, %v3411
    %v3413 = vrot.slane %v3408, %v3412
    %v3414 = vlaneseq
    %v3415 = vshrl.u32 %v3414, 7
    %v3416 = vsub.s32 1, %v3415
    %v3417 = vrot.slane %v3408, %v3416
    %v3418 = vlaneseq
    %v3419 = vshrl.u32 %v3418, 7
    %v3420 = vsub.s32 2, %v3419
    %v3421 = vrot.slane %v3408, %v3420
    %v3457 = vunpack.c.l.b16 %v3376
    %v3458 = vunpack.c.h.b16 %v3376
    %v3459 = vunpack.c.l.b16 %v3377
    %v3460 = vunpack.c.l.b16 %v3378
    %v3461 = vunpack.c.h.b16 %v3378
    %v3462 = vunpack.c.l.b16 %v3379
    %v3463 = vunpack.c.l.b16 %v3380
    %v3464 = vunpack.c.h.b16 %v3380
    %v3465 = vunpack.c.l.b16 %v3381
    %v3466 = vunpack.c.l.b16 %v3382
    %v3467 = vunpack.c.h.b16 %v3382
    %v3468 = vunpack.c.l.b16 %v3383
    %v3469 = vunpack.c.l.b16 %v3384
    %v3470 = vunpack.c.h.b16 %v3384
    %v3471 = vunpack.c.l.b16 %v3385
    %v3472 = vunpack.c.l.b16 %v3386
    %v3473 = vunpack.c.h.b16 %v3386
    %v3474 = vunpack.c.l.b16 %v3387
    %v3475 = vunpack.c.l.b16 %v3388
    %v3476 = vunpack.c.h.b16 %v3388
    %v3477 = vunpack.c.l.b16 %v3389
    %v3478 = vunpack.c.l.b16 %v3390
    %v3479 = vunpack.c.h.b16 %v3390
    %v3480 = vunpack.c.l.b16 %v3391
    %v3481 = vunpack.c.l.b16 %v3392
    %v3482 = vunpack.c.h.b16 %v3392
    %v3483 = vunpack.c.l.b16 %v3393
    %v3484 = vunpack.c.l.b16 %v3394
    %v3485 = vunpack.c.h.b16 %v3394
    %v3486 = vunpack.c.l.b16 %v3395
    %v3487 = vunpack.c.l.b16 %v3396
    %v3488 = vunpack.c.h.b16 %v3396
    %v3489 = vunpack.c.l.b16 %v3397
    %v3490 = vunpack.c.l.b16 %v3398
    %v3491 = vunpack.c.h.b16 %v3398
    %v3492 = vunpack.c.l.b16 %v3399
    %v3493 = vunpack.c.l.b16 %v3400
    %v3494 = vunpack.c.h.b16 %v3400
    %v3495 = vunpack.c.l.b16 %v3401
    %v3496 = vunpack.c.l.b16 %v3402
    %v3497 = vunpack.c.h.b16 %v3402
    %v3498 = vunpack.c.l.b16 %v3403
    %v3499 = vunpack.c.l.b16 %v3404
    %v3500 = vunpack.c.h.b16 %v3404
    %v3501 = vunpack.c.l.b16 %v3405
    %v3502 = vunpack.c.l.b16 %v3406
    %v3503 = vunpack.c.h.b16 %v3406
    %v3504 = vunpack.c.l.b16 %v3407
    %v3505 = vpack.c.b16 %v3460, %v3457
    %v3506 = vpack.c.b16 %v3461, %v3458
    %v3507 = vpack.c.b16 %v3462, %v3459
    %v3508 = vpack.c.b16 %v3466, %v3463
    %v3509 = vpack.c.b16 %v3467, %v3464
    %v3510 = vpack.c.b16 %v3468, %v3465
    %v3511 = vpack.c.b16 %v3472, %v3469
    %v3512 = vpack.c.b16 %v3473, %v3470
    %v3513 = vpack.c.b16 %v3474, %v3471
    %v3514 = vpack.c.b16 %v3478, %v3475
    %v3515 = vpack.c.b16 %v3479, %v3476
    %v3516 = vpack.c.b16 %v3480, %v3477
    %v3517 = vpack.c.b16 %v3484, %v3481
    %v3518 = vpack.c.b16 %v3485, %v3482
    %v3519 = vpack.c.b16 %v3486, %v3483
    %v3520 = vpack.c.b16 %v3490, %v3487
    %v3521 = vpack.c.b16 %v3491, %v3488
    %v3522 = vpack.c.b16 %v3492, %v3489
    %v3523 = vpack.c.b16 %v3496, %v3493
    %v3524 = vpack.c.b16 %v3497, %v3494
    %v3525 = vpack.c.b16 %v3498, %v3495
    %v3526 = vpack.c.b16 %v3502, %v3499
    %v3527 = vpack.c.b16 %v3503, %v3500
    %v3528 = vpack.c.b16 %v3504, %v3501
    %3553 = vmatprep.subr.bf16.mxu0 %v3506
    %3554 = vmatpush1.bf16.msra.mxu0 %v3505
    %3555 = vmatprep.subr.bf16.mxu0 %v3509
    %3556 = vmatpush1.bf16.msra.mxu0 %v3508
    %3557 = vmatprep.subr.bf16.mxu0 %v3512
    %3558 = vmatpush1.bf16.msra.mxu0 %v3511
    %3559 = vmatprep.subr.bf16.mxu0 %v3515
    %3560 = vmatpush1.bf16.msra.mxu0 %v3514
    %3561 = vmatprep.subr.bf16.mxu0 %v3518
    %3562 = vmatpush1.bf16.msra.mxu0 %v3517
    %3563 = vmatprep.subr.bf16.mxu0 %v3521
    %3564 = vmatpush1.bf16.msra.mxu0 %v3520
    %3565 = vmatprep.subr.bf16.mxu0 %v3524
    %3566 = vmatpush1.bf16.msra.mxu0 %v3523
    %3567 = vmatprep.subr.bf16.mxu0 %v3527
    %3568 = vmatpush1.bf16.msra.mxu0 %v3526
    %3569 = vmatprep.subr.bf16.mxu0 0
    %3570 = vmatpush1.bf16.msra.mxu0 0
    %3571 = vmatprep.subr.bf16.mxu0 0
    %3572 = vmatpush1.bf16.msra.mxu0 0
    %3573 = vmatprep.subr.bf16.mxu0 0
    %3574 = vmatpush1.bf16.msra.mxu0 0
    %3575 = vmatprep.subr.bf16.mxu0 0
    %3576 = vmatpush1.bf16.msra.mxu0 0
    %3577 = vmatprep.subr.bf16.mxu0 0
    %3578 = vmatpush1.bf16.msra.mxu0 0
    %3579 = vmatprep.subr.bf16.mxu0 0
    %3580 = vmatpush1.bf16.msra.mxu0 0
    %3581 = vmatprep.subr.bf16.mxu0 0
    %3582 = vmatpush1.bf16.msra.mxu0 0
    %3583 = vmatprep.subr.bf16.mxu0 0
    %3584 = vmatpush1.bf16.msra.mxu0 0
    %3585 = vmatprep.mubr.bf16.mxu0 0
    %3586 = vmatmul.mubr.bf16.gmra.mrb[0].mxu0 %v3375
    %v3587 = vpop.f32.mrb[0].mxu0
    %v3588 = vadd.f32 %v3413, %v3587
    %v3589 = vpop.f32.mrb[0].mxu0
    %v3590 = vadd.f32 %v3417, %v3589
    %v3591 = vpop.f32.mrb[0].mxu0
    %v3592 = vpop.f32.mrb[0].mxu0
    %3593 = vdwg.mxu0
    %3594 = vmatprep.subr.bf16.mxu0 0
    %3595 = vmatpush1.bf16.msra.mxu0 %v3507
    %3596 = vmatprep.subr.bf16.mxu0 0
    %3597 = vmatpush1.bf16.msra.mxu0 %v3510
    %3598 = vmatprep.subr.bf16.mxu0 0
    %3599 = vmatpush1.bf16.msra.mxu0 %v3513
    %3600 = vmatprep.subr.bf16.mxu0 0
    %3601 = vmatpush1.bf16.msra.mxu0 %v3516
    %3602 = vmatprep.subr.bf16.mxu0 0
    %3603 = vmatpush1.bf16.msra.mxu0 %v3519
    %3604 = vmatprep.subr.bf16.mxu0 0
    %3605 = vmatpush1.bf16.msra.mxu0 %v3522
    %3606 = vmatprep.subr.bf16.mxu0 0
    %3607 = vmatpush1.bf16.msra.mxu0 %v3525
    %3608 = vmatprep.subr.bf16.mxu0 0
    %3609 = vmatpush1.bf16.msra.mxu0 %v3528
    %3610 = vmatprep.subr.bf16.mxu0 0
    %3611 = vmatpush1.bf16.msra.mxu0 0
    %3612 = vmatprep.subr.bf16.mxu0 0
    %3613 = vmatpush1.bf16.msra.mxu0 0
    %3614 = vmatprep.subr.bf16.mxu0 0
    %3615 = vmatpush1.bf16.msra.mxu0 0
    %3616 = vmatprep.subr.bf16.mxu0 0
    %3617 = vmatpush1.bf16.msra.mxu0 0
    %3618 = vmatprep.subr.bf16.mxu0 0
    %3619 = vmatpush1.bf16.msra.mxu0 0
    %3620 = vmatprep.subr.bf16.mxu0 0
    %3621 = vmatpush1.bf16.msra.mxu0 0
    %3622 = vmatprep.subr.bf16.mxu0 0
    %3623 = vmatpush1.bf16.msra.mxu0 0
    %3624 = vmatprep.subr.bf16.mxu0 0
    %3625 = vmatpush1.bf16.msra.mxu0 0
    %3626 = vmatprep.mubr.bf16.mxu0 0
    %3627 = vmatmul.mubr.bf16.gmra.mrb[0].mxu0 %v3375
    %v3628 = vpop.f32.mrb[0].mxu0
    %v3629 = vadd.f32 %v3421, %v3628
    %v3630 = vpop.f32.mrb[0].mxu0
    %v3631 = vpop.f32.mrb[0].mxu0
    %v3632 = vpop.f32.mrb[0].mxu0
    %3633 = vdwg.mxu0
    %v3634 = vadd.f32 %v3110, %v3329
    %v3635 = vxor.u32 %v3634, 2147483648
    %v3636 = vmul.f32 %v3635, 1.442695
    %v3637 = vpow.pop %v3636
    %v3638 = vadd.f32 %v3637, 1.0
    %v3639 = vrcp.pop %v3638
    %v3640 = vmul.f32 1.0, %v3639
    %v3641 = vadd.f32 %v3111, %v3331
    %v3642 = vxor.u32 %v3641, 2147483648
    %v3643 = vmul.f32 %v3642, 1.442695
    %v3644 = vpow.pop %v3643
    %v3645 = vadd.f32 %v3644, 1.0
    %v3646 = vrcp.pop %v3645
    %v3647 = vmul.f32 1.0, %v3646
    %v3648 = vmul.f32 %v3640, %v3370
    %v3649 = vadd.f32 %v3112, %v3648
    %v3650 = vtanh.pop %v3649
    %v3651 = vsub.f32 1.0, %v3647
    %v3652 = vmul.f32 %v3651, %v3650
    %v3653 = vmul.f32 %v3647, %v3068
    %v3654 = vadd.f32 %v3652, %v3653
    %v3655 = vadd.f32 %v3113, %v3588
    %v3656 = vxor.u32 %v3655, 2147483648
    %v3657 = vmul.f32 %v3656, 1.442695
    %v3658 = vpow.pop %v3657
    %v3659 = vadd.f32 %v3658, 1.0
    %v3660 = vrcp.pop %v3659
    %v3661 = vmul.f32 1.0, %v3660
    %v3662 = vadd.f32 %v3114, %v3590
    %v3663 = vxor.u32 %v3662, 2147483648
    %v3664 = vmul.f32 %v3663, 1.442695
    %v3665 = vpow.pop %v3664
    %v3666 = vadd.f32 %v3665, 1.0
    %v3667 = vrcp.pop %v3666
    %v3668 = vmul.f32 1.0, %v3667
    %v3669 = vmul.f32 %v3661, %v3629
    %v3670 = vadd.f32 %v3115, %v3669
    %v3671 = vtanh.pop %v3670
    %v3672 = vsub.f32 1.0, %v3668
    %v3673 = vmul.f32 %v3672, %v3671
    %v3674 = vmul.f32 %v3668, %v3089
    %v3675 = vadd.f32 %v3673, %v3674
    %v3676 = vld [vmem:[%s3100] sm:$0xff]
    %3678 = vset.pattern.permute.xlu0 0
    %3679 = vperm.xlu0 %3678, %v3676
    %v3680 = vpop.permute.xlu0 %3679
    %v3682 = vmul.f32 %v3654, %v3680
    %s3683 = scalar_lea.vmem [#allocation4], 32
    %3684 = vst [vmem:[%s3683] sm:$0xff] %v3682
    %v3685 = vld [vmem:[%s3090] sm:$0xff]
    %3687 = vset.pattern.permute.xlu0 0
    %3688 = vperm.xlu0 %3687, %v3685
    %v3689 = vpop.permute.xlu0 %3688
    %v3691 = vmul.f32 %v3675, %v3689
    %s3692 = scalar_lea.vmem [#allocation10], 24
    %3693 = vst [vmem:[%s3692] sm:$0xff] %v3691
    %v3694 = vld [vmem:[#allocation2 + $0x78] sm:$0xff]
    %v3695 = vld [vmem:[#allocation2 + $0x80] sm:$0xff]
    %v3696 = vld [vmem:[#allocation2 + $0x88] sm:$0xff]
    %v3697 = vld [vmem:[#allocation3 + $0x30] sm:$0xff]
    %v3698 = vld [vmem:[#allocation3 + $0x38] sm:$0xff]
    %v3699 = vld [vmem:[#allocation3 + $0x40] sm:$0xff]
    %v3700 = vpack.c.bf16 %v3654, %v3654
    %v3701 = vld [vmem:[#allocation8] sm:$0xff]
    %v3702 = vld [vmem:[#allocation8 + $0x8] sm:$0xf]
    %v3703 = vld [vmem:[#allocation8 + $0xc] sm:$0xff]
    %v3704 = vld [vmem:[#allocation8 + $0x14] sm:$0xf]
    %v3705 = vld [vmem:[#allocation8 + $0x18] sm:$0xff]
    %v3706 = vld [vmem:[#allocation8 + $0x20] sm:$0xf]
    %v3707 = vld [vmem:[#allocation8 + $0x24] sm:$0xff]
    %v3708 = vld [vmem:[#allocation8 + $0x2c] sm:$0xf]
    %v3709 = vld [vmem:[#allocation8 + $0x30] sm:$0xff]
    %v3710 = vld [vmem:[#allocation8 + $0x38] sm:$0xf]
    %v3711 = vld [vmem:[#allocation8 + $0x3c] sm:$0xff]
    %v3712 = vld [vmem:[#allocation8 + $0x44] sm:$0xf]
    %v3713 = vld [vmem:[#allocation8 + $0x48] sm:$0xff]
    %v3714 = vld [vmem:[#allocation8 + $0x50] sm:$0xf]
    %v3715 = vld [vmem:[#allocation8 + $0x54] sm:$0xff]
    %v3716 = vld [vmem:[#allocation8 + $0x5c] sm:$0xf]
    %v3717 = vld [vmem:[#allocation8 + $0x60] sm:$0xff]
    %v3718 = vld [vmem:[#allocation8 + $0x68] sm:$0xf]
    %v3719 = vld [vmem:[#allocation8 + $0x6c] sm:$0xff]
    %v3720 = vld [vmem:[#allocation8 + $0x74] sm:$0xf]
    %v3721 = vld [vmem:[#allocation8 + $0x78] sm:$0xff]
    %v3722 = vld [vmem:[#allocation8 + $0x80] sm:$0xf]
    %v3723 = vld [vmem:[#allocation8 + $0x84] sm:$0xff]
    %v3724 = vld [vmem:[#allocation8 + $0x8c] sm:$0xf]
    %v3725 = vld [vmem:[#allocation8 + $0x90] sm:$0xff]
    %v3726 = vld [vmem:[#allocation8 + $0x98] sm:$0xf]
    %v3727 = vld [vmem:[#allocation8 + $0x9c] sm:$0xff]
    %v3728 = vld [vmem:[#allocation8 + $0xa4] sm:$0xf]
    %v3729 = vld [vmem:[#allocation8 + $0xa8] sm:$0xff]
    %v3730 = vld [vmem:[#allocation8 + $0xb0] sm:$0xf]
    %v3731 = vld [vmem:[#allocation8 + $0xb4] sm:$0xff]
    %v3732 = vld [vmem:[#allocation8 + $0xbc] sm:$0xf]
    %v3733 = vld [vmem:[%s5] sm:$0x7]
    %v3735 = vlaneseq
    %v3736 = vshrl.u32 %v3735, 7
    %v3737 = vsub.s32 0, %v3736
    %v3738 = vrot.slane %v3733, %v3737
    %v3739 = vlaneseq
    %v3740 = vshrl.u32 %v3739, 7
    %v3741 = vsub.s32 1, %v3740
    %v3742 = vrot.slane %v3733, %v3741
    %v3743 = vlaneseq
    %v3744 = vshrl.u32 %v3743, 7
    %v3745 = vsub.s32 2, %v3744
    %v3746 = vrot.slane %v3733, %v3745
    %v3782 = vunpack.c.l.b16 %v3701
    %v3783 = vunpack.c.h.b16 %v3701
    %v3784 = vunpack.c.l.b16 %v3702
    %v3785 = vunpack.c.l.b16 %v3703
    %v3786 = vunpack.c.h.b16 %v3703
    %v3787 = vunpack.c.l.b16 %v3704
    %v3788 = vunpack.c.l.b16 %v3705
    %v3789 = vunpack.c.h.b16 %v3705
    %v3790 = vunpack.c.l.b16 %v3706
    %v3791 = vunpack.c.l.b16 %v3707
    %v3792 = vunpack.c.h.b16 %v3707
    %v3793 = vunpack.c.l.b16 %v3708
    %v3794 = vunpack.c.l.b16 %v3709
    %v3795 = vunpack.c.h.b16 %v3709
    %v3796 = vunpack.c.l.b16 %v3710
    %v3797 = vunpack.c.l.b16 %v3711
    %v3798 = vunpack.c.h.b16 %v3711
    %v3799 = vunpack.c.l.b16 %v3712
    %v3800 = vunpack.c.l.b16 %v3713
    %v3801 = vunpack.c.h.b16 %v3713
    %v3802 = vunpack.c.l.b16 %v3714
    %v3803 = vunpack.c.l.b16 %v3715
    %v3804 = vunpack.c.h.b16 %v3715
    %v3805 = vunpack.c.l.b16 %v3716
    %v3806 = vunpack.c.l.b16 %v3717
    %v3807 = vunpack.c.h.b16 %v3717
    %v3808 = vunpack.c.l.b16 %v3718
    %v3809 = vunpack.c.l.b16 %v3719
    %v3810 = vunpack.c.h.b16 %v3719
    %v3811 = vunpack.c.l.b16 %v3720
    %v3812 = vunpack.c.l.b16 %v3721
    %v3813 = vunpack.c.h.b16 %v3721
    %v3814 = vunpack.c.l.b16 %v3722
    %v3815 = vunpack.c.l.b16 %v3723
    %v3816 = vunpack.c.h.b16 %v3723
    %v3817 = vunpack.c.l.b16 %v3724
    %v3818 = vunpack.c.l.b16 %v3725
    %v3819 = vunpack.c.h.b16 %v3725
    %v3820 = vunpack.c.l.b16 %v3726
    %v3821 = vunpack.c.l.b16 %v3727
    %v3822 = vunpack.c.h.b16 %v3727
    %v3823 = vunpack.c.l.b16 %v3728
    %v3824 = vunpack.c.l.b16 %v3729
    %v3825 = vunpack.c.h.b16 %v3729
    %v3826 = vunpack.c.l.b16 %v3730
    %v3827 = vunpack.c.l.b16 %v3731
    %v3828 = vunpack.c.h.b16 %v3731
    %v3829 = vunpack.c.l.b16 %v3732
    %v3830 = vpack.c.b16 %v3785, %v3782
    %v3831 = vpack.c.b16 %v3786, %v3783
    %v3832 = vpack.c.b16 %v3787, %v3784
    %v3833 = vpack.c.b16 %v3791, %v3788
    %v3834 = vpack.c.b16 %v3792, %v3789
    %v3835 = vpack.c.b16 %v3793, %v3790
    %v3836 = vpack.c.b16 %v3797, %v3794
    %v3837 = vpack.c.b16 %v3798, %v3795
    %v3838 = vpack.c.b16 %v3799, %v3796
    %v3839 = vpack.c.b16 %v3803, %v3800
    %v3840 = vpack.c.b16 %v3804, %v3801
    %v3841 = vpack.c.b16 %v3805, %v3802
    %v3842 = vpack.c.b16 %v3809, %v3806
    %v3843 = vpack.c.b16 %v3810, %v3807
    %v3844 = vpack.c.b16 %v3811, %v3808
    %v3845 = vpack.c.b16 %v3815, %v3812
    %v3846 = vpack.c.b16 %v3816, %v3813
    %v3847 = vpack.c.b16 %v3817, %v3814
    %v3848 = vpack.c.b16 %v3821, %v3818
    %v3849 = vpack.c.b16 %v3822, %v3819
    %v3850 = vpack.c.b16 %v3823, %v3820
    %v3851 = vpack.c.b16 %v3827, %v3824
    %v3852 = vpack.c.b16 %v3828, %v3825
    %v3853 = vpack.c.b16 %v3829, %v3826
    %3878 = vmatprep.subr.bf16.mxu0 %v3831
    %3879 = vmatpush1.bf16.msra.mxu0 %v3830
    %3880 = vmatprep.subr.bf16.mxu0 %v3834
    %3881 = vmatpush1.bf16.msra.mxu0 %v3833
    %3882 = vmatprep.subr.bf16.mxu0 %v3837
    %3883 = vmatpush1.bf16.msra.mxu0 %v3836
    %3884 = vmatprep.subr.bf16.mxu0 %v3840
    %3885 = vmatpush1.bf16.msra.mxu0 %v3839
    %3886 = vmatprep.subr.bf16.mxu0 %v3843
    %3887 = vmatpush1.bf16.msra.mxu0 %v3842
    %3888 = vmatprep.subr.bf16.mxu0 %v3846
    %3889 = vmatpush1.bf16.msra.mxu0 %v3845
    %3890 = vmatprep.subr.bf16.mxu0 %v3849
    %3891 = vmatpush1.bf16.msra.mxu0 %v3848
    %3892 = vmatprep.subr.bf16.mxu0 %v3852
    %3893 = vmatpush1.bf16.msra.mxu0 %v3851
    %3894 = vmatprep.subr.bf16.mxu0 0
    %3895 = vmatpush1.bf16.msra.mxu0 0
    %3896 = vmatprep.subr.bf16.mxu0 0
    %3897 = vmatpush1.bf16.msra.mxu0 0
    %3898 = vmatprep.subr.bf16.mxu0 0
    %3899 = vmatpush1.bf16.msra.mxu0 0
    %3900 = vmatprep.subr.bf16.mxu0 0
    %3901 = vmatpush1.bf16.msra.mxu0 0
    %3902 = vmatprep.subr.bf16.mxu0 0
    %3903 = vmatpush1.bf16.msra.mxu0 0
    %3904 = vmatprep.subr.bf16.mxu0 0
    %3905 = vmatpush1.bf16.msra.mxu0 0
    %3906 = vmatprep.subr.bf16.mxu0 0
    %3907 = vmatpush1.bf16.msra.mxu0 0
    %3908 = vmatprep.subr.bf16.mxu0 0
    %3909 = vmatpush1.bf16.msra.mxu0 0
    %3910 = vmatprep.mubr.bf16.mxu0 0
    %3911 = vmatmul.mubr.bf16.gmra.mrb[0].mxu0 %v3700
    %v3912 = vpop.f32.mrb[0].mxu0
    %v3913 = vadd.f32 %v3738, %v3912
    %v3914 = vpop.f32.mrb[0].mxu0
    %v3915 = vadd.f32 %v3742, %v3914
    %v3916 = vpop.f32.mrb[0].mxu0
    %v3917 = vpop.f32.mrb[0].mxu0
    %3918 = vdwg.mxu0
    %3919 = vmatprep.subr.bf16.mxu0 0
    %3920 = vmatpush1.bf16.msra.mxu0 %v3832
    %3921 = vmatprep.subr.bf16.mxu0 0
    %3922 = vmatpush1.bf16.msra.mxu0 %v3835
    %3923 = vmatprep.subr.bf16.mxu0 0
    %3924 = vmatpush1.bf16.msra.mxu0 %v3838
    %3925 = vmatprep.subr.bf16.mxu0 0
    %3926 = vmatpush1.bf16.msra.mxu0 %v3841
    %3927 = vmatprep.subr.bf16.mxu0 0
    %3928 = vmatpush1.bf16.msra.mxu0 %v3844
    %3929 = vmatprep.subr.bf16.mxu0 0
    %3930 = vmatpush1.bf16.msra.mxu0 %v3847
    %3931 = vmatprep.subr.bf16.mxu0 0
    %3932 = vmatpush1.bf16.msra.mxu0 %v3850
    %3933 = vmatprep.subr.bf16.mxu0 0
    %3934 = vmatpush1.bf16.msra.mxu0 %v3853
    %3935 = vmatprep.subr.bf16.mxu0 0
    %3936 = vmatpush1.bf16.msra.mxu0 0
    %3937 = vmatprep.subr.bf16.mxu0 0
    %3938 = vmatpush1.bf16.msra.mxu0 0
    %3939 = vmatprep.subr.bf16.mxu0 0
    %3940 = vmatpush1.bf16.msra.mxu0 0
    %3941 = vmatprep.subr.bf16.mxu0 0
    %3942 = vmatpush1.bf16.msra.mxu0 0
    %3943 = vmatprep.subr.bf16.mxu0 0
    %3944 = vmatpush1.bf16.msra.mxu0 0
    %3945 = vmatprep.subr.bf16.mxu0 0
    %3946 = vmatpush1.bf16.msra.mxu0 0
    %3947 = vmatprep.subr.bf16.mxu0 0
    %3948 = vmatpush1.bf16.msra.mxu0 0
    %3949 = vmatprep.subr.bf16.mxu0 0
    %3950 = vmatpush1.bf16.msra.mxu0 0
    %3951 = vmatprep.mubr.bf16.mxu0 0
    %3952 = vmatmul.mubr.bf16.gmra.mrb[0].mxu0 %v3700
    %v3953 = vpop.f32.mrb[0].mxu0
    %v3954 = vadd.f32 %v3746, %v3953
    %v3955 = vpop.f32.mrb[0].mxu0
    %v3956 = vpop.f32.mrb[0].mxu0
    %v3957 = vpop.f32.mrb[0].mxu0
    %3958 = vdwg.mxu0
    %v3959 = vpack.c.bf16 %v3675, %v3675
    %v3960 = vld [vmem:[%s1032] sm:$0xff]
    %v3961 = vld [vmem:[%s1032 + $0x8] sm:$0xf]
    %v3962 = vld [vmem:[%s1032 + $0xc] sm:$0xff]
    %v3963 = vld [vmem:[%s1032 + $0x14] sm:$0xf]
    %v3964 = vld [vmem:[%s1032 + $0x18] sm:$0xff]
    %v3965 = vld [vmem:[%s1032 + $0x20] sm:$0xf]
    %v3966 = vld [vmem:[%s1032 + $0x24] sm:$0xff]
    %v3967 = vld [vmem:[%s1032 + $0x2c] sm:$0xf]
    %v3968 = vld [vmem:[%s1032 + $0x30] sm:$0xff]
    %v3969 = vld [vmem:[%s1032 + $0x38] sm:$0xf]
    %v3970 = vld [vmem:[%s1032 + $0x3c] sm:$0xff]
    %v3971 = vld [vmem:[%s1032 + $0x44] sm:$0xf]
    %v3972 = vld [vmem:[%s1032 + $0x48] sm:$0xff]
    %v3973 = vld [vmem:[%s1032 + $0x50] sm:$0xf]
    %v3974 = vld [vmem:[%s1032 + $0x54] sm:$0xff]
    %v3975 = vld [vmem:[%s1032 + $0x5c] sm:$0xf]
    %v3976 = vld [vmem:[%s1032 + $0x60] sm:$0xff]
    %v3977 = vld [vmem:[%s1032 + $0x68] sm:$0xf]
    %v3978 = vld [vmem:[%s1032 + $0x6c] sm:$0xff]
    %v3979 = vld [vmem:[%s1032 + $0x74] sm:$0xf]
    %v3980 = vld [vmem:[%s1032 + $0x78] sm:$0xff]
    %v3981 = vld [vmem:[%s1032 + $0x80] sm:$0xf]
    %v3982 = vld [vmem:[%s1032 + $0x84] sm:$0xff]
    %v3983 = vld [vmem:[%s1032 + $0x8c] sm:$0xf]
    %v3984 = vld [vmem:[%s1032 + $0x90] sm:$0xff]
    %v3985 = vld [vmem:[%s1032 + $0x98] sm:$0xf]
    %v3986 = vld [vmem:[%s1032 + $0x9c] sm:$0xff]
    %v3987 = vld [vmem:[%s1032 + $0xa4] sm:$0xf]
    %v3988 = vld [vmem:[%s1032 + $0xa8] sm:$0xff]
    %v3989 = vld [vmem:[%s1032 + $0xb0] sm:$0xf]
    %v3990 = vld [vmem:[%s1032 + $0xb4] sm:$0xff]
    %v3991 = vld [vmem:[%s1032 + $0xbc] sm:$0xf]
    %v3992 = vld [vmem:[%s1065] sm:$0x7]
    %v3994 = vlaneseq
    %v3995 = vshrl.u32 %v3994, 7
    %v3996 = vsub.s32 0, %v3995
    %v3997 = vrot.slane %v3992, %v3996
    %v3998 = vlaneseq
    %v3999 = vshrl.u32 %v3998, 7
    %v4000 = vsub.s32 1, %v3999
    %v4001 = vrot.slane %v3992, %v4000
    %v4002 = vlaneseq
    %v4003 = vshrl.u32 %v4002, 7
    %v4004 = vsub.s32 2, %v4003
    %v4005 = vrot.slane %v3992, %v4004
    %v4041 = vunpack.c.l.b16 %v3960
    %v4042 = vunpack.c.h.b16 %v3960
    %v4043 = vunpack.c.l.b16 %v3961
    %v4044 = vunpack.c.l.b16 %v3962
    %v4045 = vunpack.c.h.b16 %v3962
    %v4046 = vunpack.c.l.b16 %v3963
    %v4047 = vunpack.c.l.b16 %v3964
    %v4048 = vunpack.c.h.b16 %v3964
    %v4049 = vunpack.c.l.b16 %v3965
    %v4050 = vunpack.c.l.b16 %v3966
    %v4051 = vunpack.c.h.b16 %v3966
    %v4052 = vunpack.c.l.b16 %v3967
    %v4053 = vunpack.c.l.b16 %v3968
    %v4054 = vunpack.c.h.b16 %v3968
    %v4055 = vunpack.c.l.b16 %v3969
    %v4056 = vunpack.c.l.b16 %v3970
    %v4057 = vunpack.c.h.b16 %v3970
    %v4058 = vunpack.c.l.b16 %v3971
    %v4059 = vunpack.c.l.b16 %v3972
    %v4060 = vunpack.c.h.b16 %v3972
    %v4061 = vunpack.c.l.b16 %v3973
    %v4062 = vunpack.c.l.b16 %v3974
    %v4063 = vunpack.c.h.b16 %v3974
    %v4064 = vunpack.c.l.b16 %v3975
    %v4065 = vunpack.c.l.b16 %v3976
    %v4066 = vunpack.c.h.b16 %v3976
    %v4067 = vunpack.c.l.b16 %v3977
    %v4068 = vunpack.c.l.b16 %v3978
    %v4069 = vunpack.c.h.b16 %v3978
    %v4070 = vunpack.c.l.b16 %v3979
    %v4071 = vunpack.c.l.b16 %v3980
    %v4072 = vunpack.c.h.b16 %v3980
    %v4073 = vunpack.c.l.b16 %v3981
    %v4074 = vunpack.c.l.b16 %v3982
    %v4075 = vunpack.c.h.b16 %v3982
    %v4076 = vunpack.c.l.b16 %v3983
    %v4077 = vunpack.c.l.b16 %v3984
    %v4078 = vunpack.c.h.b16 %v3984
    %v4079 = vunpack.c.l.b16 %v3985
    %v4080 = vunpack.c.l.b16 %v3986
    %v4081 = vunpack.c.h.b16 %v3986
    %v4082 = vunpack.c.l.b16 %v3987
    %v4083 = vunpack.c.l.b16 %v3988
    %v4084 = vunpack.c.h.b16 %v3988
    %v4085 = vunpack.c.l.b16 %v3989
    %v4086 = vunpack.c.l.b16 %v3990
    %v4087 = vunpack.c.h.b16 %v3990
    %v4088 = vunpack.c.l.b16 %v3991
    %v4089 = vpack.c.b16 %v4044, %v4041
    %v4090 = vpack.c.b16 %v4045, %v4042
    %v4091 = vpack.c.b16 %v4046, %v4043
    %v4092 = vpack.c.b16 %v4050, %v4047
    %v4093 = vpack.c.b16 %v4051, %v4048
    %v4094 = vpack.c.b16 %v4052, %v4049
    %v4095 = vpack.c.b16 %v4056, %v4053
    %v4096 = vpack.c.b16 %v4057, %v4054
    %v4097 = vpack.c.b16 %v4058, %v4055
    %v4098 = vpack.c.b16 %v4062, %v4059
    %v4099 = vpack.c.b16 %v4063, %v4060
    %v4100 = vpack.c.b16 %v4064, %v4061
    %v4101 = vpack.c.b16 %v4068, %v4065
    %v4102 = vpack.c.b16 %v4069, %v4066
    %v4103 = vpack.c.b16 %v4070, %v4067
    %v4104 = vpack.c.b16 %v4074, %v4071
    %v4105 = vpack.c.b16 %v4075, %v4072
    %v4106 = vpack.c.b16 %v4076, %v4073
    %v4107 = vpack.c.b16 %v4080, %v4077
    %v4108 = vpack.c.b16 %v4081, %v4078
    %v4109 = vpack.c.b16 %v4082, %v4079
    %v4110 = vpack.c.b16 %v4086, %v4083
    %v4111 = vpack.c.b16 %v4087, %v4084
    %v4112 = vpack.c.b16 %v4088, %v4085
    %4137 = vmatprep.subr.bf16.mxu0 %v4090
    %4138 = vmatpush1.bf16.msra.mxu0 %v4089
    %4139 = vmatprep.subr.bf16.mxu0 %v4093
    %4140 = vmatpush1.bf16.msra.mxu0 %v4092
    %4141 = vmatprep.subr.bf16.mxu0 %v4096
    %4142 = vmatpush1.bf16.msra.mxu0 %v4095
    %4143 = vmatprep.subr.bf16.mxu0 %v4099
    %4144 = vmatpush1.bf16.msra.mxu0 %v4098
    %4145 = vmatprep.subr.bf16.mxu0 %v4102
    %4146 = vmatpush1.bf16.msra.mxu0 %v4101
    %4147 = vmatprep.subr.bf16.mxu0 %v4105
    %4148 = vmatpush1.bf16.msra.mxu0 %v4104
    %4149 = vmatprep.subr.bf16.mxu0 %v4108
    %4150 = vmatpush1.bf16.msra.mxu0 %v4107
    %4151 = vmatprep.subr.bf16.mxu0 %v4111
    %4152 = vmatpush1.bf16.msra.mxu0 %v4110
    %4153 = vmatprep.subr.bf16.mxu0 0
    %4154 = vmatpush1.bf16.msra.mxu0 0
    %4155 = vmatprep.subr.bf16.mxu0 0
    %4156 = vmatpush1.bf16.msra.mxu0 0
    %4157 = vmatprep.subr.bf16.mxu0 0
    %4158 = vmatpush1.bf16.msra.mxu0 0
    %4159 = vmatprep.subr.bf16.mxu0 0
    %4160 = vmatpush1.bf16.msra.mxu0 0
    %4161 = vmatprep.subr.bf16.mxu0 0
    %4162 = vmatpush1.bf16.msra.mxu0 0
    %4163 = vmatprep.subr.bf16.mxu0 0
    %4164 = vmatpush1.bf16.msra.mxu0 0
    %4165 = vmatprep.subr.bf16.mxu0 0
    %4166 = vmatpush1.bf16.msra.mxu0 0
    %4167 = vmatprep.subr.bf16.mxu0 0
    %4168 = vmatpush1.bf16.msra.mxu0 0
    %4169 = vmatprep.mubr.bf16.mxu0 0
    %4170 = vmatmul.mubr.bf16.gmra.mrb[0].mxu0 %v3959
    %v4171 = vpop.f32.mrb[0].mxu0
    %v4172 = vadd.f32 %v3997, %v4171
    %v4173 = vpop.f32.mrb[0].mxu0
    %v4174 = vadd.f32 %v4001, %v4173
    %v4175 = vpop.f32.mrb[0].mxu0
    %v4176 = vpop.f32.mrb[0].mxu0
    %4177 = vdwg.mxu0
    %4178 = vmatprep.subr.bf16.mxu0 0
    %4179 = vmatpush1.bf16.msra.mxu0 %v4091
    %4180 = vmatprep.subr.bf16.mxu0 0
    %4181 = vmatpush1.bf16.msra.mxu0 %v4094
    %4182 = vmatprep.subr.bf16.mxu0 0
    %4183 = vmatpush1.bf16.msra.mxu0 %v4097
    %4184 = vmatprep.subr.bf16.mxu0 0
    %4185 = vmatpush1.bf16.msra.mxu0 %v4100
    %4186 = vmatprep.subr.bf16.mxu0 0
    %4187 = vmatpush1.bf16.msra.mxu0 %v4103
    %4188 = vmatprep.subr.bf16.mxu0 0
    %4189 = vmatpush1.bf16.msra.mxu0 %v4106
    %4190 = vmatprep.subr.bf16.mxu0 0
    %4191 = vmatpush1.bf16.msra.mxu0 %v4109
    %4192 = vmatprep.subr.bf16.mxu0 0
    %4193 = vmatpush1.bf16.msra.mxu0 %v4112
    %4194 = vmatprep.subr.bf16.mxu0 0
    %4195 = vmatpush1.bf16.msra.mxu0 0
    %4196 = vmatprep.subr.bf16.mxu0 0
    %4197 = vmatpush1.bf16.msra.mxu0 0
    %4198 = vmatprep.subr.bf16.mxu0 0
    %4199 = vmatpush1.bf16.msra.mxu0 0
    %4200 = vmatprep.subr.bf16.mxu0 0
    %4201 = vmatpush1.bf16.msra.mxu0 0
    %4202 = vmatprep.subr.bf16.mxu0 0
    %4203 = vmatpush1.bf16.msra.mxu0 0
    %4204 = vmatprep.subr.bf16.mxu0 0
    %4205 = vmatpush1.bf16.msra.mxu0 0
    %4206 = vmatprep.subr.bf16.mxu0 0
    %4207 = vmatpush1.bf16.msra.mxu0 0
    %4208 = vmatprep.subr.bf16.mxu0 0
    %4209 = vmatpush1.bf16.msra.mxu0 0
    %4210 = vmatprep.mubr.bf16.mxu0 0
    %4211 = vmatmul.mubr.bf16.gmra.mrb[0].mxu0 %v3959
    %v4212 = vpop.f32.mrb[0].mxu0
    %v4213 = vadd.f32 %v4005, %v4212
    %v4214 = vpop.f32.mrb[0].mxu0
    %v4215 = vpop.f32.mrb[0].mxu0
    %v4216 = vpop.f32.mrb[0].mxu0
    %4217 = vdwg.mxu0
    %v4218 = vadd.f32 %v3694, %v3913
    %v4219 = vxor.u32 %v4218, 2147483648
    %v4220 = vmul.f32 %v4219, 1.442695
    %v4221 = vpow.pop %v4220
    %v4222 = vadd.f32 %v4221, 1.0
    %v4223 = vrcp.pop %v4222
    %v4224 = vmul.f32 1.0, %v4223
    %v4225 = vadd.f32 %v3695, %v3915
    %v4226 = vxor.u32 %v4225, 2147483648
    %v4227 = vmul.f32 %v4226, 1.442695
    %v4228 = vpow.pop %v4227
    %v4229 = vadd.f32 %v4228, 1.0
    %v4230 = vrcp.pop %v4229
    %v4231 = vmul.f32 1.0, %v4230
    %v4232 = vmul.f32 %v4224, %v3954
    %v4233 = vadd.f32 %v3696, %v4232
    %v4234 = vtanh.pop %v4233
    %v4235 = vsub.f32 1.0, %v4231
    %v4236 = vmul.f32 %v4235, %v4234
    %v4237 = vmul.f32 %v4231, %v3654
    %v4238 = vadd.f32 %v4236, %v4237
    %v4239 = vadd.f32 %v3697, %v4172
    %v4240 = vxor.u32 %v4239, 2147483648
    %v4241 = vmul.f32 %v4240, 1.442695
    %v4242 = vpow.pop %v4241
    %v4243 = vadd.f32 %v4242, 1.0
    %v4244 = vrcp.pop %v4243
    %v4245 = vmul.f32 1.0, %v4244
    %v4246 = vadd.f32 %v3698, %v4174
    %v4247 = vxor.u32 %v4246, 2147483648
    %v4248 = vmul.f32 %v4247, 1.442695
    %v4249 = vpow.pop %v4248
    %v4250 = vadd.f32 %v4249, 1.0
    %v4251 = vrcp.pop %v4250
    %v4252 = vmul.f32 1.0, %v4251
    %v4253 = vmul.f32 %v4245, %v4213
    %v4254 = vadd.f32 %v3699, %v4253
    %v4255 = vtanh.pop %v4254
    %v4256 = vsub.f32 1.0, %v4252
    %v4257 = vmul.f32 %v4256, %v4255
    %v4258 = vmul.f32 %v4252, %v3675
    %v4259 = vadd.f32 %v4257, %v4258
    %v4260 = vld [vmem:[%s2514] sm:$0xff]
    %4262 = vset.pattern.permute.xlu0 0
    %4263 = vperm.xlu0 %4262, %v4260
    %v4264 = vpop.permute.xlu0 %4263
    %v4266 = vmul.f32 %v4238, %v4264
    %s4267 = scalar_lea.vmem [#allocation4], 40
    %4268 = vst [vmem:[%s4267] sm:$0xff] %v4266
    %v4269 = vld [vmem:[%s2504] sm:$0xff]
    %4271 = vset.pattern.permute.xlu0 0
    %4272 = vperm.xlu0 %4271, %v4269
    %v4273 = vpop.permute.xlu0 %4272
    %v4275 = vmul.f32 %v4259, %v4273
    %s4276 = scalar_lea.vmem [#allocation10], 16
    %4277 = vst [vmem:[%s4276] sm:$0xff] %v4275
    %v4278 = vld [vmem:[#allocation2 + $0x90] sm:$0xff]
    %v4279 = vld [vmem:[#allocation2 + $0x98] sm:$0xff]
    %v4280 = vld [vmem:[#allocation2 + $0xa0] sm:$0xff]
    %v4281 = vld [vmem:[#allocation3 + $0x18] sm:$0xff]
    %v4282 = vld [vmem:[#allocation3 + $0x20] sm:$0xff]
    %v4283 = vld [vmem:[#allocation3 + $0x28] sm:$0xff]
    %v4284 = vpack.c.bf16 %v4238, %v4238
    %v4285 = vld [vmem:[#allocation8] sm:$0xff]
    %v4286 = vld [vmem:[#allocation8 + $0x8] sm:$0xf]
    %v4287 = vld [vmem:[#allocation8 + $0xc] sm:$0xff]
    %v4288 = vld [vmem:[#allocation8 + $0x14] sm:$0xf]
    %v4289 = vld [vmem:[#allocation8 + $0x18] sm:$0xff]
    %v4290 = vld [vmem:[#allocation8 + $0x20] sm:$0xf]
    %v4291 = vld [vmem:[#allocation8 + $0x24] sm:$0xff]
    %v4292 = vld [vmem:[#allocation8 + $0x2c] sm:$0xf]
    %v4293 = vld [vmem:[#allocation8 + $0x30] sm:$0xff]
    %v4294 = vld [vmem:[#allocation8 + $0x38] sm:$0xf]
    %v4295 = vld [vmem:[#allocation8 + $0x3c] sm:$0xff]
    %v4296 = vld [vmem:[#allocation8 + $0x44] sm:$0xf]
    %v4297 = vld [vmem:[#allocation8 + $0x48] sm:$0xff]
    %v4298 = vld [vmem:[#allocation8 + $0x50] sm:$0xf]
    %v4299 = vld [vmem:[#allocation8 + $0x54] sm:$0xff]
    %v4300 = vld [vmem:[#allocation8 + $0x5c] sm:$0xf]
    %v4301 = vld [vmem:[#allocation8 + $0x60] sm:$0xff]
    %v4302 = vld [vmem:[#allocation8 + $0x68] sm:$0xf]
    %v4303 = vld [vmem:[#allocation8 + $0x6c] sm:$0xff]
    %v4304 = vld [vmem:[#allocation8 + $0x74] sm:$0xf]
    %v4305 = vld [vmem:[#allocation8 + $0x78] sm:$0xff]
    %v4306 = vld [vmem:[#allocation8 + $0x80] sm:$0xf]
    %v4307 = vld [vmem:[#allocation8 + $0x84] sm:$0xff]
    %v4308 = vld [vmem:[#allocation8 + $0x8c] sm:$0xf]
    %v4309 = vld [vmem:[#allocation8 + $0x90] sm:$0xff]
    %v4310 = vld [vmem:[#allocation8 + $0x98] sm:$0xf]
    %v4311 = vld [vmem:[#allocation8 + $0x9c] sm:$0xff]
    %v4312 = vld [vmem:[#allocation8 + $0xa4] sm:$0xf]
    %v4313 = vld [vmem:[#allocation8 + $0xa8] sm:$0xff]
    %v4314 = vld [vmem:[#allocation8 + $0xb0] sm:$0xf]
    %v4315 = vld [vmem:[#allocation8 + $0xb4] sm:$0xff]
    %v4316 = vld [vmem:[#allocation8 + $0xbc] sm:$0xf]
    %v4317 = vld [vmem:[%s5] sm:$0x7]
    %v4319 = vlaneseq
    %v4320 = vshrl.u32 %v4319, 7
    %v4321 = vsub.s32 0, %v4320
    %v4322 = vrot.slane %v4317, %v4321
    %v4323 = vlaneseq
    %v4324 = vshrl.u32 %v4323, 7
    %v4325 = vsub.s32 1, %v4324
    %v4326 = vrot.slane %v4317, %v4325
    %v4327 = vlaneseq
    %v4328 = vshrl.u32 %v4327, 7
    %v4329 = vsub.s32 2, %v4328
    %v4330 = vrot.slane %v4317, %v4329
    %v4366 = vunpack.c.l.b16 %v4285
    %v4367 = vunpack.c.h.b16 %v4285
    %v4368 = vunpack.c.l.b16 %v4286
    %v4369 = vunpack.c.l.b16 %v4287
    %v4370 = vunpack.c.h.b16 %v4287
    %v4371 = vunpack.c.l.b16 %v4288
    %v4372 = vunpack.c.l.b16 %v4289
    %v4373 = vunpack.c.h.b16 %v4289
    %v4374 = vunpack.c.l.b16 %v4290
    %v4375 = vunpack.c.l.b16 %v4291
    %v4376 = vunpack.c.h.b16 %v4291
    %v4377 = vunpack.c.l.b16 %v4292
    %v4378 = vunpack.c.l.b16 %v4293
    %v4379 = vunpack.c.h.b16 %v4293
    %v4380 = vunpack.c.l.b16 %v4294
    %v4381 = vunpack.c.l.b16 %v4295
    %v4382 = vunpack.c.h.b16 %v4295
    %v4383 = vunpack.c.l.b16 %v4296
    %v4384 = vunpack.c.l.b16 %v4297
    %v4385 = vunpack.c.h.b16 %v4297
    %v4386 = vunpack.c.l.b16 %v4298
    %v4387 = vunpack.c.l.b16 %v4299
    %v4388 = vunpack.c.h.b16 %v4299
    %v4389 = vunpack.c.l.b16 %v4300
    %v4390 = vunpack.c.l.b16 %v4301
    %v4391 = vunpack.c.h.b16 %v4301
    %v4392 = vunpack.c.l.b16 %v4302
    %v4393 = vunpack.c.l.b16 %v4303
    %v4394 = vunpack.c.h.b16 %v4303
    %v4395 = vunpack.c.l.b16 %v4304
    %v4396 = vunpack.c.l.b16 %v4305
    %v4397 = vunpack.c.h.b16 %v4305
    %v4398 = vunpack.c.l.b16 %v4306
    %v4399 = vunpack.c.l.b16 %v4307
    %v4400 = vunpack.c.h.b16 %v4307
    %v4401 = vunpack.c.l.b16 %v4308
    %v4402 = vunpack.c.l.b16 %v4309
    %v4403 = vunpack.c.h.b16 %v4309
    %v4404 = vunpack.c.l.b16 %v4310
    %v4405 = vunpack.c.l.b16 %v4311
    %v4406 = vunpack.c.h.b16 %v4311
    %v4407 = vunpack.c.l.b16 %v4312
    %v4408 = vunpack.c.l.b16 %v4313
    %v4409 = vunpack.c.h.b16 %v4313
    %v4410 = vunpack.c.l.b16 %v4314
    %v4411 = vunpack.c.l.b16 %v4315
    %v4412 = vunpack.c.h.b16 %v4315
    %v4413 = vunpack.c.l.b16 %v4316
    %v4414 = vpack.c.b16 %v4369, %v4366
    %v4415 = vpack.c.b16 %v4370, %v4367
    %v4416 = vpack.c.b16 %v4371, %v4368
    %v4417 = vpack.c.b16 %v4375, %v4372
    %v4418 = vpack.c.b16 %v4376, %v4373
    %v4419 = vpack.c.b16 %v4377, %v4374
    %v4420 = vpack.c.b16 %v4381, %v4378
    %v4421 = vpack.c.b16 %v4382, %v4379
    %v4422 = vpack.c.b16 %v4383, %v4380
    %v4423 = vpack.c.b16 %v4387, %v4384
    %v4424 = vpack.c.b16 %v4388, %v4385
    %v4425 = vpack.c.b16 %v4389, %v4386
    %v4426 = vpack.c.b16 %v4393, %v4390
    %v4427 = vpack.c.b16 %v4394, %v4391
    %v4428 = vpack.c.b16 %v4395, %v4392
    %v4429 = vpack.c.b16 %v4399, %v4396
    %v4430 = vpack.c.b16 %v4400, %v4397
    %v4431 = vpack.c.b16 %v4401, %v4398
    %v4432 = vpack.c.b16 %v4405, %v4402
    %v4433 = vpack.c.b16 %v4406, %v4403
    %v4434 = vpack.c.b16 %v4407, %v4404
    %v4435 = vpack.c.b16 %v4411, %v4408
    %v4436 = vpack.c.b16 %v4412, %v4409
    %v4437 = vpack.c.b16 %v4413, %v4410
    %4462 = vmatprep.subr.bf16.mxu0 %v4415
    %4463 = vmatpush1.bf16.msra.mxu0 %v4414
    %4464 = vmatprep.subr.bf16.mxu0 %v4418
    %4465 = vmatpush1.bf16.msra.mxu0 %v4417
    %4466 = vmatprep.subr.bf16.mxu0 %v4421
    %4467 = vmatpush1.bf16.msra.mxu0 %v4420
    %4468 = vmatprep.subr.bf16.mxu0 %v4424
    %4469 = vmatpush1.bf16.msra.mxu0 %v4423
    %4470 = vmatprep.subr.bf16.mxu0 %v4427
    %4471 = vmatpush1.bf16.msra.mxu0 %v4426
    %4472 = vmatprep.subr.bf16.mxu0 %v4430
    %4473 = vmatpush1.bf16.msra.mxu0 %v4429
    %4474 = vmatprep.subr.bf16.mxu0 %v4433
    %4475 = vmatpush1.bf16.msra.mxu0 %v4432
    %4476 = vmatprep.subr.bf16.mxu0 %v4436
    %4477 = vmatpush1.bf16.msra.mxu0 %v4435
    %4478 = vmatprep.subr.bf16.mxu0 0
    %4479 = vmatpush1.bf16.msra.mxu0 0
    %4480 = vmatprep.subr.bf16.mxu0 0
    %4481 = vmatpush1.bf16.msra.mxu0 0
    %4482 = vmatprep.subr.bf16.mxu0 0
    %4483 = vmatpush1.bf16.msra.mxu0 0
    %4484 = vmatprep.subr.bf16.mxu0 0
    %4485 = vmatpush1.bf16.msra.mxu0 0
    %4486 = vmatprep.subr.bf16.mxu0 0
    %4487 = vmatpush1.bf16.msra.mxu0 0
    %4488 = vmatprep.subr.bf16.mxu0 0
    %4489 = vmatpush1.bf16.msra.mxu0 0
    %4490 = vmatprep.subr.bf16.mxu0 0
    %4491 = vmatpush1.bf16.msra.mxu0 0
    %4492 = vmatprep.subr.bf16.mxu0 0
    %4493 = vmatpush1.bf16.msra.mxu0 0
    %4494 = vmatprep.mubr.bf16.mxu0 0
    %4495 = vmatmul.mubr.bf16.gmra.mrb[0].mxu0 %v4284
    %v4496 = vpop.f32.mrb[0].mxu0
    %v4497 = vadd.f32 %v4322, %v4496
    %v4498 = vpop.f32.mrb[0].mxu0
    %v4499 = vadd.f32 %v4326, %v4498
    %v4500 = vpop.f32.mrb[0].mxu0
    %v4501 = vpop.f32.mrb[0].mxu0
    %4502 = vdwg.mxu0
    %4503 = vmatprep.subr.bf16.mxu0 0
    %4504 = vmatpush1.bf16.msra.mxu0 %v4416
    %4505 = vmatprep.subr.bf16.mxu0 0
    %4506 = vmatpush1.bf16.msra.mxu0 %v4419
    %4507 = vmatprep.subr.bf16.mxu0 0
    %4508 = vmatpush1.bf16.msra.mxu0 %v4422
    %4509 = vmatprep.subr.bf16.mxu0 0
    %4510 = vmatpush1.bf16.msra.mxu0 %v4425
    %4511 = vmatprep.subr.bf16.mxu0 0
    %4512 = vmatpush1.bf16.msra.mxu0 %v4428
    %4513 = vmatprep.subr.bf16.mxu0 0
    %4514 = vmatpush1.bf16.msra.mxu0 %v4431
    %4515 = vmatprep.subr.bf16.mxu0 0
    %4516 = vmatpush1.bf16.msra.mxu0 %v4434
    %4517 = vmatprep.subr.bf16.mxu0 0
    %4518 = vmatpush1.bf16.msra.mxu0 %v4437
    %4519 = vmatprep.subr.bf16.mxu0 0
    %4520 = vmatpush1.bf16.msra.mxu0 0
    %4521 = vmatprep.subr.bf16.mxu0 0
    %4522 = vmatpush1.bf16.msra.mxu0 0
    %4523 = vmatprep.subr.bf16.mxu0 0
    %4524 = vmatpush1.bf16.msra.mxu0 0
    %4525 = vmatprep.subr.bf16.mxu0 0
    %4526 = vmatpush1.bf16.msra.mxu0 0
    %4527 = vmatprep.subr.bf16.mxu0 0
    %4528 = vmatpush1.bf16.msra.mxu0 0
    %4529 = vmatprep.subr.bf16.mxu0 0
    %4530 = vmatpush1.bf16.msra.mxu0 0
    %4531 = vmatprep.subr.bf16.mxu0 0
    %4532 = vmatpush1.bf16.msra.mxu0 0
    %4533 = vmatprep.subr.bf16.mxu0 0
    %4534 = vmatpush1.bf16.msra.mxu0 0
    %4535 = vmatprep.mubr.bf16.mxu0 0
    %4536 = vmatmul.mubr.bf16.gmra.mrb[0].mxu0 %v4284
    %v4537 = vpop.f32.mrb[0].mxu0
    %v4538 = vadd.f32 %v4330, %v4537
    %v4539 = vpop.f32.mrb[0].mxu0
    %v4540 = vpop.f32.mrb[0].mxu0
    %v4541 = vpop.f32.mrb[0].mxu0
    %4542 = vdwg.mxu0
    %v4543 = vpack.c.bf16 %v4259, %v4259
    %v4544 = vld [vmem:[%s1032] sm:$0xff]
    %v4545 = vld [vmem:[%s1032 + $0x8] sm:$0xf]
    %v4546 = vld [vmem:[%s1032 + $0xc] sm:$0xff]
    %v4547 = vld [vmem:[%s1032 + $0x14] sm:$0xf]
    %v4548 = vld [vmem:[%s1032 + $0x18] sm:$0xff]
    %v4549 = vld [vmem:[%s1032 + $0x20] sm:$0xf]
    %v4550 = vld [vmem:[%s1032 + $0x24] sm:$0xff]
    %v4551 = vld [vmem:[%s1032 + $0x2c] sm:$0xf]
    %v4552 = vld [vmem:[%s1032 + $0x30] sm:$0xff]
    %v4553 = vld [vmem:[%s1032 + $0x38] sm:$0xf]
    %v4554 = vld [vmem:[%s1032 + $0x3c] sm:$0xff]
    %v4555 = vld [vmem:[%s1032 + $0x44] sm:$0xf]
    %v4556 = vld [vmem:[%s1032 + $0x48] sm:$0xff]
    %v4557 = vld [vmem:[%s1032 + $0x50] sm:$0xf]
    %v4558 = vld [vmem:[%s1032 + $0x54] sm:$0xff]
    %v4559 = vld [vmem:[%s1032 + $0x5c] sm:$0xf]
    %v4560 = vld [vmem:[%s1032 + $0x60] sm:$0xff]
    %v4561 = vld [vmem:[%s1032 + $0x68] sm:$0xf]
    %v4562 = vld [vmem:[%s1032 + $0x6c] sm:$0xff]
    %v4563 = vld [vmem:[%s1032 + $0x74] sm:$0xf]
    %v4564 = vld [vmem:[%s1032 + $0x78] sm:$0xff]
    %v4565 = vld [vmem:[%s1032 + $0x80] sm:$0xf]
    %v4566 = vld [vmem:[%s1032 + $0x84] sm:$0xff]
    %v4567 = vld [vmem:[%s1032 + $0x8c] sm:$0xf]
    %v4568 = vld [vmem:[%s1032 + $0x90] sm:$0xff]
    %v4569 = vld [vmem:[%s1032 + $0x98] sm:$0xf]
    %v4570 = vld [vmem:[%s1032 + $0x9c] sm:$0xff]
    %v4571 = vld [vmem:[%s1032 + $0xa4] sm:$0xf]
    %v4572 = vld [vmem:[%s1032 + $0xa8] sm:$0xff]
    %v4573 = vld [vmem:[%s1032 + $0xb0] sm:$0xf]
    %v4574 = vld [vmem:[%s1032 + $0xb4] sm:$0xff]
    %v4575 = vld [vmem:[%s1032 + $0xbc] sm:$0xf]
    %v4576 = vld [vmem:[%s1065] sm:$0x7]
    %v4578 = vlaneseq
    %v4579 = vshrl.u32 %v4578, 7
    %v4580 = vsub.s32 0, %v4579
    %v4581 = vrot.slane %v4576, %v4580
    %v4582 = vlaneseq
    %v4583 = vshrl.u32 %v4582, 7
    %v4584 = vsub.s32 1, %v4583
    %v4585 = vrot.slane %v4576, %v4584
    %v4586 = vlaneseq
    %v4587 = vshrl.u32 %v4586, 7
    %v4588 = vsub.s32 2, %v4587
    %v4589 = vrot.slane %v4576, %v4588
    %v4625 = vunpack.c.l.b16 %v4544
    %v4626 = vunpack.c.h.b16 %v4544
    %v4627 = vunpack.c.l.b16 %v4545
    %v4628 = vunpack.c.l.b16 %v4546
    %v4629 = vunpack.c.h.b16 %v4546
    %v4630 = vunpack.c.l.b16 %v4547
    %v4631 = vunpack.c.l.b16 %v4548
    %v4632 = vunpack.c.h.b16 %v4548
    %v4633 = vunpack.c.l.b16 %v4549
    %v4634 = vunpack.c.l.b16 %v4550
    %v4635 = vunpack.c.h.b16 %v4550
    %v4636 = vunpack.c.l.b16 %v4551
    %v4637 = vunpack.c.l.b16 %v4552
    %v4638 = vunpack.c.h.b16 %v4552
    %v4639 = vunpack.c.l.b16 %v4553
    %v4640 = vunpack.c.l.b16 %v4554
    %v4641 = vunpack.c.h.b16 %v4554
    %v4642 = vunpack.c.l.b16 %v4555
    %v4643 = vunpack.c.l.b16 %v4556
    %v4644 = vunpack.c.h.b16 %v4556
    %v4645 = vunpack.c.l.b16 %v4557
    %v4646 = vunpack.c.l.b16 %v4558
    %v4647 = vunpack.c.h.b16 %v4558
    %v4648 = vunpack.c.l.b16 %v4559
    %v4649 = vunpack.c.l.b16 %v4560
    %v4650 = vunpack.c.h.b16 %v4560
    %v4651 = vunpack.c.l.b16 %v4561
    %v4652 = vunpack.c.l.b16 %v4562
    %v4653 = vunpack.c.h.b16 %v4562
    %v4654 = vunpack.c.l.b16 %v4563
    %v4655 = vunpack.c.l.b16 %v4564
    %v4656 = vunpack.c.h.b16 %v4564
    %v4657 = vunpack.c.l.b16 %v4565
    %v4658 = vunpack.c.l.b16 %v4566
    %v4659 = vunpack.c.h.b16 %v4566
    %v4660 = vunpack.c.l.b16 %v4567
    %v4661 = vunpack.c.l.b16 %v4568
    %v4662 = vunpack.c.h.b16 %v4568
    %v4663 = vunpack.c.l.b16 %v4569
    %v4664 = vunpack.c.l.b16 %v4570
    %v4665 = vunpack.c.h.b16 %v4570
    %v4666 = vunpack.c.l.b16 %v4571
    %v4667 = vunpack.c.l.b16 %v4572
    %v4668 = vunpack.c.h.b16 %v4572
    %v4669 = vunpack.c.l.b16 %v4573
    %v4670 = vunpack.c.l.b16 %v4574
    %v4671 = vunpack.c.h.b16 %v4574
    %v4672 = vunpack.c.l.b16 %v4575
    %v4673 = vpack.c.b16 %v4628, %v4625
    %v4674 = vpack.c.b16 %v4629, %v4626
    %v4675 = vpack.c.b16 %v4630, %v4627
    %v4676 = vpack.c.b16 %v4634, %v4631
    %v4677 = vpack.c.b16 %v4635, %v4632
    %v4678 = vpack.c.b16 %v4636, %v4633
    %v4679 = vpack.c.b16 %v4640, %v4637
    %v4680 = vpack.c.b16 %v4641, %v4638
    %v4681 = vpack.c.b16 %v4642, %v4639
    %v4682 = vpack.c.b16 %v4646, %v4643
    %v4683 = vpack.c.b16 %v4647, %v4644
    %v4684 = vpack.c.b16 %v4648, %v4645
    %v4685 = vpack.c.b16 %v4652, %v4649
    %v4686 = vpack.c.b16 %v4653, %v4650
    %v4687 = vpack.c.b16 %v4654, %v4651
    %v4688 = vpack.c.b16 %v4658, %v4655
    %v4689 = vpack.c.b16 %v4659, %v4656
    %v4690 = vpack.c.b16 %v4660, %v4657
    %v4691 = vpack.c.b16 %v4664, %v4661
    %v4692 = vpack.c.b16 %v4665, %v4662
    %v4693 = vpack.c.b16 %v4666, %v4663
    %v4694 = vpack.c.b16 %v4670, %v4667
    %v4695 = vpack.c.b16 %v4671, %v4668
    %v4696 = vpack.c.b16 %v4672, %v4669
    %4721 = vmatprep.subr.bf16.mxu0 %v4674
    %4722 = vmatpush1.bf16.msra.mxu0 %v4673
    %4723 = vmatprep.subr.bf16.mxu0 %v4677
    %4724 = vmatpush1.bf16.msra.mxu0 %v4676
    %4725 = vmatprep.subr.bf16.mxu0 %v4680
    %4726 = vmatpush1.bf16.msra.mxu0 %v4679
    %4727 = vmatprep.subr.bf16.mxu0 %v4683
    %4728 = vmatpush1.bf16.msra.mxu0 %v4682
    %4729 = vmatprep.subr.bf16.mxu0 %v4686
    %4730 = vmatpush1.bf16.msra.mxu0 %v4685
    %4731 = vmatprep.subr.bf16.mxu0 %v4689
    %4732 = vmatpush1.bf16.msra.mxu0 %v4688
    %4733 = vmatprep.subr.bf16.mxu0 %v4692
    %4734 = vmatpush1.bf16.msra.mxu0 %v4691
    %4735 = vmatprep.subr.bf16.mxu0 %v4695
    %4736 = vmatpush1.bf16.msra.mxu0 %v4694
    %4737 = vmatprep.subr.bf16.mxu0 0
    %4738 = vmatpush1.bf16.msra.mxu0 0
    %4739 = vmatprep.subr.bf16.mxu0 0
    %4740 = vmatpush1.bf16.msra.mxu0 0
    %4741 = vmatprep.subr.bf16.mxu0 0
    %4742 = vmatpush1.bf16.msra.mxu0 0
    %4743 = vmatprep.subr.bf16.mxu0 0
    %4744 = vmatpush1.bf16.msra.mxu0 0
    %4745 = vmatprep.subr.bf16.mxu0 0
    %4746 = vmatpush1.bf16.msra.mxu0 0
    %4747 = vmatprep.subr.bf16.mxu0 0
    %4748 = vmatpush1.bf16.msra.mxu0 0
    %4749 = vmatprep.subr.bf16.mxu0 0
    %4750 = vmatpush1.bf16.msra.mxu0 0
    %4751 = vmatprep.subr.bf16.mxu0 0
    %4752 = vmatpush1.bf16.msra.mxu0 0
    %4753 = vmatprep.mubr.bf16.mxu0 0
    %4754 = vmatmul.mubr.bf16.gmra.mrb[0].mxu0 %v4543
    %v4755 = vpop.f32.mrb[0].mxu0
    %v4756 = vadd.f32 %v4581, %v4755
    %v4757 = vpop.f32.mrb[0].mxu0
    %v4758 = vadd.f32 %v4585, %v4757
    %v4759 = vpop.f32.mrb[0].mxu0
    %v4760 = vpop.f32.mrb[0].mxu0
    %4761 = vdwg.mxu0
    %4762 = vmatprep.subr.bf16.mxu0 0
    %4763 = vmatpush1.bf16.msra.mxu0 %v4675
    %4764 = vmatprep.subr.bf16.mxu0 0
    %4765 = vmatpush1.bf16.msra.mxu0 %v4678
    %4766 = vmatprep.subr.bf16.mxu0 0
    %4767 = vmatpush1.bf16.msra.mxu0 %v4681
    %4768 = vmatprep.subr.bf16.mxu0 0
    %4769 = vmatpush1.bf16.msra.mxu0 %v4684
    %4770 = vmatprep.subr.bf16.mxu0 0
    %4771 = vmatpush1.bf16.msra.mxu0 %v4687
    %4772 = vmatprep.subr.bf16.mxu0 0
    %4773 = vmatpush1.bf16.msra.mxu0 %v4690
    %4774 = vmatprep.subr.bf16.mxu0 0
    %4775 = vmatpush1.bf16.msra.mxu0 %v4693
    %4776 = vmatprep.subr.bf16.mxu0 0
    %4777 = vmatpush1.bf16.msra.mxu0 %v4696
    %4778 = vmatprep.subr.bf16.mxu0 0
    %4779 = vmatpush1.bf16.msra.mxu0 0
    %4780 = vmatprep.subr.bf16.mxu0 0
    %4781 = vmatpush1.bf16.msra.mxu0 0
    %4782 = vmatprep.subr.bf16.mxu0 0
    %4783 = vmatpush1.bf16.msra.mxu0 0
    %4784 = vmatprep.subr.bf16.mxu0 0
    %4785 = vmatpush1.bf16.msra.mxu0 0
    %4786 = vmatprep.subr.bf16.mxu0 0
    %4787 = vmatpush1.bf16.msra.mxu0 0
    %4788 = vmatprep.subr.bf16.mxu0 0
    %4789 = vmatpush1.bf16.msra.mxu0 0
    %4790 = vmatprep.subr.bf16.mxu0 0
    %4791 = vmatpush1.bf16.msra.mxu0 0
    %4792 = vmatprep.subr.bf16.mxu0 0
    %4793 = vmatpush1.bf16.msra.mxu0 0
    %4794 = vmatprep.mubr.bf16.mxu0 0
    %4795 = vmatmul.mubr.bf16.gmra.mrb[0].mxu0 %v4543
    %v4796 = vpop.f32.mrb[0].mxu0
    %v4797 = vadd.f32 %v4589, %v4796
    %v4798 = vpop.f32.mrb[0].mxu0
    %v4799 = vpop.f32.mrb[0].mxu0
    %v4800 = vpop.f32.mrb[0].mxu0
    %4801 = vdwg.mxu0
    %v4802 = vadd.f32 %v4278, %v4497
    %v4803 = vxor.u32 %v4802, 2147483648
    %v4804 = vmul.f32 %v4803, 1.442695
    %v4805 = vpow.pop %v4804
    %v4806 = vadd.f32 %v4805, 1.0
    %v4807 = vrcp.pop %v4806
    %v4808 = vmul.f32 1.0, %v4807
    %v4809 = vadd.f32 %v4279, %v4499
    %v4810 = vxor.u32 %v4809, 2147483648
    %v4811 = vmul.f32 %v4810, 1.442695
    %v4812 = vpow.pop %v4811
    %v4813 = vadd.f32 %v4812, 1.0
    %v4814 = vrcp.pop %v4813
    %v4815 = vmul.f32 1.0, %v4814
    %v4816 = vmul.f32 %v4808, %v4538
    %v4817 = vadd.f32 %v4280, %v4816
    %v4818 = vtanh.pop %v4817
    %v4819 = vsub.f32 1.0, %v4815
    %v4820 = vmul.f32 %v4819, %v4818
    %v4821 = vmul.f32 %v4815, %v4238
    %v4822 = vadd.f32 %v4820, %v4821
    %v4823 = vadd.f32 %v4281, %v4756
    %v4824 = vxor.u32 %v4823, 2147483648
    %v4825 = vmul.f32 %v4824, 1.442695
    %v4826 = vpow.pop %v4825
    %v4827 = vadd.f32 %v4826, 1.0
    %v4828 = vrcp.pop %v4827
    %v4829 = vmul.f32 1.0, %v4828
    %v4830 = vadd.f32 %v4282, %v4758
    %v4831 = vxor.u32 %v4830, 2147483648
    %v4832 = vmul.f32 %v4831, 1.442695
    %v4833 = vpow.pop %v4832
    %v4834 = vadd.f32 %v4833, 1.0
    %v4835 = vrcp.pop %v4834
    %v4836 = vmul.f32 1.0, %v4835
    %v4837 = vmul.f32 %v4829, %v4797
    %v4838 = vadd.f32 %v4283, %v4837
    %v4839 = vtanh.pop %v4838
    %v4840 = vsub.f32 1.0, %v4836
    %v4841 = vmul.f32 %v4840, %v4839
    %v4842 = vmul.f32 %v4836, %v4259
    %v4843 = vadd.f32 %v4841, %v4842
    %v4844 = vld [vmem:[%s1928] sm:$0xff]
    %4846 = vset.pattern.permute.xlu0 0
    %4847 = vperm.xlu0 %4846, %v4844
    %v4848 = vpop.permute.xlu0 %4847
    %v4850 = vmul.f32 %v4822, %v4848
    %s4851 = scalar_lea.vmem [#allocation4], 48
    %4852 = vst [vmem:[%s4851] sm:$0xff] %v4850
    %v4853 = vld [vmem:[%s1918] sm:$0xff]
    %4855 = vset.pattern.permute.xlu0 0
    %4856 = vperm.xlu0 %4855, %v4853
    %v4857 = vpop.permute.xlu0 %4856
    %v4859 = vmul.f32 %v4843, %v4857
    %s4860 = scalar_lea.vmem [#allocation10], 8
    %4861 = vst [vmem:[%s4860] sm:$0xff] %v4859
    %v4862 = vld [vmem:[#allocation2 + $0xa8] sm:$0xff]
    %v4863 = vld [vmem:[#allocation2 + $0xb0] sm:$0xff]
    %v4864 = vld [vmem:[#allocation2 + $0xb8] sm:$0xff]
    %v4865 = vld [vmem:[#allocation3] sm:$0xff]
    %v4866 = vld [vmem:[#allocation3 + $0x8] sm:$0xff]
    %v4867 = vld [vmem:[#allocation3 + $0x10] sm:$0xff]
    %v4868 = vpack.c.bf16 %v4822, %v4822
    %v4869 = vld [vmem:[#allocation8] sm:$0xff]
    %v4870 = vld [vmem:[#allocation8 + $0x8] sm:$0xf]
    %v4871 = vld [vmem:[#allocation8 + $0xc] sm:$0xff]
    %v4872 = vld [vmem:[#allocation8 + $0x14] sm:$0xf]
    %v4873 = vld [vmem:[#allocation8 + $0x18] sm:$0xff]
    %v4874 = vld [vmem:[#allocation8 + $0x20] sm:$0xf]
    %v4875 = vld [vmem:[#allocation8 + $0x24] sm:$0xff]
    %v4876 = vld [vmem:[#allocation8 + $0x2c] sm:$0xf]
    %v4877 = vld [vmem:[#allocation8 + $0x30] sm:$0xff]
    %v4878 = vld [vmem:[#allocation8 + $0x38] sm:$0xf]
    %v4879 = vld [vmem:[#allocation8 + $0x3c] sm:$0xff]
    %v4880 = vld [vmem:[#allocation8 + $0x44] sm:$0xf]
    %v4881 = vld [vmem:[#allocation8 + $0x48] sm:$0xff]
    %v4882 = vld [vmem:[#allocation8 + $0x50] sm:$0xf]
    %v4883 = vld [vmem:[#allocation8 + $0x54] sm:$0xff]
    %v4884 = vld [vmem:[#allocation8 + $0x5c] sm:$0xf]
    %v4885 = vld [vmem:[#allocation8 + $0x60] sm:$0xff]
    %v4886 = vld [vmem:[#allocation8 + $0x68] sm:$0xf]
    %v4887 = vld [vmem:[#allocation8 + $0x6c] sm:$0xff]
    %v4888 = vld [vmem:[#allocation8 + $0x74] sm:$0xf]
    %v4889 = vld [vmem:[#allocation8 + $0x78] sm:$0xff]
    %v4890 = vld [vmem:[#allocation8 + $0x80] sm:$0xf]
    %v4891 = vld [vmem:[#allocation8 + $0x84] sm:$0xff]
    %v4892 = vld [vmem:[#allocation8 + $0x8c] sm:$0xf]
    %v4893 = vld [vmem:[#allocation8 + $0x90] sm:$0xff]
    %v4894 = vld [vmem:[#allocation8 + $0x98] sm:$0xf]
    %v4895 = vld [vmem:[#allocation8 + $0x9c] sm:$0xff]
    %v4896 = vld [vmem:[#allocation8 + $0xa4] sm:$0xf]
    %v4897 = vld [vmem:[#allocation8 + $0xa8] sm:$0xff]
    %v4898 = vld [vmem:[#allocation8 + $0xb0] sm:$0xf]
    %v4899 = vld [vmem:[#allocation8 + $0xb4] sm:$0xff]
    %v4900 = vld [vmem:[#allocation8 + $0xbc] sm:$0xf]
    %v4901 = vld [vmem:[%s5] sm:$0x7]
    %v4903 = vlaneseq
    %v4904 = vshrl.u32 %v4903, 7
    %v4905 = vsub.s32 0, %v4904
    %v4906 = vrot.slane %v4901, %v4905
    %v4907 = vlaneseq
    %v4908 = vshrl.u32 %v4907, 7
    %v4909 = vsub.s32 1, %v4908
    %v4910 = vrot.slane %v4901, %v4909
    %v4911 = vlaneseq
    %v4912 = vshrl.u32 %v4911, 7
    %v4913 = vsub.s32 2, %v4912
    %v4914 = vrot.slane %v4901, %v4913
    %v4950 = vunpack.c.l.b16 %v4869
    %v4951 = vunpack.c.h.b16 %v4869
    %v4952 = vunpack.c.l.b16 %v4870
    %v4953 = vunpack.c.l.b16 %v4871
    %v4954 = vunpack.c.h.b16 %v4871
    %v4955 = vunpack.c.l.b16 %v4872
    %v4956 = vunpack.c.l.b16 %v4873
    %v4957 = vunpack.c.h.b16 %v4873
    %v4958 = vunpack.c.l.b16 %v4874
    %v4959 = vunpack.c.l.b16 %v4875
    %v4960 = vunpack.c.h.b16 %v4875
    %v4961 = vunpack.c.l.b16 %v4876
    %v4962 = vunpack.c.l.b16 %v4877
    %v4963 = vunpack.c.h.b16 %v4877
    %v4964 = vunpack.c.l.b16 %v4878
    %v4965 = vunpack.c.l.b16 %v4879
    %v4966 = vunpack.c.h.b16 %v4879
    %v4967 = vunpack.c.l.b16 %v4880
    %v4968 = vunpack.c.l.b16 %v4881
    %v4969 = vunpack.c.h.b16 %v4881
    %v4970 = vunpack.c.l.b16 %v4882
    %v4971 = vunpack.c.l.b16 %v4883
    %v4972 = vunpack.c.h.b16 %v4883
    %v4973 = vunpack.c.l.b16 %v4884
    %v4974 = vunpack.c.l.b16 %v4885
    %v4975 = vunpack.c.h.b16 %v4885
    %v4976 = vunpack.c.l.b16 %v4886
    %v4977 = vunpack.c.l.b16 %v4887
    %v4978 = vunpack.c.h.b16 %v4887
    %v4979 = vunpack.c.l.b16 %v4888
    %v4980 = vunpack.c.l.b16 %v4889
    %v4981 = vunpack.c.h.b16 %v4889
    %v4982 = vunpack.c.l.b16 %v4890
    %v4983 = vunpack.c.l.b16 %v4891
    %v4984 = vunpack.c.h.b16 %v4891
    %v4985 = vunpack.c.l.b16 %v4892
    %v4986 = vunpack.c.l.b16 %v4893
    %v4987 = vunpack.c.h.b16 %v4893
    %v4988 = vunpack.c.l.b16 %v4894
    %v4989 = vunpack.c.l.b16 %v4895
    %v4990 = vunpack.c.h.b16 %v4895
    %v4991 = vunpack.c.l.b16 %v4896
    %v4992 = vunpack.c.l.b16 %v4897
    %v4993 = vunpack.c.h.b16 %v4897
    %v4994 = vunpack.c.l.b16 %v4898
    %v4995 = vunpack.c.l.b16 %v4899
    %v4996 = vunpack.c.h.b16 %v4899
    %v4997 = vunpack.c.l.b16 %v4900
    %v4998 = vpack.c.b16 %v4953, %v4950
    %v4999 = vpack.c.b16 %v4954, %v4951
    %v5000 = vpack.c.b16 %v4955, %v4952
    %v5001 = vpack.c.b16 %v4959, %v4956
    %v5002 = vpack.c.b16 %v4960, %v4957
    %v5003 = vpack.c.b16 %v4961, %v4958
    %v5004 = vpack.c.b16 %v4965, %v4962
    %v5005 = vpack.c.b16 %v4966, %v4963
    %v5006 = vpack.c.b16 %v4967, %v4964
    %v5007 = vpack.c.b16 %v4971, %v4968
    %v5008 = vpack.c.b16 %v4972, %v4969
    %v5009 = vpack.c.b16 %v4973, %v4970
    %v5010 = vpack.c.b16 %v4977, %v4974
    %v5011 = vpack.c.b16 %v4978, %v4975
    %v5012 = vpack.c.b16 %v4979, %v4976
    %v5013 = vpack.c.b16 %v4983, %v4980
    %v5014 = vpack.c.b16 %v4984, %v4981
    %v5015 = vpack.c.b16 %v4985, %v4982
    %v5016 = vpack.c.b16 %v4989, %v4986
    %v5017 = vpack.c.b16 %v4990, %v4987
    %v5018 = vpack.c.b16 %v4991, %v4988
    %v5019 = vpack.c.b16 %v4995, %v4992
    %v5020 = vpack.c.b16 %v4996, %v4993
    %v5021 = vpack.c.b16 %v4997, %v4994
    %5046 = vmatprep.subr.bf16.mxu0 %v4999
    %5047 = vmatpush1.bf16.msra.mxu0 %v4998
    %5048 = vmatprep.subr.bf16.mxu0 %v5002
    %5049 = vmatpush1.bf16.msra.mxu0 %v5001
    %5050 = vmatprep.subr.bf16.mxu0 %v5005
    %5051 = vmatpush1.bf16.msra.mxu0 %v5004
    %5052 = vmatprep.subr.bf16.mxu0 %v5008
    %5053 = vmatpush1.bf16.msra.mxu0 %v5007
    %5054 = vmatprep.subr.bf16.mxu0 %v5011
    %5055 = vmatpush1.bf16.msra.mxu0 %v5010
    %5056 = vmatprep.subr.bf16.mxu0 %v5014
    %5057 = vmatpush1.bf16.msra.mxu0 %v5013
    %5058 = vmatprep.subr.bf16.mxu0 %v5017
    %5059 = vmatpush1.bf16.msra.mxu0 %v5016
    %5060 = vmatprep.subr.bf16.mxu0 %v5020
    %5061 = vmatpush1.bf16.msra.mxu0 %v5019
    %5062 = vmatprep.subr.bf16.mxu0 0
    %5063 = vmatpush1.bf16.msra.mxu0 0
    %5064 = vmatprep.subr.bf16.mxu0 0
    %5065 = vmatpush1.bf16.msra.mxu0 0
    %5066 = vmatprep.subr.bf16.mxu0 0
    %5067 = vmatpush1.bf16.msra.mxu0 0
    %5068 = vmatprep.subr.bf16.mxu0 0
    %5069 = vmatpush1.bf16.msra.mxu0 0
    %5070 = vmatprep.subr.bf16.mxu0 0
    %5071 = vmatpush1.bf16.msra.mxu0 0
    %5072 = vmatprep.subr.bf16.mxu0 0
    %5073 = vmatpush1.bf16.msra.mxu0 0
    %5074 = vmatprep.subr.bf16.mxu0 0
    %5075 = vmatpush1.bf16.msra.mxu0 0
    %5076 = vmatprep.subr.bf16.mxu0 0
    %5077 = vmatpush1.bf16.msra.mxu0 0
    %5078 = vmatprep.mubr.bf16.mxu0 0
    %5079 = vmatmul.mubr.bf16.gmra.mrb[0].mxu0 %v4868
    %v5080 = vpop.f32.mrb[0].mxu0
    %v5081 = vadd.f32 %v4906, %v5080
    %v5082 = vpop.f32.mrb[0].mxu0
    %v5083 = vadd.f32 %v4910, %v5082
    %v5084 = vpop.f32.mrb[0].mxu0
    %v5085 = vpop.f32.mrb[0].mxu0
    %5086 = vdwg.mxu0
    %5087 = vmatprep.subr.bf16.mxu0 0
    %5088 = vmatpush1.bf16.msra.mxu0 %v5000
    %5089 = vmatprep.subr.bf16.mxu0 0
    %5090 = vmatpush1.bf16.msra.mxu0 %v5003
    %5091 = vmatprep.subr.bf16.mxu0 0
    %5092 = vmatpush1.bf16.msra.mxu0 %v5006
    %5093 = vmatprep.subr.bf16.mxu0 0
    %5094 = vmatpush1.bf16.msra.mxu0 %v5009
    %5095 = vmatprep.subr.bf16.mxu0 0
    %5096 = vmatpush1.bf16.msra.mxu0 %v5012
    %5097 = vmatprep.subr.bf16.mxu0 0
    %5098 = vmatpush1.bf16.msra.mxu0 %v5015
    %5099 = vmatprep.subr.bf16.mxu0 0
    %5100 = vmatpush1.bf16.msra.mxu0 %v5018
    %5101 = vmatprep.subr.bf16.mxu0 0
    %5102 = vmatpush1.bf16.msra.mxu0 %v5021
    %5103 = vmatprep.subr.bf16.mxu0 0
    %5104 = vmatpush1.bf16.msra.mxu0 0
    %5105 = vmatprep.subr.bf16.mxu0 0
    %5106 = vmatpush1.bf16.msra.mxu0 0
    %5107 = vmatprep.subr.bf16.mxu0 0
    %5108 = vmatpush1.bf16.msra.mxu0 0
    %5109 = vmatprep.subr.bf16.mxu0 0
    %5110 = vmatpush1.bf16.msra.mxu0 0
    %5111 = vmatprep.subr.bf16.mxu0 0
    %5112 = vmatpush1.bf16.msra.mxu0 0
    %5113 = vmatprep.subr.bf16.mxu0 0
    %5114 = vmatpush1.bf16.msra.mxu0 0
    %5115 = vmatprep.subr.bf16.mxu0 0
    %5116 = vmatpush1.bf16.msra.mxu0 0
    %5117 = vmatprep.subr.bf16.mxu0 0
    %5118 = vmatpush1.bf16.msra.mxu0 0
    %5119 = vmatprep.mubr.bf16.mxu0 0
    %5120 = vmatmul.mubr.bf16.gmra.mrb[0].mxu0 %v4868
    %v5121 = vpop.f32.mrb[0].mxu0
    %v5122 = vadd.f32 %v4914, %v5121
    %v5123 = vpop.f32.mrb[0].mxu0
    %v5124 = vpop.f32.mrb[0].mxu0
    %v5125 = vpop.f32.mrb[0].mxu0
    %5126 = vdwg.mxu0
    %v5127 = vpack.c.bf16 %v4843, %v4843
    %v5128 = vld [vmem:[%s1032] sm:$0xff]
    %v5129 = vld [vmem:[%s1032 + $0x8] sm:$0xf]
    %v5130 = vld [vmem:[%s1032 + $0xc] sm:$0xff]
    %v5131 = vld [vmem:[%s1032 + $0x14] sm:$0xf]
    %v5132 = vld [vmem:[%s1032 + $0x18] sm:$0xff]
    %v5133 = vld [vmem:[%s1032 + $0x20] sm:$0xf]
    %v5134 = vld [vmem:[%s1032 + $0x24] sm:$0xff]
    %v5135 = vld [vmem:[%s1032 + $0x2c] sm:$0xf]
    %v5136 = vld [vmem:[%s1032 + $0x30] sm:$0xff]
    %v5137 = vld [vmem:[%s1032 + $0x38] sm:$0xf]
    %v5138 = vld [vmem:[%s1032 + $0x3c] sm:$0xff]
    %v5139 = vld [vmem:[%s1032 + $0x44] sm:$0xf]
    %v5140 = vld [vmem:[%s1032 + $0x48] sm:$0xff]
    %v5141 = vld [vmem:[%s1032 + $0x50] sm:$0xf]
    %v5142 = vld [vmem:[%s1032 + $0x54] sm:$0xff]
    %v5143 = vld [vmem:[%s1032 + $0x5c] sm:$0xf]
    %v5144 = vld [vmem:[%s1032 + $0x60] sm:$0xff]
    %v5145 = vld [vmem:[%s1032 + $0x68] sm:$0xf]
    %v5146 = vld [vmem:[%s1032 + $0x6c] sm:$0xff]
    %v5147 = vld [vmem:[%s1032 + $0x74] sm:$0xf]
    %v5148 = vld [vmem:[%s1032 + $0x78] sm:$0xff]
    %v5149 = vld [vmem:[%s1032 + $0x80] sm:$0xf]
    %v5150 = vld [vmem:[%s1032 + $0x84] sm:$0xff]
    %v5151 = vld [vmem:[%s1032 + $0x8c] sm:$0xf]
    %v5152 = vld [vmem:[%s1032 + $0x90] sm:$0xff]
    %v5153 = vld [vmem:[%s1032 + $0x98] sm:$0xf]
    %v5154 = vld [vmem:[%s1032 + $0x9c] sm:$0xff]
    %v5155 = vld [vmem:[%s1032 + $0xa4] sm:$0xf]
    %v5156 = vld [vmem:[%s1032 + $0xa8] sm:$0xff]
    %v5157 = vld [vmem:[%s1032 + $0xb0] sm:$0xf]
    %v5158 = vld [vmem:[%s1032 + $0xb4] sm:$0xff]
    %v5159 = vld [vmem:[%s1032 + $0xbc] sm:$0xf]
    %v5160 = vld [vmem:[%s1065] sm:$0x7]
    %v5162 = vlaneseq
    %v5163 = vshrl.u32 %v5162, 7
    %v5164 = vsub.s32 0, %v5163
    %v5165 = vrot.slane %v5160, %v5164
    %v5166 = vlaneseq
    %v5167 = vshrl.u32 %v5166, 7
    %v5168 = vsub.s32 1, %v5167
    %v5169 = vrot.slane %v5160, %v5168
    %v5170 = vlaneseq
    %v5171 = vshrl.u32 %v5170, 7
    %v5172 = vsub.s32 2, %v5171
    %v5173 = vrot.slane %v5160, %v5172
    %v5209 = vunpack.c.l.b16 %v5128
    %v5210 = vunpack.c.h.b16 %v5128
    %v5211 = vunpack.c.l.b16 %v5129
    %v5212 = vunpack.c.l.b16 %v5130
    %v5213 = vunpack.c.h.b16 %v5130
    %v5214 = vunpack.c.l.b16 %v5131
    %v5215 = vunpack.c.l.b16 %v5132
    %v5216 = vunpack.c.h.b16 %v5132
    %v5217 = vunpack.c.l.b16 %v5133
    %v5218 = vunpack.c.l.b16 %v5134
    %v5219 = vunpack.c.h.b16 %v5134
    %v5220 = vunpack.c.l.b16 %v5135
    %v5221 = vunpack.c.l.b16 %v5136
    %v5222 = vunpack.c.h.b16 %v5136
    %v5223 = vunpack.c.l.b16 %v5137
    %v5224 = vunpack.c.l.b16 %v5138
    %v5225 = vunpack.c.h.b16 %v5138
    %v5226 = vunpack.c.l.b16 %v5139
    %v5227 = vunpack.c.l.b16 %v5140
    %v5228 = vunpack.c.h.b16 %v5140
    %v5229 = vunpack.c.l.b16 %v5141
    %v5230 = vunpack.c.l.b16 %v5142
    %v5231 = vunpack.c.h.b16 %v5142
    %v5232 = vunpack.c.l.b16 %v5143
    %v5233 = vunpack.c.l.b16 %v5144
    %v5234 = vunpack.c.h.b16 %v5144
    %v5235 = vunpack.c.l.b16 %v5145
    %v5236 = vunpack.c.l.b16 %v5146
    %v5237 = vunpack.c.h.b16 %v5146
    %v5238 = vunpack.c.l.b16 %v5147
    %v5239 = vunpack.c.l.b16 %v5148
    %v5240 = vunpack.c.h.b16 %v5148
    %v5241 = vunpack.c.l.b16 %v5149
    %v5242 = vunpack.c.l.b16 %v5150
    %v5243 = vunpack.c.h.b16 %v5150
    %v5244 = vunpack.c.l.b16 %v5151
    %v5245 = vunpack.c.l.b16 %v5152
    %v5246 = vunpack.c.h.b16 %v5152
    %v5247 = vunpack.c.l.b16 %v5153
    %v5248 = vunpack.c.l.b16 %v5154
    %v5249 = vunpack.c.h.b16 %v5154
    %v5250 = vunpack.c.l.b16 %v5155
    %v5251 = vunpack.c.l.b16 %v5156
    %v5252 = vunpack.c.h.b16 %v5156
    %v5253 = vunpack.c.l.b16 %v5157
    %v5254 = vunpack.c.l.b16 %v5158
    %v5255 = vunpack.c.h.b16 %v5158
    %v5256 = vunpack.c.l.b16 %v5159
    %v5257 = vpack.c.b16 %v5212, %v5209
    %v5258 = vpack.c.b16 %v5213, %v5210
    %v5259 = vpack.c.b16 %v5214, %v5211
    %v5260 = vpack.c.b16 %v5218, %v5215
    %v5261 = vpack.c.b16 %v5219, %v5216
    %v5262 = vpack.c.b16 %v5220, %v5217
    %v5263 = vpack.c.b16 %v5224, %v5221
    %v5264 = vpack.c.b16 %v5225, %v5222
    %v5265 = vpack.c.b16 %v5226, %v5223
    %v5266 = vpack.c.b16 %v5230, %v5227
    %v5267 = vpack.c.b16 %v5231, %v5228
    %v5268 = vpack.c.b16 %v5232, %v5229
    %v5269 = vpack.c.b16 %v5236, %v5233
    %v5270 = vpack.c.b16 %v5237, %v5234
    %v5271 = vpack.c.b16 %v5238, %v5235
    %v5272 = vpack.c.b16 %v5242, %v5239
    %v5273 = vpack.c.b16 %v5243, %v5240
    %v5274 = vpack.c.b16 %v5244, %v5241
    %v5275 = vpack.c.b16 %v5248, %v5245
    %v5276 = vpack.c.b16 %v5249, %v5246
    %v5277 = vpack.c.b16 %v5250, %v5247
    %v5278 = vpack.c.b16 %v5254, %v5251
    %v5279 = vpack.c.b16 %v5255, %v5252
    %v5280 = vpack.c.b16 %v5256, %v5253
    %5305 = vmatprep.subr.bf16.mxu0 %v5258
    %5306 = vmatpush1.bf16.msra.mxu0 %v5257
    %5307 = vmatprep.subr.bf16.mxu0 %v5261
    %5308 = vmatpush1.bf16.msra.mxu0 %v5260
    %5309 = vmatprep.subr.bf16.mxu0 %v5264
    %5310 = vmatpush1.bf16.msra.mxu0 %v5263
    %5311 = vmatprep.subr.bf16.mxu0 %v5267
    %5312 = vmatpush1.bf16.msra.mxu0 %v5266
    %5313 = vmatprep.subr.bf16.mxu0 %v5270
    %5314 = vmatpush1.bf16.msra.mxu0 %v5269
    %5315 = vmatprep.subr.bf16.mxu0 %v5273
    %5316 = vmatpush1.bf16.msra.mxu0 %v5272
    %5317 = vmatprep.subr.bf16.mxu0 %v5276
    %5318 = vmatpush1.bf16.msra.mxu0 %v5275
    %5319 = vmatprep.subr.bf16.mxu0 %v5279
    %5320 = vmatpush1.bf16.msra.mxu0 %v5278
    %5321 = vmatprep.subr.bf16.mxu0 0
    %5322 = vmatpush1.bf16.msra.mxu0 0
    %5323 = vmatprep.subr.bf16.mxu0 0
    %5324 = vmatpush1.bf16.msra.mxu0 0
    %5325 = vmatprep.subr.bf16.mxu0 0
    %5326 = vmatpush1.bf16.msra.mxu0 0
    %5327 = vmatprep.subr.bf16.mxu0 0
    %5328 = vmatpush1.bf16.msra.mxu0 0
    %5329 = vmatprep.subr.bf16.mxu0 0
    %5330 = vmatpush1.bf16.msra.mxu0 0
    %5331 = vmatprep.subr.bf16.mxu0 0
    %5332 = vmatpush1.bf16.msra.mxu0 0
    %5333 = vmatprep.subr.bf16.mxu0 0
    %5334 = vmatpush1.bf16.msra.mxu0 0
    %5335 = vmatprep.subr.bf16.mxu0 0
    %5336 = vmatpush1.bf16.msra.mxu0 0
    %5337 = vmatprep.mubr.bf16.mxu0 0
    %5338 = vmatmul.mubr.bf16.gmra.mrb[0].mxu0 %v5127
    %v5339 = vpop.f32.mrb[0].mxu0
    %v5340 = vadd.f32 %v5165, %v5339
    %v5341 = vpop.f32.mrb[0].mxu0
    %v5342 = vadd.f32 %v5169, %v5341
    %v5343 = vpop.f32.mrb[0].mxu0
    %v5344 = vpop.f32.mrb[0].mxu0
    %5345 = vdwg.mxu0
    %5346 = vmatprep.subr.bf16.mxu0 0
    %5347 = vmatpush1.bf16.msra.mxu0 %v5259
    %5348 = vmatprep.subr.bf16.mxu0 0
    %5349 = vmatpush1.bf16.msra.mxu0 %v5262
    %5350 = vmatprep.subr.bf16.mxu0 0
    %5351 = vmatpush1.bf16.msra.mxu0 %v5265
    %5352 = vmatprep.subr.bf16.mxu0 0
    %5353 = vmatpush1.bf16.msra.mxu0 %v5268
    %5354 = vmatprep.subr.bf16.mxu0 0
    %5355 = vmatpush1.bf16.msra.mxu0 %v5271
    %5356 = vmatprep.subr.bf16.mxu0 0
    %5357 = vmatpush1.bf16.msra.mxu0 %v5274
    %5358 = vmatprep.subr.bf16.mxu0 0
    %5359 = vmatpush1.bf16.msra.mxu0 %v5277
    %5360 = vmatprep.subr.bf16.mxu0 0
    %5361 = vmatpush1.bf16.msra.mxu0 %v5280
    %5362 = vmatprep.subr.bf16.mxu0 0
    %5363 = vmatpush1.bf16.msra.mxu0 0
    %5364 = vmatprep.subr.bf16.mxu0 0
    %5365 = vmatpush1.bf16.msra.mxu0 0
    %5366 = vmatprep.subr.bf16.mxu0 0
    %5367 = vmatpush1.bf16.msra.mxu0 0
    %5368 = vmatprep.subr.bf16.mxu0 0
    %5369 = vmatpush1.bf16.msra.mxu0 0
    %5370 = vmatprep.subr.bf16.mxu0 0
    %5371 = vmatpush1.bf16.msra.mxu0 0
    %5372 = vmatprep.subr.bf16.mxu0 0
    %5373 = vmatpush1.bf16.msra.mxu0 0
    %5374 = vmatprep.subr.bf16.mxu0 0
    %5375 = vmatpush1.bf16.msra.mxu0 0
    %5376 = vmatprep.subr.bf16.mxu0 0
    %5377 = vmatpush1.bf16.msra.mxu0 0
    %5378 = vmatprep.mubr.bf16.mxu0 0
    %5379 = vmatmul.mubr.bf16.gmra.mrb[0].mxu0 %v5127
    %v5380 = vpop.f32.mrb[0].mxu0
    %v5381 = vadd.f32 %v5173, %v5380
    %v5382 = vpop.f32.mrb[0].mxu0
    %v5383 = vpop.f32.mrb[0].mxu0
    %v5384 = vpop.f32.mrb[0].mxu0
    %5385 = vdwg.mxu0
    %v5386 = vadd.f32 %v4862, %v5081
    %v5387 = vxor.u32 %v5386, 2147483648
    %v5388 = vmul.f32 %v5387, 1.442695
    %v5389 = vpow.pop %v5388
    %v5390 = vadd.f32 %v5389, 1.0
    %v5391 = vrcp.pop %v5390
    %v5392 = vmul.f32 1.0, %v5391
    %v5393 = vadd.f32 %v4863, %v5083
    %v5394 = vxor.u32 %v5393, 2147483648
    %v5395 = vmul.f32 %v5394, 1.442695
    %v5396 = vpow.pop %v5395
    %v5397 = vadd.f32 %v5396, 1.0
    %v5398 = vrcp.pop %v5397
    %v5399 = vmul.f32 1.0, %v5398
    %v5400 = vmul.f32 %v5392, %v5122
    %v5401 = vadd.f32 %v4864, %v5400
    %v5402 = vtanh.pop %v5401
    %v5403 = vsub.f32 1.0, %v5399
    %v5404 = vmul.f32 %v5403, %v5402
    %v5405 = vmul.f32 %v5399, %v4822
    %v5406 = vadd.f32 %v5404, %v5405
    %v5407 = vadd.f32 %v4865, %v5340
    %v5408 = vxor.u32 %v5407, 2147483648
    %v5409 = vmul.f32 %v5408, 1.442695
    %v5410 = vpow.pop %v5409
    %v5411 = vadd.f32 %v5410, 1.0
    %v5412 = vrcp.pop %v5411
    %v5413 = vmul.f32 1.0, %v5412
    %v5414 = vadd.f32 %v4866, %v5342
    %v5415 = vxor.u32 %v5414, 2147483648
    %v5416 = vmul.f32 %v5415, 1.442695
    %v5417 = vpow.pop %v5416
    %v5418 = vadd.f32 %v5417, 1.0
    %v5419 = vrcp.pop %v5418
    %v5420 = vmul.f32 1.0, %v5419
    %v5421 = vmul.f32 %v5413, %v5381
    %v5422 = vadd.f32 %v4867, %v5421
    %v5423 = vtanh.pop %v5422
    %v5424 = vsub.f32 1.0, %v5420
    %v5425 = vmul.f32 %v5424, %v5423
    %v5426 = vmul.f32 %v5420, %v4843
    %v5427 = vadd.f32 %v5425, %v5426
    %v5428 = vld [vmem:[%s1342] sm:$0xff]
    %5430 = vset.pattern.permute.xlu0 0
    %5431 = vperm.xlu0 %5430, %v5428
    %v5432 = vpop.permute.xlu0 %5431
    %v5434 = vmul.f32 %v5406, %v5432
    %s5435 = scalar_lea.vmem [#allocation4], 56
    %5436 = vst [vmem:[%s5435] sm:$0xff] %v5434
    %v5437 = vld [vmem:[%s1] sm:$0xff]
    %5439 = vset.pattern.permute.xlu0 0
    %5440 = vperm.xlu0 %5439, %v5437
    %v5441 = vpop.permute.xlu0 %5440
    %v5443 = vmul.f32 %v5427, %v5441
    %5444 = vst [vmem:[#allocation10] sm:$0xff] %v5443
    %v5445 = vld [vmem:[#allocation10] sm:$0xff]
    %v5446 = vld [vmem:[#allocation10 + $0x8] sm:$0xff]
    %v5447 = vld [vmem:[#allocation10 + $0x10] sm:$0xff]
    %v5448 = vld [vmem:[#allocation10 + $0x18] sm:$0xff]
    %v5449 = vld [vmem:[#allocation10 + $0x20] sm:$0xff]
    %v5450 = vld [vmem:[#allocation10 + $0x28] sm:$0xff]
    %v5451 = vld [vmem:[#allocation10 + $0x30] sm:$0xff]
    %v5452 = vld [vmem:[#allocation10 + $0x38] sm:$0xff]
    %v5453 = vld [vmem:[#allocation4] sm:$0xff]
    %v5454 = vld [vmem:[#allocation4 + $0x8] sm:$0xff]
    %v5455 = vld [vmem:[#allocation4 + $0x10] sm:$0xff]
    %v5456 = vld [vmem:[#allocation4 + $0x18] sm:$0xff]
    %v5457 = vld [vmem:[#allocation4 + $0x20] sm:$0xff]
    %v5458 = vld [vmem:[#allocation4 + $0x28] sm:$0xff]
    %v5459 = vld [vmem:[#allocation4 + $0x30] sm:$0xff]
    %v5460 = vld [vmem:[#allocation4 + $0x38] sm:$0xff]
    %v5461 = vadd.f32 %v5445, %v5453
    %v5462 = vadd.f32 %v5446, %v5454
    %v5463 = vadd.f32 %v5447, %v5455
    %v5464 = vadd.f32 %v5448, %v5456
    %v5465 = vadd.f32 %v5449, %v5457
    %v5466 = vadd.f32 %v5450, %v5458
    %v5467 = vadd.f32 %v5451, %v5459
    %v5468 = vadd.f32 %v5452, %v5460
    %5469 = vst [vmem:[#allocation10] sm:$0xff] %v5461
    %5470 = vst [vmem:[#allocation10 + $0x8] sm:$0xff] %v5462
    %5471 = vst [vmem:[#allocation10 + $0x10] sm:$0xff] %v5463
    %5472 = vst [vmem:[#allocation10 + $0x18] sm:$0xff] %v5464
    %5473 = vst [vmem:[#allocation10 + $0x20] sm:$0xff] %v5465
    %5474 = vst [vmem:[#allocation10 + $0x28] sm:$0xff] %v5466
    %5475 = vst [vmem:[#allocation10 + $0x30] sm:$0xff] %v5467
    %5476 = vst [vmem:[#allocation10 + $0x38] sm:$0xff] %v5468
    %v5477 = vadd.f32 %v5406, %v5427
    %5478 = vst [vmem:[#allocation11] sm:$0xff] %v5477
    // Predicated region
    $region34: #{tpu_custom_call.1} parent=1 // pred_check
      _
    $region35: #{tpu_custom_call.1} parent=1 // pred_check_branch
      %5480 = sbr.rel (0) target = $region37
    $region36: #{tpu_custom_call.1} parent=1 // pred_region
      %s5482 = ssub.s32 1024, 1024
      %5483 = vsyncadd [#allocation7], %s5482
      %s5484 = sshll.u32 [#allocation10], 4
      %s5485 = int_to_ptr.vmem [resolvable:$true] %s5484
      %5490 = dma.vmem_to_hbm [thread:$0]  %s5485, 1024, %s6, [#allocation7], 128, 128, 8
    $region37: #{tpu_custom_call.1} parent=1 // pred_fallthru
      _
    // Predicated region
    $region38: #{tpu_custom_call.1} parent=1 // pred_check
      _
    $region39: #{tpu_custom_call.1} parent=1 // pred_check_branch
      %5492 = sbr.rel (0) target = $region41
    $region40: #{tpu_custom_call.1} parent=1 // pred_region
      %s5494 = ssub.s32 128, 128
      %5495 = vsyncadd [#allocation12], %s5494
      %s5497 = sshll.u32 [#allocation11], 4
      %s5498 = int_to_ptr.vmem [resolvable:$true] %s5497
      %5500 = dma.vmem_to_hbm [thread:$0]  %s5498, 128, %s7, [#allocation12]
    $region41: #{tpu_custom_call.1} parent=1 // pred_fallthru
      _
    // Predicated region
    $region42: #{tpu_custom_call.1} parent=1 // pred_check
      _
    $region43: #{tpu_custom_call.1} parent=1 // pred_check_branch
      %5502 = sbr.rel (0) target = $region45
    $region44: #{tpu_custom_call.1} parent=1 // pred_region
      %5503 = dma.done [#allocation7], 1024
    $region45: #{tpu_custom_call.1} parent=1 // pred_fallthru
      _
    // Predicated region
    $region46: #{tpu_custom_call.1} parent=1 // pred_check
      _
    $region47: #{tpu_custom_call.1} parent=1 // pred_check_branch
      %5505 = sbr.rel (0) target = $region49
    $region48: #{tpu_custom_call.1} parent=1 // pred_region
      %5506 = dma.done [#allocation12], 128
    $region49: #{tpu_custom_call.1} parent=1 // pred_fallthru
      _
    %5507 = vsyncpa [#allocation6], 1
    %5508 = vsyncpa [#allocation9], 1
    %5509 = vsyncpa [#allocation7], 1
    %5510 = vsyncpa [#allocation12], 1

</llo_original>
